<compile_context>
chip_gen: v7x
topology: tpu7x:2x2x1
jax: 0.10.0
libtpu: 0.0.40
codegen_flags: <defaults>
</compile_context>

<pallas_src>
import math

import numpy as np
import jax
import jax.numpy as jnp
from jax.experimental import pallas as pl
from jax.experimental.pallas import tpu as pltpu

# ---------------- model config (consistent with the PyTorch module) ----------
PATCH_W = 4
PATCH_H = 4
NUM_CHANNELS = 3
IMG_H = 16
IMG_W = 16
BATCH = 2
EMBED = PATCH_W * PATCH_W * NUM_CHANNELS          # 48 (module uses patchWidth twice)
KEY_SIZE = 8
QUERY_SIZE = 8
VALUE_SIZE = 8
NUM_HEADS = 4
HIDDEN = 64
NUM_CLASSES = 10
NUM_BLOCKS = 2
SEQ = (IMG_H // PATCH_W) * (IMG_W // PATCH_H) + 1  # 16 patches + class token = 17
TOKENS = BATCH * SEQ                               # 34 tokens for the whole batch
LN_EPS = 1e-5

HK = NUM_HEADS * KEY_SIZE                          # 32
HV = NUM_HEADS * VALUE_SIZE                        # 32
HS = NUM_HEADS * SEQ                               # 68  (block-diag score width)
FLAT_PER_HEAD = SEQ * KEY_SIZE                     # 136
FLAT_ALL = NUM_HEADS * FLAT_PER_HEAD               # 544


# ----------------------------- kernel ---------------------------------------
def _layernorm(x, gamma, beta):
    # single-pass stats: var = E[x^2] - E[x]^2 ; rsqrt on the EUP
    mean = jnp.mean(x, axis=-1, keepdims=True)
    meansq = jnp.mean(x * x, axis=-1, keepdims=True)
    var = meansq - mean * mean
    return (x - mean) * jax.lax.rsqrt(var + LN_EPS) * gamma + beta


def vit_kernel(x_ref, ln1g_ref, ln1b_ref, wq_ref, wk_ref, wv_ref, wconv_ref,
               ln2g_ref, ln2b_ref, w1_ref, b1_ref, w2_ref, b2_ref,
               hw_ref, hb_ref,
               rt_ref, rm_ref, rg_ref, rh_ref,
               seg_ref, segt_ref, pmat_ref, vmask_ref,
               sel_ref, place_ref, clssel_ref,
               probs_ref):
    f32 = jnp.float32
    x = x_ref[...]                                   # (B*S, E) all tokens of the batch
    rT = rt_ref[...]                                 # (HK, FLAT_ALL) writer column map
    rM = rm_ref[...]                                 # (S,  FLAT_ALL) writer row mask
    rG = rg_ref[...]                                 # (HK, FLAT_ALL) reader row map
    rH = rh_ref[...]                                 # (FLAT_ALL, HS) reader -> block-diag cols
    seg = seg_ref[...]                               # (HS, H)   per-head segment indicator
    segT = segt_ref[...]                             # (H, HS)
    pmat = pmat_ref[...]                             # (HS, S)   V row replicator
    vmask = vmask_ref[...]                           # (HS, HV)  block-diag V mask
    ones_s = jnp.ones((1, SEQ), f32)
    scale = 1.0 / math.sqrt(float(SEQ))              # module divides by sqrt(seq len)

    for blk in range(NUM_BLOCKS):                    # static unroll (2 blocks)
        xn = _layernorm(x, ln1g_ref[blk], ln1b_ref[blk])          # (B*S, E) batched

        ctx_all = None                               # (B*S, HV) accumulated head outputs
        for b in range(BATCH):                       # static unroll over images
            # per-image token extraction via constant selection matmul (MXU, no
            # sublane-unaligned slices)
            xb = jnp.dot(sel_ref[b], xn, preferred_element_type=f32)          # (S, E)
            qb = jnp.dot(xb, wq_ref[blk], preferred_element_type=f32)         # (S, 32)
            kb = jnp.dot(xb, wk_ref[blk], preferred_element_type=f32)         # (S, 32)
            vb = jnp.dot(xb, wv_ref[blk], preferred_element_type=f32)         # (S, 32)

            # Exact reproduction of the module's buggy keys.reshape(B, K, S)
            # (row-major reshape, NOT a transpose), built as a block-diagonal
            # (32, 68) matrix via constant 0/1 maps and MXU matmuls:
            #   fmat[s, f]  = kb[s, head(f)*K + col(f)]
            #   kflat[f]    = k_{head(f)}[row(f), col(f)]   (f = h*S*K + s*K + c)
            #   kr[h*K+r, h*S+t] = kflat[h*S*K + r*S + t]
            fmat = jnp.dot(kb, rT, preferred_element_type=f32)                # (S, 544)
            kflat = jnp.dot(ones_s, fmat * rM, preferred_element_type=f32)    # (1, 544)
            kr = jnp.dot(kflat * rG, rH, preferred_element_type=f32)          # (32, 68)

            # all heads' scores in one matmul; one softmax over the (S, 68) tile
            s = jnp.dot(qb, kr, preferred_element_type=f32) * scale           # (S, 68)
            s = s - jnp.max(s, axis=-1, keepdims=True)                        # global row max
            e = jnp.exp(s)
            ssum = jnp.dot(e, seg, preferred_element_type=f32)                # (S, H) per-head sums
            rinv = pl.reciprocal(ssum, approx=True)                           # EUP
            p = e * jnp.dot(rinv, segT, preferred_element_type=f32)           # (S, 68)

            # block-diagonal V (68, 32): row h*S+t, cols [h*V,(h+1)*V) = vb[t, h*V:...]
            vbd = jnp.dot(pmat, vb, preferred_element_type=f32) * vmask       # (68, 32)
            ctx = jnp.dot(p, vbd, preferred_element_type=f32)                 # (S, 32) concat heads

            placed = jnp.dot(place_ref[b], ctx, preferred_element_type=f32)   # (B*S, 32)
            ctx_all = placed if ctx_all is None else ctx_all + placed

        attn = jnp.dot(ctx_all, wconv_ref[blk], preferred_element_type=f32)   # (B*S, E)
        res1 = attn + x
        xn2 = _layernorm(res1, ln2g_ref[blk], ln2b_ref[blk])
        h1 = jnp.dot(xn2, w1_ref[blk], preferred_element_type=f32) + b1_ref[blk]
        g = 0.5 * h1 * (1.0 + jax.lax.erf(h1 * (1.0 / math.sqrt(2.0))))       # exact GELU
        h2 = jnp.dot(g, w2_ref[blk], preferred_element_type=f32) + b2_ref[blk]
        x = h2 + res1

    # classifier fused in: class tokens are rows b*S of x, gathered by a constant matmul
    cls = jnp.dot(clssel_ref[...], x, preferred_element_type=f32)             # (B, E)
    logits = jnp.dot(cls, hw_ref[...], preferred_element_type=f32) + hb_ref[...]
    logits = logits - jnp.max(logits, axis=-1, keepdims=True)
    pe = jnp.exp(logits)
    probs_ref[...] = pe * pl.reciprocal(jnp.sum(pe, axis=-1, keepdims=True), approx=True)


# --------------------------- pallas wrapper ----------------------------------
def _full_spec(shape):
    rank = len(shape)
    return pl.BlockSpec(tuple(shape), lambda *idx: (0,) * rank)


def vit_forward(images, params):
    tokens = get_patches(images, params["class_tok"])       # (B, S, E)
    x2d = tokens.reshape(BATCH * SEQ, EMBED)                 # flatten batch outside kernel

    args = [
        x2d,
        params["ln1_g"], params["ln1_b"],
        params["wq"], params["wk"], params["wv"], params["wconv"],
        params["ln2_g"], params["ln2_b"],
        params["w1"], params["b1"], params["w2"], params["b2"],
        params["head_w"], params["head_b"],
        params["rT"], params["rM"], params["rG"], params["rH"],
        params["segind"], params["segindT"], params["pmat"], params["vmask"],
        params["sel"], params["place"], params["clssel"],
    ]

    probs = pl.pallas_call(
        vit_kernel,
        out_shape=jax.ShapeDtypeStruct((BATCH, NUM_CLASSES), jnp.float32),
        grid=(1,),                                    # whole batch folded into one step
        in_specs=[_full_spec(a.shape) for a in args],
        out_specs=_full_spec((BATCH, NUM_CLASSES)),
        compiler_params=pltpu.CompilerParams(dimension_semantics=("arbitrary",)),
    )(*args)

    preds = jnp.argmax(probs, axis=-1).astype(jnp.int32)
    # TODO(synk): torch.argmax returns int64; int32 used here.
    return preds, probs


# ------------------------------ plain-JAX glue -------------------------------
def get_patches(images, class_tok):
    # images: (B, H, W, C) channels-last.  Matches ViT.getPatches + positional enc.
    B, Hh, Ww, C = images.shape
    nph, npw = Hh // PATCH_W, Ww // PATCH_H
    patches = images.reshape(B, nph, PATCH_W, npw, PATCH_H, C)
    patches = patches.transpose(0, 1, 3, 2, 4, 5).reshape(B, nph * npw, EMBED)
    cls = jnp.broadcast_to(class_tok[None, None, :], (B, 1, EMBED))
    seq = jnp.concatenate([cls, patches], axis=1)              # (B, S, E)

    # posEncAngle[i, pos] = pos / 10000**(2*i/dModel)  (as in the module)
    d_model = EMBED
    pos = jnp.arange(d_model, dtype=jnp.float32)
    i = jnp.arange(SEQ, dtype=jnp.float32)
    angle = pos[None, :] / (10000.0 ** (2.0 * i[:, None] / d_model))
    col = jnp.arange(d_model)
    enc = jnp.where((col % 2 == 0)[None, :], jnp.sin(angle), jnp.cos(angle))
    return seq + enc[None, :, :]


def build_constants():
    """Constant 0/1 matrices for the block-diagonal attention formulation."""
    rT = np.zeros((HK, FLAT_ALL), np.float32)
    rM = np.zeros((SEQ, FLAT_ALL), np.float32)
    rG = np.zeros((HK, FLAT_ALL), np.float32)
    rH = np.zeros((FLAT_ALL, HS), np.float32)
    for h in range(NUM_HEADS):
        base = h * FLAT_PER_HEAD
        for s in range(SEQ):
            for c in range(KEY_SIZE):
                f = base + s * KEY_SIZE + c          # writer order: flat = s*K + c
                rT[h * KEY_SIZE + c, f] = 1.0
                rM[s, f] = 1.0
        for r in range(KEY_SIZE):
            for t in range(SEQ):
                f = base + r * SEQ + t               # reader order: kr[r, t] = flat[r*S + t]
                rG[h * KEY_SIZE + r, f] = 1.0
                rH[f, h * SEQ + t] = 1.0             # block-diag column placement

    segind = np.zeros((HS, NUM_HEADS), np.float32)   # per-head softmax segments
    pmat = np.zeros((HS, SEQ), np.float32)           # replicate V rows per head
    vmask = np.zeros((HS, HV), np.float32)           # keep only the head's own columns
    for h in range(NUM_HEADS):
        for t in range(SEQ):
            segind[h * SEQ + t, h] = 1.0
            pmat[h * SEQ + t, t] = 1.0
            vmask[h * SEQ + t, h * VALUE_SIZE:(h + 1) * VALUE_SIZE] = 1.0

    sel = np.zeros((BATCH, SEQ, TOKENS), np.float32)     # extract image b's rows
    place = np.zeros((BATCH, TOKENS, SEQ), np.float32)   # put them back
    clssel = np.zeros((BATCH, TOKENS), np.float32)       # pick class-token rows
    for b in range(BATCH):
        for t in range(SEQ):
            sel[b, t, b * SEQ + t] = 1.0
            place[b, b * SEQ + t, t] = 1.0
        clssel[b, b * SEQ] = 1.0

    return {
        "rT": jnp.asarray(rT), "rM": jnp.asarray(rM),
        "rG": jnp.asarray(rG), "rH": jnp.asarray(rH),
        "segind": jnp.asarray(segind), "segindT": jnp.asarray(segind.T.copy()),
        "pmat": jnp.asarray(pmat), "vmask": jnp.asarray(vmask),
        "sel": jnp.asarray(sel), "place": jnp.asarray(place),
        "clssel": jnp.asarray(clssel),
    }


def init_params(key):
    k_sqrt = math.sqrt(1.0 / EMBED)
    lin1_bound = 1.0 / math.sqrt(EMBED)
    lin2_bound = 1.0 / math.sqrt(HIDDEN)

    def pack_heads(w):  # (H, E, d) -> (E, H*d); head h occupies columns [h*d, (h+1)*d)
        return jnp.transpose(w, (1, 0, 2)).reshape(EMBED, -1)

    wq_l, wk_l, wv_l, wconv_l, w1_l, b1_l, w2_l, b2_l = [], [], [], [], [], [], [], []
    for _ in range(NUM_BLOCKS):
        key, kq, kk, kv, kc, k1, kb1, k2, kb2 = jax.random.split(key, 9)
        wq = jax.random.uniform(kq, (NUM_HEADS, EMBED, QUERY_SIZE), jnp.float32, -k_sqrt, k_sqrt)
        wk = jax.random.uniform(kk, (NUM_HEADS, EMBED, KEY_SIZE), jnp.float32, -k_sqrt, k_sqrt)
        wv = jax.random.uniform(kv, (NUM_HEADS, EMBED, VALUE_SIZE), jnp.float32, -k_sqrt, k_sqrt)
        wq_l.append(pack_heads(wq))                                            # (E, 32)
        wk_l.append(pack_heads(wk))
        wv_l.append(pack_heads(wv))
        wconv_l.append(jax.random.uniform(
            kc, (HV, EMBED), jnp.float32, -k_sqrt, k_sqrt))
        w1_l.append(jax.random.uniform(k1, (EMBED, HIDDEN), jnp.float32,
                                       -lin1_bound, lin1_bound))
        b1_l.append(jax.random.uniform(kb1, (1, HIDDEN), jnp.float32,
                                       -lin1_bound, lin1_bound))
        w2_l.append(jax.random.uniform(k2, (HIDDEN, EMBED), jnp.float32,
                                       -lin2_bound, lin2_bound))
        b2_l.append(jax.random.uniform(kb2, (1, EMBED), jnp.float32,
                                       -lin2_bound, lin2_bound))

    key, k_cls, k_w, k_b = jax.random.split(key, 4)
    params = {
        "ln1_g": jnp.ones((NUM_BLOCKS, 1, EMBED), jnp.float32),
        "ln1_b": jnp.zeros((NUM_BLOCKS, 1, EMBED), jnp.float32),
        "ln2_g": jnp.ones((NUM_BLOCKS, 1, EMBED), jnp.float32),
        "ln2_b": jnp.zeros((NUM_BLOCKS, 1, EMBED), jnp.float32),
        "wq": jnp.stack(wq_l), "wk": jnp.stack(wk_l), "wv": jnp.stack(wv_l),
        "wconv": jnp.stack(wconv_l),
        "w1": jnp.stack(w1_l), "b1": jnp.stack(b1_l),
        "w2": jnp.stack(w2_l), "b2": jnp.stack(b2_l),
        "head_w": jax.random.uniform(k_w, (EMBED, NUM_CLASSES), jnp.float32,
                                     -lin1_bound, lin1_bound),
        "head_b": jax.random.uniform(k_b, (1, NUM_CLASSES), jnp.float32,
                                     -lin1_bound, lin1_bound),
        "class_tok": jax.random.uniform(k_cls, (EMBED,), jnp.float32, 0.0, 1.0),
    }
    params.update(build_constants())
    return params


if __name__ == "__main__":
    key = jax.random.PRNGKey(0)
    key_img, key_params = jax.random.split(key)
    images = jax.random.uniform(
        key_img, (BATCH, IMG_H, IMG_W, NUM_CHANNELS), jnp.float32)
    params = init_params(key_params)
    fwd = jax.jit(vit_forward)
    preds, probs = fwd(images, params)
    jax.block_until_ready((preds, probs))
    print("KERNEL_OK")
</pallas_src>

<mosaic_0001>
module attributes {stable_mosaic.version = 11 : i64} {
  func.func @vit_kernel(%arg0: i32, %arg1: memref<34x48xf32, #tpu.memory_space<vmem>>, %arg2: memref<2x1x48xf32, #tpu.memory_space<vmem>>, %arg3: memref<2x1x48xf32, #tpu.memory_space<vmem>>, %arg4: memref<2x48x32xf32, #tpu.memory_space<vmem>>, %arg5: memref<2x48x32xf32, #tpu.memory_space<vmem>>, %arg6: memref<2x48x32xf32, #tpu.memory_space<vmem>>, %arg7: memref<2x32x48xf32, #tpu.memory_space<vmem>>, %arg8: memref<2x1x48xf32, #tpu.memory_space<vmem>>, %arg9: memref<2x1x48xf32, #tpu.memory_space<vmem>>, %arg10: memref<2x48x64xf32, #tpu.memory_space<vmem>>, %arg11: memref<2x1x64xf32, #tpu.memory_space<vmem>>, %arg12: memref<2x64x48xf32, #tpu.memory_space<vmem>>, %arg13: memref<2x1x48xf32, #tpu.memory_space<vmem>>, %arg14: memref<48x10xf32, #tpu.memory_space<vmem>>, %arg15: memref<1x10xf32, #tpu.memory_space<vmem>>, %arg16: memref<32x544xf32, #tpu.memory_space<vmem>>, %arg17: memref<17x544xf32, #tpu.memory_space<vmem>>, %arg18: memref<32x544xf32, #tpu.memory_space<vmem>>, %arg19: memref<544x68xf32, #tpu.memory_space<vmem>>, %arg20: memref<68x4xf32, #tpu.memory_space<vmem>>, %arg21: memref<4x68xf32, #tpu.memory_space<vmem>>, %arg22: memref<68x17xf32, #tpu.memory_space<vmem>>, %arg23: memref<68x32xf32, #tpu.memory_space<vmem>>, %arg24: memref<2x17x34xf32, #tpu.memory_space<vmem>>, %arg25: memref<2x34x17xf32, #tpu.memory_space<vmem>>, %arg26: memref<2x34xf32, #tpu.memory_space<vmem>>, %arg27: memref<2x10xf32, #tpu.memory_space<vmem>>) attributes {dimension_semantics = [#tpu.dimension_semantics<arbitrary>], iteration_bounds = array<i64: 1>, scalar_prefetch = 0 : i64, scratch_operands = 0 : i64, tpu.core_type = #tpu.core_type<tc>, window_params = [{pipeline_mode = #tpu.pipeline_mode<synchronous>, transform_indices = @transform_0, window_bounds = array<i64: 34, 48>}, {pipeline_mode = #tpu.pipeline_mode<synchronous>, transform_indices = @transform_1, window_bounds = array<i64: 2, 1, 48>}, {pipeline_mode = #tpu.pipeline_mode<synchronous>, transform_indices = @transform_2, window_bounds = array<i64: 2, 1, 48>}, {pipeline_mode = #tpu.pipeline_mode<synchronous>, transform_indices = @transform_3, window_bounds = array<i64: 2, 48, 32>}, {pipeline_mode = #tpu.pipeline_mode<synchronous>, transform_indices = @transform_4, window_bounds = array<i64: 2, 48, 32>}, {pipeline_mode = #tpu.pipeline_mode<synchronous>, transform_indices = @transform_5, window_bounds = array<i64: 2, 48, 32>}, {pipeline_mode = #tpu.pipeline_mode<synchronous>, transform_indices = @transform_6, window_bounds = array<i64: 2, 32, 48>}, {pipeline_mode = #tpu.pipeline_mode<synchronous>, transform_indices = @transform_7, window_bounds = array<i64: 2, 1, 48>}, {pipeline_mode = #tpu.pipeline_mode<synchronous>, transform_indices = @transform_8, window_bounds = array<i64: 2, 1, 48>}, {pipeline_mode = #tpu.pipeline_mode<synchronous>, transform_indices = @transform_9, window_bounds = array<i64: 2, 48, 64>}, {pipeline_mode = #tpu.pipeline_mode<synchronous>, transform_indices = @transform_10, window_bounds = array<i64: 2, 1, 64>}, {pipeline_mode = #tpu.pipeline_mode<synchronous>, transform_indices = @transform_11, window_bounds = array<i64: 2, 64, 48>}, {pipeline_mode = #tpu.pipeline_mode<synchronous>, transform_indices = @transform_12, window_bounds = array<i64: 2, 1, 48>}, {pipeline_mode = #tpu.pipeline_mode<synchronous>, transform_indices = @transform_13, window_bounds = array<i64: 48, 10>}, {pipeline_mode = #tpu.pipeline_mode<synchronous>, transform_indices = @transform_14, window_bounds = array<i64: 1, 10>}, {pipeline_mode = #tpu.pipeline_mode<synchronous>, transform_indices = @transform_15, window_bounds = array<i64: 32, 544>}, {pipeline_mode = #tpu.pipeline_mode<synchronous>, transform_indices = @transform_16, window_bounds = array<i64: 17, 544>}, {pipeline_mode = #tpu.pipeline_mode<synchronous>, transform_indices = @transform_17, window_bounds = array<i64: 32, 544>}, {pipeline_mode = #tpu.pipeline_mode<synchronous>, transform_indices = @transform_18, window_bounds = array<i64: 544, 68>}, {pipeline_mode = #tpu.pipeline_mode<synchronous>, transform_indices = @transform_19, window_bounds = array<i64: 68, 4>}, {pipeline_mode = #tpu.pipeline_mode<synchronous>, transform_indices = @transform_20, window_bounds = array<i64: 4, 68>}, {pipeline_mode = #tpu.pipeline_mode<synchronous>, transform_indices = @transform_21, window_bounds = array<i64: 68, 17>}, {pipeline_mode = #tpu.pipeline_mode<synchronous>, transform_indices = @transform_22, window_bounds = array<i64: 68, 32>}, {pipeline_mode = #tpu.pipeline_mode<synchronous>, transform_indices = @transform_23, window_bounds = array<i64: 2, 17, 34>}, {pipeline_mode = #tpu.pipeline_mode<synchronous>, transform_indices = @transform_24, window_bounds = array<i64: 2, 34, 17>}, {pipeline_mode = #tpu.pipeline_mode<synchronous>, transform_indices = @transform_25, window_bounds = array<i64: 2, 34>}, {pipeline_mode = #tpu.pipeline_mode<synchronous>, transform_indices = @transform_26, window_bounds = array<i64: 2, 10>}]} {
    %c0 = arith.constant 0 : index
    %c0_0 = arith.constant 0 : index
    %0 = vector.load %arg1[%c0, %c0_0] : memref<34x48xf32, #tpu.memory_space<vmem>>, vector<34x48xf32>
    %c0_1 = arith.constant 0 : index
    %c0_2 = arith.constant 0 : index
    %1 = vector.load %arg16[%c0_1, %c0_2] : memref<32x544xf32, #tpu.memory_space<vmem>>, vector<32x544xf32>
    %c0_3 = arith.constant 0 : index
    %c0_4 = arith.constant 0 : index
    %2 = vector.load %arg17[%c0_3, %c0_4] : memref<17x544xf32, #tpu.memory_space<vmem>>, vector<17x544xf32>
    %c0_5 = arith.constant 0 : index
    %c0_6 = arith.constant 0 : index
    %3 = vector.load %arg18[%c0_5, %c0_6] : memref<32x544xf32, #tpu.memory_space<vmem>>, vector<32x544xf32>
    %c0_7 = arith.constant 0 : index
    %c0_8 = arith.constant 0 : index
    %4 = vector.load %arg19[%c0_7, %c0_8] : memref<544x68xf32, #tpu.memory_space<vmem>>, vector<544x68xf32>
    %c0_9 = arith.constant 0 : index
    %c0_10 = arith.constant 0 : index
    %5 = vector.load %arg20[%c0_9, %c0_10] : memref<68x4xf32, #tpu.memory_space<vmem>>, vector<68x4xf32>
    %c0_11 = arith.constant 0 : index
    %c0_12 = arith.constant 0 : index
    %6 = vector.load %arg21[%c0_11, %c0_12] : memref<4x68xf32, #tpu.memory_space<vmem>>, vector<4x68xf32>
    %c0_13 = arith.constant 0 : index
    %c0_14 = arith.constant 0 : index
    %7 = vector.load %arg22[%c0_13, %c0_14] : memref<68x17xf32, #tpu.memory_space<vmem>>, vector<68x17xf32>
    %c0_15 = arith.constant 0 : index
    %c0_16 = arith.constant 0 : index
    %8 = vector.load %arg23[%c0_15, %c0_16] : memref<68x32xf32, #tpu.memory_space<vmem>>, vector<68x32xf32>
    %cst = arith.constant 1.000000e+00 : f32
    %9 = vector.broadcast %cst : f32 to vector<1x17xf32>
    %c0_17 = arith.constant 0 : index
    %c0_18 = arith.constant 0 : index
    %c0_19 = arith.constant 0 : index
    %10 = vector.load %arg2[%c0_17, %c0_18, %c0_19] : memref<2x1x48xf32, #tpu.memory_space<vmem>>, vector<1x1x48xf32>
    %11 = vector.shape_cast %10 : vector<1x1x48xf32> to vector<1x48xf32>
    %c0_20 = arith.constant 0 : index
    %c0_21 = arith.constant 0 : index
    %c0_22 = arith.constant 0 : index
    %12 = vector.load %arg3[%c0_20, %c0_21, %c0_22] : memref<2x1x48xf32, #tpu.memory_space<vmem>>, vector<1x1x48xf32>
    %13 = vector.shape_cast %12 : vector<1x1x48xf32> to vector<1x48xf32>
    %cst_23 = arith.constant dense<0.000000e+00> : vector<34xf32>
    %14 = vector.multi_reduction <add>, %0, %cst_23 [1] : vector<34x48xf32> to vector<34xf32>
    %15 = vector.shape_cast %14 : vector<34xf32> to vector<34x1xf32>
    %cst_24 = arith.constant 4.800000e+01 : f32
    %16 = vector.broadcast %cst_24 : f32 to vector<34x1xf32>
    %17 = arith.divf %15, %16 : vector<34x1xf32>
    %18 = arith.mulf %0, %0 : vector<34x48xf32>
    %cst_25 = arith.constant dense<0.000000e+00> : vector<34xf32>
    %19 = vector.multi_reduction <add>, %18, %cst_25 [1] : vector<34x48xf32> to vector<34xf32>
    %20 = vector.shape_cast %19 : vector<34xf32> to vector<34x1xf32>
    %cst_26 = arith.constant 4.800000e+01 : f32
    %21 = vector.broadcast %cst_26 : f32 to vector<34x1xf32>
    %22 = arith.divf %20, %21 : vector<34x1xf32>
    %23 = arith.mulf %17, %17 : vector<34x1xf32>
    %24 = arith.subf %22, %23 : vector<34x1xf32>
    %25 = vector.broadcast %17 : vector<34x1xf32> to vector<34x48xf32>
    %26 = arith.subf %0, %25 : vector<34x48xf32>
    %cst_27 = arith.constant 9.99999974E-6 : f32
    %27 = vector.broadcast %cst_27 : f32 to vector<34x1xf32>
    %28 = arith.addf %24, %27 : vector<34x1xf32>
    %29 = math.rsqrt %28 : vector<34x1xf32>
    %30 = vector.broadcast %29 : vector<34x1xf32> to vector<34x48xf32>
    %31 = arith.mulf %26, %30 : vector<34x48xf32>
    %32 = vector.broadcast %11 : vector<1x48xf32> to vector<34x48xf32>
    %33 = arith.mulf %31, %32 : vector<34x48xf32>
    %34 = vector.broadcast %13 : vector<1x48xf32> to vector<34x48xf32>
    %35 = arith.addf %33, %34 : vector<34x48xf32>
    %c0_28 = arith.constant 0 : index
    %c0_29 = arith.constant 0 : index
    %c0_30 = arith.constant 0 : index
    %36 = vector.load %arg24[%c0_28, %c0_29, %c0_30] : memref<2x17x34xf32, #tpu.memory_space<vmem>>, vector<1x17x34xf32>
    %37 = vector.shape_cast %36 : vector<1x17x34xf32> to vector<17x34xf32>
    %cst_31 = arith.constant dense<0.000000e+00> : vector<17x48xf32>
    %38 = tpu.matmul %37, %35, %cst_31 {dimension_numbers = #tpu.dot_dimension_numbers<[1], [0], [0], [1], [0, 0, 1, 1], [], []>} : vector<17x34xf32>, vector<34x48xf32>, vector<17x48xf32> -> vector<17x48xf32>
    %c0_32 = arith.constant 0 : index
    %c0_33 = arith.constant 0 : index
    %c0_34 = arith.constant 0 : index
    %39 = vector.load %arg4[%c0_32, %c0_33, %c0_34] : memref<2x48x32xf32, #tpu.memory_space<vmem>>, vector<1x48x32xf32>
    %40 = vector.shape_cast %39 : vector<1x48x32xf32> to vector<48x32xf32>
    %cst_35 = arith.constant dense<0.000000e+00> : vector<17x32xf32>
    %41 = tpu.matmul %38, %40, %cst_35 {dimension_numbers = #tpu.dot_dimension_numbers<[1], [0], [0], [1], [0, 0, 1, 1], [], []>} : vector<17x48xf32>, vector<48x32xf32>, vector<17x32xf32> -> vector<17x32xf32>
    %c0_36 = arith.constant 0 : index
    %c0_37 = arith.constant 0 : index
    %c0_38 = arith.constant 0 : index
    %42 = vector.load %arg5[%c0_36, %c0_37, %c0_38] : memref<2x48x32xf32, #tpu.memory_space<vmem>>, vector<1x48x32xf32>
    %43 = vector.shape_cast %42 : vector<1x48x32xf32> to vector<48x32xf32>
    %cst_39 = arith.constant dense<0.000000e+00> : vector<17x32xf32>
    %44 = tpu.matmul %38, %43, %cst_39 {dimension_numbers = #tpu.dot_dimension_numbers<[1], [0], [0], [1], [0, 0, 1, 1], [], []>} : vector<17x48xf32>, vector<48x32xf32>, vector<17x32xf32> -> vector<17x32xf32>
    %c0_40 = arith.constant 0 : index
    %c0_41 = arith.constant 0 : index
    %c0_42 = arith.constant 0 : index
    %45 = vector.load %arg6[%c0_40, %c0_41, %c0_42] : memref<2x48x32xf32, #tpu.memory_space<vmem>>, vector<1x48x32xf32>
    %46 = vector.shape_cast %45 : vector<1x48x32xf32> to vector<48x32xf32>
    %cst_43 = arith.constant dense<0.000000e+00> : vector<17x32xf32>
    %47 = tpu.matmul %38, %46, %cst_43 {dimension_numbers = #tpu.dot_dimension_numbers<[1], [0], [0], [1], [0, 0, 1, 1], [], []>} : vector<17x48xf32>, vector<48x32xf32>, vector<17x32xf32> -> vector<17x32xf32>
    %cst_44 = arith.constant dense<0.000000e+00> : vector<17x544xf32>
    %48 = tpu.matmul %44, %1, %cst_44 {dimension_numbers = #tpu.dot_dimension_numbers<[1], [0], [0], [1], [0, 0, 1, 1], [], []>} : vector<17x32xf32>, vector<32x544xf32>, vector<17x544xf32> -> vector<17x544xf32>
    %49 = arith.mulf %48, %2 : vector<17x544xf32>
    %cst_45 = arith.constant dense<0.000000e+00> : vector<1x544xf32>
    %50 = tpu.matmul %9, %49, %cst_45 {dimension_numbers = #tpu.dot_dimension_numbers<[1], [0], [0], [1], [0, 0, 1, 1], [], []>} : vector<1x17xf32>, vector<17x544xf32>, vector<1x544xf32> -> vector<1x544xf32>
    %51 = vector.broadcast %50 : vector<1x544xf32> to vector<32x544xf32>
    %52 = arith.mulf %51, %3 : vector<32x544xf32>
    %cst_46 = arith.constant dense<0.000000e+00> : vector<32x68xf32>
    %53 = tpu.matmul %52, %4, %cst_46 {dimension_numbers = #tpu.dot_dimension_numbers<[1], [0], [0], [1], [0, 0, 1, 1], [], []>} : vector<32x544xf32>, vector<544x68xf32>, vector<32x68xf32> -> vector<32x68xf32>
    %cst_47 = arith.constant dense<0.000000e+00> : vector<17x68xf32>
    %54 = tpu.matmul %41, %53, %cst_47 {dimension_numbers = #tpu.dot_dimension_numbers<[1], [0], [0], [1], [0, 0, 1, 1], [], []>} : vector<17x32xf32>, vector<32x68xf32>, vector<17x68xf32> -> vector<17x68xf32>
    %cst_48 = arith.constant 0.242535621 : f32
    %55 = vector.broadcast %cst_48 : f32 to vector<17x68xf32>
    %56 = arith.mulf %54, %55 : vector<17x68xf32>
    %cst_49 = arith.constant dense<0xFF800000> : vector<17xf32>
    %57 = vector.multi_reduction <maximumf>, %56, %cst_49 [1] : vector<17x68xf32> to vector<17xf32>
    %58 = vector.shape_cast %57 : vector<17xf32> to vector<17x1xf32>
    %59 = vector.broadcast %58 : vector<17x1xf32> to vector<17x68xf32>
    %60 = arith.subf %56, %59 : vector<17x68xf32>
    %61 = math.exp %60 : vector<17x68xf32>
    %cst_50 = arith.constant dense<0.000000e+00> : vector<17x4xf32>
    %62 = tpu.matmul %61, %5, %cst_50 {dimension_numbers = #tpu.dot_dimension_numbers<[1], [0], [0], [1], [0, 0, 1, 1], [], []>} : vector<17x68xf32>, vector<68x4xf32>, vector<17x4xf32> -> vector<17x4xf32>
    %63 = tpu.reciprocal %62 {approx = true} : vector<17x4xf32> -> vector<17x4xf32>
    %cst_51 = arith.constant dense<0.000000e+00> : vector<17x68xf32>
    %64 = tpu.matmul %63, %6, %cst_51 {dimension_numbers = #tpu.dot_dimension_numbers<[1], [0], [0], [1], [0, 0, 1, 1], [], []>} : vector<17x4xf32>, vector<4x68xf32>, vector<17x68xf32> -> vector<17x68xf32>
    %65 = arith.mulf %61, %64 : vector<17x68xf32>
    %cst_52 = arith.constant dense<0.000000e+00> : vector<68x32xf32>
    %66 = tpu.matmul %7, %47, %cst_52 {dimension_numbers = #tpu.dot_dimension_numbers<[1], [0], [0], [1], [0, 0, 1, 1], [], []>} : vector<68x17xf32>, vector<17x32xf32>, vector<68x32xf32> -> vector<68x32xf32>
    %67 = arith.mulf %66, %8 : vector<68x32xf32>
    %cst_53 = arith.constant dense<0.000000e+00> : vector<17x32xf32>
    %68 = tpu.matmul %65, %67, %cst_53 {dimension_numbers = #tpu.dot_dimension_numbers<[1], [0], [0], [1], [0, 0, 1, 1], [], []>} : vector<17x68xf32>, vector<68x32xf32>, vector<17x32xf32> -> vector<17x32xf32>
    %c0_54 = arith.constant 0 : index
    %c0_55 = arith.constant 0 : index
    %c0_56 = arith.constant 0 : index
    %69 = vector.load %arg25[%c0_54, %c0_55, %c0_56] : memref<2x34x17xf32, #tpu.memory_space<vmem>>, vector<1x34x17xf32>
    %70 = vector.shape_cast %69 : vector<1x34x17xf32> to vector<34x17xf32>
    %cst_57 = arith.constant dense<0.000000e+00> : vector<34x32xf32>
    %71 = tpu.matmul %70, %68, %cst_57 {dimension_numbers = #tpu.dot_dimension_numbers<[1], [0], [0], [1], [0, 0, 1, 1], [], []>} : vector<34x17xf32>, vector<17x32xf32>, vector<34x32xf32> -> vector<34x32xf32>
    %c1 = arith.constant 1 : index
    %c0_58 = arith.constant 0 : index
    %c0_59 = arith.constant 0 : index
    %72 = vector.load %arg24[%c1, %c0_58, %c0_59] : memref<2x17x34xf32, #tpu.memory_space<vmem>>, vector<1x17x34xf32>
    %73 = vector.shape_cast %72 : vector<1x17x34xf32> to vector<17x34xf32>
    %cst_60 = arith.constant dense<0.000000e+00> : vector<17x48xf32>
    %74 = tpu.matmul %73, %35, %cst_60 {dimension_numbers = #tpu.dot_dimension_numbers<[1], [0], [0], [1], [0, 0, 1, 1], [], []>} : vector<17x34xf32>, vector<34x48xf32>, vector<17x48xf32> -> vector<17x48xf32>
    %c0_61 = arith.constant 0 : index
    %c0_62 = arith.constant 0 : index
    %c0_63 = arith.constant 0 : index
    %75 = vector.load %arg4[%c0_61, %c0_62, %c0_63] : memref<2x48x32xf32, #tpu.memory_space<vmem>>, vector<1x48x32xf32>
    %76 = vector.shape_cast %75 : vector<1x48x32xf32> to vector<48x32xf32>
    %cst_64 = arith.constant dense<0.000000e+00> : vector<17x32xf32>
    %77 = tpu.matmul %74, %76, %cst_64 {dimension_numbers = #tpu.dot_dimension_numbers<[1], [0], [0], [1], [0, 0, 1, 1], [], []>} : vector<17x48xf32>, vector<48x32xf32>, vector<17x32xf32> -> vector<17x32xf32>
    %c0_65 = arith.constant 0 : index
    %c0_66 = arith.constant 0 : index
    %c0_67 = arith.constant 0 : index
    %78 = vector.load %arg5[%c0_65, %c0_66, %c0_67] : memref<2x48x32xf32, #tpu.memory_space<vmem>>, vector<1x48x32xf32>
    %79 = vector.shape_cast %78 : vector<1x48x32xf32> to vector<48x32xf32>
    %cst_68 = arith.constant dense<0.000000e+00> : vector<17x32xf32>
    %80 = tpu.matmul %74, %79, %cst_68 {dimension_numbers = #tpu.dot_dimension_numbers<[1], [0], [0], [1], [0, 0, 1, 1], [], []>} : vector<17x48xf32>, vector<48x32xf32>, vector<17x32xf32> -> vector<17x32xf32>
    %c0_69 = arith.constant 0 : index
    %c0_70 = arith.constant 0 : index
    %c0_71 = arith.constant 0 : index
    %81 = vector.load %arg6[%c0_69, %c0_70, %c0_71] : memref<2x48x32xf32, #tpu.memory_space<vmem>>, vector<1x48x32xf32>
    %82 = vector.shape_cast %81 : vector<1x48x32xf32> to vector<48x32xf32>
    %cst_72 = arith.constant dense<0.000000e+00> : vector<17x32xf32>
    %83 = tpu.matmul %74, %82, %cst_72 {dimension_numbers = #tpu.dot_dimension_numbers<[1], [0], [0], [1], [0, 0, 1, 1], [], []>} : vector<17x48xf32>, vector<48x32xf32>, vector<17x32xf32> -> vector<17x32xf32>
    %cst_73 = arith.constant dense<0.000000e+00> : vector<17x544xf32>
    %84 = tpu.matmul %80, %1, %cst_73 {dimension_numbers = #tpu.dot_dimension_numbers<[1], [0], [0], [1], [0, 0, 1, 1], [], []>} : vector<17x32xf32>, vector<32x544xf32>, vector<17x544xf32> -> vector<17x544xf32>
    %85 = arith.mulf %84, %2 : vector<17x544xf32>
    %cst_74 = arith.constant dense<0.000000e+00> : vector<1x544xf32>
    %86 = tpu.matmul %9, %85, %cst_74 {dimension_numbers = #tpu.dot_dimension_numbers<[1], [0], [0], [1], [0, 0, 1, 1], [], []>} : vector<1x17xf32>, vector<17x544xf32>, vector<1x544xf32> -> vector<1x544xf32>
    %87 = vector.broadcast %86 : vector<1x544xf32> to vector<32x544xf32>
    %88 = arith.mulf %87, %3 : vector<32x544xf32>
    %cst_75 = arith.constant dense<0.000000e+00> : vector<32x68xf32>
    %89 = tpu.matmul %88, %4, %cst_75 {dimension_numbers = #tpu.dot_dimension_numbers<[1], [0], [0], [1], [0, 0, 1, 1], [], []>} : vector<32x544xf32>, vector<544x68xf32>, vector<32x68xf32> -> vector<32x68xf32>
    %cst_76 = arith.constant dense<0.000000e+00> : vector<17x68xf32>
    %90 = tpu.matmul %77, %89, %cst_76 {dimension_numbers = #tpu.dot_dimension_numbers<[1], [0], [0], [1], [0, 0, 1, 1], [], []>} : vector<17x32xf32>, vector<32x68xf32>, vector<17x68xf32> -> vector<17x68xf32>
    %cst_77 = arith.constant 0.242535621 : f32
    %91 = vector.broadcast %cst_77 : f32 to vector<17x68xf32>
    %92 = arith.mulf %90, %91 : vector<17x68xf32>
    %cst_78 = arith.constant dense<0xFF800000> : vector<17xf32>
    %93 = vector.multi_reduction <maximumf>, %92, %cst_78 [1] : vector<17x68xf32> to vector<17xf32>
    %94 = vector.shape_cast %93 : vector<17xf32> to vector<17x1xf32>
    %95 = vector.broadcast %94 : vector<17x1xf32> to vector<17x68xf32>
    %96 = arith.subf %92, %95 : vector<17x68xf32>
    %97 = math.exp %96 : vector<17x68xf32>
    %cst_79 = arith.constant dense<0.000000e+00> : vector<17x4xf32>
    %98 = tpu.matmul %97, %5, %cst_79 {dimension_numbers = #tpu.dot_dimension_numbers<[1], [0], [0], [1], [0, 0, 1, 1], [], []>} : vector<17x68xf32>, vector<68x4xf32>, vector<17x4xf32> -> vector<17x4xf32>
    %99 = tpu.reciprocal %98 {approx = true} : vector<17x4xf32> -> vector<17x4xf32>
    %cst_80 = arith.constant dense<0.000000e+00> : vector<17x68xf32>
    %100 = tpu.matmul %99, %6, %cst_80 {dimension_numbers = #tpu.dot_dimension_numbers<[1], [0], [0], [1], [0, 0, 1, 1], [], []>} : vector<17x4xf32>, vector<4x68xf32>, vector<17x68xf32> -> vector<17x68xf32>
    %101 = arith.mulf %97, %100 : vector<17x68xf32>
    %cst_81 = arith.constant dense<0.000000e+00> : vector<68x32xf32>
    %102 = tpu.matmul %7, %83, %cst_81 {dimension_numbers = #tpu.dot_dimension_numbers<[1], [0], [0], [1], [0, 0, 1, 1], [], []>} : vector<68x17xf32>, vector<17x32xf32>, vector<68x32xf32> -> vector<68x32xf32>
    %103 = arith.mulf %102, %8 : vector<68x32xf32>
    %cst_82 = arith.constant dense<0.000000e+00> : vector<17x32xf32>
    %104 = tpu.matmul %101, %103, %cst_82 {dimension_numbers = #tpu.dot_dimension_numbers<[1], [0], [0], [1], [0, 0, 1, 1], [], []>} : vector<17x68xf32>, vector<68x32xf32>, vector<17x32xf32> -> vector<17x32xf32>
    %c1_83 = arith.constant 1 : index
    %c0_84 = arith.constant 0 : index
    %c0_85 = arith.constant 0 : index
    %105 = vector.load %arg25[%c1_83, %c0_84, %c0_85] : memref<2x34x17xf32, #tpu.memory_space<vmem>>, vector<1x34x17xf32>
    %106 = vector.shape_cast %105 : vector<1x34x17xf32> to vector<34x17xf32>
    %cst_86 = arith.constant dense<0.000000e+00> : vector<34x32xf32>
    %107 = tpu.matmul %106, %104, %cst_86 {dimension_numbers = #tpu.dot_dimension_numbers<[1], [0], [0], [1], [0, 0, 1, 1], [], []>} : vector<34x17xf32>, vector<17x32xf32>, vector<34x32xf32> -> vector<34x32xf32>
    %108 = arith.addf %71, %107 : vector<34x32xf32>
    %c0_87 = arith.constant 0 : index
    %c0_88 = arith.constant 0 : index
    %c0_89 = arith.constant 0 : index
    %109 = vector.load %arg7[%c0_87, %c0_88, %c0_89] : memref<2x32x48xf32, #tpu.memory_space<vmem>>, vector<1x32x48xf32>
    %110 = vector.shape_cast %109 : vector<1x32x48xf32> to vector<32x48xf32>
    %cst_90 = arith.constant dense<0.000000e+00> : vector<34x48xf32>
    %111 = tpu.matmul %108, %110, %cst_90 {dimension_numbers = #tpu.dot_dimension_numbers<[1], [0], [0], [1], [0, 0, 1, 1], [], []>} : vector<34x32xf32>, vector<32x48xf32>, vector<34x48xf32> -> vector<34x48xf32>
    %112 = arith.addf %111, %0 : vector<34x48xf32>
    %c0_91 = arith.constant 0 : index
    %c0_92 = arith.constant 0 : index
    %c0_93 = arith.constant 0 : index
    %113 = vector.load %arg8[%c0_91, %c0_92, %c0_93] : memref<2x1x48xf32, #tpu.memory_space<vmem>>, vector<1x1x48xf32>
    %114 = vector.shape_cast %113 : vector<1x1x48xf32> to vector<1x48xf32>
    %c0_94 = arith.constant 0 : index
    %c0_95 = arith.constant 0 : index
    %c0_96 = arith.constant 0 : index
    %115 = vector.load %arg9[%c0_94, %c0_95, %c0_96] : memref<2x1x48xf32, #tpu.memory_space<vmem>>, vector<1x1x48xf32>
    %116 = vector.shape_cast %115 : vector<1x1x48xf32> to vector<1x48xf32>
    %cst_97 = arith.constant dense<0.000000e+00> : vector<34xf32>
    %117 = vector.multi_reduction <add>, %112, %cst_97 [1] : vector<34x48xf32> to vector<34xf32>
    %118 = vector.shape_cast %117 : vector<34xf32> to vector<34x1xf32>
    %cst_98 = arith.constant 4.800000e+01 : f32
    %119 = vector.broadcast %cst_98 : f32 to vector<34x1xf32>
    %120 = arith.divf %118, %119 : vector<34x1xf32>
    %121 = arith.mulf %112, %112 : vector<34x48xf32>
    %cst_99 = arith.constant dense<0.000000e+00> : vector<34xf32>
    %122 = vector.multi_reduction <add>, %121, %cst_99 [1] : vector<34x48xf32> to vector<34xf32>
    %123 = vector.shape_cast %122 : vector<34xf32> to vector<34x1xf32>
    %cst_100 = arith.constant 4.800000e+01 : f32
    %124 = vector.broadcast %cst_100 : f32 to vector<34x1xf32>
    %125 = arith.divf %123, %124 : vector<34x1xf32>
    %126 = arith.mulf %120, %120 : vector<34x1xf32>
    %127 = arith.subf %125, %126 : vector<34x1xf32>
    %128 = vector.broadcast %120 : vector<34x1xf32> to vector<34x48xf32>
    %129 = arith.subf %112, %128 : vector<34x48xf32>
    %cst_101 = arith.constant 9.99999974E-6 : f32
    %130 = vector.broadcast %cst_101 : f32 to vector<34x1xf32>
    %131 = arith.addf %127, %130 : vector<34x1xf32>
    %132 = math.rsqrt %131 : vector<34x1xf32>
    %133 = vector.broadcast %132 : vector<34x1xf32> to vector<34x48xf32>
    %134 = arith.mulf %129, %133 : vector<34x48xf32>
    %135 = vector.broadcast %114 : vector<1x48xf32> to vector<34x48xf32>
    %136 = arith.mulf %134, %135 : vector<34x48xf32>
    %137 = vector.broadcast %116 : vector<1x48xf32> to vector<34x48xf32>
    %138 = arith.addf %136, %137 : vector<34x48xf32>
    %c0_102 = arith.constant 0 : index
    %c0_103 = arith.constant 0 : index
    %c0_104 = arith.constant 0 : index
    %139 = vector.load %arg10[%c0_102, %c0_103, %c0_104] : memref<2x48x64xf32, #tpu.memory_space<vmem>>, vector<1x48x64xf32>
    %140 = vector.shape_cast %139 : vector<1x48x64xf32> to vector<48x64xf32>
    %cst_105 = arith.constant dense<0.000000e+00> : vector<34x64xf32>
    %141 = tpu.matmul %138, %140, %cst_105 {dimension_numbers = #tpu.dot_dimension_numbers<[1], [0], [0], [1], [0, 0, 1, 1], [], []>} : vector<34x48xf32>, vector<48x64xf32>, vector<34x64xf32> -> vector<34x64xf32>
    %c0_106 = arith.constant 0 : index
    %c0_107 = arith.constant 0 : index
    %c0_108 = arith.constant 0 : index
    %142 = vector.load %arg11[%c0_106, %c0_107, %c0_108] : memref<2x1x64xf32, #tpu.memory_space<vmem>>, vector<1x1x64xf32>
    %143 = vector.shape_cast %142 : vector<1x1x64xf32> to vector<1x64xf32>
    %144 = vector.broadcast %143 : vector<1x64xf32> to vector<34x64xf32>
    %145 = arith.addf %141, %144 : vector<34x64xf32>
    %cst_109 = arith.constant 5.000000e-01 : f32
    %146 = vector.broadcast %cst_109 : f32 to vector<34x64xf32>
    %147 = arith.mulf %146, %145 : vector<34x64xf32>
    %cst_110 = arith.constant 0.707106769 : f32
    %148 = vector.broadcast %cst_110 : f32 to vector<34x64xf32>
    %149 = arith.mulf %145, %148 : vector<34x64xf32>
    %150 = math.erf %149 : vector<34x64xf32>
    %cst_111 = arith.constant 1.000000e+00 : f32
    %151 = vector.broadcast %cst_111 : f32 to vector<34x64xf32>
    %152 = arith.addf %151, %150 : vector<34x64xf32>
    %153 = arith.mulf %147, %152 : vector<34x64xf32>
    %c0_112 = arith.constant 0 : index
    %c0_113 = arith.constant 0 : index
    %c0_114 = arith.constant 0 : index
    %154 = vector.load %arg12[%c0_112, %c0_113, %c0_114] : memref<2x64x48xf32, #tpu.memory_space<vmem>>, vector<1x64x48xf32>
    %155 = vector.shape_cast %154 : vector<1x64x48xf32> to vector<64x48xf32>
    %cst_115 = arith.constant dense<0.000000e+00> : vector<34x48xf32>
    %156 = tpu.matmul %153, %155, %cst_115 {dimension_numbers = #tpu.dot_dimension_numbers<[1], [0], [0], [1], [0, 0, 1, 1], [], []>} : vector<34x64xf32>, vector<64x48xf32>, vector<34x48xf32> -> vector<34x48xf32>
    %c0_116 = arith.constant 0 : index
    %c0_117 = arith.constant 0 : index
    %c0_118 = arith.constant 0 : index
    %157 = vector.load %arg13[%c0_116, %c0_117, %c0_118] : memref<2x1x48xf32, #tpu.memory_space<vmem>>, vector<1x1x48xf32>
    %158 = vector.shape_cast %157 : vector<1x1x48xf32> to vector<1x48xf32>
    %159 = vector.broadcast %158 : vector<1x48xf32> to vector<34x48xf32>
    %160 = arith.addf %156, %159 : vector<34x48xf32>
    %161 = arith.addf %160, %112 : vector<34x48xf32>
    %c1_119 = arith.constant 1 : index
    %c0_120 = arith.constant 0 : index
    %c0_121 = arith.constant 0 : index
    %162 = vector.load %arg2[%c1_119, %c0_120, %c0_121] : memref<2x1x48xf32, #tpu.memory_space<vmem>>, vector<1x1x48xf32>
    %163 = vector.shape_cast %162 : vector<1x1x48xf32> to vector<1x48xf32>
    %c1_122 = arith.constant 1 : index
    %c0_123 = arith.constant 0 : index
    %c0_124 = arith.constant 0 : index
    %164 = vector.load %arg3[%c1_122, %c0_123, %c0_124] : memref<2x1x48xf32, #tpu.memory_space<vmem>>, vector<1x1x48xf32>
    %165 = vector.shape_cast %164 : vector<1x1x48xf32> to vector<1x48xf32>
    %cst_125 = arith.constant dense<0.000000e+00> : vector<34xf32>
    %166 = vector.multi_reduction <add>, %161, %cst_125 [1] : vector<34x48xf32> to vector<34xf32>
    %167 = vector.shape_cast %166 : vector<34xf32> to vector<34x1xf32>
    %cst_126 = arith.constant 4.800000e+01 : f32
    %168 = vector.broadcast %cst_126 : f32 to vector<34x1xf32>
    %169 = arith.divf %167, %168 : vector<34x1xf32>
    %170 = arith.mulf %161, %161 : vector<34x48xf32>
    %cst_127 = arith.constant dense<0.000000e+00> : vector<34xf32>
    %171 = vector.multi_reduction <add>, %170, %cst_127 [1] : vector<34x48xf32> to vector<34xf32>
    %172 = vector.shape_cast %171 : vector<34xf32> to vector<34x1xf32>
    %cst_128 = arith.constant 4.800000e+01 : f32
    %173 = vector.broadcast %cst_128 : f32 to vector<34x1xf32>
    %174 = arith.divf %172, %173 : vector<34x1xf32>
    %175 = arith.mulf %169, %169 : vector<34x1xf32>
    %176 = arith.subf %174, %175 : vector<34x1xf32>
    %177 = vector.broadcast %169 : vector<34x1xf32> to vector<34x48xf32>
    %178 = arith.subf %161, %177 : vector<34x48xf32>
    %cst_129 = arith.constant 9.99999974E-6 : f32
    %179 = vector.broadcast %cst_129 : f32 to vector<34x1xf32>
    %180 = arith.addf %176, %179 : vector<34x1xf32>
    %181 = math.rsqrt %180 : vector<34x1xf32>
    %182 = vector.broadcast %181 : vector<34x1xf32> to vector<34x48xf32>
    %183 = arith.mulf %178, %182 : vector<34x48xf32>
    %184 = vector.broadcast %163 : vector<1x48xf32> to vector<34x48xf32>
    %185 = arith.mulf %183, %184 : vector<34x48xf32>
    %186 = vector.broadcast %165 : vector<1x48xf32> to vector<34x48xf32>
    %187 = arith.addf %185, %186 : vector<34x48xf32>
    %c0_130 = arith.constant 0 : index
    %c0_131 = arith.constant 0 : index
    %c0_132 = arith.constant 0 : index
    %188 = vector.load %arg24[%c0_130, %c0_131, %c0_132] : memref<2x17x34xf32, #tpu.memory_space<vmem>>, vector<1x17x34xf32>
    %189 = vector.shape_cast %188 : vector<1x17x34xf32> to vector<17x34xf32>
    %cst_133 = arith.constant dense<0.000000e+00> : vector<17x48xf32>
    %190 = tpu.matmul %189, %187, %cst_133 {dimension_numbers = #tpu.dot_dimension_numbers<[1], [0], [0], [1], [0, 0, 1, 1], [], []>} : vector<17x34xf32>, vector<34x48xf32>, vector<17x48xf32> -> vector<17x48xf32>
    %c1_134 = arith.constant 1 : index
    %c0_135 = arith.constant 0 : index
    %c0_136 = arith.constant 0 : index
    %191 = vector.load %arg4[%c1_134, %c0_135, %c0_136] : memref<2x48x32xf32, #tpu.memory_space<vmem>>, vector<1x48x32xf32>
    %192 = vector.shape_cast %191 : vector<1x48x32xf32> to vector<48x32xf32>
    %cst_137 = arith.constant dense<0.000000e+00> : vector<17x32xf32>
    %193 = tpu.matmul %190, %192, %cst_137 {dimension_numbers = #tpu.dot_dimension_numbers<[1], [0], [0], [1], [0, 0, 1, 1], [], []>} : vector<17x48xf32>, vector<48x32xf32>, vector<17x32xf32> -> vector<17x32xf32>
    %c1_138 = arith.constant 1 : index
    %c0_139 = arith.constant 0 : index
    %c0_140 = arith.constant 0 : index
    %194 = vector.load %arg5[%c1_138, %c0_139, %c0_140] : memref<2x48x32xf32, #tpu.memory_space<vmem>>, vector<1x48x32xf32>
    %195 = vector.shape_cast %194 : vector<1x48x32xf32> to vector<48x32xf32>
    %cst_141 = arith.constant dense<0.000000e+00> : vector<17x32xf32>
    %196 = tpu.matmul %190, %195, %cst_141 {dimension_numbers = #tpu.dot_dimension_numbers<[1], [0], [0], [1], [0, 0, 1, 1], [], []>} : vector<17x48xf32>, vector<48x32xf32>, vector<17x32xf32> -> vector<17x32xf32>
    %c1_142 = arith.constant 1 : index
    %c0_143 = arith.constant 0 : index
    %c0_144 = arith.constant 0 : index
    %197 = vector.load %arg6[%c1_142, %c0_143, %c0_144] : memref<2x48x32xf32, #tpu.memory_space<vmem>>, vector<1x48x32xf32>
    %198 = vector.shape_cast %197 : vector<1x48x32xf32> to vector<48x32xf32>
    %cst_145 = arith.constant dense<0.000000e+00> : vector<17x32xf32>
    %199 = tpu.matmul %190, %198, %cst_145 {dimension_numbers = #tpu.dot_dimension_numbers<[1], [0], [0], [1], [0, 0, 1, 1], [], []>} : vector<17x48xf32>, vector<48x32xf32>, vector<17x32xf32> -> vector<17x32xf32>
    %cst_146 = arith.constant dense<0.000000e+00> : vector<17x544xf32>
    %200 = tpu.matmul %196, %1, %cst_146 {dimension_numbers = #tpu.dot_dimension_numbers<[1], [0], [0], [1], [0, 0, 1, 1], [], []>} : vector<17x32xf32>, vector<32x544xf32>, vector<17x544xf32> -> vector<17x544xf32>
    %201 = arith.mulf %200, %2 : vector<17x544xf32>
    %cst_147 = arith.constant dense<0.000000e+00> : vector<1x544xf32>
    %202 = tpu.matmul %9, %201, %cst_147 {dimension_numbers = #tpu.dot_dimension_numbers<[1], [0], [0], [1], [0, 0, 1, 1], [], []>} : vector<1x17xf32>, vector<17x544xf32>, vector<1x544xf32> -> vector<1x544xf32>
    %203 = vector.broadcast %202 : vector<1x544xf32> to vector<32x544xf32>
    %204 = arith.mulf %203, %3 : vector<32x544xf32>
    %cst_148 = arith.constant dense<0.000000e+00> : vector<32x68xf32>
    %205 = tpu.matmul %204, %4, %cst_148 {dimension_numbers = #tpu.dot_dimension_numbers<[1], [0], [0], [1], [0, 0, 1, 1], [], []>} : vector<32x544xf32>, vector<544x68xf32>, vector<32x68xf32> -> vector<32x68xf32>
    %cst_149 = arith.constant dense<0.000000e+00> : vector<17x68xf32>
    %206 = tpu.matmul %193, %205, %cst_149 {dimension_numbers = #tpu.dot_dimension_numbers<[1], [0], [0], [1], [0, 0, 1, 1], [], []>} : vector<17x32xf32>, vector<32x68xf32>, vector<17x68xf32> -> vector<17x68xf32>
    %cst_150 = arith.constant 0.242535621 : f32
    %207 = vector.broadcast %cst_150 : f32 to vector<17x68xf32>
    %208 = arith.mulf %206, %207 : vector<17x68xf32>
    %cst_151 = arith.constant dense<0xFF800000> : vector<17xf32>
    %209 = vector.multi_reduction <maximumf>, %208, %cst_151 [1] : vector<17x68xf32> to vector<17xf32>
    %210 = vector.shape_cast %209 : vector<17xf32> to vector<17x1xf32>
    %211 = vector.broadcast %210 : vector<17x1xf32> to vector<17x68xf32>
    %212 = arith.subf %208, %211 : vector<17x68xf32>
    %213 = math.exp %212 : vector<17x68xf32>
    %cst_152 = arith.constant dense<0.000000e+00> : vector<17x4xf32>
    %214 = tpu.matmul %213, %5, %cst_152 {dimension_numbers = #tpu.dot_dimension_numbers<[1], [0], [0], [1], [0, 0, 1, 1], [], []>} : vector<17x68xf32>, vector<68x4xf32>, vector<17x4xf32> -> vector<17x4xf32>
    %215 = tpu.reciprocal %214 {approx = true} : vector<17x4xf32> -> vector<17x4xf32>
    %cst_153 = arith.constant dense<0.000000e+00> : vector<17x68xf32>
    %216 = tpu.matmul %215, %6, %cst_153 {dimension_numbers = #tpu.dot_dimension_numbers<[1], [0], [0], [1], [0, 0, 1, 1], [], []>} : vector<17x4xf32>, vector<4x68xf32>, vector<17x68xf32> -> vector<17x68xf32>
    %217 = arith.mulf %213, %216 : vector<17x68xf32>
    %cst_154 = arith.constant dense<0.000000e+00> : vector<68x32xf32>
    %218 = tpu.matmul %7, %199, %cst_154 {dimension_numbers = #tpu.dot_dimension_numbers<[1], [0], [0], [1], [0, 0, 1, 1], [], []>} : vector<68x17xf32>, vector<17x32xf32>, vector<68x32xf32> -> vector<68x32xf32>
    %219 = arith.mulf %218, %8 : vector<68x32xf32>
    %cst_155 = arith.constant dense<0.000000e+00> : vector<17x32xf32>
    %220 = tpu.matmul %217, %219, %cst_155 {dimension_numbers = #tpu.dot_dimension_numbers<[1], [0], [0], [1], [0, 0, 1, 1], [], []>} : vector<17x68xf32>, vector<68x32xf32>, vector<17x32xf32> -> vector<17x32xf32>
    %c0_156 = arith.constant 0 : index
    %c0_157 = arith.constant 0 : index
    %c0_158 = arith.constant 0 : index
    %221 = vector.load %arg25[%c0_156, %c0_157, %c0_158] : memref<2x34x17xf32, #tpu.memory_space<vmem>>, vector<1x34x17xf32>
    %222 = vector.shape_cast %221 : vector<1x34x17xf32> to vector<34x17xf32>
    %cst_159 = arith.constant dense<0.000000e+00> : vector<34x32xf32>
    %223 = tpu.matmul %222, %220, %cst_159 {dimension_numbers = #tpu.dot_dimension_numbers<[1], [0], [0], [1], [0, 0, 1, 1], [], []>} : vector<34x17xf32>, vector<17x32xf32>, vector<34x32xf32> -> vector<34x32xf32>
    %c1_160 = arith.constant 1 : index
    %c0_161 = arith.constant 0 : index
    %c0_162 = arith.constant 0 : index
    %224 = vector.load %arg24[%c1_160, %c0_161, %c0_162] : memref<2x17x34xf32, #tpu.memory_space<vmem>>, vector<1x17x34xf32>
    %225 = vector.shape_cast %224 : vector<1x17x34xf32> to vector<17x34xf32>
    %cst_163 = arith.constant dense<0.000000e+00> : vector<17x48xf32>
    %226 = tpu.matmul %225, %187, %cst_163 {dimension_numbers = #tpu.dot_dimension_numbers<[1], [0], [0], [1], [0, 0, 1, 1], [], []>} : vector<17x34xf32>, vector<34x48xf32>, vector<17x48xf32> -> vector<17x48xf32>
    %c1_164 = arith.constant 1 : index
    %c0_165 = arith.constant 0 : index
    %c0_166 = arith.constant 0 : index
    %227 = vector.load %arg4[%c1_164, %c0_165, %c0_166] : memref<2x48x32xf32, #tpu.memory_space<vmem>>, vector<1x48x32xf32>
    %228 = vector.shape_cast %227 : vector<1x48x32xf32> to vector<48x32xf32>
    %cst_167 = arith.constant dense<0.000000e+00> : vector<17x32xf32>
    %229 = tpu.matmul %226, %228, %cst_167 {dimension_numbers = #tpu.dot_dimension_numbers<[1], [0], [0], [1], [0, 0, 1, 1], [], []>} : vector<17x48xf32>, vector<48x32xf32>, vector<17x32xf32> -> vector<17x32xf32>
    %c1_168 = arith.constant 1 : index
    %c0_169 = arith.constant 0 : index
    %c0_170 = arith.constant 0 : index
    %230 = vector.load %arg5[%c1_168, %c0_169, %c0_170] : memref<2x48x32xf32, #tpu.memory_space<vmem>>, vector<1x48x32xf32>
    %231 = vector.shape_cast %230 : vector<1x48x32xf32> to vector<48x32xf32>
    %cst_171 = arith.constant dense<0.000000e+00> : vector<17x32xf32>
    %232 = tpu.matmul %226, %231, %cst_171 {dimension_numbers = #tpu.dot_dimension_numbers<[1], [0], [0], [1], [0, 0, 1, 1], [], []>} : vector<17x48xf32>, vector<48x32xf32>, vector<17x32xf32> -> vector<17x32xf32>
    %c1_172 = arith.constant 1 : index
    %c0_173 = arith.constant 0 : index
    %c0_174 = arith.constant 0 : index
    %233 = vector.load %arg6[%c1_172, %c0_173, %c0_174] : memref<2x48x32xf32, #tpu.memory_space<vmem>>, vector<1x48x32xf32>
    %234 = vector.shape_cast %233 : vector<1x48x32xf32> to vector<48x32xf32>
    %cst_175 = arith.constant dense<0.000000e+00> : vector<17x32xf32>
    %235 = tpu.matmul %226, %234, %cst_175 {dimension_numbers = #tpu.dot_dimension_numbers<[1], [0], [0], [1], [0, 0, 1, 1], [], []>} : vector<17x48xf32>, vector<48x32xf32>, vector<17x32xf32> -> vector<17x32xf32>
    %cst_176 = arith.constant dense<0.000000e+00> : vector<17x544xf32>
    %236 = tpu.matmul %232, %1, %cst_176 {dimension_numbers = #tpu.dot_dimension_numbers<[1], [0], [0], [1], [0, 0, 1, 1], [], []>} : vector<17x32xf32>, vector<32x544xf32>, vector<17x544xf32> -> vector<17x544xf32>
    %237 = arith.mulf %236, %2 : vector<17x544xf32>
    %cst_177 = arith.constant dense<0.000000e+00> : vector<1x544xf32>
    %238 = tpu.matmul %9, %237, %cst_177 {dimension_numbers = #tpu.dot_dimension_numbers<[1], [0], [0], [1], [0, 0, 1, 1], [], []>} : vector<1x17xf32>, vector<17x544xf32>, vector<1x544xf32> -> vector<1x544xf32>
    %239 = vector.broadcast %238 : vector<1x544xf32> to vector<32x544xf32>
    %240 = arith.mulf %239, %3 : vector<32x544xf32>
    %cst_178 = arith.constant dense<0.000000e+00> : vector<32x68xf32>
    %241 = tpu.matmul %240, %4, %cst_178 {dimension_numbers = #tpu.dot_dimension_numbers<[1], [0], [0], [1], [0, 0, 1, 1], [], []>} : vector<32x544xf32>, vector<544x68xf32>, vector<32x68xf32> -> vector<32x68xf32>
    %cst_179 = arith.constant dense<0.000000e+00> : vector<17x68xf32>
    %242 = tpu.matmul %229, %241, %cst_179 {dimension_numbers = #tpu.dot_dimension_numbers<[1], [0], [0], [1], [0, 0, 1, 1], [], []>} : vector<17x32xf32>, vector<32x68xf32>, vector<17x68xf32> -> vector<17x68xf32>
    %cst_180 = arith.constant 0.242535621 : f32
    %243 = vector.broadcast %cst_180 : f32 to vector<17x68xf32>
    %244 = arith.mulf %242, %243 : vector<17x68xf32>
    %cst_181 = arith.constant dense<0xFF800000> : vector<17xf32>
    %245 = vector.multi_reduction <maximumf>, %244, %cst_181 [1] : vector<17x68xf32> to vector<17xf32>
    %246 = vector.shape_cast %245 : vector<17xf32> to vector<17x1xf32>
    %247 = vector.broadcast %246 : vector<17x1xf32> to vector<17x68xf32>
    %248 = arith.subf %244, %247 : vector<17x68xf32>
    %249 = math.exp %248 : vector<17x68xf32>
    %cst_182 = arith.constant dense<0.000000e+00> : vector<17x4xf32>
    %250 = tpu.matmul %249, %5, %cst_182 {dimension_numbers = #tpu.dot_dimension_numbers<[1], [0], [0], [1], [0, 0, 1, 1], [], []>} : vector<17x68xf32>, vector<68x4xf32>, vector<17x4xf32> -> vector<17x4xf32>
    %251 = tpu.reciprocal %250 {approx = true} : vector<17x4xf32> -> vector<17x4xf32>
    %cst_183 = arith.constant dense<0.000000e+00> : vector<17x68xf32>
    %252 = tpu.matmul %251, %6, %cst_183 {dimension_numbers = #tpu.dot_dimension_numbers<[1], [0], [0], [1], [0, 0, 1, 1], [], []>} : vector<17x4xf32>, vector<4x68xf32>, vector<17x68xf32> -> vector<17x68xf32>
    %253 = arith.mulf %249, %252 : vector<17x68xf32>
    %cst_184 = arith.constant dense<0.000000e+00> : vector<68x32xf32>
    %254 = tpu.matmul %7, %235, %cst_184 {dimension_numbers = #tpu.dot_dimension_numbers<[1], [0], [0], [1], [0, 0, 1, 1], [], []>} : vector<68x17xf32>, vector<17x32xf32>, vector<68x32xf32> -> vector<68x32xf32>
    %255 = arith.mulf %254, %8 : vector<68x32xf32>
    %cst_185 = arith.constant dense<0.000000e+00> : vector<17x32xf32>
    %256 = tpu.matmul %253, %255, %cst_185 {dimension_numbers = #tpu.dot_dimension_numbers<[1], [0], [0], [1], [0, 0, 1, 1], [], []>} : vector<17x68xf32>, vector<68x32xf32>, vector<17x32xf32> -> vector<17x32xf32>
    %c1_186 = arith.constant 1 : index
    %c0_187 = arith.constant 0 : index
    %c0_188 = arith.constant 0 : index
    %257 = vector.load %arg25[%c1_186, %c0_187, %c0_188] : memref<2x34x17xf32, #tpu.memory_space<vmem>>, vector<1x34x17xf32>
    %258 = vector.shape_cast %257 : vector<1x34x17xf32> to vector<34x17xf32>
    %cst_189 = arith.constant dense<0.000000e+00> : vector<34x32xf32>
    %259 = tpu.matmul %258, %256, %cst_189 {dimension_numbers = #tpu.dot_dimension_numbers<[1], [0], [0], [1], [0, 0, 1, 1], [], []>} : vector<34x17xf32>, vector<17x32xf32>, vector<34x32xf32> -> vector<34x32xf32>
    %260 = arith.addf %223, %259 : vector<34x32xf32>
    %c1_190 = arith.constant 1 : index
    %c0_191 = arith.constant 0 : index
    %c0_192 = arith.constant 0 : index
    %261 = vector.load %arg7[%c1_190, %c0_191, %c0_192] : memref<2x32x48xf32, #tpu.memory_space<vmem>>, vector<1x32x48xf32>
    %262 = vector.shape_cast %261 : vector<1x32x48xf32> to vector<32x48xf32>
    %cst_193 = arith.constant dense<0.000000e+00> : vector<34x48xf32>
    %263 = tpu.matmul %260, %262, %cst_193 {dimension_numbers = #tpu.dot_dimension_numbers<[1], [0], [0], [1], [0, 0, 1, 1], [], []>} : vector<34x32xf32>, vector<32x48xf32>, vector<34x48xf32> -> vector<34x48xf32>
    %264 = arith.addf %263, %161 : vector<34x48xf32>
    %c1_194 = arith.constant 1 : index
    %c0_195 = arith.constant 0 : index
    %c0_196 = arith.constant 0 : index
    %265 = vector.load %arg8[%c1_194, %c0_195, %c0_196] : memref<2x1x48xf32, #tpu.memory_space<vmem>>, vector<1x1x48xf32>
    %266 = vector.shape_cast %265 : vector<1x1x48xf32> to vector<1x48xf32>
    %c1_197 = arith.constant 1 : index
    %c0_198 = arith.constant 0 : index
    %c0_199 = arith.constant 0 : index
    %267 = vector.load %arg9[%c1_197, %c0_198, %c0_199] : memref<2x1x48xf32, #tpu.memory_space<vmem>>, vector<1x1x48xf32>
    %268 = vector.shape_cast %267 : vector<1x1x48xf32> to vector<1x48xf32>
    %cst_200 = arith.constant dense<0.000000e+00> : vector<34xf32>
    %269 = vector.multi_reduction <add>, %264, %cst_200 [1] : vector<34x48xf32> to vector<34xf32>
    %270 = vector.shape_cast %269 : vector<34xf32> to vector<34x1xf32>
    %cst_201 = arith.constant 4.800000e+01 : f32
    %271 = vector.broadcast %cst_201 : f32 to vector<34x1xf32>
    %272 = arith.divf %270, %271 : vector<34x1xf32>
    %273 = arith.mulf %264, %264 : vector<34x48xf32>
    %cst_202 = arith.constant dense<0.000000e+00> : vector<34xf32>
    %274 = vector.multi_reduction <add>, %273, %cst_202 [1] : vector<34x48xf32> to vector<34xf32>
    %275 = vector.shape_cast %274 : vector<34xf32> to vector<34x1xf32>
    %cst_203 = arith.constant 4.800000e+01 : f32
    %276 = vector.broadcast %cst_203 : f32 to vector<34x1xf32>
    %277 = arith.divf %275, %276 : vector<34x1xf32>
    %278 = arith.mulf %272, %272 : vector<34x1xf32>
    %279 = arith.subf %277, %278 : vector<34x1xf32>
    %280 = vector.broadcast %272 : vector<34x1xf32> to vector<34x48xf32>
    %281 = arith.subf %264, %280 : vector<34x48xf32>
    %cst_204 = arith.constant 9.99999974E-6 : f32
    %282 = vector.broadcast %cst_204 : f32 to vector<34x1xf32>
    %283 = arith.addf %279, %282 : vector<34x1xf32>
    %284 = math.rsqrt %283 : vector<34x1xf32>
    %285 = vector.broadcast %284 : vector<34x1xf32> to vector<34x48xf32>
    %286 = arith.mulf %281, %285 : vector<34x48xf32>
    %287 = vector.broadcast %266 : vector<1x48xf32> to vector<34x48xf32>
    %288 = arith.mulf %286, %287 : vector<34x48xf32>
    %289 = vector.broadcast %268 : vector<1x48xf32> to vector<34x48xf32>
    %290 = arith.addf %288, %289 : vector<34x48xf32>
    %c1_205 = arith.constant 1 : index
    %c0_206 = arith.constant 0 : index
    %c0_207 = arith.constant 0 : index
    %291 = vector.load %arg10[%c1_205, %c0_206, %c0_207] : memref<2x48x64xf32, #tpu.memory_space<vmem>>, vector<1x48x64xf32>
    %292 = vector.shape_cast %291 : vector<1x48x64xf32> to vector<48x64xf32>
    %cst_208 = arith.constant dense<0.000000e+00> : vector<34x64xf32>
    %293 = tpu.matmul %290, %292, %cst_208 {dimension_numbers = #tpu.dot_dimension_numbers<[1], [0], [0], [1], [0, 0, 1, 1], [], []>} : vector<34x48xf32>, vector<48x64xf32>, vector<34x64xf32> -> vector<34x64xf32>
    %c1_209 = arith.constant 1 : index
    %c0_210 = arith.constant 0 : index
    %c0_211 = arith.constant 0 : index
    %294 = vector.load %arg11[%c1_209, %c0_210, %c0_211] : memref<2x1x64xf32, #tpu.memory_space<vmem>>, vector<1x1x64xf32>
    %295 = vector.shape_cast %294 : vector<1x1x64xf32> to vector<1x64xf32>
    %296 = vector.broadcast %295 : vector<1x64xf32> to vector<34x64xf32>
    %297 = arith.addf %293, %296 : vector<34x64xf32>
    %cst_212 = arith.constant 5.000000e-01 : f32
    %298 = vector.broadcast %cst_212 : f32 to vector<34x64xf32>
    %299 = arith.mulf %298, %297 : vector<34x64xf32>
    %cst_213 = arith.constant 0.707106769 : f32
    %300 = vector.broadcast %cst_213 : f32 to vector<34x64xf32>
    %301 = arith.mulf %297, %300 : vector<34x64xf32>
    %302 = math.erf %301 : vector<34x64xf32>
    %cst_214 = arith.constant 1.000000e+00 : f32
    %303 = vector.broadcast %cst_214 : f32 to vector<34x64xf32>
    %304 = arith.addf %303, %302 : vector<34x64xf32>
    %305 = arith.mulf %299, %304 : vector<34x64xf32>
    %c1_215 = arith.constant 1 : index
    %c0_216 = arith.constant 0 : index
    %c0_217 = arith.constant 0 : index
    %306 = vector.load %arg12[%c1_215, %c0_216, %c0_217] : memref<2x64x48xf32, #tpu.memory_space<vmem>>, vector<1x64x48xf32>
    %307 = vector.shape_cast %306 : vector<1x64x48xf32> to vector<64x48xf32>
    %cst_218 = arith.constant dense<0.000000e+00> : vector<34x48xf32>
    %308 = tpu.matmul %305, %307, %cst_218 {dimension_numbers = #tpu.dot_dimension_numbers<[1], [0], [0], [1], [0, 0, 1, 1], [], []>} : vector<34x64xf32>, vector<64x48xf32>, vector<34x48xf32> -> vector<34x48xf32>
    %c1_219 = arith.constant 1 : index
    %c0_220 = arith.constant 0 : index
    %c0_221 = arith.constant 0 : index
    %309 = vector.load %arg13[%c1_219, %c0_220, %c0_221] : memref<2x1x48xf32, #tpu.memory_space<vmem>>, vector<1x1x48xf32>
    %310 = vector.shape_cast %309 : vector<1x1x48xf32> to vector<1x48xf32>
    %311 = vector.broadcast %310 : vector<1x48xf32> to vector<34x48xf32>
    %312 = arith.addf %308, %311 : vector<34x48xf32>
    %313 = arith.addf %312, %264 : vector<34x48xf32>
    %c0_222 = arith.constant 0 : index
    %c0_223 = arith.constant 0 : index
    %314 = vector.load %arg26[%c0_222, %c0_223] : memref<2x34xf32, #tpu.memory_space<vmem>>, vector<2x34xf32>
    %cst_224 = arith.constant dense<0.000000e+00> : vector<2x48xf32>
    %315 = tpu.matmul %314, %313, %cst_224 {dimension_numbers = #tpu.dot_dimension_numbers<[1], [0], [0], [1], [0, 0, 1, 1], [], []>} : vector<2x34xf32>, vector<34x48xf32>, vector<2x48xf32> -> vector<2x48xf32>
    %c0_225 = arith.constant 0 : index
    %c0_226 = arith.constant 0 : index
    %316 = vector.load %arg14[%c0_225, %c0_226] : memref<48x10xf32, #tpu.memory_space<vmem>>, vector<48x10xf32>
    %cst_227 = arith.constant dense<0.000000e+00> : vector<2x10xf32>
    %317 = tpu.matmul %315, %316, %cst_227 {dimension_numbers = #tpu.dot_dimension_numbers<[1], [0], [0], [1], [0, 0, 1, 1], [], []>} : vector<2x48xf32>, vector<48x10xf32>, vector<2x10xf32> -> vector<2x10xf32>
    %c0_228 = arith.constant 0 : index
    %c0_229 = arith.constant 0 : index
    %318 = vector.load %arg15[%c0_228, %c0_229] : memref<1x10xf32, #tpu.memory_space<vmem>>, vector<1x10xf32>
    %319 = vector.broadcast %318 : vector<1x10xf32> to vector<2x10xf32>
    %320 = arith.addf %317, %319 : vector<2x10xf32>
    %cst_230 = arith.constant dense<0xFF800000> : vector<2xf32>
    %321 = vector.multi_reduction <maximumf>, %320, %cst_230 [1] : vector<2x10xf32> to vector<2xf32>
    %322 = vector.shape_cast %321 : vector<2xf32> to vector<2x1xf32>
    %323 = vector.broadcast %322 : vector<2x1xf32> to vector<2x10xf32>
    %324 = arith.subf %320, %323 : vector<2x10xf32>
    %325 = math.exp %324 : vector<2x10xf32>
    %cst_231 = arith.constant dense<0.000000e+00> : vector<2xf32>
    %326 = vector.multi_reduction <add>, %325, %cst_231 [1] : vector<2x10xf32> to vector<2xf32>
    %327 = vector.shape_cast %326 : vector<2xf32> to vector<2x1xf32>
    %328 = tpu.reciprocal %327 {approx = true} : vector<2x1xf32> -> vector<2x1xf32>
    %329 = vector.broadcast %328 : vector<2x1xf32> to vector<2x10xf32>
    %330 = arith.mulf %325, %329 : vector<2x10xf32>
    %c0_232 = arith.constant 0 : index
    %c0_233 = arith.constant 0 : index
    %331 = vector.load %arg27[%c0_232, %c0_233] : memref<2x10xf32, #tpu.memory_space<vmem>>, vector<2x10xf32>
    tpu.vector_store %arg27[%c0_232, %c0_233], %330 {strides = array<i32>} : memref<2x10xf32, #tpu.memory_space<vmem>>, vector<2x10xf32>,
    return
  }
  func.func @transform_0(%arg0: i32) -> (i32, i32) {
    %c0_i32 = arith.constant 0 : i32
    %c0_i32_0 = arith.constant 0 : i32
    %c0_i32_1 = arith.constant 0 : i32
    return %c0_i32, %c0_i32_0 : i32, i32
  }
  func.func @transform_1(%arg0: i32) -> (i32, i32, i32) {
    %c0_i32 = arith.constant 0 : i32
    %c0_i32_0 = arith.constant 0 : i32
    %c0_i32_1 = arith.constant 0 : i32
    %c0_i32_2 = arith.constant 0 : i32
    return %c0_i32, %c0_i32_0, %c0_i32_1 : i32, i32, i32
  }
  func.func @transform_2(%arg0: i32) -> (i32, i32, i32) {
    %c0_i32 = arith.constant 0 : i32
    %c0_i32_0 = arith.constant 0 : i32
    %c0_i32_1 = arith.constant 0 : i32
    %c0_i32_2 = arith.constant 0 : i32
    return %c0_i32, %c0_i32_0, %c0_i32_1 : i32, i32, i32
  }
  func.func @transform_3(%arg0: i32) -> (i32, i32, i32) {
    %c0_i32 = arith.constant 0 : i32
    %c0_i32_0 = arith.constant 0 : i32
    %c0_i32_1 = arith.constant 0 : i32
    %c0_i32_2 = arith.constant 0 : i32
    return %c0_i32, %c0_i32_0, %c0_i32_1 : i32, i32, i32
  }
  func.func @transform_4(%arg0: i32) -> (i32, i32, i32) {
    %c0_i32 = arith.constant 0 : i32
    %c0_i32_0 = arith.constant 0 : i32
    %c0_i32_1 = arith.constant 0 : i32
    %c0_i32_2 = arith.constant 0 : i32
    return %c0_i32, %c0_i32_0, %c0_i32_1 : i32, i32, i32
  }
  func.func @transform_5(%arg0: i32) -> (i32, i32, i32) {
    %c0_i32 = arith.constant 0 : i32
    %c0_i32_0 = arith.constant 0 : i32
    %c0_i32_1 = arith.constant 0 : i32
    %c0_i32_2 = arith.constant 0 : i32
    return %c0_i32, %c0_i32_0, %c0_i32_1 : i32, i32, i32
  }
  func.func @transform_6(%arg0: i32) -> (i32, i32, i32) {
    %c0_i32 = arith.constant 0 : i32
    %c0_i32_0 = arith.constant 0 : i32
    %c0_i32_1 = arith.constant 0 : i32
    %c0_i32_2 = arith.constant 0 : i32
    return %c0_i32, %c0_i32_0, %c0_i32_1 : i32, i32, i32
  }
  func.func @transform_7(%arg0: i32) -> (i32, i32, i32) {
    %c0_i32 = arith.constant 0 : i32
    %c0_i32_0 = arith.constant 0 : i32
    %c0_i32_1 = arith.constant 0 : i32
    %c0_i32_2 = arith.constant 0 : i32
    return %c0_i32, %c0_i32_0, %c0_i32_1 : i32, i32, i32
  }
  func.func @transform_8(%arg0: i32) -> (i32, i32, i32) {
    %c0_i32 = arith.constant 0 : i32
    %c0_i32_0 = arith.constant 0 : i32
    %c0_i32_1 = arith.constant 0 : i32
    %c0_i32_2 = arith.constant 0 : i32
    return %c0_i32, %c0_i32_0, %c0_i32_1 : i32, i32, i32
  }
  func.func @transform_9(%arg0: i32) -> (i32, i32, i32) {
    %c0_i32 = arith.constant 0 : i32
    %c0_i32_0 = arith.constant 0 : i32
    %c0_i32_1 = arith.constant 0 : i32
    %c0_i32_2 = arith.constant 0 : i32
    return %c0_i32, %c0_i32_0, %c0_i32_1 : i32, i32, i32
  }
  func.func @transform_10(%arg0: i32) -> (i32, i32, i32) {
    %c0_i32 = arith.constant 0 : i32
    %c0_i32_0 = arith.constant 0 : i32
    %c0_i32_1 = arith.constant 0 : i32
    %c0_i32_2 = arith.constant 0 : i32
    return %c0_i32, %c0_i32_0, %c0_i32_1 : i32, i32, i32
  }
  func.func @transform_11(%arg0: i32) -> (i32, i32, i32) {
    %c0_i32 = arith.constant 0 : i32
    %c0_i32_0 = arith.constant 0 : i32
    %c0_i32_1 = arith.constant 0 : i32
    %c0_i32_2 = arith.constant 0 : i32
    return %c0_i32, %c0_i32_0, %c0_i32_1 : i32, i32, i32
  }
  func.func @transform_12(%arg0: i32) -> (i32, i32, i32) {
    %c0_i32 = arith.constant 0 : i32
    %c0_i32_0 = arith.constant 0 : i32
    %c0_i32_1 = arith.constant 0 : i32
    %c0_i32_2 = arith.constant 0 : i32
    return %c0_i32, %c0_i32_0, %c0_i32_1 : i32, i32, i32
  }
  func.func @transform_13(%arg0: i32) -> (i32, i32) {
    %c0_i32 = arith.constant 0 : i32
    %c0_i32_0 = arith.constant 0 : i32
    %c0_i32_1 = arith.constant 0 : i32
    return %c0_i32, %c0_i32_0 : i32, i32
  }
  func.func @transform_14(%arg0: i32) -> (i32, i32) {
    %c0_i32 = arith.constant 0 : i32
    %c0_i32_0 = arith.constant 0 : i32
    %c0_i32_1 = arith.constant 0 : i32
    return %c0_i32, %c0_i32_0 : i32, i32
  }
  func.func @transform_15(%arg0: i32) -> (i32, i32) {
    %c0_i32 = arith.constant 0 : i32
    %c0_i32_0 = arith.constant 0 : i32
    %c0_i32_1 = arith.constant 0 : i32
    return %c0_i32, %c0_i32_0 : i32, i32
  }
  func.func @transform_16(%arg0: i32) -> (i32, i32) {
    %c0_i32 = arith.constant 0 : i32
    %c0_i32_0 = arith.constant 0 : i32
    %c0_i32_1 = arith.constant 0 : i32
    return %c0_i32, %c0_i32_0 : i32, i32
  }
  func.func @transform_17(%arg0: i32) -> (i32, i32) {
    %c0_i32 = arith.constant 0 : i32
    %c0_i32_0 = arith.constant 0 : i32
    %c0_i32_1 = arith.constant 0 : i32
    return %c0_i32, %c0_i32_0 : i32, i32
  }
  func.func @transform_18(%arg0: i32) -> (i32, i32) {
    %c0_i32 = arith.constant 0 : i32
    %c0_i32_0 = arith.constant 0 : i32
    %c0_i32_1 = arith.constant 0 : i32
    return %c0_i32, %c0_i32_0 : i32, i32
  }
  func.func @transform_19(%arg0: i32) -> (i32, i32) {
    %c0_i32 = arith.constant 0 : i32
    %c0_i32_0 = arith.constant 0 : i32
    %c0_i32_1 = arith.constant 0 : i32
    return %c0_i32, %c0_i32_0 : i32, i32
  }
  func.func @transform_20(%arg0: i32) -> (i32, i32) {
    %c0_i32 = arith.constant 0 : i32
    %c0_i32_0 = arith.constant 0 : i32
    %c0_i32_1 = arith.constant 0 : i32
    return %c0_i32, %c0_i32_0 : i32, i32
  }
  func.func @transform_21(%arg0: i32) -> (i32, i32) {
    %c0_i32 = arith.constant 0 : i32
    %c0_i32_0 = arith.constant 0 : i32
    %c0_i32_1 = arith.constant 0 : i32
    return %c0_i32, %c0_i32_0 : i32, i32
  }
  func.func @transform_22(%arg0: i32) -> (i32, i32) {
    %c0_i32 = arith.constant 0 : i32
    %c0_i32_0 = arith.constant 0 : i32
    %c0_i32_1 = arith.constant 0 : i32
    return %c0_i32, %c0_i32_0 : i32, i32
  }
  func.func @transform_23(%arg0: i32) -> (i32, i32, i32) {
    %c0_i32 = arith.constant 0 : i32
    %c0_i32_0 = arith.constant 0 : i32
    %c0_i32_1 = arith.constant 0 : i32
    %c0_i32_2 = arith.constant 0 : i32
    return %c0_i32, %c0_i32_0, %c0_i32_1 : i32, i32, i32
  }
  func.func @transform_24(%arg0: i32) -> (i32, i32, i32) {
    %c0_i32 = arith.constant 0 : i32
    %c0_i32_0 = arith.constant 0 : i32
    %c0_i32_1 = arith.constant 0 : i32
    %c0_i32_2 = arith.constant 0 : i32
    return %c0_i32, %c0_i32_0, %c0_i32_1 : i32, i32, i32
  }
  func.func @transform_25(%arg0: i32) -> (i32, i32) {
    %c0_i32 = arith.constant 0 : i32
    %c0_i32_0 = arith.constant 0 : i32
    %c0_i32_1 = arith.constant 0 : i32
    return %c0_i32, %c0_i32_0 : i32, i32
  }
  func.func @transform_26(%arg0: i32) -> (i32, i32) {
    %c0_i32 = arith.constant 0 : i32
    %c0_i32_0 = arith.constant 0 : i32
    %c0_i32_1 = arith.constant 0 : i32
    return %c0_i32, %c0_i32_0 : i32, i32
  }
}

</mosaic_0001>

<llo_original>
// kernel: vit_forward.1
$region0: #{vit_forward.1}
  #allocation0 [shape = 'u32[]', space=smem, size = 0x4, offset = 0x4, fixed_abs, tag = 'smem constant byte address 0x4 - core index']
  #allocation1 [shape = 'u32[144,128]{1,0:T(1,128)}', space=vmem, size = 0x12000, scoped, tag = 'internal scratch']
  %s0 = inlined_call_operand.vmem [shape: f32[34,48], index: 0, kind: input, shape index: {}]
  %s1 = inlined_call_operand.vmem [shape: f32[2,1,48], index: 1, kind: input, shape index: {}]
  %s2 = inlined_call_operand.vmem [shape: f32[2,1,48], index: 2, kind: input, shape index: {}]
  %s3 = inlined_call_operand.vmem [shape: f32[2,48,32], index: 3, kind: input, shape index: {}]
  %s4 = inlined_call_operand.vmem [shape: f32[2,48,32], index: 4, kind: input, shape index: {}]
  %s5 = inlined_call_operand.vmem [shape: f32[2,48,32], index: 5, kind: input, shape index: {}]
  %s6 = inlined_call_operand.vmem [shape: f32[2,32,48], index: 6, kind: input, shape index: {}]
  %s7 = inlined_call_operand.vmem [shape: f32[2,1,48], index: 7, kind: input, shape index: {}]
  %s8 = inlined_call_operand.vmem [shape: f32[2,1,48], index: 8, kind: input, shape index: {}]
  %s9 = inlined_call_operand.vmem [shape: f32[2,48,64], index: 9, kind: input, shape index: {}]
  %s10 = inlined_call_operand.vmem [shape: f32[2,1,64], index: 10, kind: input, shape index: {}]
  %s11 = inlined_call_operand.vmem [shape: f32[2,64,48], index: 11, kind: input, shape index: {}]
  %s12 = inlined_call_operand.vmem [shape: f32[2,1,48], index: 12, kind: input, shape index: {}]
  %s13 = inlined_call_operand.vmem [shape: f32[48,10], index: 13, kind: input, shape index: {}]
  %s14 = inlined_call_operand.vmem [shape: f32[1,10], index: 14, kind: input, shape index: {}]
  %s15 = inlined_call_operand.vmem [shape: f32[32,544], index: 15, kind: input, shape index: {}]
  %s16 = inlined_call_operand.vmem [shape: f32[17,544], index: 16, kind: input, shape index: {}]
  %s17 = inlined_call_operand.vmem [shape: f32[32,544], index: 17, kind: input, shape index: {}]
  %s18 = inlined_call_operand.vmem [shape: f32[544,68], index: 18, kind: input, shape index: {}]
  %s19 = inlined_call_operand.vmem [shape: f32[68,4], index: 19, kind: input, shape index: {}]
  %s20 = inlined_call_operand.vmem [shape: f32[4,68], index: 20, kind: input, shape index: {}]
  %s21 = inlined_call_operand.vmem [shape: f32[68,17], index: 21, kind: input, shape index: {}]
  %s22 = inlined_call_operand.vmem [shape: f32[68,32], index: 22, kind: input, shape index: {}]
  %s23 = inlined_call_operand.vmem [shape: f32[2,17,34], index: 23, kind: input, shape index: {}]
  %s24 = inlined_call_operand.vmem [shape: f32[2,34,17], index: 24, kind: input, shape index: {}]
  %s25 = inlined_call_operand.vmem [shape: f32[2,34], index: 25, kind: input, shape index: {}]
  %s26 = inlined_call_operand.vmem [shape: f32[2,10], index: 26, kind: output, shape index: {}]
  %s27 = sld [smem:[#allocation0]]
  $region114: #{vit_forward.1} parent=0
    _
  %s29 = ssub.s32 1, %s27
  %s30 = scalar_select 0, %s29, %s27
  // Predicated region
  $region2: #{vit_forward.1} parent=0 // pred_check
    _
  $region3: #{vit_forward.1} parent=0 // pred_check_branch
    %32 = sbr.rel (0) target = $region5
  $region4: #{vit_forward.1} parent=0 // pred_region
    _
  $region5: #{vit_forward.1} parent=0 // pred_fallthru
    _
  // Predicated region
  $region6: #{vit_forward.1} parent=0 // pred_check
    _
  $region7: #{vit_forward.1} parent=0 // pred_check_branch
    %34 = sbr.rel (0) target = $region9
  $region8: #{vit_forward.1} parent=0 // pred_region
    _
  $region9: #{vit_forward.1} parent=0 // pred_fallthru
    _
  // Predicated region
  $region10: #{vit_forward.1} parent=0 // pred_check
    _
  $region11: #{vit_forward.1} parent=0 // pred_check_branch
    %36 = sbr.rel (0) target = $region13
  $region12: #{vit_forward.1} parent=0 // pred_region
    _
  $region13: #{vit_forward.1} parent=0 // pred_fallthru
    _
  // Predicated region
  $region14: #{vit_forward.1} parent=0 // pred_check
    _
  $region15: #{vit_forward.1} parent=0 // pred_check_branch
    %38 = sbr.rel (0) target = $region17
  $region16: #{vit_forward.1} parent=0 // pred_region
    _
  $region17: #{vit_forward.1} parent=0 // pred_fallthru
    _
  // Predicated region
  $region18: #{vit_forward.1} parent=0 // pred_check
    _
  $region19: #{vit_forward.1} parent=0 // pred_check_branch
    %40 = sbr.rel (0) target = $region21
  $region20: #{vit_forward.1} parent=0 // pred_region
    _
  $region21: #{vit_forward.1} parent=0 // pred_fallthru
    _
  // Predicated region
  $region22: #{vit_forward.1} parent=0 // pred_check
    _
  $region23: #{vit_forward.1} parent=0 // pred_check_branch
    %42 = sbr.rel (0) target = $region25
  $region24: #{vit_forward.1} parent=0 // pred_region
    _
  $region25: #{vit_forward.1} parent=0 // pred_fallthru
    _
  // Predicated region
  $region26: #{vit_forward.1} parent=0 // pred_check
    _
  $region27: #{vit_forward.1} parent=0 // pred_check_branch
    %44 = sbr.rel (0) target = $region29
  $region28: #{vit_forward.1} parent=0 // pred_region
    _
  $region29: #{vit_forward.1} parent=0 // pred_fallthru
    _
  // Predicated region
  $region30: #{vit_forward.1} parent=0 // pred_check
    _
  $region31: #{vit_forward.1} parent=0 // pred_check_branch
    %46 = sbr.rel (0) target = $region33
  $region32: #{vit_forward.1} parent=0 // pred_region
    _
  $region33: #{vit_forward.1} parent=0 // pred_fallthru
    _
  // Predicated region
  $region34: #{vit_forward.1} parent=0 // pred_check
    _
  $region35: #{vit_forward.1} parent=0 // pred_check_branch
    %48 = sbr.rel (0) target = $region37
  $region36: #{vit_forward.1} parent=0 // pred_region
    _
  $region37: #{vit_forward.1} parent=0 // pred_fallthru
    _
  // Predicated region
  $region38: #{vit_forward.1} parent=0 // pred_check
    _
  $region39: #{vit_forward.1} parent=0 // pred_check_branch
    %50 = sbr.rel (0) target = $region41
  $region40: #{vit_forward.1} parent=0 // pred_region
    _
  $region41: #{vit_forward.1} parent=0 // pred_fallthru
    _
  // Predicated region
  $region42: #{vit_forward.1} parent=0 // pred_check
    _
  $region43: #{vit_forward.1} parent=0 // pred_check_branch
    %52 = sbr.rel (0) target = $region45
  $region44: #{vit_forward.1} parent=0 // pred_region
    _
  $region45: #{vit_forward.1} parent=0 // pred_fallthru
    _
  // Predicated region
  $region46: #{vit_forward.1} parent=0 // pred_check
    _
  $region47: #{vit_forward.1} parent=0 // pred_check_branch
    %54 = sbr.rel (0) target = $region49
  $region48: #{vit_forward.1} parent=0 // pred_region
    _
  $region49: #{vit_forward.1} parent=0 // pred_fallthru
    _
  // Predicated region
  $region50: #{vit_forward.1} parent=0 // pred_check
    _
  $region51: #{vit_forward.1} parent=0 // pred_check_branch
    %56 = sbr.rel (0) target = $region53
  $region52: #{vit_forward.1} parent=0 // pred_region
    _
  $region53: #{vit_forward.1} parent=0 // pred_fallthru
    _
  // Predicated region
  $region54: #{vit_forward.1} parent=0 // pred_check
    _
  $region55: #{vit_forward.1} parent=0 // pred_check_branch
    %58 = sbr.rel (0) target = $region57
  $region56: #{vit_forward.1} parent=0 // pred_region
    _
  $region57: #{vit_forward.1} parent=0 // pred_fallthru
    _
  // Predicated region
  $region58: #{vit_forward.1} parent=0 // pred_check
    _
  $region59: #{vit_forward.1} parent=0 // pred_check_branch
    %60 = sbr.rel (0) target = $region61
  $region60: #{vit_forward.1} parent=0 // pred_region
    _
  $region61: #{vit_forward.1} parent=0 // pred_fallthru
    _
  // Predicated region
  $region62: #{vit_forward.1} parent=0 // pred_check
    _
  $region63: #{vit_forward.1} parent=0 // pred_check_branch
    %62 = sbr.rel (0) target = $region65
  $region64: #{vit_forward.1} parent=0 // pred_region
    _
  $region65: #{vit_forward.1} parent=0 // pred_fallthru
    _
  // Predicated region
  $region66: #{vit_forward.1} parent=0 // pred_check
    _
  $region67: #{vit_forward.1} parent=0 // pred_check_branch
    %64 = sbr.rel (0) target = $region69
  $region68: #{vit_forward.1} parent=0 // pred_region
    _
  $region69: #{vit_forward.1} parent=0 // pred_fallthru
    _
  // Predicated region
  $region70: #{vit_forward.1} parent=0 // pred_check
    _
  $region71: #{vit_forward.1} parent=0 // pred_check_branch
    %66 = sbr.rel (0) target = $region73
  $region72: #{vit_forward.1} parent=0 // pred_region
    _
  $region73: #{vit_forward.1} parent=0 // pred_fallthru
    _
  // Predicated region
  $region74: #{vit_forward.1} parent=0 // pred_check
    _
  $region75: #{vit_forward.1} parent=0 // pred_check_branch
    %68 = sbr.rel (0) target = $region77
  $region76: #{vit_forward.1} parent=0 // pred_region
    _
  $region77: #{vit_forward.1} parent=0 // pred_fallthru
    _
  // Predicated region
  $region78: #{vit_forward.1} parent=0 // pred_check
    _
  $region79: #{vit_forward.1} parent=0 // pred_check_branch
    %70 = sbr.rel (0) target = $region81
  $region80: #{vit_forward.1} parent=0 // pred_region
    _
  $region81: #{vit_forward.1} parent=0 // pred_fallthru
    _
  // Predicated region
  $region82: #{vit_forward.1} parent=0 // pred_check
    _
  $region83: #{vit_forward.1} parent=0 // pred_check_branch
    %72 = sbr.rel (0) target = $region85
  $region84: #{vit_forward.1} parent=0 // pred_region
    _
  $region85: #{vit_forward.1} parent=0 // pred_fallthru
    _
  // Predicated region
  $region86: #{vit_forward.1} parent=0 // pred_check
    _
  $region87: #{vit_forward.1} parent=0 // pred_check_branch
    %74 = sbr.rel (0) target = $region89
  $region88: #{vit_forward.1} parent=0 // pred_region
    _
  $region89: #{vit_forward.1} parent=0 // pred_fallthru
    _
  // Predicated region
  $region90: #{vit_forward.1} parent=0 // pred_check
    _
  $region91: #{vit_forward.1} parent=0 // pred_check_branch
    %76 = sbr.rel (0) target = $region93
  $region92: #{vit_forward.1} parent=0 // pred_region
    _
  $region93: #{vit_forward.1} parent=0 // pred_fallthru
    _
  // Predicated region
  $region94: #{vit_forward.1} parent=0 // pred_check
    _
  $region95: #{vit_forward.1} parent=0 // pred_check_branch
    %78 = sbr.rel (0) target = $region97
  $region96: #{vit_forward.1} parent=0 // pred_region
    _
  $region97: #{vit_forward.1} parent=0 // pred_fallthru
    _
  // Predicated region
  $region98: #{vit_forward.1} parent=0 // pred_check
    _
  $region99: #{vit_forward.1} parent=0 // pred_check_branch
    %80 = sbr.rel (0) target = $region101
  $region100: #{vit_forward.1} parent=0 // pred_region
    _
  $region101: #{vit_forward.1} parent=0 // pred_fallthru
    _
  // Predicated region
  $region102: #{vit_forward.1} parent=0 // pred_check
    _
  $region103: #{vit_forward.1} parent=0 // pred_check_branch
    %82 = sbr.rel (0) target = $region105
  $region104: #{vit_forward.1} parent=0 // pred_region
    _
  $region105: #{vit_forward.1} parent=0 // pred_fallthru
    _
  %v83 = vld [vmem:[%s0] sm:$0xff]
  %v84 = vld [vmem:[%s0 + $0x8] sm:$0xff]
  %v85 = vld [vmem:[%s0 + $0x10] sm:$0xff]
  %v86 = vld [vmem:[%s0 + $0x18] sm:$0xff]
  %v87 = vld [vmem:[%s0 + $0x20] sm:$0x3]
  %v88 = vld [vmem:[%s15] sm:$0xff]
  %v89 = vld [vmem:[%s15 + $0x8] sm:$0xff]
  %v90 = vld [vmem:[%s15 + $0x10] sm:$0xff]
  %v91 = vld [vmem:[%s15 + $0x18] sm:$0xff]
  %v92 = vld [vmem:[%s15 + $0x20] sm:$0xff]
  %v93 = vld [vmem:[%s15 + $0x28] sm:$0xff]
  %v94 = vld [vmem:[%s15 + $0x30] sm:$0xff]
  %v95 = vld [vmem:[%s15 + $0x38] sm:$0xff]
  %v96 = vld [vmem:[%s15 + $0x40] sm:$0xff]
  %v97 = vld [vmem:[%s15 + $0x48] sm:$0xff]
  %v98 = vld [vmem:[%s15 + $0x50] sm:$0xff]
  %v99 = vld [vmem:[%s15 + $0x58] sm:$0xff]
  %v100 = vld [vmem:[%s15 + $0x60] sm:$0xff]
  %v101 = vld [vmem:[%s15 + $0x68] sm:$0xff]
  %v102 = vld [vmem:[%s15 + $0x70] sm:$0xff]
  %v103 = vld [vmem:[%s15 + $0x78] sm:$0xff]
  %v104 = vld [vmem:[%s15 + $0x80] sm:$0xff]
  %v105 = vld [vmem:[%s15 + $0x88] sm:$0xff]
  %v106 = vld [vmem:[%s15 + $0x90] sm:$0xff]
  %v107 = vld [vmem:[%s15 + $0x98] sm:$0xff]
  %v108 = vld [vmem:[%s16] sm:$0xff]
  %v109 = vld [vmem:[%s16 + $0x8] sm:$0xff]
  %v110 = vld [vmem:[%s16 + $0x10] sm:$0xff]
  %v111 = vld [vmem:[%s16 + $0x18] sm:$0xff]
  %v112 = vld [vmem:[%s16 + $0x20] sm:$0xff]
  %v113 = vld [vmem:[%s16 + $0x28] sm:$0xff]
  %v114 = vld [vmem:[%s16 + $0x30] sm:$0xff]
  %v115 = vld [vmem:[%s16 + $0x38] sm:$0xff]
  %v116 = vld [vmem:[%s16 + $0x40] sm:$0xff]
  %v117 = vld [vmem:[%s16 + $0x48] sm:$0xff]
  %v118 = vld [vmem:[%s16 + $0x50] sm:$0x1]
  %v119 = vld [vmem:[%s16 + $0x58] sm:$0x1]
  %v120 = vld [vmem:[%s16 + $0x60] sm:$0x1]
  %v121 = vld [vmem:[%s16 + $0x68] sm:$0x1]
  %v122 = vld [vmem:[%s16 + $0x70] sm:$0x1]
  %v123 = vld [vmem:[%s17] sm:$0xff]
  %v124 = vld [vmem:[%s17 + $0x8] sm:$0xff]
  %v125 = vld [vmem:[%s17 + $0x10] sm:$0xff]
  %v126 = vld [vmem:[%s17 + $0x18] sm:$0xff]
  %v127 = vld [vmem:[%s17 + $0x20] sm:$0xff]
  %v128 = vld [vmem:[%s17 + $0x28] sm:$0xff]
  %v129 = vld [vmem:[%s17 + $0x30] sm:$0xff]
  %v130 = vld [vmem:[%s17 + $0x38] sm:$0xff]
  %v131 = vld [vmem:[%s17 + $0x40] sm:$0xff]
  %v132 = vld [vmem:[%s17 + $0x48] sm:$0xff]
  %v133 = vld [vmem:[%s17 + $0x50] sm:$0xff]
  %v134 = vld [vmem:[%s17 + $0x58] sm:$0xff]
  %v135 = vld [vmem:[%s17 + $0x60] sm:$0xff]
  %v136 = vld [vmem:[%s17 + $0x68] sm:$0xff]
  %v137 = vld [vmem:[%s17 + $0x70] sm:$0xff]
  %v138 = vld [vmem:[%s17 + $0x78] sm:$0xff]
  %v139 = vld [vmem:[%s17 + $0x80] sm:$0xff]
  %v140 = vld [vmem:[%s17 + $0x88] sm:$0xff]
  %v141 = vld [vmem:[%s17 + $0x90] sm:$0xff]
  %v142 = vld [vmem:[%s17 + $0x98] sm:$0xff]
  %v143 = vld [vmem:[%s18] sm:$0xff]
  %v144 = vld [vmem:[%s18 + $0x8] sm:$0xff]
  %v145 = vld [vmem:[%s18 + $0x10] sm:$0xff]
  %v146 = vld [vmem:[%s18 + $0x18] sm:$0xff]
  %v147 = vld [vmem:[%s18 + $0x20] sm:$0xff]
  %v148 = vld [vmem:[%s18 + $0x28] sm:$0xff]
  %v149 = vld [vmem:[%s18 + $0x30] sm:$0xff]
  %v150 = vld [vmem:[%s18 + $0x38] sm:$0xff]
  %v151 = vld [vmem:[%s18 + $0x40] sm:$0xff]
  %v152 = vld [vmem:[%s18 + $0x48] sm:$0xff]
  %v153 = vld [vmem:[%s18 + $0x50] sm:$0xff]
  %v154 = vld [vmem:[%s18 + $0x58] sm:$0xff]
  %v155 = vld [vmem:[%s18 + $0x60] sm:$0xff]
  %v156 = vld [vmem:[%s18 + $0x68] sm:$0xff]
  %v157 = vld [vmem:[%s18 + $0x70] sm:$0xff]
  %v158 = vld [vmem:[%s18 + $0x78] sm:$0xff]
  %v159 = vld [vmem:[%s18 + $0x80] sm:$0xff]
  %v160 = vld [vmem:[%s18 + $0x88] sm:$0xff]
  %v161 = vld [vmem:[%s18 + $0x90] sm:$0xff]
  %v162 = vld [vmem:[%s18 + $0x98] sm:$0xff]
  %v163 = vld [vmem:[%s18 + $0xa0] sm:$0xff]
  %v164 = vld [vmem:[%s18 + $0xa8] sm:$0xff]
  %v165 = vld [vmem:[%s18 + $0xb0] sm:$0xff]
  %v166 = vld [vmem:[%s18 + $0xb8] sm:$0xff]
  %v167 = vld [vmem:[%s18 + $0xc0] sm:$0xff]
  %v168 = vld [vmem:[%s18 + $0xc8] sm:$0xff]
  %v169 = vld [vmem:[%s18 + $0xd0] sm:$0xff]
  %v170 = vld [vmem:[%s18 + $0xd8] sm:$0xff]
  %v171 = vld [vmem:[%s18 + $0xe0] sm:$0xff]
  %v172 = vld [vmem:[%s18 + $0xe8] sm:$0xff]
  %v173 = vld [vmem:[%s18 + $0xf0] sm:$0xff]
  %v174 = vld [vmem:[%s18 + $0xf8] sm:$0xff]
  %v175 = vld [vmem:[%s18 + $0x100] sm:$0xff]
  %v176 = vld [vmem:[%s18 + $0x108] sm:$0xff]
  %v177 = vld [vmem:[%s18 + $0x110] sm:$0xff]
  %v178 = vld [vmem:[%s18 + $0x118] sm:$0xff]
  %v179 = vld [vmem:[%s18 + $0x120] sm:$0xff]
  %v180 = vld [vmem:[%s18 + $0x128] sm:$0xff]
  %v181 = vld [vmem:[%s18 + $0x130] sm:$0xff]
  %v182 = vld [vmem:[%s18 + $0x138] sm:$0xff]
  %v183 = vld [vmem:[%s18 + $0x140] sm:$0xff]
  %v184 = vld [vmem:[%s18 + $0x148] sm:$0xff]
  %v185 = vld [vmem:[%s18 + $0x150] sm:$0xff]
  %v186 = vld [vmem:[%s18 + $0x158] sm:$0xff]
  %v187 = vld [vmem:[%s18 + $0x160] sm:$0xff]
  %v188 = vld [vmem:[%s18 + $0x168] sm:$0xff]
  %v189 = vld [vmem:[%s18 + $0x170] sm:$0xff]
  %v190 = vld [vmem:[%s18 + $0x178] sm:$0xff]
  %v191 = vld [vmem:[%s18 + $0x180] sm:$0xff]
  %v192 = vld [vmem:[%s18 + $0x188] sm:$0xff]
  %v193 = vld [vmem:[%s18 + $0x190] sm:$0xff]
  %v194 = vld [vmem:[%s18 + $0x198] sm:$0xff]
  %v195 = vld [vmem:[%s18 + $0x1a0] sm:$0xff]
  %v196 = vld [vmem:[%s18 + $0x1a8] sm:$0xff]
  %v197 = vld [vmem:[%s18 + $0x1b0] sm:$0xff]
  %v198 = vld [vmem:[%s18 + $0x1b8] sm:$0xff]
  %v199 = vld [vmem:[%s18 + $0x1c0] sm:$0xff]
  %v200 = vld [vmem:[%s18 + $0x1c8] sm:$0xff]
  %v201 = vld [vmem:[%s18 + $0x1d0] sm:$0xff]
  %v202 = vld [vmem:[%s18 + $0x1d8] sm:$0xff]
  %v203 = vld [vmem:[%s18 + $0x1e0] sm:$0xff]
  %v204 = vld [vmem:[%s18 + $0x1e8] sm:$0xff]
  %v205 = vld [vmem:[%s18 + $0x1f0] sm:$0xff]
  %v206 = vld [vmem:[%s18 + $0x1f8] sm:$0xff]
  %v207 = vld [vmem:[%s18 + $0x200] sm:$0xff]
  %v208 = vld [vmem:[%s18 + $0x208] sm:$0xff]
  %v209 = vld [vmem:[%s18 + $0x210] sm:$0xff]
  %v210 = vld [vmem:[%s18 + $0x218] sm:$0xff]
  %v211 = vld [vmem:[%s19] sm:$0xff]
  %v212 = vld [vmem:[%s19 + $0x8] sm:$0xff]
  %v213 = vld [vmem:[%s19 + $0x10] sm:$0xff]
  %v214 = vld [vmem:[%s19 + $0x18] sm:$0xff]
  %v215 = vld [vmem:[%s19 + $0x20] sm:$0xff]
  %v216 = vld [vmem:[%s19 + $0x28] sm:$0xff]
  %v217 = vld [vmem:[%s19 + $0x30] sm:$0xff]
  %v218 = vld [vmem:[%s19 + $0x38] sm:$0xff]
  %v219 = vld [vmem:[%s19 + $0x40] sm:$0xf]
  %v220 = vld [vmem:[%s20] sm:$0xf]
  %v221 = vld [vmem:[%s21] sm:$0xff]
  %v222 = vld [vmem:[%s21 + $0x8] sm:$0xff]
  %v223 = vld [vmem:[%s21 + $0x10] sm:$0xff]
  %v224 = vld [vmem:[%s21 + $0x18] sm:$0xff]
  %v225 = vld [vmem:[%s21 + $0x20] sm:$0xff]
  %v226 = vld [vmem:[%s21 + $0x28] sm:$0xff]
  %v227 = vld [vmem:[%s21 + $0x30] sm:$0xff]
  %v228 = vld [vmem:[%s21 + $0x38] sm:$0xff]
  %v229 = vld [vmem:[%s21 + $0x40] sm:$0xf]
  %v230 = vld [vmem:[%s22] sm:$0xff]
  %v231 = vld [vmem:[%s22 + $0x8] sm:$0xff]
  %v232 = vld [vmem:[%s22 + $0x10] sm:$0xff]
  %v233 = vld [vmem:[%s22 + $0x18] sm:$0xff]
  %v234 = vld [vmem:[%s22 + $0x20] sm:$0xff]
  %v235 = vld [vmem:[%s22 + $0x28] sm:$0xff]
  %v236 = vld [vmem:[%s22 + $0x30] sm:$0xff]
  %v237 = vld [vmem:[%s22 + $0x38] sm:$0xff]
  %v238 = vld [vmem:[%s22 + $0x40] sm:$0xf]
  %v239 = vld [vmem:[%s1] sm:$0x1]
  %v240 = vld [vmem:[%s2] sm:$0x1]
  %vm241 = vcmask 392192
  %v242 = vsel %vm241, %v83, 0.0
  %243 = vadd.xlane.f32.xlu0 %v242
  %v244 = vpop.xlane.xlu0 %243
  %v245 = vsel %vm241, %v84, 0.0
  %246 = vadd.xlane.f32.xlu0 %v245
  %v247 = vpop.xlane.xlu0 %246
  %v248 = vsel %vm241, %v85, 0.0
  %249 = vadd.xlane.f32.xlu0 %v248
  %v250 = vpop.xlane.xlu0 %249
  %v251 = vsel %vm241, %v86, 0.0
  %252 = vadd.xlane.f32.xlu0 %v251
  %v253 = vpop.xlane.xlu0 %252
  %vm254 = vcmask 386048
  %v255 = vsel %vm254, %v87, 0.0
  %256 = vadd.xlane.f32.xlu0 %v255
  %v257 = vpop.xlane.xlu0 %256
  %v258 = vrcp.pop 48.0
  %v259 = vmul.f32 %v244, %v258
  %v260 = vmul.f32 %v247, %v258
  %v261 = vmul.f32 %v250, %v258
  %v262 = vmul.f32 %v253, %v258
  %v263 = vmul.f32 %v257, %v258
  %v264 = vmul.f32 %v83, %v83
  %v265 = vmul.f32 %v84, %v84
  %v266 = vmul.f32 %v85, %v85
  %v267 = vmul.f32 %v86, %v86
  %v268 = vmul.f32 %v87, %v87
  %v269 = vsel %vm241, %v264, 0.0
  %270 = vadd.xlane.f32.xlu0 %v269
  %v271 = vpop.xlane.xlu0 %270
  %v272 = vsel %vm241, %v265, 0.0
  %273 = vadd.xlane.f32.xlu0 %v272
  %v274 = vpop.xlane.xlu0 %273
  %v275 = vsel %vm241, %v266, 0.0
  %276 = vadd.xlane.f32.xlu0 %v275
  %v277 = vpop.xlane.xlu0 %276
  %v278 = vsel %vm241, %v267, 0.0
  %279 = vadd.xlane.f32.xlu0 %v278
  %v280 = vpop.xlane.xlu0 %279
  %v281 = vsel %vm254, %v268, 0.0
  %282 = vadd.xlane.f32.xlu0 %v281
  %v283 = vpop.xlane.xlu0 %282
  %v284 = vmul.f32 %v271, %v258
  %v285 = vmul.f32 %v274, %v258
  %v286 = vmul.f32 %v277, %v258
  %v287 = vmul.f32 %v280, %v258
  %v288 = vmul.f32 %v283, %v258
  %v289 = vmul.f32 %v259, %v259
  %v290 = vmul.f32 %v260, %v260
  %v291 = vmul.f32 %v261, %v261
  %v292 = vmul.f32 %v262, %v262
  %v293 = vmul.f32 %v263, %v263
  %v294 = vsub.f32 %v284, %v289
  %v295 = vsub.f32 %v285, %v290
  %v296 = vsub.f32 %v286, %v291
  %v297 = vsub.f32 %v287, %v292
  %v298 = vsub.f32 %v288, %v293
  %v299 = vsub.f32 %v83, %v259
  %v300 = vsub.f32 %v84, %v260
  %v301 = vsub.f32 %v85, %v261
  %v302 = vsub.f32 %v86, %v262
  %v303 = vsub.f32 %v87, %v263
  %v304 = vadd.f32 %v294, 1e-05
  %v305 = vadd.f32 %v295, 1e-05
  %v306 = vadd.f32 %v296, 1e-05
  %v307 = vadd.f32 %v297, 1e-05
  %v308 = vadd.f32 %v298, 1e-05
  %v309 = vrsqrt.pop %v304
  %v310 = vrsqrt.pop %v305
  %v311 = vrsqrt.pop %v306
  %v312 = vrsqrt.pop %v307
  %v313 = vrsqrt.pop %v308
  %v314 = vmul.f32 %v299, %v309
  %v315 = vmul.f32 %v300, %v310
  %v316 = vmul.f32 %v301, %v311
  %v317 = vmul.f32 %v302, %v312
  %v318 = vmul.f32 %v303, %v313
  %v320 = vlaneseq
  %v321 = vshrl.u32 %v320, 7
  %v322 = vsub.s32 0, %v321
  %v323 = vrot.slane %v239, %v322
  %v325 = vmul.f32 %v314, %v323
  %v326 = vmul.f32 %v315, %v323
  %v327 = vmul.f32 %v316, %v323
  %v328 = vmul.f32 %v317, %v323
  %v329 = vmul.f32 %v318, %v323
  %v331 = vlaneseq
  %v332 = vshrl.u32 %v331, 7
  %v333 = vsub.s32 0, %v332
  %v334 = vrot.slane %v240, %v333
  %v336 = vadd.f32 %v325, %v334
  %v337 = vadd.f32 %v326, %v334
  %v338 = vadd.f32 %v327, %v334
  %v339 = vadd.f32 %v328, %v334
  %v340 = vadd.f32 %v329, %v334
  %v341 = vld [vmem:[%s23] sm:$0xff]
  %v342 = vld [vmem:[%s23 + $0x8] sm:$0xff]
  %v343 = vld [vmem:[%s23 + $0x10] sm:$0x1]
  %vm344 = vcmask 277504
  %v346 = vsel %vm344, %v341, 0
  %v349 = vsel %vm344, %v342, 0
  %v352 = vsel %vm344, %v343, 0
  %vm354 = vcmask 1041408
  %v356 = vsel %vm354, %v340, 0
  %358 = vmatprep.subr.mxu0 0.0
  %359 = vmatpush1.msra.mxu0 %v336
  %360 = vmatprep.subr.mxu0 0.0
  %361 = vmatpush1.msra.mxu0 %v337
  %362 = vmatprep.subr.mxu0 0.0
  %363 = vmatpush1.msra.mxu0 %v338
  %364 = vmatprep.subr.mxu0 0.0
  %365 = vmatpush1.msra.mxu0 %v339
  %366 = vmatprep.subr.mxu0 0.0
  %367 = vmatpush1.msra.mxu0 %v356
  %368 = vmatprep.subr.mxu0 0.0
  %369 = vmatpush1.msra.mxu0 0.0
  %370 = vmatprep.subr.mxu0 0.0
  %371 = vmatpush1.msra.mxu0 0.0
  %372 = vmatprep.subr.mxu0 0.0
  %373 = vmatpush1.msra.mxu0 0.0
  %374 = vmatprep.subr.mxu0 0.0
  %375 = vmatpush1.msra.mxu0 0.0
  %376 = vmatprep.subr.mxu0 0.0
  %377 = vmatpush1.msra.mxu0 0.0
  %378 = vmatprep.subr.mxu0 0.0
  %379 = vmatpush1.msra.mxu0 0.0
  %380 = vmatprep.subr.mxu0 0.0
  %381 = vmatpush1.msra.mxu0 0.0
  %382 = vmatprep.subr.mxu0 0.0
  %383 = vmatpush1.msra.mxu0 0.0
  %384 = vmatprep.subr.mxu0 0.0
  %385 = vmatpush1.msra.mxu0 0.0
  %386 = vmatprep.subr.mxu0 0.0
  %387 = vmatpush1.msra.mxu0 0.0
  %388 = vmatprep.subr.mxu0 0.0
  %389 = vmatpush1.msra.mxu0 0.0
  %390 = vmatprep.subr.mxu0 0.0
  %391 = vmatpush1.msra.mxu0 0.0
  %392 = vmatprep.subr.mxu0 0.0
  %393 = vmatpush1.msra.mxu0 0.0
  %394 = vmatprep.subr.mxu0 0.0
  %395 = vmatpush1.msra.mxu0 0.0
  %396 = vmatprep.subr.mxu0 0.0
  %397 = vmatpush1.msra.mxu0 0.0
  %398 = vmatprep.subr.mxu0 0.0
  %399 = vmatpush1.msra.mxu0 0.0
  %400 = vmatprep.subr.mxu0 0.0
  %401 = vmatpush1.msra.mxu0 0.0
  %402 = vmatprep.subr.mxu0 0.0
  %403 = vmatpush1.msra.mxu0 0.0
  %404 = vmatprep.subr.mxu0 0.0
  %405 = vmatpush1.msra.mxu0 0.0
  %406 = vmatprep.subr.mxu0 0.0
  %407 = vmatpush1.msra.mxu0 0.0
  %408 = vmatprep.subr.mxu0 0.0
  %409 = vmatpush1.msra.mxu0 0.0
  %410 = vmatprep.subr.mxu0 0.0
  %411 = vmatpush1.msra.mxu0 0.0
  %412 = vmatprep.subr.mxu0 0.0
  %413 = vmatpush1.msra.mxu0 0.0
  %414 = vmatprep.subr.mxu0 0.0
  %415 = vmatpush1.msra.mxu0 0.0
  %416 = vmatprep.subr.mxu0 0.0
  %417 = vmatpush1.msra.mxu0 0.0
  %418 = vmatprep.subr.mxu0 0.0
  %419 = vmatpush1.msra.mxu0 0.0
  %420 = vmatprep.subr.mxu0 0.0
  %421 = vmatpush1.msra.mxu0 0.0
  %422 = vmatprep.mubr.f32.mxu0 0.0
  %423 = vmatmul.mubr.f32.gmra.mrb[0].mxu0 %v346
  %v424 = vpop.f32.mrb[0].mxu0
  %v425 = vadd.f32 0.0, %v424
  %v426 = vpop.f32.mrb[0].mxu0
  %427 = vmatprep.mubr.f32.mxu0 0.0
  %428 = vmatmul.mubr.f32.gmra.mrb[0].mxu0 %v349
  %v429 = vpop.f32.mrb[0].mxu0
  %v430 = vadd.f32 0.0, %v429
  %v431 = vpop.f32.mrb[0].mxu0
  %432 = vmatprep.mubr.f32.mxu0 0.0
  %433 = vmatmul.mubr.f32.gmra.mrb[0].mxu0 %v352
  %v434 = vpop.f32.mrb[0].mxu0
  %v435 = vadd.f32 0.0, %v434
  %v436 = vpop.f32.mrb[0].mxu0
  %437 = vdwg.mxu0
  %v438 = vld [vmem:[%s3] sm:$0xff]
  %v439 = vld [vmem:[%s3 + $0x8] sm:$0xff]
  %v440 = vld [vmem:[%s3 + $0x10] sm:$0xff]
  %v441 = vld [vmem:[%s3 + $0x18] sm:$0xff]
  %v442 = vld [vmem:[%s3 + $0x20] sm:$0xff]
  %v443 = vld [vmem:[%s3 + $0x28] sm:$0xff]
  %v445 = vsel %vm241, %v425, 0
  %v448 = vsel %vm241, %v430, 0
  %v451 = vsel %vm241, %v435, 0
  %453 = vmatprep.subr.mxu0 0.0
  %454 = vmatpush1.msra.mxu0 %v438
  %455 = vmatprep.subr.mxu0 0.0
  %456 = vmatpush1.msra.mxu0 %v439
  %457 = vmatprep.subr.mxu0 0.0
  %458 = vmatpush1.msra.mxu0 %v440
  %459 = vmatprep.subr.mxu0 0.0
  %460 = vmatpush1.msra.mxu0 %v441
  %461 = vmatprep.subr.mxu0 0.0
  %462 = vmatpush1.msra.mxu0 %v442
  %463 = vmatprep.subr.mxu0 0.0
  %464 = vmatpush1.msra.mxu0 %v443
  %465 = vmatprep.subr.mxu0 0.0
  %466 = vmatpush1.msra.mxu0 0.0
  %467 = vmatprep.subr.mxu0 0.0
  %468 = vmatpush1.msra.mxu0 0.0
  %469 = vmatprep.subr.mxu0 0.0
  %470 = vmatpush1.msra.mxu0 0.0
  %471 = vmatprep.subr.mxu0 0.0
  %472 = vmatpush1.msra.mxu0 0.0
  %473 = vmatprep.subr.mxu0 0.0
  %474 = vmatpush1.msra.mxu0 0.0
  %475 = vmatprep.subr.mxu0 0.0
  %476 = vmatpush1.msra.mxu0 0.0
  %477 = vmatprep.subr.mxu0 0.0
  %478 = vmatpush1.msra.mxu0 0.0
  %479 = vmatprep.subr.mxu0 0.0
  %480 = vmatpush1.msra.mxu0 0.0
  %481 = vmatprep.subr.mxu0 0.0
  %482 = vmatpush1.msra.mxu0 0.0
  %483 = vmatprep.subr.mxu0 0.0
  %484 = vmatpush1.msra.mxu0 0.0
  %485 = vmatprep.subr.mxu0 0.0
  %486 = vmatpush1.msra.mxu0 0.0
  %487 = vmatprep.subr.mxu0 0.0
  %488 = vmatpush1.msra.mxu0 0.0
  %489 = vmatprep.subr.mxu0 0.0
  %490 = vmatpush1.msra.mxu0 0.0
  %491 = vmatprep.subr.mxu0 0.0
  %492 = vmatpush1.msra.mxu0 0.0
  %493 = vmatprep.subr.mxu0 0.0
  %494 = vmatpush1.msra.mxu0 0.0
  %495 = vmatprep.subr.mxu0 0.0
  %496 = vmatpush1.msra.mxu0 0.0
  %497 = vmatprep.subr.mxu0 0.0
  %498 = vmatpush1.msra.mxu0 0.0
  %499 = vmatprep.subr.mxu0 0.0
  %500 = vmatpush1.msra.mxu0 0.0
  %501 = vmatprep.subr.mxu0 0.0
  %502 = vmatpush1.msra.mxu0 0.0
  %503 = vmatprep.subr.mxu0 0.0
  %504 = vmatpush1.msra.mxu0 0.0
  %505 = vmatprep.subr.mxu0 0.0
  %506 = vmatpush1.msra.mxu0 0.0
  %507 = vmatprep.subr.mxu0 0.0
  %508 = vmatpush1.msra.mxu0 0.0
  %509 = vmatprep.subr.mxu0 0.0
  %510 = vmatpush1.msra.mxu0 0.0
  %511 = vmatprep.subr.mxu0 0.0
  %512 = vmatpush1.msra.mxu0 0.0
  %513 = vmatprep.subr.mxu0 0.0
  %514 = vmatpush1.msra.mxu0 0.0
  %515 = vmatprep.subr.mxu0 0.0
  %516 = vmatpush1.msra.mxu0 0.0
  %517 = vmatprep.mubr.f32.mxu0 0.0
  %518 = vmatmul.mubr.f32.gmra.mrb[0].mxu0 %v445
  %v519 = vpop.f32.mrb[0].mxu0
  %v520 = vadd.f32 0.0, %v519
  %v521 = vpop.f32.mrb[0].mxu0
  %522 = vmatprep.mubr.f32.mxu0 0.0
  %523 = vmatmul.mubr.f32.gmra.mrb[0].mxu0 %v448
  %v524 = vpop.f32.mrb[0].mxu0
  %v525 = vadd.f32 0.0, %v524
  %v526 = vpop.f32.mrb[0].mxu0
  %527 = vmatprep.mubr.f32.mxu0 0.0
  %528 = vmatmul.mubr.f32.gmra.mrb[0].mxu0 %v451
  %v529 = vpop.f32.mrb[0].mxu0
  %v530 = vadd.f32 0.0, %v529
  %v531 = vpop.f32.mrb[0].mxu0
  %532 = vdwg.mxu0
  %v533 = vld [vmem:[%s4] sm:$0xff]
  %v534 = vld [vmem:[%s4 + $0x8] sm:$0xff]
  %v535 = vld [vmem:[%s4 + $0x10] sm:$0xff]
  %v536 = vld [vmem:[%s4 + $0x18] sm:$0xff]
  %v537 = vld [vmem:[%s4 + $0x20] sm:$0xff]
  %v538 = vld [vmem:[%s4 + $0x28] sm:$0xff]
  %539 = vmatprep.subr.mxu0 0.0
  %540 = vmatpush1.msra.mxu0 %v533
  %541 = vmatprep.subr.mxu0 0.0
  %542 = vmatpush1.msra.mxu0 %v534
  %543 = vmatprep.subr.mxu0 0.0
  %544 = vmatpush1.msra.mxu0 %v535
  %545 = vmatprep.subr.mxu0 0.0
  %546 = vmatpush1.msra.mxu0 %v536
  %547 = vmatprep.subr.mxu0 0.0
  %548 = vmatpush1.msra.mxu0 %v537
  %549 = vmatprep.subr.mxu0 0.0
  %550 = vmatpush1.msra.mxu0 %v538
  %551 = vmatprep.subr.mxu0 0.0
  %552 = vmatpush1.msra.mxu0 0.0
  %553 = vmatprep.subr.mxu0 0.0
  %554 = vmatpush1.msra.mxu0 0.0
  %555 = vmatprep.subr.mxu0 0.0
  %556 = vmatpush1.msra.mxu0 0.0
  %557 = vmatprep.subr.mxu0 0.0
  %558 = vmatpush1.msra.mxu0 0.0
  %559 = vmatprep.subr.mxu0 0.0
  %560 = vmatpush1.msra.mxu0 0.0
  %561 = vmatprep.subr.mxu0 0.0
  %562 = vmatpush1.msra.mxu0 0.0
  %563 = vmatprep.subr.mxu0 0.0
  %564 = vmatpush1.msra.mxu0 0.0
  %565 = vmatprep.subr.mxu0 0.0
  %566 = vmatpush1.msra.mxu0 0.0
  %567 = vmatprep.subr.mxu0 0.0
  %568 = vmatpush1.msra.mxu0 0.0
  %569 = vmatprep.subr.mxu0 0.0
  %570 = vmatpush1.msra.mxu0 0.0
  %571 = vmatprep.subr.mxu0 0.0
  %572 = vmatpush1.msra.mxu0 0.0
  %573 = vmatprep.subr.mxu0 0.0
  %574 = vmatpush1.msra.mxu0 0.0
  %575 = vmatprep.subr.mxu0 0.0
  %576 = vmatpush1.msra.mxu0 0.0
  %577 = vmatprep.subr.mxu0 0.0
  %578 = vmatpush1.msra.mxu0 0.0
  %579 = vmatprep.subr.mxu0 0.0
  %580 = vmatpush1.msra.mxu0 0.0
  %581 = vmatprep.subr.mxu0 0.0
  %582 = vmatpush1.msra.mxu0 0.0
  %583 = vmatprep.subr.mxu0 0.0
  %584 = vmatpush1.msra.mxu0 0.0
  %585 = vmatprep.subr.mxu0 0.0
  %586 = vmatpush1.msra.mxu0 0.0
  %587 = vmatprep.subr.mxu0 0.0
  %588 = vmatpush1.msra.mxu0 0.0
  %589 = vmatprep.subr.mxu0 0.0
  %590 = vmatpush1.msra.mxu0 0.0
  %591 = vmatprep.subr.mxu0 0.0
  %592 = vmatpush1.msra.mxu0 0.0
  %593 = vmatprep.subr.mxu0 0.0
  %594 = vmatpush1.msra.mxu0 0.0
  %595 = vmatprep.subr.mxu0 0.0
  %596 = vmatpush1.msra.mxu0 0.0
  %597 = vmatprep.subr.mxu0 0.0
  %598 = vmatpush1.msra.mxu0 0.0
  %599 = vmatprep.subr.mxu0 0.0
  %600 = vmatpush1.msra.mxu0 0.0
  %601 = vmatprep.subr.mxu0 0.0
  %602 = vmatpush1.msra.mxu0 0.0
  %603 = vmatprep.mubr.f32.mxu0 0.0
  %604 = vmatmul.mubr.f32.gmra.mrb[0].mxu0 %v445
  %v605 = vpop.f32.mrb[0].mxu0
  %v606 = vadd.f32 0.0, %v605
  %v607 = vpop.f32.mrb[0].mxu0
  %608 = vmatprep.mubr.f32.mxu0 0.0
  %609 = vmatmul.mubr.f32.gmra.mrb[0].mxu0 %v448
  %v610 = vpop.f32.mrb[0].mxu0
  %v611 = vadd.f32 0.0, %v610
  %v612 = vpop.f32.mrb[0].mxu0
  %613 = vmatprep.mubr.f32.mxu0 0.0
  %614 = vmatmul.mubr.f32.gmra.mrb[0].mxu0 %v451
  %v615 = vpop.f32.mrb[0].mxu0
  %v616 = vadd.f32 0.0, %v615
  %v617 = vpop.f32.mrb[0].mxu0
  %618 = vdwg.mxu0
  %v619 = vld [vmem:[%s5] sm:$0xff]
  %v620 = vld [vmem:[%s5 + $0x8] sm:$0xff]
  %v621 = vld [vmem:[%s5 + $0x10] sm:$0xff]
  %v622 = vld [vmem:[%s5 + $0x18] sm:$0xff]
  %v623 = vld [vmem:[%s5 + $0x20] sm:$0xff]
  %v624 = vld [vmem:[%s5 + $0x28] sm:$0xff]
  %625 = vmatprep.subr.mxu0 0.0
  %626 = vmatpush1.msra.mxu0 %v619
  %627 = vmatprep.subr.mxu0 0.0
  %628 = vmatpush1.msra.mxu0 %v620
  %629 = vmatprep.subr.mxu0 0.0
  %630 = vmatpush1.msra.mxu0 %v621
  %631 = vmatprep.subr.mxu0 0.0
  %632 = vmatpush1.msra.mxu0 %v622
  %633 = vmatprep.subr.mxu0 0.0
  %634 = vmatpush1.msra.mxu0 %v623
  %635 = vmatprep.subr.mxu0 0.0
  %636 = vmatpush1.msra.mxu0 %v624
  %637 = vmatprep.subr.mxu0 0.0
  %638 = vmatpush1.msra.mxu0 0.0
  %639 = vmatprep.subr.mxu0 0.0
  %640 = vmatpush1.msra.mxu0 0.0
  %641 = vmatprep.subr.mxu0 0.0
  %642 = vmatpush1.msra.mxu0 0.0
  %643 = vmatprep.subr.mxu0 0.0
  %644 = vmatpush1.msra.mxu0 0.0
  %645 = vmatprep.subr.mxu0 0.0
  %646 = vmatpush1.msra.mxu0 0.0
  %647 = vmatprep.subr.mxu0 0.0
  %648 = vmatpush1.msra.mxu0 0.0
  %649 = vmatprep.subr.mxu0 0.0
  %650 = vmatpush1.msra.mxu0 0.0
  %651 = vmatprep.subr.mxu0 0.0
  %652 = vmatpush1.msra.mxu0 0.0
  %653 = vmatprep.subr.mxu0 0.0
  %654 = vmatpush1.msra.mxu0 0.0
  %655 = vmatprep.subr.mxu0 0.0
  %656 = vmatpush1.msra.mxu0 0.0
  %657 = vmatprep.subr.mxu0 0.0
  %658 = vmatpush1.msra.mxu0 0.0
  %659 = vmatprep.subr.mxu0 0.0
  %660 = vmatpush1.msra.mxu0 0.0
  %661 = vmatprep.subr.mxu0 0.0
  %662 = vmatpush1.msra.mxu0 0.0
  %663 = vmatprep.subr.mxu0 0.0
  %664 = vmatpush1.msra.mxu0 0.0
  %665 = vmatprep.subr.mxu0 0.0
  %666 = vmatpush1.msra.mxu0 0.0
  %667 = vmatprep.subr.mxu0 0.0
  %668 = vmatpush1.msra.mxu0 0.0
  %669 = vmatprep.subr.mxu0 0.0
  %670 = vmatpush1.msra.mxu0 0.0
  %671 = vmatprep.subr.mxu0 0.0
  %672 = vmatpush1.msra.mxu0 0.0
  %673 = vmatprep.subr.mxu0 0.0
  %674 = vmatpush1.msra.mxu0 0.0
  %675 = vmatprep.subr.mxu0 0.0
  %676 = vmatpush1.msra.mxu0 0.0
  %677 = vmatprep.subr.mxu0 0.0
  %678 = vmatpush1.msra.mxu0 0.0
  %679 = vmatprep.subr.mxu0 0.0
  %680 = vmatpush1.msra.mxu0 0.0
  %681 = vmatprep.subr.mxu0 0.0
  %682 = vmatpush1.msra.mxu0 0.0
  %683 = vmatprep.subr.mxu0 0.0
  %684 = vmatpush1.msra.mxu0 0.0
  %685 = vmatprep.subr.mxu0 0.0
  %686 = vmatpush1.msra.mxu0 0.0
  %687 = vmatprep.subr.mxu0 0.0
  %688 = vmatpush1.msra.mxu0 0.0
  %689 = vmatprep.mubr.f32.mxu0 0.0
  %690 = vmatmul.mubr.f32.gmra.mrb[0].mxu0 %v445
  %v691 = vpop.f32.mrb[0].mxu0
  %v692 = vadd.f32 0.0, %v691
  %v693 = vpop.f32.mrb[0].mxu0
  %694 = vmatprep.mubr.f32.mxu0 0.0
  %695 = vmatmul.mubr.f32.gmra.mrb[0].mxu0 %v448
  %v696 = vpop.f32.mrb[0].mxu0
  %v697 = vadd.f32 0.0, %v696
  %v698 = vpop.f32.mrb[0].mxu0
  %699 = vmatprep.mubr.f32.mxu0 0.0
  %700 = vmatmul.mubr.f32.gmra.mrb[0].mxu0 %v451
  %v701 = vpop.f32.mrb[0].mxu0
  %v702 = vadd.f32 0.0, %v701
  %v703 = vpop.f32.mrb[0].mxu0
  %704 = vdwg.mxu0
  %vm705 = vcmask 261120
  %v707 = vsel %vm705, %v606, 0
  %v710 = vsel %vm705, %v611, 0
  %v713 = vsel %vm705, %v616, 0
  %715 = vmatprep.subr.mxu0 %v89
  %716 = vmatpush1.msra.mxu0 %v88
  %717 = vmatprep.subr.mxu0 %v94
  %718 = vmatpush1.msra.mxu0 %v93
  %719 = vmatprep.subr.mxu0 %v99
  %720 = vmatpush1.msra.mxu0 %v98
  %721 = vmatprep.subr.mxu0 %v104
  %722 = vmatpush1.msra.mxu0 %v103
  %723 = vmatprep.subr.mxu0 0.0
  %724 = vmatpush1.msra.mxu0 0.0
  %725 = vmatprep.subr.mxu0 0.0
  %726 = vmatpush1.msra.mxu0 0.0
  %727 = vmatprep.subr.mxu0 0.0
  %728 = vmatpush1.msra.mxu0 0.0
  %729 = vmatprep.subr.mxu0 0.0
  %730 = vmatpush1.msra.mxu0 0.0
  %731 = vmatprep.subr.mxu0 0.0
  %732 = vmatpush1.msra.mxu0 0.0
  %733 = vmatprep.subr.mxu0 0.0
  %734 = vmatpush1.msra.mxu0 0.0
  %735 = vmatprep.subr.mxu0 0.0
  %736 = vmatpush1.msra.mxu0 0.0
  %737 = vmatprep.subr.mxu0 0.0
  %738 = vmatpush1.msra.mxu0 0.0
  %739 = vmatprep.subr.mxu0 0.0
  %740 = vmatpush1.msra.mxu0 0.0
  %741 = vmatprep.subr.mxu0 0.0
  %742 = vmatpush1.msra.mxu0 0.0
  %743 = vmatprep.subr.mxu0 0.0
  %744 = vmatpush1.msra.mxu0 0.0
  %745 = vmatprep.subr.mxu0 0.0
  %746 = vmatpush1.msra.mxu0 0.0
  %747 = vmatprep.subr.mxu0 0.0
  %748 = vmatpush1.msra.mxu0 0.0
  %749 = vmatprep.subr.mxu0 0.0
  %750 = vmatpush1.msra.mxu0 0.0
  %751 = vmatprep.subr.mxu0 0.0
  %752 = vmatpush1.msra.mxu0 0.0
  %753 = vmatprep.subr.mxu0 0.0
  %754 = vmatpush1.msra.mxu0 0.0
  %755 = vmatprep.subr.mxu0 0.0
  %756 = vmatpush1.msra.mxu0 0.0
  %757 = vmatprep.subr.mxu0 0.0
  %758 = vmatpush1.msra.mxu0 0.0
  %759 = vmatprep.subr.mxu0 0.0
  %760 = vmatpush1.msra.mxu0 0.0
  %761 = vmatprep.subr.mxu0 0.0
  %762 = vmatpush1.msra.mxu0 0.0
  %763 = vmatprep.subr.mxu0 0.0
  %764 = vmatpush1.msra.mxu0 0.0
  %765 = vmatprep.subr.mxu0 0.0
  %766 = vmatpush1.msra.mxu0 0.0
  %767 = vmatprep.subr.mxu0 0.0
  %768 = vmatpush1.msra.mxu0 0.0
  %769 = vmatprep.subr.mxu0 0.0
  %770 = vmatpush1.msra.mxu0 0.0
  %771 = vmatprep.subr.mxu0 0.0
  %772 = vmatpush1.msra.mxu0 0.0
  %773 = vmatprep.subr.mxu0 0.0
  %774 = vmatpush1.msra.mxu0 0.0
  %775 = vmatprep.subr.mxu0 0.0
  %776 = vmatpush1.msra.mxu0 0.0
  %777 = vmatprep.subr.mxu0 0.0
  %778 = vmatpush1.msra.mxu0 0.0
  %779 = vmatprep.mubr.f32.mxu0 0.0
  %780 = vmatmul.mubr.f32.gmra.mrb[0].mxu0 %v707
  %v781 = vpop.f32.mrb[0].mxu0
  %v782 = vadd.f32 0.0, %v781
  %v783 = vpop.f32.mrb[0].mxu0
  %v784 = vadd.f32 0.0, %v783
  %785 = vmatprep.mubr.f32.mxu0 0.0
  %786 = vmatmul.mubr.f32.gmra.mrb[0].mxu0 %v710
  %v787 = vpop.f32.mrb[0].mxu0
  %v788 = vadd.f32 0.0, %v787
  %v789 = vpop.f32.mrb[0].mxu0
  %v790 = vadd.f32 0.0, %v789
  %791 = vmatprep.mubr.f32.mxu0 0.0
  %792 = vmatmul.mubr.f32.gmra.mrb[0].mxu0 %v713
  %v793 = vpop.f32.mrb[0].mxu0
  %v794 = vadd.f32 0.0, %v793
  %v795 = vpop.f32.mrb[0].mxu0
  %v796 = vadd.f32 0.0, %v795
  %797 = vdwg.mxu0
  %798 = vmatprep.subr.mxu0 %v91
  %799 = vmatpush1.msra.mxu0 %v90
  %800 = vmatprep.subr.mxu0 %v96
  %801 = vmatpush1.msra.mxu0 %v95
  %802 = vmatprep.subr.mxu0 %v101
  %803 = vmatpush1.msra.mxu0 %v100
  %804 = vmatprep.subr.mxu0 %v106
  %805 = vmatpush1.msra.mxu0 %v105
  %806 = vmatprep.subr.mxu0 0.0
  %807 = vmatpush1.msra.mxu0 0.0
  %808 = vmatprep.subr.mxu0 0.0
  %809 = vmatpush1.msra.mxu0 0.0
  %810 = vmatprep.subr.mxu0 0.0
  %811 = vmatpush1.msra.mxu0 0.0
  %812 = vmatprep.subr.mxu0 0.0
  %813 = vmatpush1.msra.mxu0 0.0
  %814 = vmatprep.subr.mxu0 0.0
  %815 = vmatpush1.msra.mxu0 0.0
  %816 = vmatprep.subr.mxu0 0.0
  %817 = vmatpush1.msra.mxu0 0.0
  %818 = vmatprep.subr.mxu0 0.0
  %819 = vmatpush1.msra.mxu0 0.0
  %820 = vmatprep.subr.mxu0 0.0
  %821 = vmatpush1.msra.mxu0 0.0
  %822 = vmatprep.subr.mxu0 0.0
  %823 = vmatpush1.msra.mxu0 0.0
  %824 = vmatprep.subr.mxu0 0.0
  %825 = vmatpush1.msra.mxu0 0.0
  %826 = vmatprep.subr.mxu0 0.0
  %827 = vmatpush1.msra.mxu0 0.0
  %828 = vmatprep.subr.mxu0 0.0
  %829 = vmatpush1.msra.mxu0 0.0
  %830 = vmatprep.subr.mxu0 0.0
  %831 = vmatpush1.msra.mxu0 0.0
  %832 = vmatprep.subr.mxu0 0.0
  %833 = vmatpush1.msra.mxu0 0.0
  %834 = vmatprep.subr.mxu0 0.0
  %835 = vmatpush1.msra.mxu0 0.0
  %836 = vmatprep.subr.mxu0 0.0
  %837 = vmatpush1.msra.mxu0 0.0
  %838 = vmatprep.subr.mxu0 0.0
  %839 = vmatpush1.msra.mxu0 0.0
  %840 = vmatprep.subr.mxu0 0.0
  %841 = vmatpush1.msra.mxu0 0.0
  %842 = vmatprep.subr.mxu0 0.0
  %843 = vmatpush1.msra.mxu0 0.0
  %844 = vmatprep.subr.mxu0 0.0
  %845 = vmatpush1.msra.mxu0 0.0
  %846 = vmatprep.subr.mxu0 0.0
  %847 = vmatpush1.msra.mxu0 0.0
  %848 = vmatprep.subr.mxu0 0.0
  %849 = vmatpush1.msra.mxu0 0.0
  %850 = vmatprep.subr.mxu0 0.0
  %851 = vmatpush1.msra.mxu0 0.0
  %852 = vmatprep.subr.mxu0 0.0
  %853 = vmatpush1.msra.mxu0 0.0
  %854 = vmatprep.subr.mxu0 0.0
  %855 = vmatpush1.msra.mxu0 0.0
  %856 = vmatprep.subr.mxu0 0.0
  %857 = vmatpush1.msra.mxu0 0.0
  %858 = vmatprep.subr.mxu0 0.0
  %859 = vmatpush1.msra.mxu0 0.0
  %860 = vmatprep.subr.mxu0 0.0
  %861 = vmatpush1.msra.mxu0 0.0
  %862 = vmatprep.mubr.f32.mxu0 0.0
  %863 = vmatmul.mubr.f32.gmra.mrb[0].mxu0 %v707
  %v864 = vpop.f32.mrb[0].mxu0
  %v865 = vadd.f32 0.0, %v864
  %v866 = vpop.f32.mrb[0].mxu0
  %v867 = vadd.f32 0.0, %v866
  %868 = vmatprep.mubr.f32.mxu0 0.0
  %869 = vmatmul.mubr.f32.gmra.mrb[0].mxu0 %v710
  %v870 = vpop.f32.mrb[0].mxu0
  %v871 = vadd.f32 0.0, %v870
  %v872 = vpop.f32.mrb[0].mxu0
  %v873 = vadd.f32 0.0, %v872
  %874 = vmatprep.mubr.f32.mxu0 0.0
  %875 = vmatmul.mubr.f32.gmra.mrb[0].mxu0 %v713
  %v876 = vpop.f32.mrb[0].mxu0
  %v877 = vadd.f32 0.0, %v876
  %v878 = vpop.f32.mrb[0].mxu0
  %v879 = vadd.f32 0.0, %v878
  %880 = vdwg.mxu0
  %881 = vmatprep.subr.mxu0 0.0
  %882 = vmatpush1.msra.mxu0 %v92
  %883 = vmatprep.subr.mxu0 0.0
  %884 = vmatpush1.msra.mxu0 %v97
  %885 = vmatprep.subr.mxu0 0.0
  %886 = vmatpush1.msra.mxu0 %v102
  %887 = vmatprep.subr.mxu0 0.0
  %888 = vmatpush1.msra.mxu0 %v107
  %889 = vmatprep.subr.mxu0 0.0
  %890 = vmatpush1.msra.mxu0 0.0
  %891 = vmatprep.subr.mxu0 0.0
  %892 = vmatpush1.msra.mxu0 0.0
  %893 = vmatprep.subr.mxu0 0.0
  %894 = vmatpush1.msra.mxu0 0.0
  %895 = vmatprep.subr.mxu0 0.0
  %896 = vmatpush1.msra.mxu0 0.0
  %897 = vmatprep.subr.mxu0 0.0
  %898 = vmatpush1.msra.mxu0 0.0
  %899 = vmatprep.subr.mxu0 0.0
  %900 = vmatpush1.msra.mxu0 0.0
  %901 = vmatprep.subr.mxu0 0.0
  %902 = vmatpush1.msra.mxu0 0.0
  %903 = vmatprep.subr.mxu0 0.0
  %904 = vmatpush1.msra.mxu0 0.0
  %905 = vmatprep.subr.mxu0 0.0
  %906 = vmatpush1.msra.mxu0 0.0
  %907 = vmatprep.subr.mxu0 0.0
  %908 = vmatpush1.msra.mxu0 0.0
  %909 = vmatprep.subr.mxu0 0.0
  %910 = vmatpush1.msra.mxu0 0.0
  %911 = vmatprep.subr.mxu0 0.0
  %912 = vmatpush1.msra.mxu0 0.0
  %913 = vmatprep.subr.mxu0 0.0
  %914 = vmatpush1.msra.mxu0 0.0
  %915 = vmatprep.subr.mxu0 0.0
  %916 = vmatpush1.msra.mxu0 0.0
  %917 = vmatprep.subr.mxu0 0.0
  %918 = vmatpush1.msra.mxu0 0.0
  %919 = vmatprep.subr.mxu0 0.0
  %920 = vmatpush1.msra.mxu0 0.0
  %921 = vmatprep.subr.mxu0 0.0
  %922 = vmatpush1.msra.mxu0 0.0
  %923 = vmatprep.subr.mxu0 0.0
  %924 = vmatpush1.msra.mxu0 0.0
  %925 = vmatprep.subr.mxu0 0.0
  %926 = vmatpush1.msra.mxu0 0.0
  %927 = vmatprep.subr.mxu0 0.0
  %928 = vmatpush1.msra.mxu0 0.0
  %929 = vmatprep.subr.mxu0 0.0
  %930 = vmatpush1.msra.mxu0 0.0
  %931 = vmatprep.subr.mxu0 0.0
  %932 = vmatpush1.msra.mxu0 0.0
  %933 = vmatprep.subr.mxu0 0.0
  %934 = vmatpush1.msra.mxu0 0.0
  %935 = vmatprep.subr.mxu0 0.0
  %936 = vmatpush1.msra.mxu0 0.0
  %937 = vmatprep.subr.mxu0 0.0
  %938 = vmatpush1.msra.mxu0 0.0
  %939 = vmatprep.subr.mxu0 0.0
  %940 = vmatpush1.msra.mxu0 0.0
  %941 = vmatprep.subr.mxu0 0.0
  %942 = vmatpush1.msra.mxu0 0.0
  %943 = vmatprep.subr.mxu0 0.0
  %944 = vmatpush1.msra.mxu0 0.0
  %945 = vmatprep.mubr.f32.mxu0 0.0
  %946 = vmatmul.mubr.f32.gmra.mrb[0].mxu0 %v707
  %v947 = vpop.f32.mrb[0].mxu0
  %v948 = vadd.f32 0.0, %v947
  %v949 = vpop.f32.mrb[0].mxu0
  %950 = vmatprep.mubr.f32.mxu0 0.0
  %951 = vmatmul.mubr.f32.gmra.mrb[0].mxu0 %v710
  %v952 = vpop.f32.mrb[0].mxu0
  %v953 = vadd.f32 0.0, %v952
  %v954 = vpop.f32.mrb[0].mxu0
  %955 = vmatprep.mubr.f32.mxu0 0.0
  %956 = vmatmul.mubr.f32.gmra.mrb[0].mxu0 %v713
  %v957 = vpop.f32.mrb[0].mxu0
  %v958 = vadd.f32 0.0, %v957
  %v959 = vpop.f32.mrb[0].mxu0
  %960 = vdwg.mxu0
  %v961 = vmul.f32 %v782, %v108
  %v962 = vmul.f32 %v784, %v109
  %v963 = vmul.f32 %v865, %v110
  %v964 = vmul.f32 %v867, %v111
  %v965 = vmul.f32 %v948, %v112
  %v966 = vmul.f32 %v788, %v113
  %v967 = vmul.f32 %v790, %v114
  %v968 = vmul.f32 %v871, %v115
  %v969 = vmul.f32 %v873, %v116
  %v970 = vmul.f32 %v953, %v117
  %v971 = vmul.f32 %v794, %v118
  %v972 = vmul.f32 %v796, %v119
  %v973 = vmul.f32 %v877, %v120
  %v974 = vmul.f32 %v879, %v121
  %v975 = vmul.f32 %v958, %v122
  %vm976 = vcmask 138240
  %v978 = vsel %vm976, 1.0, 0
  %vm980 = vcmask 1040384
  %v982 = vsel %vm980, %v971, 0
  %v985 = vsel %vm980, %v972, 0
  %v988 = vsel %vm980, %v973, 0
  %v991 = vsel %vm980, %v974, 0
  %v994 = vsel %vm980, %v975, 0
  %996 = vmatprep.subr.mxu0 %v962
  %997 = vmatpush1.msra.mxu0 %v961
  %998 = vmatprep.subr.mxu0 %v967
  %999 = vmatpush1.msra.mxu0 %v966
  %1000 = vmatprep.subr.mxu0 %v985
  %1001 = vmatpush1.msra.mxu0 %v982
  %1002 = vmatprep.subr.mxu0 0.0
  %1003 = vmatpush1.msra.mxu0 0.0
  %1004 = vmatprep.subr.mxu0 0.0
  %1005 = vmatpush1.msra.mxu0 0.0
  %1006 = vmatprep.subr.mxu0 0.0
  %1007 = vmatpush1.msra.mxu0 0.0
  %1008 = vmatprep.subr.mxu0 0.0
  %1009 = vmatpush1.msra.mxu0 0.0
  %1010 = vmatprep.subr.mxu0 0.0
  %1011 = vmatpush1.msra.mxu0 0.0
  %1012 = vmatprep.subr.mxu0 0.0
  %1013 = vmatpush1.msra.mxu0 0.0
  %1014 = vmatprep.subr.mxu0 0.0
  %1015 = vmatpush1.msra.mxu0 0.0
  %1016 = vmatprep.subr.mxu0 0.0
  %1017 = vmatpush1.msra.mxu0 0.0
  %1018 = vmatprep.subr.mxu0 0.0
  %1019 = vmatpush1.msra.mxu0 0.0
  %1020 = vmatprep.subr.mxu0 0.0
  %1021 = vmatpush1.msra.mxu0 0.0
  %1022 = vmatprep.subr.mxu0 0.0
  %1023 = vmatpush1.msra.mxu0 0.0
  %1024 = vmatprep.subr.mxu0 0.0
  %1025 = vmatpush1.msra.mxu0 0.0
  %1026 = vmatprep.subr.mxu0 0.0
  %1027 = vmatpush1.msra.mxu0 0.0
  %1028 = vmatprep.subr.mxu0 0.0
  %1029 = vmatpush1.msra.mxu0 0.0
  %1030 = vmatprep.subr.mxu0 0.0
  %1031 = vmatpush1.msra.mxu0 0.0
  %1032 = vmatprep.subr.mxu0 0.0
  %1033 = vmatpush1.msra.mxu0 0.0
  %1034 = vmatprep.subr.mxu0 0.0
  %1035 = vmatpush1.msra.mxu0 0.0
  %1036 = vmatprep.subr.mxu0 0.0
  %1037 = vmatpush1.msra.mxu0 0.0
  %1038 = vmatprep.subr.mxu0 0.0
  %1039 = vmatpush1.msra.mxu0 0.0
  %1040 = vmatprep.subr.mxu0 0.0
  %1041 = vmatpush1.msra.mxu0 0.0
  %1042 = vmatprep.subr.mxu0 0.0
  %1043 = vmatpush1.msra.mxu0 0.0
  %1044 = vmatprep.subr.mxu0 0.0
  %1045 = vmatpush1.msra.mxu0 0.0
  %1046 = vmatprep.subr.mxu0 0.0
  %1047 = vmatpush1.msra.mxu0 0.0
  %1048 = vmatprep.subr.mxu0 0.0
  %1049 = vmatpush1.msra.mxu0 0.0
  %1050 = vmatprep.subr.mxu0 0.0
  %1051 = vmatpush1.msra.mxu0 0.0
  %1052 = vmatprep.subr.mxu0 0.0
  %1053 = vmatpush1.msra.mxu0 0.0
  %1054 = vmatprep.subr.mxu0 0.0
  %1055 = vmatpush1.msra.mxu0 0.0
  %1056 = vmatprep.subr.mxu0 0.0
  %1057 = vmatpush1.msra.mxu0 0.0
  %1058 = vmatprep.subr.mxu0 0.0
  %1059 = vmatpush1.msra.mxu0 0.0
  %1060 = vmatprep.mubr.f32.mxu0 0.0
  %1061 = vmatmul.mubr.f32.gmra.mrb[0].mxu0 %v978
  %v1062 = vpop.f32.mrb[0].mxu0
  %v1063 = vadd.f32 0.0, %v1062
  %v1064 = vpop.f32.mrb[0].mxu0
  %v1065 = vadd.f32 0.0, %v1064
  %1066 = vdwg.mxu0
  %1067 = vmatprep.subr.mxu0 %v964
  %1068 = vmatpush1.msra.mxu0 %v963
  %1069 = vmatprep.subr.mxu0 %v969
  %1070 = vmatpush1.msra.mxu0 %v968
  %1071 = vmatprep.subr.mxu0 %v991
  %1072 = vmatpush1.msra.mxu0 %v988
  %1073 = vmatprep.subr.mxu0 0.0
  %1074 = vmatpush1.msra.mxu0 0.0
  %1075 = vmatprep.subr.mxu0 0.0
  %1076 = vmatpush1.msra.mxu0 0.0
  %1077 = vmatprep.subr.mxu0 0.0
  %1078 = vmatpush1.msra.mxu0 0.0
  %1079 = vmatprep.subr.mxu0 0.0
  %1080 = vmatpush1.msra.mxu0 0.0
  %1081 = vmatprep.subr.mxu0 0.0
  %1082 = vmatpush1.msra.mxu0 0.0
  %1083 = vmatprep.subr.mxu0 0.0
  %1084 = vmatpush1.msra.mxu0 0.0
  %1085 = vmatprep.subr.mxu0 0.0
  %1086 = vmatpush1.msra.mxu0 0.0
  %1087 = vmatprep.subr.mxu0 0.0
  %1088 = vmatpush1.msra.mxu0 0.0
  %1089 = vmatprep.subr.mxu0 0.0
  %1090 = vmatpush1.msra.mxu0 0.0
  %1091 = vmatprep.subr.mxu0 0.0
  %1092 = vmatpush1.msra.mxu0 0.0
  %1093 = vmatprep.subr.mxu0 0.0
  %1094 = vmatpush1.msra.mxu0 0.0
  %1095 = vmatprep.subr.mxu0 0.0
  %1096 = vmatpush1.msra.mxu0 0.0
  %1097 = vmatprep.subr.mxu0 0.0
  %1098 = vmatpush1.msra.mxu0 0.0
  %1099 = vmatprep.subr.mxu0 0.0
  %1100 = vmatpush1.msra.mxu0 0.0
  %1101 = vmatprep.subr.mxu0 0.0
  %1102 = vmatpush1.msra.mxu0 0.0
  %1103 = vmatprep.subr.mxu0 0.0
  %1104 = vmatpush1.msra.mxu0 0.0
  %1105 = vmatprep.subr.mxu0 0.0
  %1106 = vmatpush1.msra.mxu0 0.0
  %1107 = vmatprep.subr.mxu0 0.0
  %1108 = vmatpush1.msra.mxu0 0.0
  %1109 = vmatprep.subr.mxu0 0.0
  %1110 = vmatpush1.msra.mxu0 0.0
  %1111 = vmatprep.subr.mxu0 0.0
  %1112 = vmatpush1.msra.mxu0 0.0
  %1113 = vmatprep.subr.mxu0 0.0
  %1114 = vmatpush1.msra.mxu0 0.0
  %1115 = vmatprep.subr.mxu0 0.0
  %1116 = vmatpush1.msra.mxu0 0.0
  %1117 = vmatprep.subr.mxu0 0.0
  %1118 = vmatpush1.msra.mxu0 0.0
  %1119 = vmatprep.subr.mxu0 0.0
  %1120 = vmatpush1.msra.mxu0 0.0
  %1121 = vmatprep.subr.mxu0 0.0
  %1122 = vmatpush1.msra.mxu0 0.0
  %1123 = vmatprep.subr.mxu0 0.0
  %1124 = vmatpush1.msra.mxu0 0.0
  %1125 = vmatprep.subr.mxu0 0.0
  %1126 = vmatpush1.msra.mxu0 0.0
  %1127 = vmatprep.subr.mxu0 0.0
  %1128 = vmatpush1.msra.mxu0 0.0
  %1129 = vmatprep.subr.mxu0 0.0
  %1130 = vmatpush1.msra.mxu0 0.0
  %1131 = vmatprep.mubr.f32.mxu0 0.0
  %1132 = vmatmul.mubr.f32.gmra.mrb[0].mxu0 %v978
  %v1133 = vpop.f32.mrb[0].mxu0
  %v1134 = vadd.f32 0.0, %v1133
  %v1135 = vpop.f32.mrb[0].mxu0
  %v1136 = vadd.f32 0.0, %v1135
  %1137 = vdwg.mxu0
  %1138 = vmatprep.subr.mxu0 0.0
  %1139 = vmatpush1.msra.mxu0 %v965
  %1140 = vmatprep.subr.mxu0 0.0
  %1141 = vmatpush1.msra.mxu0 %v970
  %1142 = vmatprep.subr.mxu0 0.0
  %1143 = vmatpush1.msra.mxu0 %v994
  %1144 = vmatprep.subr.mxu0 0.0
  %1145 = vmatpush1.msra.mxu0 0.0
  %1146 = vmatprep.subr.mxu0 0.0
  %1147 = vmatpush1.msra.mxu0 0.0
  %1148 = vmatprep.subr.mxu0 0.0
  %1149 = vmatpush1.msra.mxu0 0.0
  %1150 = vmatprep.subr.mxu0 0.0
  %1151 = vmatpush1.msra.mxu0 0.0
  %1152 = vmatprep.subr.mxu0 0.0
  %1153 = vmatpush1.msra.mxu0 0.0
  %1154 = vmatprep.subr.mxu0 0.0
  %1155 = vmatpush1.msra.mxu0 0.0
  %1156 = vmatprep.subr.mxu0 0.0
  %1157 = vmatpush1.msra.mxu0 0.0
  %1158 = vmatprep.subr.mxu0 0.0
  %1159 = vmatpush1.msra.mxu0 0.0
  %1160 = vmatprep.subr.mxu0 0.0
  %1161 = vmatpush1.msra.mxu0 0.0
  %1162 = vmatprep.subr.mxu0 0.0
  %1163 = vmatpush1.msra.mxu0 0.0
  %1164 = vmatprep.subr.mxu0 0.0
  %1165 = vmatpush1.msra.mxu0 0.0
  %1166 = vmatprep.subr.mxu0 0.0
  %1167 = vmatpush1.msra.mxu0 0.0
  %1168 = vmatprep.subr.mxu0 0.0
  %1169 = vmatpush1.msra.mxu0 0.0
  %1170 = vmatprep.subr.mxu0 0.0
  %1171 = vmatpush1.msra.mxu0 0.0
  %1172 = vmatprep.subr.mxu0 0.0
  %1173 = vmatpush1.msra.mxu0 0.0
  %1174 = vmatprep.subr.mxu0 0.0
  %1175 = vmatpush1.msra.mxu0 0.0
  %1176 = vmatprep.subr.mxu0 0.0
  %1177 = vmatpush1.msra.mxu0 0.0
  %1178 = vmatprep.subr.mxu0 0.0
  %1179 = vmatpush1.msra.mxu0 0.0
  %1180 = vmatprep.subr.mxu0 0.0
  %1181 = vmatpush1.msra.mxu0 0.0
  %1182 = vmatprep.subr.mxu0 0.0
  %1183 = vmatpush1.msra.mxu0 0.0
  %1184 = vmatprep.subr.mxu0 0.0
  %1185 = vmatpush1.msra.mxu0 0.0
  %1186 = vmatprep.subr.mxu0 0.0
  %1187 = vmatpush1.msra.mxu0 0.0
  %1188 = vmatprep.subr.mxu0 0.0
  %1189 = vmatpush1.msra.mxu0 0.0
  %1190 = vmatprep.subr.mxu0 0.0
  %1191 = vmatpush1.msra.mxu0 0.0
  %1192 = vmatprep.subr.mxu0 0.0
  %1193 = vmatpush1.msra.mxu0 0.0
  %1194 = vmatprep.subr.mxu0 0.0
  %1195 = vmatpush1.msra.mxu0 0.0
  %1196 = vmatprep.subr.mxu0 0.0
  %1197 = vmatpush1.msra.mxu0 0.0
  %1198 = vmatprep.subr.mxu0 0.0
  %1199 = vmatpush1.msra.mxu0 0.0
  %1200 = vmatprep.subr.mxu0 0.0
  %1201 = vmatpush1.msra.mxu0 0.0
  %1202 = vmatprep.mubr.f32.mxu0 0.0
  %1203 = vmatmul.mubr.f32.gmra.mrb[0].mxu0 %v978
  %v1204 = vpop.f32.mrb[0].mxu0
  %v1205 = vadd.f32 0.0, %v1204
  %v1206 = vpop.f32.mrb[0].mxu0
  %1207 = vdwg.mxu0
  %v1208 = vlaneseq
  %v1209 = vshrl.u32 %v1208, 7
  %v1210 = vsub.s32 0, %v1209
  %v1211 = vrot.slane %v1063, %v1210
  %v1212 = vlaneseq
  %v1213 = vshrl.u32 %v1212, 7
  %v1214 = vsub.s32 0, %v1213
  %v1215 = vrot.slane %v1065, %v1214
  %v1216 = vlaneseq
  %v1217 = vshrl.u32 %v1216, 7
  %v1218 = vsub.s32 0, %v1217
  %v1219 = vrot.slane %v1134, %v1218
  %v1220 = vlaneseq
  %v1221 = vshrl.u32 %v1220, 7
  %v1222 = vsub.s32 0, %v1221
  %v1223 = vrot.slane %v1136, %v1222
  %v1224 = vlaneseq
  %v1225 = vshrl.u32 %v1224, 7
  %v1226 = vsub.s32 0, %v1225
  %v1227 = vrot.slane %v1205, %v1226
  %v1228 = vmul.f32 %v1211, %v123
  %v1229 = vmul.f32 %v1215, %v124
  %v1230 = vmul.f32 %v1219, %v125
  %v1231 = vmul.f32 %v1223, %v126
  %v1232 = vmul.f32 %v1227, %v127
  %v1233 = vmul.f32 %v1211, %v128
  %v1234 = vmul.f32 %v1215, %v129
  %v1235 = vmul.f32 %v1219, %v130
  %v1236 = vmul.f32 %v1223, %v131
  %v1237 = vmul.f32 %v1227, %v132
  %v1238 = vmul.f32 %v1211, %v133
  %v1239 = vmul.f32 %v1215, %v134
  %v1240 = vmul.f32 %v1219, %v135
  %v1241 = vmul.f32 %v1223, %v136
  %v1242 = vmul.f32 %v1227, %v137
  %v1243 = vmul.f32 %v1211, %v138
  %v1244 = vmul.f32 %v1215, %v139
  %v1245 = vmul.f32 %v1219, %v140
  %v1246 = vmul.f32 %v1223, %v141
  %v1247 = vmul.f32 %v1227, %v142
  %v1249 = vsel %vm705, %v1232, 0
  %v1252 = vsel %vm705, %v1237, 0
  %v1255 = vsel %vm705, %v1242, 0
  %v1258 = vsel %vm705, %v1247, 0
  %1260 = vmatprep.subr.mxu0 0.0
  %1261 = vmatpush1.msra.mxu0 %v143
  %1262 = vmatprep.subr.mxu0 0.0
  %1263 = vmatpush1.msra.mxu0 %v144
  %1264 = vmatprep.subr.mxu0 0.0
  %1265 = vmatpush1.msra.mxu0 %v145
  %1266 = vmatprep.subr.mxu0 0.0
  %1267 = vmatpush1.msra.mxu0 %v146
  %1268 = vmatprep.subr.mxu0 0.0
  %1269 = vmatpush1.msra.mxu0 %v147
  %1270 = vmatprep.subr.mxu0 0.0
  %1271 = vmatpush1.msra.mxu0 %v148
  %1272 = vmatprep.subr.mxu0 0.0
  %1273 = vmatpush1.msra.mxu0 %v149
  %1274 = vmatprep.subr.mxu0 0.0
  %1275 = vmatpush1.msra.mxu0 %v150
  %1276 = vmatprep.subr.mxu0 0.0
  %1277 = vmatpush1.msra.mxu0 %v151
  %1278 = vmatprep.subr.mxu0 0.0
  %1279 = vmatpush1.msra.mxu0 %v152
  %1280 = vmatprep.subr.mxu0 0.0
  %1281 = vmatpush1.msra.mxu0 %v153
  %1282 = vmatprep.subr.mxu0 0.0
  %1283 = vmatpush1.msra.mxu0 %v154
  %1284 = vmatprep.subr.mxu0 0.0
  %1285 = vmatpush1.msra.mxu0 %v155
  %1286 = vmatprep.subr.mxu0 0.0
  %1287 = vmatpush1.msra.mxu0 %v156
  %1288 = vmatprep.subr.mxu0 0.0
  %1289 = vmatpush1.msra.mxu0 %v157
  %1290 = vmatprep.subr.mxu0 0.0
  %1291 = vmatpush1.msra.mxu0 %v158
  %1292 = vmatprep.subr.mxu0 0.0
  %1293 = vmatpush1.msra.mxu0 %v159
  %1294 = vmatprep.subr.mxu0 0.0
  %1295 = vmatpush1.msra.mxu0 %v160
  %1296 = vmatprep.subr.mxu0 0.0
  %1297 = vmatpush1.msra.mxu0 %v161
  %1298 = vmatprep.subr.mxu0 0.0
  %1299 = vmatpush1.msra.mxu0 %v162
  %1300 = vmatprep.subr.mxu0 0.0
  %1301 = vmatpush1.msra.mxu0 %v163
  %1302 = vmatprep.subr.mxu0 0.0
  %1303 = vmatpush1.msra.mxu0 %v164
  %1304 = vmatprep.subr.mxu0 0.0
  %1305 = vmatpush1.msra.mxu0 %v165
  %1306 = vmatprep.subr.mxu0 0.0
  %1307 = vmatpush1.msra.mxu0 %v166
  %1308 = vmatprep.subr.mxu0 0.0
  %1309 = vmatpush1.msra.mxu0 %v167
  %1310 = vmatprep.subr.mxu0 0.0
  %1311 = vmatpush1.msra.mxu0 %v168
  %1312 = vmatprep.subr.mxu0 0.0
  %1313 = vmatpush1.msra.mxu0 %v169
  %1314 = vmatprep.subr.mxu0 0.0
  %1315 = vmatpush1.msra.mxu0 %v170
  %1316 = vmatprep.subr.mxu0 0.0
  %1317 = vmatpush1.msra.mxu0 %v171
  %1318 = vmatprep.subr.mxu0 0.0
  %1319 = vmatpush1.msra.mxu0 %v172
  %1320 = vmatprep.subr.mxu0 0.0
  %1321 = vmatpush1.msra.mxu0 %v173
  %1322 = vmatprep.subr.mxu0 0.0
  %1323 = vmatpush1.msra.mxu0 %v174
  %1324 = vmatprep.mubr.f32.mxu0 %v1229
  %1325 = vmatmul.mubr.f32.gmra.mrb[0].mxu0 %v1228
  %v1326 = vpop.f32.mrb[0].mxu0
  %v1327 = vadd.f32 0.0, %v1326
  %v1328 = vpop.f32.mrb[0].mxu0
  %1329 = vmatprep.mubr.f32.mxu0 %v1234
  %1330 = vmatmul.mubr.f32.gmra.mrb[0].mxu0 %v1233
  %v1331 = vpop.f32.mrb[0].mxu0
  %v1332 = vadd.f32 0.0, %v1331
  %v1333 = vpop.f32.mrb[0].mxu0
  %1334 = vmatprep.mubr.f32.mxu0 %v1239
  %1335 = vmatmul.mubr.f32.gmra.mrb[0].mxu0 %v1238
  %v1336 = vpop.f32.mrb[0].mxu0
  %v1337 = vadd.f32 0.0, %v1336
  %v1338 = vpop.f32.mrb[0].mxu0
  %1339 = vmatprep.mubr.f32.mxu0 %v1244
  %1340 = vmatmul.mubr.f32.gmra.mrb[0].mxu0 %v1243
  %v1341 = vpop.f32.mrb[0].mxu0
  %v1342 = vadd.f32 0.0, %v1341
  %v1343 = vpop.f32.mrb[0].mxu0
  %1344 = vdwg.mxu0
  %1345 = vmatprep.subr.mxu0 0.0
  %1346 = vmatpush1.msra.mxu0 %v175
  %1347 = vmatprep.subr.mxu0 0.0
  %1348 = vmatpush1.msra.mxu0 %v176
  %1349 = vmatprep.subr.mxu0 0.0
  %1350 = vmatpush1.msra.mxu0 %v177
  %1351 = vmatprep.subr.mxu0 0.0
  %1352 = vmatpush1.msra.mxu0 %v178
  %1353 = vmatprep.subr.mxu0 0.0
  %1354 = vmatpush1.msra.mxu0 %v179
  %1355 = vmatprep.subr.mxu0 0.0
  %1356 = vmatpush1.msra.mxu0 %v180
  %1357 = vmatprep.subr.mxu0 0.0
  %1358 = vmatpush1.msra.mxu0 %v181
  %1359 = vmatprep.subr.mxu0 0.0
  %1360 = vmatpush1.msra.mxu0 %v182
  %1361 = vmatprep.subr.mxu0 0.0
  %1362 = vmatpush1.msra.mxu0 %v183
  %1363 = vmatprep.subr.mxu0 0.0
  %1364 = vmatpush1.msra.mxu0 %v184
  %1365 = vmatprep.subr.mxu0 0.0
  %1366 = vmatpush1.msra.mxu0 %v185
  %1367 = vmatprep.subr.mxu0 0.0
  %1368 = vmatpush1.msra.mxu0 %v186
  %1369 = vmatprep.subr.mxu0 0.0
  %1370 = vmatpush1.msra.mxu0 %v187
  %1371 = vmatprep.subr.mxu0 0.0
  %1372 = vmatpush1.msra.mxu0 %v188
  %1373 = vmatprep.subr.mxu0 0.0
  %1374 = vmatpush1.msra.mxu0 %v189
  %1375 = vmatprep.subr.mxu0 0.0
  %1376 = vmatpush1.msra.mxu0 %v190
  %1377 = vmatprep.subr.mxu0 0.0
  %1378 = vmatpush1.msra.mxu0 %v191
  %1379 = vmatprep.subr.mxu0 0.0
  %1380 = vmatpush1.msra.mxu0 %v192
  %1381 = vmatprep.subr.mxu0 0.0
  %1382 = vmatpush1.msra.mxu0 %v193
  %1383 = vmatprep.subr.mxu0 0.0
  %1384 = vmatpush1.msra.mxu0 %v194
  %1385 = vmatprep.subr.mxu0 0.0
  %1386 = vmatpush1.msra.mxu0 %v195
  %1387 = vmatprep.subr.mxu0 0.0
  %1388 = vmatpush1.msra.mxu0 %v196
  %1389 = vmatprep.subr.mxu0 0.0
  %1390 = vmatpush1.msra.mxu0 %v197
  %1391 = vmatprep.subr.mxu0 0.0
  %1392 = vmatpush1.msra.mxu0 %v198
  %1393 = vmatprep.subr.mxu0 0.0
  %1394 = vmatpush1.msra.mxu0 %v199
  %1395 = vmatprep.subr.mxu0 0.0
  %1396 = vmatpush1.msra.mxu0 %v200
  %1397 = vmatprep.subr.mxu0 0.0
  %1398 = vmatpush1.msra.mxu0 %v201
  %1399 = vmatprep.subr.mxu0 0.0
  %1400 = vmatpush1.msra.mxu0 %v202
  %1401 = vmatprep.subr.mxu0 0.0
  %1402 = vmatpush1.msra.mxu0 %v203
  %1403 = vmatprep.subr.mxu0 0.0
  %1404 = vmatpush1.msra.mxu0 %v204
  %1405 = vmatprep.subr.mxu0 0.0
  %1406 = vmatpush1.msra.mxu0 %v205
  %1407 = vmatprep.subr.mxu0 0.0
  %1408 = vmatpush1.msra.mxu0 %v206
  %1409 = vmatprep.mubr.f32.mxu0 %v1231
  %1410 = vmatmul.mubr.f32.gmra.mrb[0].mxu0 %v1230
  %v1411 = vpop.f32.mrb[0].mxu0
  %v1412 = vadd.f32 %v1327, %v1411
  %v1413 = vpop.f32.mrb[0].mxu0
  %1414 = vmatprep.mubr.f32.mxu0 %v1236
  %1415 = vmatmul.mubr.f32.gmra.mrb[0].mxu0 %v1235
  %v1416 = vpop.f32.mrb[0].mxu0
  %v1417 = vadd.f32 %v1332, %v1416
  %v1418 = vpop.f32.mrb[0].mxu0
  %1419 = vmatprep.mubr.f32.mxu0 %v1241
  %1420 = vmatmul.mubr.f32.gmra.mrb[0].mxu0 %v1240
  %v1421 = vpop.f32.mrb[0].mxu0
  %v1422 = vadd.f32 %v1337, %v1421
  %v1423 = vpop.f32.mrb[0].mxu0
  %1424 = vmatprep.mubr.f32.mxu0 %v1246
  %1425 = vmatmul.mubr.f32.gmra.mrb[0].mxu0 %v1245
  %v1426 = vpop.f32.mrb[0].mxu0
  %v1427 = vadd.f32 %v1342, %v1426
  %v1428 = vpop.f32.mrb[0].mxu0
  %1429 = vdwg.mxu0
  %1430 = vmatprep.subr.mxu0 0.0
  %1431 = vmatpush1.msra.mxu0 %v207
  %1432 = vmatprep.subr.mxu0 0.0
  %1433 = vmatpush1.msra.mxu0 %v208
  %1434 = vmatprep.subr.mxu0 0.0
  %1435 = vmatpush1.msra.mxu0 %v209
  %1436 = vmatprep.subr.mxu0 0.0
  %1437 = vmatpush1.msra.mxu0 %v210
  %1438 = vmatprep.subr.mxu0 0.0
  %1439 = vmatpush1.msra.mxu0 0.0
  %1440 = vmatprep.subr.mxu0 0.0
  %1441 = vmatpush1.msra.mxu0 0.0
  %1442 = vmatprep.subr.mxu0 0.0
  %1443 = vmatpush1.msra.mxu0 0.0
  %1444 = vmatprep.subr.mxu0 0.0
  %1445 = vmatpush1.msra.mxu0 0.0
  %1446 = vmatprep.subr.mxu0 0.0
  %1447 = vmatpush1.msra.mxu0 0.0
  %1448 = vmatprep.subr.mxu0 0.0
  %1449 = vmatpush1.msra.mxu0 0.0
  %1450 = vmatprep.subr.mxu0 0.0
  %1451 = vmatpush1.msra.mxu0 0.0
  %1452 = vmatprep.subr.mxu0 0.0
  %1453 = vmatpush1.msra.mxu0 0.0
  %1454 = vmatprep.subr.mxu0 0.0
  %1455 = vmatpush1.msra.mxu0 0.0
  %1456 = vmatprep.subr.mxu0 0.0
  %1457 = vmatpush1.msra.mxu0 0.0
  %1458 = vmatprep.subr.mxu0 0.0
  %1459 = vmatpush1.msra.mxu0 0.0
  %1460 = vmatprep.subr.mxu0 0.0
  %1461 = vmatpush1.msra.mxu0 0.0
  %1462 = vmatprep.subr.mxu0 0.0
  %1463 = vmatpush1.msra.mxu0 0.0
  %1464 = vmatprep.subr.mxu0 0.0
  %1465 = vmatpush1.msra.mxu0 0.0
  %1466 = vmatprep.subr.mxu0 0.0
  %1467 = vmatpush1.msra.mxu0 0.0
  %1468 = vmatprep.subr.mxu0 0.0
  %1469 = vmatpush1.msra.mxu0 0.0
  %1470 = vmatprep.subr.mxu0 0.0
  %1471 = vmatpush1.msra.mxu0 0.0
  %1472 = vmatprep.subr.mxu0 0.0
  %1473 = vmatpush1.msra.mxu0 0.0
  %1474 = vmatprep.subr.mxu0 0.0
  %1475 = vmatpush1.msra.mxu0 0.0
  %1476 = vmatprep.subr.mxu0 0.0
  %1477 = vmatpush1.msra.mxu0 0.0
  %1478 = vmatprep.subr.mxu0 0.0
  %1479 = vmatpush1.msra.mxu0 0.0
  %1480 = vmatprep.subr.mxu0 0.0
  %1481 = vmatpush1.msra.mxu0 0.0
  %1482 = vmatprep.subr.mxu0 0.0
  %1483 = vmatpush1.msra.mxu0 0.0
  %1484 = vmatprep.subr.mxu0 0.0
  %1485 = vmatpush1.msra.mxu0 0.0
  %1486 = vmatprep.subr.mxu0 0.0
  %1487 = vmatpush1.msra.mxu0 0.0
  %1488 = vmatprep.subr.mxu0 0.0
  %1489 = vmatpush1.msra.mxu0 0.0
  %1490 = vmatprep.subr.mxu0 0.0
  %1491 = vmatpush1.msra.mxu0 0.0
  %1492 = vmatprep.subr.mxu0 0.0
  %1493 = vmatpush1.msra.mxu0 0.0
  %1494 = vmatprep.mubr.f32.mxu0 0.0
  %1495 = vmatmul.mubr.f32.gmra.mrb[0].mxu0 %v1249
  %v1496 = vpop.f32.mrb[0].mxu0
  %v1497 = vadd.f32 %v1412, %v1496
  %v1498 = vpop.f32.mrb[0].mxu0
  %1499 = vmatprep.mubr.f32.mxu0 0.0
  %1500 = vmatmul.mubr.f32.gmra.mrb[0].mxu0 %v1252
  %v1501 = vpop.f32.mrb[0].mxu0
  %v1502 = vadd.f32 %v1417, %v1501
  %v1503 = vpop.f32.mrb[0].mxu0
  %1504 = vmatprep.mubr.f32.mxu0 0.0
  %1505 = vmatmul.mubr.f32.gmra.mrb[0].mxu0 %v1255
  %v1506 = vpop.f32.mrb[0].mxu0
  %v1507 = vadd.f32 %v1422, %v1506
  %v1508 = vpop.f32.mrb[0].mxu0
  %1509 = vmatprep.mubr.f32.mxu0 0.0
  %1510 = vmatmul.mubr.f32.gmra.mrb[0].mxu0 %v1258
  %v1511 = vpop.f32.mrb[0].mxu0
  %v1512 = vadd.f32 %v1427, %v1511
  %v1513 = vpop.f32.mrb[0].mxu0
  %1514 = vdwg.mxu0
  %v1516 = vsel %vm705, %v520, 0
  %v1519 = vsel %vm705, %v525, 0
  %v1522 = vsel %vm705, %v530, 0
  %1524 = vmatprep.subr.mxu0 0.0
  %1525 = vmatpush1.msra.mxu0 %v1497
  %1526 = vmatprep.subr.mxu0 0.0
  %1527 = vmatpush1.msra.mxu0 %v1502
  %1528 = vmatprep.subr.mxu0 0.0
  %1529 = vmatpush1.msra.mxu0 %v1507
  %1530 = vmatprep.subr.mxu0 0.0
  %1531 = vmatpush1.msra.mxu0 %v1512
  %1532 = vmatprep.subr.mxu0 0.0
  %1533 = vmatpush1.msra.mxu0 0.0
  %1534 = vmatprep.subr.mxu0 0.0
  %1535 = vmatpush1.msra.mxu0 0.0
  %1536 = vmatprep.subr.mxu0 0.0
  %1537 = vmatpush1.msra.mxu0 0.0
  %1538 = vmatprep.subr.mxu0 0.0
  %1539 = vmatpush1.msra.mxu0 0.0
  %1540 = vmatprep.subr.mxu0 0.0
  %1541 = vmatpush1.msra.mxu0 0.0
  %1542 = vmatprep.subr.mxu0 0.0
  %1543 = vmatpush1.msra.mxu0 0.0
  %1544 = vmatprep.subr.mxu0 0.0
  %1545 = vmatpush1.msra.mxu0 0.0
  %1546 = vmatprep.subr.mxu0 0.0
  %1547 = vmatpush1.msra.mxu0 0.0
  %1548 = vmatprep.subr.mxu0 0.0
  %1549 = vmatpush1.msra.mxu0 0.0
  %1550 = vmatprep.subr.mxu0 0.0
  %1551 = vmatpush1.msra.mxu0 0.0
  %1552 = vmatprep.subr.mxu0 0.0
  %1553 = vmatpush1.msra.mxu0 0.0
  %1554 = vmatprep.subr.mxu0 0.0
  %1555 = vmatpush1.msra.mxu0 0.0
  %1556 = vmatprep.subr.mxu0 0.0
  %1557 = vmatpush1.msra.mxu0 0.0
  %1558 = vmatprep.subr.mxu0 0.0
  %1559 = vmatpush1.msra.mxu0 0.0
  %1560 = vmatprep.subr.mxu0 0.0
  %1561 = vmatpush1.msra.mxu0 0.0
  %1562 = vmatprep.subr.mxu0 0.0
  %1563 = vmatpush1.msra.mxu0 0.0
  %1564 = vmatprep.subr.mxu0 0.0
  %1565 = vmatpush1.msra.mxu0 0.0
  %1566 = vmatprep.subr.mxu0 0.0
  %1567 = vmatpush1.msra.mxu0 0.0
  %1568 = vmatprep.subr.mxu0 0.0
  %1569 = vmatpush1.msra.mxu0 0.0
  %1570 = vmatprep.subr.mxu0 0.0
  %1571 = vmatpush1.msra.mxu0 0.0
  %1572 = vmatprep.subr.mxu0 0.0
  %1573 = vmatpush1.msra.mxu0 0.0
  %1574 = vmatprep.subr.mxu0 0.0
  %1575 = vmatpush1.msra.mxu0 0.0
  %1576 = vmatprep.subr.mxu0 0.0
  %1577 = vmatpush1.msra.mxu0 0.0
  %1578 = vmatprep.subr.mxu0 0.0
  %1579 = vmatpush1.msra.mxu0 0.0
  %1580 = vmatprep.subr.mxu0 0.0
  %1581 = vmatpush1.msra.mxu0 0.0
  %1582 = vmatprep.subr.mxu0 0.0
  %1583 = vmatpush1.msra.mxu0 0.0
  %1584 = vmatprep.subr.mxu0 0.0
  %1585 = vmatpush1.msra.mxu0 0.0
  %1586 = vmatprep.subr.mxu0 0.0
  %1587 = vmatpush1.msra.mxu0 0.0
  %1588 = vmatprep.mubr.f32.mxu0 0.0
  %1589 = vmatmul.mubr.f32.gmra.mrb[0].mxu0 %v1516
  %v1590 = vpop.f32.mrb[0].mxu0
  %v1591 = vadd.f32 0.0, %v1590
  %v1592 = vpop.f32.mrb[0].mxu0
  %1593 = vmatprep.mubr.f32.mxu0 0.0
  %1594 = vmatmul.mubr.f32.gmra.mrb[0].mxu0 %v1519
  %v1595 = vpop.f32.mrb[0].mxu0
  %v1596 = vadd.f32 0.0, %v1595
  %v1597 = vpop.f32.mrb[0].mxu0
  %1598 = vmatprep.mubr.f32.mxu0 0.0
  %1599 = vmatmul.mubr.f32.gmra.mrb[0].mxu0 %v1522
  %v1600 = vpop.f32.mrb[0].mxu0
  %v1601 = vadd.f32 0.0, %v1600
  %v1602 = vpop.f32.mrb[0].mxu0
  %1603 = vdwg.mxu0
  %v1604 = vmul.f32 %v1591, 0.24253562
  %v1605 = vmul.f32 %v1596, 0.24253562
  %v1606 = vmul.f32 %v1601, 0.24253562
  %vm1607 = vcmask 556032
  %v1608 = vsel %vm1607, %v1604, -inf
  %1609 = vmax.xlane.f32.xlu0 %v1608
  %v1610 = vpop.xlane.xlu0 %1609
  %v1611 = vsel %vm1607, %v1605, -inf
  %1612 = vmax.xlane.f32.xlu0 %v1611
  %v1613 = vpop.xlane.xlu0 %1612
  %vm1614 = vcmask 548864
  %v1615 = vsel %vm1614, %v1606, -inf
  %1616 = vmax.xlane.f32.xlu0 %v1615
  %v1617 = vpop.xlane.xlu0 %1616
  %v1618 = vsub.f32 %v1604, %v1610
  %v1619 = vsub.f32 %v1605, %v1613
  %v1620 = vsub.f32 %v1606, %v1617
  %v1621 = vmul.f32 %v1618, 1.442695
  %v1622 = vpow.pop %v1621
  %v1623 = vmul.f32 %v1619, 1.442695
  %v1624 = vpow.pop %v1623
  %v1625 = vmul.f32 %v1620, 1.442695
  %v1626 = vpow.pop %v1625
  %v1628 = vsel %vm1607, %v1622, 0
  %v1631 = vsel %vm1607, %v1624, 0
  %v1634 = vsel %vm1607, %v1626, 0
  %vm1636 = vcmask 1043456
  %v1638 = vsel %vm1636, %v219, 0
  %1640 = vmatprep.subr.mxu0 0.0
  %1641 = vmatpush1.msra.mxu0 %v211
  %1642 = vmatprep.subr.mxu0 0.0
  %1643 = vmatpush1.msra.mxu0 %v212
  %1644 = vmatprep.subr.mxu0 0.0
  %1645 = vmatpush1.msra.mxu0 %v213
  %1646 = vmatprep.subr.mxu0 0.0
  %1647 = vmatpush1.msra.mxu0 %v214
  %1648 = vmatprep.subr.mxu0 0.0
  %1649 = vmatpush1.msra.mxu0 %v215
  %1650 = vmatprep.subr.mxu0 0.0
  %1651 = vmatpush1.msra.mxu0 %v216
  %1652 = vmatprep.subr.mxu0 0.0
  %1653 = vmatpush1.msra.mxu0 %v217
  %1654 = vmatprep.subr.mxu0 0.0
  %1655 = vmatpush1.msra.mxu0 %v218
  %1656 = vmatprep.subr.mxu0 0.0
  %1657 = vmatpush1.msra.mxu0 %v1638
  %1658 = vmatprep.subr.mxu0 0.0
  %1659 = vmatpush1.msra.mxu0 0.0
  %1660 = vmatprep.subr.mxu0 0.0
  %1661 = vmatpush1.msra.mxu0 0.0
  %1662 = vmatprep.subr.mxu0 0.0
  %1663 = vmatpush1.msra.mxu0 0.0
  %1664 = vmatprep.subr.mxu0 0.0
  %1665 = vmatpush1.msra.mxu0 0.0
  %1666 = vmatprep.subr.mxu0 0.0
  %1667 = vmatpush1.msra.mxu0 0.0
  %1668 = vmatprep.subr.mxu0 0.0
  %1669 = vmatpush1.msra.mxu0 0.0
  %1670 = vmatprep.subr.mxu0 0.0
  %1671 = vmatpush1.msra.mxu0 0.0
  %1672 = vmatprep.subr.mxu0 0.0
  %1673 = vmatpush1.msra.mxu0 0.0
  %1674 = vmatprep.subr.mxu0 0.0
  %1675 = vmatpush1.msra.mxu0 0.0
  %1676 = vmatprep.subr.mxu0 0.0
  %1677 = vmatpush1.msra.mxu0 0.0
  %1678 = vmatprep.subr.mxu0 0.0
  %1679 = vmatpush1.msra.mxu0 0.0
  %1680 = vmatprep.subr.mxu0 0.0
  %1681 = vmatpush1.msra.mxu0 0.0
  %1682 = vmatprep.subr.mxu0 0.0
  %1683 = vmatpush1.msra.mxu0 0.0
  %1684 = vmatprep.subr.mxu0 0.0
  %1685 = vmatpush1.msra.mxu0 0.0
  %1686 = vmatprep.subr.mxu0 0.0
  %1687 = vmatpush1.msra.mxu0 0.0
  %1688 = vmatprep.subr.mxu0 0.0
  %1689 = vmatpush1.msra.mxu0 0.0
  %1690 = vmatprep.subr.mxu0 0.0
  %1691 = vmatpush1.msra.mxu0 0.0
  %1692 = vmatprep.subr.mxu0 0.0
  %1693 = vmatpush1.msra.mxu0 0.0
  %1694 = vmatprep.subr.mxu0 0.0
  %1695 = vmatpush1.msra.mxu0 0.0
  %1696 = vmatprep.subr.mxu0 0.0
  %1697 = vmatpush1.msra.mxu0 0.0
  %1698 = vmatprep.subr.mxu0 0.0
  %1699 = vmatpush1.msra.mxu0 0.0
  %1700 = vmatprep.subr.mxu0 0.0
  %1701 = vmatpush1.msra.mxu0 0.0
  %1702 = vmatprep.subr.mxu0 0.0
  %1703 = vmatpush1.msra.mxu0 0.0
  %1704 = vmatprep.mubr.f32.mxu0 0.0
  %1705 = vmatmul.mubr.f32.gmra.mrb[0].mxu0 %v1628
  %v1706 = vpop.f32.mrb[0].mxu0
  %v1707 = vadd.f32 0.0, %v1706
  %v1708 = vpop.f32.mrb[0].mxu0
  %1709 = vmatprep.mubr.f32.mxu0 0.0
  %1710 = vmatmul.mubr.f32.gmra.mrb[0].mxu0 %v1631
  %v1711 = vpop.f32.mrb[0].mxu0
  %v1712 = vadd.f32 0.0, %v1711
  %v1713 = vpop.f32.mrb[0].mxu0
  %1714 = vmatprep.mubr.f32.mxu0 0.0
  %1715 = vmatmul.mubr.f32.gmra.mrb[0].mxu0 %v1634
  %v1716 = vpop.f32.mrb[0].mxu0
  %v1717 = vadd.f32 0.0, %v1716
  %v1718 = vpop.f32.mrb[0].mxu0
  %1719 = vdwg.mxu0
  %v1720 = vrcp.pop %v1707
  %v1721 = vrcp.pop %v1712
  %v1722 = vrcp.pop %v1717
  %vm1723 = vcmask 31744
  %v1725 = vsel %vm1723, %v1720, 0
  %v1728 = vsel %vm1723, %v1721, 0
  %v1731 = vsel %vm1723, %v1722, 0
  %v1734 = vsel %vm1636, %v220, 0
  %1736 = vmatprep.subr.mxu0 0.0
  %1737 = vmatpush1.msra.mxu0 %v1734
  %1738 = vmatprep.subr.mxu0 0.0
  %1739 = vmatpush1.msra.mxu0 0.0
  %1740 = vmatprep.subr.mxu0 0.0
  %1741 = vmatpush1.msra.mxu0 0.0
  %1742 = vmatprep.subr.mxu0 0.0
  %1743 = vmatpush1.msra.mxu0 0.0
  %1744 = vmatprep.subr.mxu0 0.0
  %1745 = vmatpush1.msra.mxu0 0.0
  %1746 = vmatprep.subr.mxu0 0.0
  %1747 = vmatpush1.msra.mxu0 0.0
  %1748 = vmatprep.subr.mxu0 0.0
  %1749 = vmatpush1.msra.mxu0 0.0
  %1750 = vmatprep.subr.mxu0 0.0
  %1751 = vmatpush1.msra.mxu0 0.0
  %1752 = vmatprep.subr.mxu0 0.0
  %1753 = vmatpush1.msra.mxu0 0.0
  %1754 = vmatprep.subr.mxu0 0.0
  %1755 = vmatpush1.msra.mxu0 0.0
  %1756 = vmatprep.subr.mxu0 0.0
  %1757 = vmatpush1.msra.mxu0 0.0
  %1758 = vmatprep.subr.mxu0 0.0
  %1759 = vmatpush1.msra.mxu0 0.0
  %1760 = vmatprep.subr.mxu0 0.0
  %1761 = vmatpush1.msra.mxu0 0.0
  %1762 = vmatprep.subr.mxu0 0.0
  %1763 = vmatpush1.msra.mxu0 0.0
  %1764 = vmatprep.subr.mxu0 0.0
  %1765 = vmatpush1.msra.mxu0 0.0
  %1766 = vmatprep.subr.mxu0 0.0
  %1767 = vmatpush1.msra.mxu0 0.0
  %1768 = vmatprep.subr.mxu0 0.0
  %1769 = vmatpush1.msra.mxu0 0.0
  %1770 = vmatprep.subr.mxu0 0.0
  %1771 = vmatpush1.msra.mxu0 0.0
  %1772 = vmatprep.subr.mxu0 0.0
  %1773 = vmatpush1.msra.mxu0 0.0
  %1774 = vmatprep.subr.mxu0 0.0
  %1775 = vmatpush1.msra.mxu0 0.0
  %1776 = vmatprep.subr.mxu0 0.0
  %1777 = vmatpush1.msra.mxu0 0.0
  %1778 = vmatprep.subr.mxu0 0.0
  %1779 = vmatpush1.msra.mxu0 0.0
  %1780 = vmatprep.subr.mxu0 0.0
  %1781 = vmatpush1.msra.mxu0 0.0
  %1782 = vmatprep.subr.mxu0 0.0
  %1783 = vmatpush1.msra.mxu0 0.0
  %1784 = vmatprep.subr.mxu0 0.0
  %1785 = vmatpush1.msra.mxu0 0.0
  %1786 = vmatprep.subr.mxu0 0.0
  %1787 = vmatpush1.msra.mxu0 0.0
  %1788 = vmatprep.subr.mxu0 0.0
  %1789 = vmatpush1.msra.mxu0 0.0
  %1790 = vmatprep.subr.mxu0 0.0
  %1791 = vmatpush1.msra.mxu0 0.0
  %1792 = vmatprep.subr.mxu0 0.0
  %1793 = vmatpush1.msra.mxu0 0.0
  %1794 = vmatprep.subr.mxu0 0.0
  %1795 = vmatpush1.msra.mxu0 0.0
  %1796 = vmatprep.subr.mxu0 0.0
  %1797 = vmatpush1.msra.mxu0 0.0
  %1798 = vmatprep.subr.mxu0 0.0
  %1799 = vmatpush1.msra.mxu0 0.0
  %1800 = vmatprep.mubr.f32.mxu0 0.0
  %1801 = vmatmul.mubr.f32.gmra.mrb[0].mxu0 %v1725
  %v1802 = vpop.f32.mrb[0].mxu0
  %v1803 = vadd.f32 0.0, %v1802
  %v1804 = vpop.f32.mrb[0].mxu0
  %1805 = vmatprep.mubr.f32.mxu0 0.0
  %1806 = vmatmul.mubr.f32.gmra.mrb[0].mxu0 %v1728
  %v1807 = vpop.f32.mrb[0].mxu0
  %v1808 = vadd.f32 0.0, %v1807
  %v1809 = vpop.f32.mrb[0].mxu0
  %1810 = vmatprep.mubr.f32.mxu0 0.0
  %1811 = vmatmul.mubr.f32.gmra.mrb[0].mxu0 %v1731
  %v1812 = vpop.f32.mrb[0].mxu0
  %v1813 = vadd.f32 0.0, %v1812
  %v1814 = vpop.f32.mrb[0].mxu0
  %1815 = vdwg.mxu0
  %v1816 = vmul.f32 %v1622, %v1803
  %v1817 = vmul.f32 %v1624, %v1808
  %v1818 = vmul.f32 %v1626, %v1813
  %v1820 = vsel %vm976, %v221, 0
  %v1823 = vsel %vm976, %v222, 0
  %v1826 = vsel %vm976, %v223, 0
  %v1829 = vsel %vm976, %v224, 0
  %v1832 = vsel %vm976, %v225, 0
  %v1835 = vsel %vm976, %v226, 0
  %v1838 = vsel %vm976, %v227, 0
  %v1841 = vsel %vm976, %v228, 0
  %v1844 = vsel %vm976, %v229, 0
  %v1847 = vsel %vm980, %v702, 0
  %1849 = vmatprep.subr.mxu0 0.0
  %1850 = vmatpush1.msra.mxu0 %v692
  %1851 = vmatprep.subr.mxu0 0.0
  %1852 = vmatpush1.msra.mxu0 %v697
  %1853 = vmatprep.subr.mxu0 0.0
  %1854 = vmatpush1.msra.mxu0 %v1847
  %1855 = vmatprep.subr.mxu0 0.0
  %1856 = vmatpush1.msra.mxu0 0.0
  %1857 = vmatprep.subr.mxu0 0.0
  %1858 = vmatpush1.msra.mxu0 0.0
  %1859 = vmatprep.subr.mxu0 0.0
  %1860 = vmatpush1.msra.mxu0 0.0
  %1861 = vmatprep.subr.mxu0 0.0
  %1862 = vmatpush1.msra.mxu0 0.0
  %1863 = vmatprep.subr.mxu0 0.0
  %1864 = vmatpush1.msra.mxu0 0.0
  %1865 = vmatprep.subr.mxu0 0.0
  %1866 = vmatpush1.msra.mxu0 0.0
  %1867 = vmatprep.subr.mxu0 0.0
  %1868 = vmatpush1.msra.mxu0 0.0
  %1869 = vmatprep.subr.mxu0 0.0
  %1870 = vmatpush1.msra.mxu0 0.0
  %1871 = vmatprep.subr.mxu0 0.0
  %1872 = vmatpush1.msra.mxu0 0.0
  %1873 = vmatprep.subr.mxu0 0.0
  %1874 = vmatpush1.msra.mxu0 0.0
  %1875 = vmatprep.subr.mxu0 0.0
  %1876 = vmatpush1.msra.mxu0 0.0
  %1877 = vmatprep.subr.mxu0 0.0
  %1878 = vmatpush1.msra.mxu0 0.0
  %1879 = vmatprep.subr.mxu0 0.0
  %1880 = vmatpush1.msra.mxu0 0.0
  %1881 = vmatprep.subr.mxu0 0.0
  %1882 = vmatpush1.msra.mxu0 0.0
  %1883 = vmatprep.subr.mxu0 0.0
  %1884 = vmatpush1.msra.mxu0 0.0
  %1885 = vmatprep.subr.mxu0 0.0
  %1886 = vmatpush1.msra.mxu0 0.0
  %1887 = vmatprep.subr.mxu0 0.0
  %1888 = vmatpush1.msra.mxu0 0.0
  %1889 = vmatprep.subr.mxu0 0.0
  %1890 = vmatpush1.msra.mxu0 0.0
  %1891 = vmatprep.subr.mxu0 0.0
  %1892 = vmatpush1.msra.mxu0 0.0
  %1893 = vmatprep.subr.mxu0 0.0
  %1894 = vmatpush1.msra.mxu0 0.0
  %1895 = vmatprep.subr.mxu0 0.0
  %1896 = vmatpush1.msra.mxu0 0.0
  %1897 = vmatprep.subr.mxu0 0.0
  %1898 = vmatpush1.msra.mxu0 0.0
  %1899 = vmatprep.subr.mxu0 0.0
  %1900 = vmatpush1.msra.mxu0 0.0
  %1901 = vmatprep.subr.mxu0 0.0
  %1902 = vmatpush1.msra.mxu0 0.0
  %1903 = vmatprep.subr.mxu0 0.0
  %1904 = vmatpush1.msra.mxu0 0.0
  %1905 = vmatprep.subr.mxu0 0.0
  %1906 = vmatpush1.msra.mxu0 0.0
  %1907 = vmatprep.subr.mxu0 0.0
  %1908 = vmatpush1.msra.mxu0 0.0
  %1909 = vmatprep.subr.mxu0 0.0
  %1910 = vmatpush1.msra.mxu0 0.0
  %1911 = vmatprep.subr.mxu0 0.0
  %1912 = vmatpush1.msra.mxu0 0.0
  %1913 = vmatprep.mubr.f32.mxu0 0.0
  %1914 = vmatmul.mubr.f32.gmra.mrb[0].mxu0 %v1820
  %v1915 = vpop.f32.mrb[0].mxu0
  %v1916 = vadd.f32 0.0, %v1915
  %v1917 = vpop.f32.mrb[0].mxu0
  %1918 = vmatprep.mubr.f32.mxu0 0.0
  %1919 = vmatmul.mubr.f32.gmra.mrb[0].mxu0 %v1823
  %v1920 = vpop.f32.mrb[0].mxu0
  %v1921 = vadd.f32 0.0, %v1920
  %v1922 = vpop.f32.mrb[0].mxu0
  %1923 = vmatprep.mubr.f32.mxu0 0.0
  %1924 = vmatmul.mubr.f32.gmra.mrb[0].mxu0 %v1826
  %v1925 = vpop.f32.mrb[0].mxu0
  %v1926 = vadd.f32 0.0, %v1925
  %v1927 = vpop.f32.mrb[0].mxu0
  %1928 = vmatprep.mubr.f32.mxu0 0.0
  %1929 = vmatmul.mubr.f32.gmra.mrb[0].mxu0 %v1829
  %v1930 = vpop.f32.mrb[0].mxu0
  %v1931 = vadd.f32 0.0, %v1930
  %v1932 = vpop.f32.mrb[0].mxu0
  %1933 = vmatprep.mubr.f32.mxu0 0.0
  %1934 = vmatmul.mubr.f32.gmra.mrb[0].mxu0 %v1832
  %v1935 = vpop.f32.mrb[0].mxu0
  %v1936 = vadd.f32 0.0, %v1935
  %v1937 = vpop.f32.mrb[0].mxu0
  %1938 = vmatprep.mubr.f32.mxu0 0.0
  %1939 = vmatmul.mubr.f32.gmra.mrb[0].mxu0 %v1835
  %v1940 = vpop.f32.mrb[0].mxu0
  %v1941 = vadd.f32 0.0, %v1940
  %v1942 = vpop.f32.mrb[0].mxu0
  %1943 = vmatprep.mubr.f32.mxu0 0.0
  %1944 = vmatmul.mubr.f32.gmra.mrb[0].mxu0 %v1838
  %v1945 = vpop.f32.mrb[0].mxu0
  %v1946 = vadd.f32 0.0, %v1945
  %v1947 = vpop.f32.mrb[0].mxu0
  %1948 = vmatprep.mubr.f32.mxu0 0.0
  %1949 = vmatmul.mubr.f32.gmra.mrb[0].mxu0 %v1841
  %v1950 = vpop.f32.mrb[0].mxu0
  %v1951 = vadd.f32 0.0, %v1950
  %v1952 = vpop.f32.mrb[0].mxu0
  %1953 = vmatprep.mubr.f32.mxu0 0.0
  %1954 = vmatmul.mubr.f32.gmra.mrb[0].mxu0 %v1844
  %v1955 = vpop.f32.mrb[0].mxu0
  %v1956 = vadd.f32 0.0, %v1955
  %v1957 = vpop.f32.mrb[0].mxu0
  %1958 = vdwg.mxu0
  %v1959 = vmul.f32 %v1916, %v230
  %v1960 = vmul.f32 %v1921, %v231
  %v1961 = vmul.f32 %v1926, %v232
  %v1962 = vmul.f32 %v1931, %v233
  %v1963 = vmul.f32 %v1936, %v234
  %v1964 = vmul.f32 %v1941, %v235
  %v1965 = vmul.f32 %v1946, %v236
  %v1966 = vmul.f32 %v1951, %v237
  %v1967 = vmul.f32 %v1956, %v238
  %v1969 = vsel %vm1607, %v1816, 0
  %v1972 = vsel %vm1607, %v1817, 0
  %v1975 = vsel %vm1607, %v1818, 0
  %v1978 = vsel %vm1636, %v1967, 0
  %1980 = vmatprep.subr.mxu0 0.0
  %1981 = vmatpush1.msra.mxu0 %v1959
  %1982 = vmatprep.subr.mxu0 0.0
  %1983 = vmatpush1.msra.mxu0 %v1960
  %1984 = vmatprep.subr.mxu0 0.0
  %1985 = vmatpush1.msra.mxu0 %v1961
  %1986 = vmatprep.subr.mxu0 0.0
  %1987 = vmatpush1.msra.mxu0 %v1962
  %1988 = vmatprep.subr.mxu0 0.0
  %1989 = vmatpush1.msra.mxu0 %v1963
  %1990 = vmatprep.subr.mxu0 0.0
  %1991 = vmatpush1.msra.mxu0 %v1964
  %1992 = vmatprep.subr.mxu0 0.0
  %1993 = vmatpush1.msra.mxu0 %v1965
  %1994 = vmatprep.subr.mxu0 0.0
  %1995 = vmatpush1.msra.mxu0 %v1966
  %1996 = vmatprep.subr.mxu0 0.0
  %1997 = vmatpush1.msra.mxu0 %v1978
  %1998 = vmatprep.subr.mxu0 0.0
  %1999 = vmatpush1.msra.mxu0 0.0
  %2000 = vmatprep.subr.mxu0 0.0
  %2001 = vmatpush1.msra.mxu0 0.0
  %2002 = vmatprep.subr.mxu0 0.0
  %2003 = vmatpush1.msra.mxu0 0.0
  %2004 = vmatprep.subr.mxu0 0.0
  %2005 = vmatpush1.msra.mxu0 0.0
  %2006 = vmatprep.subr.mxu0 0.0
  %2007 = vmatpush1.msra.mxu0 0.0
  %2008 = vmatprep.subr.mxu0 0.0
  %2009 = vmatpush1.msra.mxu0 0.0
  %2010 = vmatprep.subr.mxu0 0.0
  %2011 = vmatpush1.msra.mxu0 0.0
  %2012 = vmatprep.subr.mxu0 0.0
  %2013 = vmatpush1.msra.mxu0 0.0
  %2014 = vmatprep.subr.mxu0 0.0
  %2015 = vmatpush1.msra.mxu0 0.0
  %2016 = vmatprep.subr.mxu0 0.0
  %2017 = vmatpush1.msra.mxu0 0.0
  %2018 = vmatprep.subr.mxu0 0.0
  %2019 = vmatpush1.msra.mxu0 0.0
  %2020 = vmatprep.subr.mxu0 0.0
  %2021 = vmatpush1.msra.mxu0 0.0
  %2022 = vmatprep.subr.mxu0 0.0
  %2023 = vmatpush1.msra.mxu0 0.0
  %2024 = vmatprep.subr.mxu0 0.0
  %2025 = vmatpush1.msra.mxu0 0.0
  %2026 = vmatprep.subr.mxu0 0.0
  %2027 = vmatpush1.msra.mxu0 0.0
  %2028 = vmatprep.subr.mxu0 0.0
  %2029 = vmatpush1.msra.mxu0 0.0
  %2030 = vmatprep.subr.mxu0 0.0
  %2031 = vmatpush1.msra.mxu0 0.0
  %2032 = vmatprep.subr.mxu0 0.0
  %2033 = vmatpush1.msra.mxu0 0.0
  %2034 = vmatprep.subr.mxu0 0.0
  %2035 = vmatpush1.msra.mxu0 0.0
  %2036 = vmatprep.subr.mxu0 0.0
  %2037 = vmatpush1.msra.mxu0 0.0
  %2038 = vmatprep.subr.mxu0 0.0
  %2039 = vmatpush1.msra.mxu0 0.0
  %2040 = vmatprep.subr.mxu0 0.0
  %2041 = vmatpush1.msra.mxu0 0.0
  %2042 = vmatprep.subr.mxu0 0.0
  %2043 = vmatpush1.msra.mxu0 0.0
  %2044 = vmatprep.mubr.f32.mxu0 0.0
  %2045 = vmatmul.mubr.f32.gmra.mrb[0].mxu0 %v1969
  %v2046 = vpop.f32.mrb[0].mxu0
  %v2047 = vadd.f32 0.0, %v2046
  %v2048 = vpop.f32.mrb[0].mxu0
  %2049 = vmatprep.mubr.f32.mxu0 0.0
  %2050 = vmatmul.mubr.f32.gmra.mrb[0].mxu0 %v1972
  %v2051 = vpop.f32.mrb[0].mxu0
  %v2052 = vadd.f32 0.0, %v2051
  %v2053 = vpop.f32.mrb[0].mxu0
  %2054 = vmatprep.mubr.f32.mxu0 0.0
  %2055 = vmatmul.mubr.f32.gmra.mrb[0].mxu0 %v1975
  %v2056 = vpop.f32.mrb[0].mxu0
  %v2057 = vadd.f32 0.0, %v2056
  %v2058 = vpop.f32.mrb[0].mxu0
  %2059 = vdwg.mxu0
  %v2060 = vld [vmem:[%s24] sm:$0xff]
  %v2061 = vld [vmem:[%s24 + $0x8] sm:$0xff]
  %v2062 = vld [vmem:[%s24 + $0x10] sm:$0xff]
  %v2063 = vld [vmem:[%s24 + $0x18] sm:$0xff]
  %v2064 = vld [vmem:[%s24 + $0x20] sm:$0x3]
  %s2065 = scalar_lea.vmem %s23, 24
  %v2066 = vld [vmem:[%s2065] sm:$0xff]
  %v2067 = vld [vmem:[%s2065 + $0x8] sm:$0xff]
  %v2068 = vld [vmem:[%s2065 + $0x10] sm:$0x1]
  %v2070 = vsel %vm344, %v2066, 0
  %v2073 = vsel %vm344, %v2067, 0
  %v2076 = vsel %vm344, %v2068, 0
  %2078 = vmatprep.subr.mxu0 0.0
  %2079 = vmatpush1.msra.mxu0 %v336
  %2080 = vmatprep.subr.mxu0 0.0
  %2081 = vmatpush1.msra.mxu0 %v337
  %2082 = vmatprep.subr.mxu0 0.0
  %2083 = vmatpush1.msra.mxu0 %v338
  %2084 = vmatprep.subr.mxu0 0.0
  %2085 = vmatpush1.msra.mxu0 %v339
  %2086 = vmatprep.subr.mxu0 0.0
  %2087 = vmatpush1.msra.mxu0 %v356
  %2088 = vmatprep.subr.mxu0 0.0
  %2089 = vmatpush1.msra.mxu0 0.0
  %2090 = vmatprep.subr.mxu0 0.0
  %2091 = vmatpush1.msra.mxu0 0.0
  %2092 = vmatprep.subr.mxu0 0.0
  %2093 = vmatpush1.msra.mxu0 0.0
  %2094 = vmatprep.subr.mxu0 0.0
  %2095 = vmatpush1.msra.mxu0 0.0
  %2096 = vmatprep.subr.mxu0 0.0
  %2097 = vmatpush1.msra.mxu0 0.0
  %2098 = vmatprep.subr.mxu0 0.0
  %2099 = vmatpush1.msra.mxu0 0.0
  %2100 = vmatprep.subr.mxu0 0.0
  %2101 = vmatpush1.msra.mxu0 0.0
  %2102 = vmatprep.subr.mxu0 0.0
  %2103 = vmatpush1.msra.mxu0 0.0
  %2104 = vmatprep.subr.mxu0 0.0
  %2105 = vmatpush1.msra.mxu0 0.0
  %2106 = vmatprep.subr.mxu0 0.0
  %2107 = vmatpush1.msra.mxu0 0.0
  %2108 = vmatprep.subr.mxu0 0.0
  %2109 = vmatpush1.msra.mxu0 0.0
  %2110 = vmatprep.subr.mxu0 0.0
  %2111 = vmatpush1.msra.mxu0 0.0
  %2112 = vmatprep.subr.mxu0 0.0
  %2113 = vmatpush1.msra.mxu0 0.0
  %2114 = vmatprep.subr.mxu0 0.0
  %2115 = vmatpush1.msra.mxu0 0.0
  %2116 = vmatprep.subr.mxu0 0.0
  %2117 = vmatpush1.msra.mxu0 0.0
  %2118 = vmatprep.subr.mxu0 0.0
  %2119 = vmatpush1.msra.mxu0 0.0
  %2120 = vmatprep.subr.mxu0 0.0
  %2121 = vmatpush1.msra.mxu0 0.0
  %2122 = vmatprep.subr.mxu0 0.0
  %2123 = vmatpush1.msra.mxu0 0.0
  %2124 = vmatprep.subr.mxu0 0.0
  %2125 = vmatpush1.msra.mxu0 0.0
  %2126 = vmatprep.subr.mxu0 0.0
  %2127 = vmatpush1.msra.mxu0 0.0
  %2128 = vmatprep.subr.mxu0 0.0
  %2129 = vmatpush1.msra.mxu0 0.0
  %2130 = vmatprep.subr.mxu0 0.0
  %2131 = vmatpush1.msra.mxu0 0.0
  %2132 = vmatprep.subr.mxu0 0.0
  %2133 = vmatpush1.msra.mxu0 0.0
  %2134 = vmatprep.subr.mxu0 0.0
  %2135 = vmatpush1.msra.mxu0 0.0
  %2136 = vmatprep.subr.mxu0 0.0
  %2137 = vmatpush1.msra.mxu0 0.0
  %2138 = vmatprep.subr.mxu0 0.0
  %2139 = vmatpush1.msra.mxu0 0.0
  %2140 = vmatprep.subr.mxu0 0.0
  %2141 = vmatpush1.msra.mxu0 0.0
  %2142 = vmatprep.mubr.f32.mxu0 0.0
  %2143 = vmatmul.mubr.f32.gmra.mrb[0].mxu0 %v2070
  %v2144 = vpop.f32.mrb[0].mxu0
  %v2145 = vadd.f32 0.0, %v2144
  %v2146 = vpop.f32.mrb[0].mxu0
  %2147 = vmatprep.mubr.f32.mxu0 0.0
  %2148 = vmatmul.mubr.f32.gmra.mrb[0].mxu0 %v2073
  %v2149 = vpop.f32.mrb[0].mxu0
  %v2150 = vadd.f32 0.0, %v2149
  %v2151 = vpop.f32.mrb[0].mxu0
  %2152 = vmatprep.mubr.f32.mxu0 0.0
  %2153 = vmatmul.mubr.f32.gmra.mrb[0].mxu0 %v2076
  %v2154 = vpop.f32.mrb[0].mxu0
  %v2155 = vadd.f32 0.0, %v2154
  %v2156 = vpop.f32.mrb[0].mxu0
  %2157 = vdwg.mxu0
  %v2159 = vsel %vm241, %v2145, 0
  %v2162 = vsel %vm241, %v2150, 0
  %v2165 = vsel %vm241, %v2155, 0
  %2167 = vmatprep.subr.mxu0 0.0
  %2168 = vmatpush1.msra.mxu0 %v438
  %2169 = vmatprep.subr.mxu0 0.0
  %2170 = vmatpush1.msra.mxu0 %v439
  %2171 = vmatprep.subr.mxu0 0.0
  %2172 = vmatpush1.msra.mxu0 %v440
  %2173 = vmatprep.subr.mxu0 0.0
  %2174 = vmatpush1.msra.mxu0 %v441
  %2175 = vmatprep.subr.mxu0 0.0
  %2176 = vmatpush1.msra.mxu0 %v442
  %2177 = vmatprep.subr.mxu0 0.0
  %2178 = vmatpush1.msra.mxu0 %v443
  %2179 = vmatprep.subr.mxu0 0.0
  %2180 = vmatpush1.msra.mxu0 0.0
  %2181 = vmatprep.subr.mxu0 0.0
  %2182 = vmatpush1.msra.mxu0 0.0
  %2183 = vmatprep.subr.mxu0 0.0
  %2184 = vmatpush1.msra.mxu0 0.0
  %2185 = vmatprep.subr.mxu0 0.0
  %2186 = vmatpush1.msra.mxu0 0.0
  %2187 = vmatprep.subr.mxu0 0.0
  %2188 = vmatpush1.msra.mxu0 0.0
  %2189 = vmatprep.subr.mxu0 0.0
  %2190 = vmatpush1.msra.mxu0 0.0
  %2191 = vmatprep.subr.mxu0 0.0
  %2192 = vmatpush1.msra.mxu0 0.0
  %2193 = vmatprep.subr.mxu0 0.0
  %2194 = vmatpush1.msra.mxu0 0.0
  %2195 = vmatprep.subr.mxu0 0.0
  %2196 = vmatpush1.msra.mxu0 0.0
  %2197 = vmatprep.subr.mxu0 0.0
  %2198 = vmatpush1.msra.mxu0 0.0
  %2199 = vmatprep.subr.mxu0 0.0
  %2200 = vmatpush1.msra.mxu0 0.0
  %2201 = vmatprep.subr.mxu0 0.0
  %2202 = vmatpush1.msra.mxu0 0.0
  %2203 = vmatprep.subr.mxu0 0.0
  %2204 = vmatpush1.msra.mxu0 0.0
  %2205 = vmatprep.subr.mxu0 0.0
  %2206 = vmatpush1.msra.mxu0 0.0
  %2207 = vmatprep.subr.mxu0 0.0
  %2208 = vmatpush1.msra.mxu0 0.0
  %2209 = vmatprep.subr.mxu0 0.0
  %2210 = vmatpush1.msra.mxu0 0.0
  %2211 = vmatprep.subr.mxu0 0.0
  %2212 = vmatpush1.msra.mxu0 0.0
  %2213 = vmatprep.subr.mxu0 0.0
  %2214 = vmatpush1.msra.mxu0 0.0
  %2215 = vmatprep.subr.mxu0 0.0
  %2216 = vmatpush1.msra.mxu0 0.0
  %2217 = vmatprep.subr.mxu0 0.0
  %2218 = vmatpush1.msra.mxu0 0.0
  %2219 = vmatprep.subr.mxu0 0.0
  %2220 = vmatpush1.msra.mxu0 0.0
  %2221 = vmatprep.subr.mxu0 0.0
  %2222 = vmatpush1.msra.mxu0 0.0
  %2223 = vmatprep.subr.mxu0 0.0
  %2224 = vmatpush1.msra.mxu0 0.0
  %2225 = vmatprep.subr.mxu0 0.0
  %2226 = vmatpush1.msra.mxu0 0.0
  %2227 = vmatprep.subr.mxu0 0.0
  %2228 = vmatpush1.msra.mxu0 0.0
  %2229 = vmatprep.subr.mxu0 0.0
  %2230 = vmatpush1.msra.mxu0 0.0
  %2231 = vmatprep.mubr.f32.mxu0 0.0
  %2232 = vmatmul.mubr.f32.gmra.mrb[0].mxu0 %v2159
  %v2233 = vpop.f32.mrb[0].mxu0
  %v2234 = vadd.f32 0.0, %v2233
  %v2235 = vpop.f32.mrb[0].mxu0
  %2236 = vmatprep.mubr.f32.mxu0 0.0
  %2237 = vmatmul.mubr.f32.gmra.mrb[0].mxu0 %v2162
  %v2238 = vpop.f32.mrb[0].mxu0
  %v2239 = vadd.f32 0.0, %v2238
  %v2240 = vpop.f32.mrb[0].mxu0
  %2241 = vmatprep.mubr.f32.mxu0 0.0
  %2242 = vmatmul.mubr.f32.gmra.mrb[0].mxu0 %v2165
  %v2243 = vpop.f32.mrb[0].mxu0
  %v2244 = vadd.f32 0.0, %v2243
  %v2245 = vpop.f32.mrb[0].mxu0
  %2246 = vdwg.mxu0
  %2247 = vmatprep.subr.mxu0 0.0
  %2248 = vmatpush1.msra.mxu0 %v533
  %2249 = vmatprep.subr.mxu0 0.0
  %2250 = vmatpush1.msra.mxu0 %v534
  %2251 = vmatprep.subr.mxu0 0.0
  %2252 = vmatpush1.msra.mxu0 %v535
  %2253 = vmatprep.subr.mxu0 0.0
  %2254 = vmatpush1.msra.mxu0 %v536
  %2255 = vmatprep.subr.mxu0 0.0
  %2256 = vmatpush1.msra.mxu0 %v537
  %2257 = vmatprep.subr.mxu0 0.0
  %2258 = vmatpush1.msra.mxu0 %v538
  %2259 = vmatprep.subr.mxu0 0.0
  %2260 = vmatpush1.msra.mxu0 0.0
  %2261 = vmatprep.subr.mxu0 0.0
  %2262 = vmatpush1.msra.mxu0 0.0
  %2263 = vmatprep.subr.mxu0 0.0
  %2264 = vmatpush1.msra.mxu0 0.0
  %2265 = vmatprep.subr.mxu0 0.0
  %2266 = vmatpush1.msra.mxu0 0.0
  %2267 = vmatprep.subr.mxu0 0.0
  %2268 = vmatpush1.msra.mxu0 0.0
  %2269 = vmatprep.subr.mxu0 0.0
  %2270 = vmatpush1.msra.mxu0 0.0
  %2271 = vmatprep.subr.mxu0 0.0
  %2272 = vmatpush1.msra.mxu0 0.0
  %2273 = vmatprep.subr.mxu0 0.0
  %2274 = vmatpush1.msra.mxu0 0.0
  %2275 = vmatprep.subr.mxu0 0.0
  %2276 = vmatpush1.msra.mxu0 0.0
  %2277 = vmatprep.subr.mxu0 0.0
  %2278 = vmatpush1.msra.mxu0 0.0
  %2279 = vmatprep.subr.mxu0 0.0
  %2280 = vmatpush1.msra.mxu0 0.0
  %2281 = vmatprep.subr.mxu0 0.0
  %2282 = vmatpush1.msra.mxu0 0.0
  %2283 = vmatprep.subr.mxu0 0.0
  %2284 = vmatpush1.msra.mxu0 0.0
  %2285 = vmatprep.subr.mxu0 0.0
  %2286 = vmatpush1.msra.mxu0 0.0
  %2287 = vmatprep.subr.mxu0 0.0
  %2288 = vmatpush1.msra.mxu0 0.0
  %2289 = vmatprep.subr.mxu0 0.0
  %2290 = vmatpush1.msra.mxu0 0.0
  %2291 = vmatprep.subr.mxu0 0.0
  %2292 = vmatpush1.msra.mxu0 0.0
  %2293 = vmatprep.subr.mxu0 0.0
  %2294 = vmatpush1.msra.mxu0 0.0
  %2295 = vmatprep.subr.mxu0 0.0
  %2296 = vmatpush1.msra.mxu0 0.0
  %2297 = vmatprep.subr.mxu0 0.0
  %2298 = vmatpush1.msra.mxu0 0.0
  %2299 = vmatprep.subr.mxu0 0.0
  %2300 = vmatpush1.msra.mxu0 0.0
  %2301 = vmatprep.subr.mxu0 0.0
  %2302 = vmatpush1.msra.mxu0 0.0
  %2303 = vmatprep.subr.mxu0 0.0
  %2304 = vmatpush1.msra.mxu0 0.0
  %2305 = vmatprep.subr.mxu0 0.0
  %2306 = vmatpush1.msra.mxu0 0.0
  %2307 = vmatprep.subr.mxu0 0.0
  %2308 = vmatpush1.msra.mxu0 0.0
  %2309 = vmatprep.subr.mxu0 0.0
  %2310 = vmatpush1.msra.mxu0 0.0
  %2311 = vmatprep.mubr.f32.mxu0 0.0
  %2312 = vmatmul.mubr.f32.gmra.mrb[0].mxu0 %v2159
  %v2313 = vpop.f32.mrb[0].mxu0
  %v2314 = vadd.f32 0.0, %v2313
  %v2315 = vpop.f32.mrb[0].mxu0
  %2316 = vmatprep.mubr.f32.mxu0 0.0
  %2317 = vmatmul.mubr.f32.gmra.mrb[0].mxu0 %v2162
  %v2318 = vpop.f32.mrb[0].mxu0
  %v2319 = vadd.f32 0.0, %v2318
  %v2320 = vpop.f32.mrb[0].mxu0
  %2321 = vmatprep.mubr.f32.mxu0 0.0
  %2322 = vmatmul.mubr.f32.gmra.mrb[0].mxu0 %v2165
  %v2323 = vpop.f32.mrb[0].mxu0
  %v2324 = vadd.f32 0.0, %v2323
  %v2325 = vpop.f32.mrb[0].mxu0
  %2326 = vdwg.mxu0
  %2327 = vmatprep.subr.mxu0 0.0
  %2328 = vmatpush1.msra.mxu0 %v619
  %2329 = vmatprep.subr.mxu0 0.0
  %2330 = vmatpush1.msra.mxu0 %v620
  %2331 = vmatprep.subr.mxu0 0.0
  %2332 = vmatpush1.msra.mxu0 %v621
  %2333 = vmatprep.subr.mxu0 0.0
  %2334 = vmatpush1.msra.mxu0 %v622
  %2335 = vmatprep.subr.mxu0 0.0
  %2336 = vmatpush1.msra.mxu0 %v623
  %2337 = vmatprep.subr.mxu0 0.0
  %2338 = vmatpush1.msra.mxu0 %v624
  %2339 = vmatprep.subr.mxu0 0.0
  %2340 = vmatpush1.msra.mxu0 0.0
  %2341 = vmatprep.subr.mxu0 0.0
  %2342 = vmatpush1.msra.mxu0 0.0
  %2343 = vmatprep.subr.mxu0 0.0
  %2344 = vmatpush1.msra.mxu0 0.0
  %2345 = vmatprep.subr.mxu0 0.0
  %2346 = vmatpush1.msra.mxu0 0.0
  %2347 = vmatprep.subr.mxu0 0.0
  %2348 = vmatpush1.msra.mxu0 0.0
  %2349 = vmatprep.subr.mxu0 0.0
  %2350 = vmatpush1.msra.mxu0 0.0
  %2351 = vmatprep.subr.mxu0 0.0
  %2352 = vmatpush1.msra.mxu0 0.0
  %2353 = vmatprep.subr.mxu0 0.0
  %2354 = vmatpush1.msra.mxu0 0.0
  %2355 = vmatprep.subr.mxu0 0.0
  %2356 = vmatpush1.msra.mxu0 0.0
  %2357 = vmatprep.subr.mxu0 0.0
  %2358 = vmatpush1.msra.mxu0 0.0
  %2359 = vmatprep.subr.mxu0 0.0
  %2360 = vmatpush1.msra.mxu0 0.0
  %2361 = vmatprep.subr.mxu0 0.0
  %2362 = vmatpush1.msra.mxu0 0.0
  %2363 = vmatprep.subr.mxu0 0.0
  %2364 = vmatpush1.msra.mxu0 0.0
  %2365 = vmatprep.subr.mxu0 0.0
  %2366 = vmatpush1.msra.mxu0 0.0
  %2367 = vmatprep.subr.mxu0 0.0
  %2368 = vmatpush1.msra.mxu0 0.0
  %2369 = vmatprep.subr.mxu0 0.0
  %2370 = vmatpush1.msra.mxu0 0.0
  %2371 = vmatprep.subr.mxu0 0.0
  %2372 = vmatpush1.msra.mxu0 0.0
  %2373 = vmatprep.subr.mxu0 0.0
  %2374 = vmatpush1.msra.mxu0 0.0
  %2375 = vmatprep.subr.mxu0 0.0
  %2376 = vmatpush1.msra.mxu0 0.0
  %2377 = vmatprep.subr.mxu0 0.0
  %2378 = vmatpush1.msra.mxu0 0.0
  %2379 = vmatprep.subr.mxu0 0.0
  %2380 = vmatpush1.msra.mxu0 0.0
  %2381 = vmatprep.subr.mxu0 0.0
  %2382 = vmatpush1.msra.mxu0 0.0
  %2383 = vmatprep.subr.mxu0 0.0
  %2384 = vmatpush1.msra.mxu0 0.0
  %2385 = vmatprep.subr.mxu0 0.0
  %2386 = vmatpush1.msra.mxu0 0.0
  %2387 = vmatprep.subr.mxu0 0.0
  %2388 = vmatpush1.msra.mxu0 0.0
  %2389 = vmatprep.subr.mxu0 0.0
  %2390 = vmatpush1.msra.mxu0 0.0
  %2391 = vmatprep.mubr.f32.mxu0 0.0
  %2392 = vmatmul.mubr.f32.gmra.mrb[0].mxu0 %v2159
  %v2393 = vpop.f32.mrb[0].mxu0
  %v2394 = vadd.f32 0.0, %v2393
  %v2395 = vpop.f32.mrb[0].mxu0
  %2396 = vmatprep.mubr.f32.mxu0 0.0
  %2397 = vmatmul.mubr.f32.gmra.mrb[0].mxu0 %v2162
  %v2398 = vpop.f32.mrb[0].mxu0
  %v2399 = vadd.f32 0.0, %v2398
  %v2400 = vpop.f32.mrb[0].mxu0
  %2401 = vmatprep.mubr.f32.mxu0 0.0
  %2402 = vmatmul.mubr.f32.gmra.mrb[0].mxu0 %v2165
  %v2403 = vpop.f32.mrb[0].mxu0
  %v2404 = vadd.f32 0.0, %v2403
  %v2405 = vpop.f32.mrb[0].mxu0
  %2406 = vdwg.mxu0
  %v2408 = vsel %vm705, %v2314, 0
  %v2411 = vsel %vm705, %v2319, 0
  %v2414 = vsel %vm705, %v2324, 0
  %2416 = vmatprep.subr.mxu0 %v89
  %2417 = vmatpush1.msra.mxu0 %v88
  %2418 = vmatprep.subr.mxu0 %v94
  %2419 = vmatpush1.msra.mxu0 %v93
  %2420 = vmatprep.subr.mxu0 %v99
  %2421 = vmatpush1.msra.mxu0 %v98
  %2422 = vmatprep.subr.mxu0 %v104
  %2423 = vmatpush1.msra.mxu0 %v103
  %2424 = vmatprep.subr.mxu0 0.0
  %2425 = vmatpush1.msra.mxu0 0.0
  %2426 = vmatprep.subr.mxu0 0.0
  %2427 = vmatpush1.msra.mxu0 0.0
  %2428 = vmatprep.subr.mxu0 0.0
  %2429 = vmatpush1.msra.mxu0 0.0
  %2430 = vmatprep.subr.mxu0 0.0
  %2431 = vmatpush1.msra.mxu0 0.0
  %2432 = vmatprep.subr.mxu0 0.0
  %2433 = vmatpush1.msra.mxu0 0.0
  %2434 = vmatprep.subr.mxu0 0.0
  %2435 = vmatpush1.msra.mxu0 0.0
  %2436 = vmatprep.subr.mxu0 0.0
  %2437 = vmatpush1.msra.mxu0 0.0
  %2438 = vmatprep.subr.mxu0 0.0
  %2439 = vmatpush1.msra.mxu0 0.0
  %2440 = vmatprep.subr.mxu0 0.0
  %2441 = vmatpush1.msra.mxu0 0.0
  %2442 = vmatprep.subr.mxu0 0.0
  %2443 = vmatpush1.msra.mxu0 0.0
  %2444 = vmatprep.subr.mxu0 0.0
  %2445 = vmatpush1.msra.mxu0 0.0
  %2446 = vmatprep.subr.mxu0 0.0
  %2447 = vmatpush1.msra.mxu0 0.0
  %2448 = vmatprep.subr.mxu0 0.0
  %2449 = vmatpush1.msra.mxu0 0.0
  %2450 = vmatprep.subr.mxu0 0.0
  %2451 = vmatpush1.msra.mxu0 0.0
  %2452 = vmatprep.subr.mxu0 0.0
  %2453 = vmatpush1.msra.mxu0 0.0
  %2454 = vmatprep.subr.mxu0 0.0
  %2455 = vmatpush1.msra.mxu0 0.0
  %2456 = vmatprep.subr.mxu0 0.0
  %2457 = vmatpush1.msra.mxu0 0.0
  %2458 = vmatprep.subr.mxu0 0.0
  %2459 = vmatpush1.msra.mxu0 0.0
  %2460 = vmatprep.subr.mxu0 0.0
  %2461 = vmatpush1.msra.mxu0 0.0
  %2462 = vmatprep.subr.mxu0 0.0
  %2463 = vmatpush1.msra.mxu0 0.0
  %2464 = vmatprep.subr.mxu0 0.0
  %2465 = vmatpush1.msra.mxu0 0.0
  %2466 = vmatprep.subr.mxu0 0.0
  %2467 = vmatpush1.msra.mxu0 0.0
  %2468 = vmatprep.subr.mxu0 0.0
  %2469 = vmatpush1.msra.mxu0 0.0
  %2470 = vmatprep.subr.mxu0 0.0
  %2471 = vmatpush1.msra.mxu0 0.0
  %2472 = vmatprep.subr.mxu0 0.0
  %2473 = vmatpush1.msra.mxu0 0.0
  %2474 = vmatprep.subr.mxu0 0.0
  %2475 = vmatpush1.msra.mxu0 0.0
  %2476 = vmatprep.subr.mxu0 0.0
  %2477 = vmatpush1.msra.mxu0 0.0
  %2478 = vmatprep.subr.mxu0 0.0
  %2479 = vmatpush1.msra.mxu0 0.0
  %2480 = vmatprep.mubr.f32.mxu0 0.0
  %2481 = vmatmul.mubr.f32.gmra.mrb[0].mxu0 %v2408
  %v2482 = vpop.f32.mrb[0].mxu0
  %v2483 = vadd.f32 0.0, %v2482
  %v2484 = vpop.f32.mrb[0].mxu0
  %v2485 = vadd.f32 0.0, %v2484
  %2486 = vmatprep.mubr.f32.mxu0 0.0
  %2487 = vmatmul.mubr.f32.gmra.mrb[0].mxu0 %v2411
  %v2488 = vpop.f32.mrb[0].mxu0
  %v2489 = vadd.f32 0.0, %v2488
  %v2490 = vpop.f32.mrb[0].mxu0
  %v2491 = vadd.f32 0.0, %v2490
  %2492 = vmatprep.mubr.f32.mxu0 0.0
  %2493 = vmatmul.mubr.f32.gmra.mrb[0].mxu0 %v2414
  %v2494 = vpop.f32.mrb[0].mxu0
  %v2495 = vadd.f32 0.0, %v2494
  %v2496 = vpop.f32.mrb[0].mxu0
  %v2497 = vadd.f32 0.0, %v2496
  %2498 = vdwg.mxu0
  %2499 = vmatprep.subr.mxu0 %v91
  %2500 = vmatpush1.msra.mxu0 %v90
  %2501 = vmatprep.subr.mxu0 %v96
  %2502 = vmatpush1.msra.mxu0 %v95
  %2503 = vmatprep.subr.mxu0 %v101
  %2504 = vmatpush1.msra.mxu0 %v100
  %2505 = vmatprep.subr.mxu0 %v106
  %2506 = vmatpush1.msra.mxu0 %v105
  %2507 = vmatprep.subr.mxu0 0.0
  %2508 = vmatpush1.msra.mxu0 0.0
  %2509 = vmatprep.subr.mxu0 0.0
  %2510 = vmatpush1.msra.mxu0 0.0
  %2511 = vmatprep.subr.mxu0 0.0
  %2512 = vmatpush1.msra.mxu0 0.0
  %2513 = vmatprep.subr.mxu0 0.0
  %2514 = vmatpush1.msra.mxu0 0.0
  %2515 = vmatprep.subr.mxu0 0.0
  %2516 = vmatpush1.msra.mxu0 0.0
  %2517 = vmatprep.subr.mxu0 0.0
  %2518 = vmatpush1.msra.mxu0 0.0
  %2519 = vmatprep.subr.mxu0 0.0
  %2520 = vmatpush1.msra.mxu0 0.0
  %2521 = vmatprep.subr.mxu0 0.0
  %2522 = vmatpush1.msra.mxu0 0.0
  %2523 = vmatprep.subr.mxu0 0.0
  %2524 = vmatpush1.msra.mxu0 0.0
  %2525 = vmatprep.subr.mxu0 0.0
  %2526 = vmatpush1.msra.mxu0 0.0
  %2527 = vmatprep.subr.mxu0 0.0
  %2528 = vmatpush1.msra.mxu0 0.0
  %2529 = vmatprep.subr.mxu0 0.0
  %2530 = vmatpush1.msra.mxu0 0.0
  %2531 = vmatprep.subr.mxu0 0.0
  %2532 = vmatpush1.msra.mxu0 0.0
  %2533 = vmatprep.subr.mxu0 0.0
  %2534 = vmatpush1.msra.mxu0 0.0
  %2535 = vmatprep.subr.mxu0 0.0
  %2536 = vmatpush1.msra.mxu0 0.0
  %2537 = vmatprep.subr.mxu0 0.0
  %2538 = vmatpush1.msra.mxu0 0.0
  %2539 = vmatprep.subr.mxu0 0.0
  %2540 = vmatpush1.msra.mxu0 0.0
  %2541 = vmatprep.subr.mxu0 0.0
  %2542 = vmatpush1.msra.mxu0 0.0
  %2543 = vmatprep.subr.mxu0 0.0
  %2544 = vmatpush1.msra.mxu0 0.0
  %2545 = vmatprep.subr.mxu0 0.0
  %2546 = vmatpush1.msra.mxu0 0.0
  %2547 = vmatprep.subr.mxu0 0.0
  %2548 = vmatpush1.msra.mxu0 0.0
  %2549 = vmatprep.subr.mxu0 0.0
  %2550 = vmatpush1.msra.mxu0 0.0
  %2551 = vmatprep.subr.mxu0 0.0
  %2552 = vmatpush1.msra.mxu0 0.0
  %2553 = vmatprep.subr.mxu0 0.0
  %2554 = vmatpush1.msra.mxu0 0.0
  %2555 = vmatprep.subr.mxu0 0.0
  %2556 = vmatpush1.msra.mxu0 0.0
  %2557 = vmatprep.subr.mxu0 0.0
  %2558 = vmatpush1.msra.mxu0 0.0
  %2559 = vmatprep.subr.mxu0 0.0
  %2560 = vmatpush1.msra.mxu0 0.0
  %2561 = vmatprep.subr.mxu0 0.0
  %2562 = vmatpush1.msra.mxu0 0.0
  %2563 = vmatprep.mubr.f32.mxu0 0.0
  %2564 = vmatmul.mubr.f32.gmra.mrb[0].mxu0 %v2408
  %v2565 = vpop.f32.mrb[0].mxu0
  %v2566 = vadd.f32 0.0, %v2565
  %v2567 = vpop.f32.mrb[0].mxu0
  %v2568 = vadd.f32 0.0, %v2567
  %2569 = vmatprep.mubr.f32.mxu0 0.0
  %2570 = vmatmul.mubr.f32.gmra.mrb[0].mxu0 %v2411
  %v2571 = vpop.f32.mrb[0].mxu0
  %v2572 = vadd.f32 0.0, %v2571
  %v2573 = vpop.f32.mrb[0].mxu0
  %v2574 = vadd.f32 0.0, %v2573
  %2575 = vmatprep.mubr.f32.mxu0 0.0
  %2576 = vmatmul.mubr.f32.gmra.mrb[0].mxu0 %v2414
  %v2577 = vpop.f32.mrb[0].mxu0
  %v2578 = vadd.f32 0.0, %v2577
  %v2579 = vpop.f32.mrb[0].mxu0
  %v2580 = vadd.f32 0.0, %v2579
  %2581 = vdwg.mxu0
  %2582 = vmatprep.subr.mxu0 0.0
  %2583 = vmatpush1.msra.mxu0 %v92
  %2584 = vmatprep.subr.mxu0 0.0
  %2585 = vmatpush1.msra.mxu0 %v97
  %2586 = vmatprep.subr.mxu0 0.0
  %2587 = vmatpush1.msra.mxu0 %v102
  %2588 = vmatprep.subr.mxu0 0.0
  %2589 = vmatpush1.msra.mxu0 %v107
  %2590 = vmatprep.subr.mxu0 0.0
  %2591 = vmatpush1.msra.mxu0 0.0
  %2592 = vmatprep.subr.mxu0 0.0
  %2593 = vmatpush1.msra.mxu0 0.0
  %2594 = vmatprep.subr.mxu0 0.0
  %2595 = vmatpush1.msra.mxu0 0.0
  %2596 = vmatprep.subr.mxu0 0.0
  %2597 = vmatpush1.msra.mxu0 0.0
  %2598 = vmatprep.subr.mxu0 0.0
  %2599 = vmatpush1.msra.mxu0 0.0
  %2600 = vmatprep.subr.mxu0 0.0
  %2601 = vmatpush1.msra.mxu0 0.0
  %2602 = vmatprep.subr.mxu0 0.0
  %2603 = vmatpush1.msra.mxu0 0.0
  %2604 = vmatprep.subr.mxu0 0.0
  %2605 = vmatpush1.msra.mxu0 0.0
  %2606 = vmatprep.subr.mxu0 0.0
  %2607 = vmatpush1.msra.mxu0 0.0
  %2608 = vmatprep.subr.mxu0 0.0
  %2609 = vmatpush1.msra.mxu0 0.0
  %2610 = vmatprep.subr.mxu0 0.0
  %2611 = vmatpush1.msra.mxu0 0.0
  %2612 = vmatprep.subr.mxu0 0.0
  %2613 = vmatpush1.msra.mxu0 0.0
  %2614 = vmatprep.subr.mxu0 0.0
  %2615 = vmatpush1.msra.mxu0 0.0
  %2616 = vmatprep.subr.mxu0 0.0
  %2617 = vmatpush1.msra.mxu0 0.0
  %2618 = vmatprep.subr.mxu0 0.0
  %2619 = vmatpush1.msra.mxu0 0.0
  %2620 = vmatprep.subr.mxu0 0.0
  %2621 = vmatpush1.msra.mxu0 0.0
  %2622 = vmatprep.subr.mxu0 0.0
  %2623 = vmatpush1.msra.mxu0 0.0
  %2624 = vmatprep.subr.mxu0 0.0
  %2625 = vmatpush1.msra.mxu0 0.0
  %2626 = vmatprep.subr.mxu0 0.0
  %2627 = vmatpush1.msra.mxu0 0.0
  %2628 = vmatprep.subr.mxu0 0.0
  %2629 = vmatpush1.msra.mxu0 0.0
  %2630 = vmatprep.subr.mxu0 0.0
  %2631 = vmatpush1.msra.mxu0 0.0
  %2632 = vmatprep.subr.mxu0 0.0
  %2633 = vmatpush1.msra.mxu0 0.0
  %2634 = vmatprep.subr.mxu0 0.0
  %2635 = vmatpush1.msra.mxu0 0.0
  %2636 = vmatprep.subr.mxu0 0.0
  %2637 = vmatpush1.msra.mxu0 0.0
  %2638 = vmatprep.subr.mxu0 0.0
  %2639 = vmatpush1.msra.mxu0 0.0
  %2640 = vmatprep.subr.mxu0 0.0
  %2641 = vmatpush1.msra.mxu0 0.0
  %2642 = vmatprep.subr.mxu0 0.0
  %2643 = vmatpush1.msra.mxu0 0.0
  %2644 = vmatprep.subr.mxu0 0.0
  %2645 = vmatpush1.msra.mxu0 0.0
  %2646 = vmatprep.mubr.f32.mxu0 0.0
  %2647 = vmatmul.mubr.f32.gmra.mrb[0].mxu0 %v2408
  %v2648 = vpop.f32.mrb[0].mxu0
  %v2649 = vadd.f32 0.0, %v2648
  %v2650 = vpop.f32.mrb[0].mxu0
  %2651 = vmatprep.mubr.f32.mxu0 0.0
  %2652 = vmatmul.mubr.f32.gmra.mrb[0].mxu0 %v2411
  %v2653 = vpop.f32.mrb[0].mxu0
  %v2654 = vadd.f32 0.0, %v2653
  %v2655 = vpop.f32.mrb[0].mxu0
  %2656 = vmatprep.mubr.f32.mxu0 0.0
  %2657 = vmatmul.mubr.f32.gmra.mrb[0].mxu0 %v2414
  %v2658 = vpop.f32.mrb[0].mxu0
  %v2659 = vadd.f32 0.0, %v2658
  %v2660 = vpop.f32.mrb[0].mxu0
  %2661 = vdwg.mxu0
  %v2662 = vmul.f32 %v2483, %v108
  %v2663 = vmul.f32 %v2485, %v109
  %v2664 = vmul.f32 %v2566, %v110
  %v2665 = vmul.f32 %v2568, %v111
  %v2666 = vmul.f32 %v2649, %v112
  %v2667 = vmul.f32 %v2489, %v113
  %v2668 = vmul.f32 %v2491, %v114
  %v2669 = vmul.f32 %v2572, %v115
  %v2670 = vmul.f32 %v2574, %v116
  %v2671 = vmul.f32 %v2654, %v117
  %v2672 = vmul.f32 %v2495, %v118
  %v2673 = vmul.f32 %v2497, %v119
  %v2674 = vmul.f32 %v2578, %v120
  %v2675 = vmul.f32 %v2580, %v121
  %v2676 = vmul.f32 %v2659, %v122
  %v2678 = vsel %vm980, %v2672, 0
  %v2681 = vsel %vm980, %v2673, 0
  %v2684 = vsel %vm980, %v2674, 0
  %v2687 = vsel %vm980, %v2675, 0
  %v2690 = vsel %vm980, %v2676, 0
  %2692 = vmatprep.subr.mxu0 %v2663
  %2693 = vmatpush1.msra.mxu0 %v2662
  %2694 = vmatprep.subr.mxu0 %v2668
  %2695 = vmatpush1.msra.mxu0 %v2667
  %2696 = vmatprep.subr.mxu0 %v2681
  %2697 = vmatpush1.msra.mxu0 %v2678
  %2698 = vmatprep.subr.mxu0 0.0
  %2699 = vmatpush1.msra.mxu0 0.0
  %2700 = vmatprep.subr.mxu0 0.0
  %2701 = vmatpush1.msra.mxu0 0.0
  %2702 = vmatprep.subr.mxu0 0.0
  %2703 = vmatpush1.msra.mxu0 0.0
  %2704 = vmatprep.subr.mxu0 0.0
  %2705 = vmatpush1.msra.mxu0 0.0
  %2706 = vmatprep.subr.mxu0 0.0
  %2707 = vmatpush1.msra.mxu0 0.0
  %2708 = vmatprep.subr.mxu0 0.0
  %2709 = vmatpush1.msra.mxu0 0.0
  %2710 = vmatprep.subr.mxu0 0.0
  %2711 = vmatpush1.msra.mxu0 0.0
  %2712 = vmatprep.subr.mxu0 0.0
  %2713 = vmatpush1.msra.mxu0 0.0
  %2714 = vmatprep.subr.mxu0 0.0
  %2715 = vmatpush1.msra.mxu0 0.0
  %2716 = vmatprep.subr.mxu0 0.0
  %2717 = vmatpush1.msra.mxu0 0.0
  %2718 = vmatprep.subr.mxu0 0.0
  %2719 = vmatpush1.msra.mxu0 0.0
  %2720 = vmatprep.subr.mxu0 0.0
  %2721 = vmatpush1.msra.mxu0 0.0
  %2722 = vmatprep.subr.mxu0 0.0
  %2723 = vmatpush1.msra.mxu0 0.0
  %2724 = vmatprep.subr.mxu0 0.0
  %2725 = vmatpush1.msra.mxu0 0.0
  %2726 = vmatprep.subr.mxu0 0.0
  %2727 = vmatpush1.msra.mxu0 0.0
  %2728 = vmatprep.subr.mxu0 0.0
  %2729 = vmatpush1.msra.mxu0 0.0
  %2730 = vmatprep.subr.mxu0 0.0
  %2731 = vmatpush1.msra.mxu0 0.0
  %2732 = vmatprep.subr.mxu0 0.0
  %2733 = vmatpush1.msra.mxu0 0.0
  %2734 = vmatprep.subr.mxu0 0.0
  %2735 = vmatpush1.msra.mxu0 0.0
  %2736 = vmatprep.subr.mxu0 0.0
  %2737 = vmatpush1.msra.mxu0 0.0
  %2738 = vmatprep.subr.mxu0 0.0
  %2739 = vmatpush1.msra.mxu0 0.0
  %2740 = vmatprep.subr.mxu0 0.0
  %2741 = vmatpush1.msra.mxu0 0.0
  %2742 = vmatprep.subr.mxu0 0.0
  %2743 = vmatpush1.msra.mxu0 0.0
  %2744 = vmatprep.subr.mxu0 0.0
  %2745 = vmatpush1.msra.mxu0 0.0
  %2746 = vmatprep.subr.mxu0 0.0
  %2747 = vmatpush1.msra.mxu0 0.0
  %2748 = vmatprep.subr.mxu0 0.0
  %2749 = vmatpush1.msra.mxu0 0.0
  %2750 = vmatprep.subr.mxu0 0.0
  %2751 = vmatpush1.msra.mxu0 0.0
  %2752 = vmatprep.subr.mxu0 0.0
  %2753 = vmatpush1.msra.mxu0 0.0
  %2754 = vmatprep.subr.mxu0 0.0
  %2755 = vmatpush1.msra.mxu0 0.0
  %2756 = vmatprep.mubr.f32.mxu0 0.0
  %2757 = vmatmul.mubr.f32.gmra.mrb[0].mxu0 %v978
  %v2758 = vpop.f32.mrb[0].mxu0
  %v2759 = vadd.f32 0.0, %v2758
  %v2760 = vpop.f32.mrb[0].mxu0
  %v2761 = vadd.f32 0.0, %v2760
  %2762 = vdwg.mxu0
  %2763 = vmatprep.subr.mxu0 %v2665
  %2764 = vmatpush1.msra.mxu0 %v2664
  %2765 = vmatprep.subr.mxu0 %v2670
  %2766 = vmatpush1.msra.mxu0 %v2669
  %2767 = vmatprep.subr.mxu0 %v2687
  %2768 = vmatpush1.msra.mxu0 %v2684
  %2769 = vmatprep.subr.mxu0 0.0
  %2770 = vmatpush1.msra.mxu0 0.0
  %2771 = vmatprep.subr.mxu0 0.0
  %2772 = vmatpush1.msra.mxu0 0.0
  %2773 = vmatprep.subr.mxu0 0.0
  %2774 = vmatpush1.msra.mxu0 0.0
  %2775 = vmatprep.subr.mxu0 0.0
  %2776 = vmatpush1.msra.mxu0 0.0
  %2777 = vmatprep.subr.mxu0 0.0
  %2778 = vmatpush1.msra.mxu0 0.0
  %2779 = vmatprep.subr.mxu0 0.0
  %2780 = vmatpush1.msra.mxu0 0.0
  %2781 = vmatprep.subr.mxu0 0.0
  %2782 = vmatpush1.msra.mxu0 0.0
  %2783 = vmatprep.subr.mxu0 0.0
  %2784 = vmatpush1.msra.mxu0 0.0
  %2785 = vmatprep.subr.mxu0 0.0
  %2786 = vmatpush1.msra.mxu0 0.0
  %2787 = vmatprep.subr.mxu0 0.0
  %2788 = vmatpush1.msra.mxu0 0.0
  %2789 = vmatprep.subr.mxu0 0.0
  %2790 = vmatpush1.msra.mxu0 0.0
  %2791 = vmatprep.subr.mxu0 0.0
  %2792 = vmatpush1.msra.mxu0 0.0
  %2793 = vmatprep.subr.mxu0 0.0
  %2794 = vmatpush1.msra.mxu0 0.0
  %2795 = vmatprep.subr.mxu0 0.0
  %2796 = vmatpush1.msra.mxu0 0.0
  %2797 = vmatprep.subr.mxu0 0.0
  %2798 = vmatpush1.msra.mxu0 0.0
  %2799 = vmatprep.subr.mxu0 0.0
  %2800 = vmatpush1.msra.mxu0 0.0
  %2801 = vmatprep.subr.mxu0 0.0
  %2802 = vmatpush1.msra.mxu0 0.0
  %2803 = vmatprep.subr.mxu0 0.0
  %2804 = vmatpush1.msra.mxu0 0.0
  %2805 = vmatprep.subr.mxu0 0.0
  %2806 = vmatpush1.msra.mxu0 0.0
  %2807 = vmatprep.subr.mxu0 0.0
  %2808 = vmatpush1.msra.mxu0 0.0
  %2809 = vmatprep.subr.mxu0 0.0
  %2810 = vmatpush1.msra.mxu0 0.0
  %2811 = vmatprep.subr.mxu0 0.0
  %2812 = vmatpush1.msra.mxu0 0.0
  %2813 = vmatprep.subr.mxu0 0.0
  %2814 = vmatpush1.msra.mxu0 0.0
  %2815 = vmatprep.subr.mxu0 0.0
  %2816 = vmatpush1.msra.mxu0 0.0
  %2817 = vmatprep.subr.mxu0 0.0
  %2818 = vmatpush1.msra.mxu0 0.0
  %2819 = vmatprep.subr.mxu0 0.0
  %2820 = vmatpush1.msra.mxu0 0.0
  %2821 = vmatprep.subr.mxu0 0.0
  %2822 = vmatpush1.msra.mxu0 0.0
  %2823 = vmatprep.subr.mxu0 0.0
  %2824 = vmatpush1.msra.mxu0 0.0
  %2825 = vmatprep.subr.mxu0 0.0
  %2826 = vmatpush1.msra.mxu0 0.0
  %2827 = vmatprep.mubr.f32.mxu0 0.0
  %2828 = vmatmul.mubr.f32.gmra.mrb[0].mxu0 %v978
  %v2829 = vpop.f32.mrb[0].mxu0
  %v2830 = vadd.f32 0.0, %v2829
  %v2831 = vpop.f32.mrb[0].mxu0
  %v2832 = vadd.f32 0.0, %v2831
  %2833 = vdwg.mxu0
  %2834 = vmatprep.subr.mxu0 0.0
  %2835 = vmatpush1.msra.mxu0 %v2666
  %2836 = vmatprep.subr.mxu0 0.0
  %2837 = vmatpush1.msra.mxu0 %v2671
  %2838 = vmatprep.subr.mxu0 0.0
  %2839 = vmatpush1.msra.mxu0 %v2690
  %2840 = vmatprep.subr.mxu0 0.0
  %2841 = vmatpush1.msra.mxu0 0.0
  %2842 = vmatprep.subr.mxu0 0.0
  %2843 = vmatpush1.msra.mxu0 0.0
  %2844 = vmatprep.subr.mxu0 0.0
  %2845 = vmatpush1.msra.mxu0 0.0
  %2846 = vmatprep.subr.mxu0 0.0
  %2847 = vmatpush1.msra.mxu0 0.0
  %2848 = vmatprep.subr.mxu0 0.0
  %2849 = vmatpush1.msra.mxu0 0.0
  %2850 = vmatprep.subr.mxu0 0.0
  %2851 = vmatpush1.msra.mxu0 0.0
  %2852 = vmatprep.subr.mxu0 0.0
  %2853 = vmatpush1.msra.mxu0 0.0
  %2854 = vmatprep.subr.mxu0 0.0
  %2855 = vmatpush1.msra.mxu0 0.0
  %2856 = vmatprep.subr.mxu0 0.0
  %2857 = vmatpush1.msra.mxu0 0.0
  %2858 = vmatprep.subr.mxu0 0.0
  %2859 = vmatpush1.msra.mxu0 0.0
  %2860 = vmatprep.subr.mxu0 0.0
  %2861 = vmatpush1.msra.mxu0 0.0
  %2862 = vmatprep.subr.mxu0 0.0
  %2863 = vmatpush1.msra.mxu0 0.0
  %2864 = vmatprep.subr.mxu0 0.0
  %2865 = vmatpush1.msra.mxu0 0.0
  %2866 = vmatprep.subr.mxu0 0.0
  %2867 = vmatpush1.msra.mxu0 0.0
  %2868 = vmatprep.subr.mxu0 0.0
  %2869 = vmatpush1.msra.mxu0 0.0
  %2870 = vmatprep.subr.mxu0 0.0
  %2871 = vmatpush1.msra.mxu0 0.0
  %2872 = vmatprep.subr.mxu0 0.0
  %2873 = vmatpush1.msra.mxu0 0.0
  %2874 = vmatprep.subr.mxu0 0.0
  %2875 = vmatpush1.msra.mxu0 0.0
  %2876 = vmatprep.subr.mxu0 0.0
  %2877 = vmatpush1.msra.mxu0 0.0
  %2878 = vmatprep.subr.mxu0 0.0
  %2879 = vmatpush1.msra.mxu0 0.0
  %2880 = vmatprep.subr.mxu0 0.0
  %2881 = vmatpush1.msra.mxu0 0.0
  %2882 = vmatprep.subr.mxu0 0.0
  %2883 = vmatpush1.msra.mxu0 0.0
  %2884 = vmatprep.subr.mxu0 0.0
  %2885 = vmatpush1.msra.mxu0 0.0
  %2886 = vmatprep.subr.mxu0 0.0
  %2887 = vmatpush1.msra.mxu0 0.0
  %2888 = vmatprep.subr.mxu0 0.0
  %2889 = vmatpush1.msra.mxu0 0.0
  %2890 = vmatprep.subr.mxu0 0.0
  %2891 = vmatpush1.msra.mxu0 0.0
  %2892 = vmatprep.subr.mxu0 0.0
  %2893 = vmatpush1.msra.mxu0 0.0
  %2894 = vmatprep.subr.mxu0 0.0
  %2895 = vmatpush1.msra.mxu0 0.0
  %2896 = vmatprep.subr.mxu0 0.0
  %2897 = vmatpush1.msra.mxu0 0.0
  %2898 = vmatprep.mubr.f32.mxu0 0.0
  %2899 = vmatmul.mubr.f32.gmra.mrb[0].mxu0 %v978
  %v2900 = vpop.f32.mrb[0].mxu0
  %v2901 = vadd.f32 0.0, %v2900
  %v2902 = vpop.f32.mrb[0].mxu0
  %2903 = vdwg.mxu0
  %v2904 = vlaneseq
  %v2905 = vshrl.u32 %v2904, 7
  %v2906 = vsub.s32 0, %v2905
  %v2907 = vrot.slane %v2759, %v2906
  %v2908 = vlaneseq
  %v2909 = vshrl.u32 %v2908, 7
  %v2910 = vsub.s32 0, %v2909
  %v2911 = vrot.slane %v2761, %v2910
  %v2912 = vlaneseq
  %v2913 = vshrl.u32 %v2912, 7
  %v2914 = vsub.s32 0, %v2913
  %v2915 = vrot.slane %v2830, %v2914
  %v2916 = vlaneseq
  %v2917 = vshrl.u32 %v2916, 7
  %v2918 = vsub.s32 0, %v2917
  %v2919 = vrot.slane %v2832, %v2918
  %v2920 = vlaneseq
  %v2921 = vshrl.u32 %v2920, 7
  %v2922 = vsub.s32 0, %v2921
  %v2923 = vrot.slane %v2901, %v2922
  %v2924 = vmul.f32 %v2907, %v123
  %v2925 = vmul.f32 %v2911, %v124
  %v2926 = vmul.f32 %v2915, %v125
  %v2927 = vmul.f32 %v2919, %v126
  %v2928 = vmul.f32 %v2923, %v127
  %v2929 = vmul.f32 %v2907, %v128
  %v2930 = vmul.f32 %v2911, %v129
  %v2931 = vmul.f32 %v2915, %v130
  %v2932 = vmul.f32 %v2919, %v131
  %v2933 = vmul.f32 %v2923, %v132
  %v2934 = vmul.f32 %v2907, %v133
  %v2935 = vmul.f32 %v2911, %v134
  %v2936 = vmul.f32 %v2915, %v135
  %v2937 = vmul.f32 %v2919, %v136
  %v2938 = vmul.f32 %v2923, %v137
  %v2939 = vmul.f32 %v2907, %v138
  %v2940 = vmul.f32 %v2911, %v139
  %v2941 = vmul.f32 %v2915, %v140
  %v2942 = vmul.f32 %v2919, %v141
  %v2943 = vmul.f32 %v2923, %v142
  %v2945 = vsel %vm705, %v2928, 0
  %v2948 = vsel %vm705, %v2933, 0
  %v2951 = vsel %vm705, %v2938, 0
  %v2954 = vsel %vm705, %v2943, 0
  %2956 = vmatprep.subr.mxu0 0.0
  %2957 = vmatpush1.msra.mxu0 %v143
  %2958 = vmatprep.subr.mxu0 0.0
  %2959 = vmatpush1.msra.mxu0 %v144
  %2960 = vmatprep.subr.mxu0 0.0
  %2961 = vmatpush1.msra.mxu0 %v145
  %2962 = vmatprep.subr.mxu0 0.0
  %2963 = vmatpush1.msra.mxu0 %v146
  %2964 = vmatprep.subr.mxu0 0.0
  %2965 = vmatpush1.msra.mxu0 %v147
  %2966 = vmatprep.subr.mxu0 0.0
  %2967 = vmatpush1.msra.mxu0 %v148
  %2968 = vmatprep.subr.mxu0 0.0
  %2969 = vmatpush1.msra.mxu0 %v149
  %2970 = vmatprep.subr.mxu0 0.0
  %2971 = vmatpush1.msra.mxu0 %v150
  %2972 = vmatprep.subr.mxu0 0.0
  %2973 = vmatpush1.msra.mxu0 %v151
  %2974 = vmatprep.subr.mxu0 0.0
  %2975 = vmatpush1.msra.mxu0 %v152
  %2976 = vmatprep.subr.mxu0 0.0
  %2977 = vmatpush1.msra.mxu0 %v153
  %2978 = vmatprep.subr.mxu0 0.0
  %2979 = vmatpush1.msra.mxu0 %v154
  %2980 = vmatprep.subr.mxu0 0.0
  %2981 = vmatpush1.msra.mxu0 %v155
  %2982 = vmatprep.subr.mxu0 0.0
  %2983 = vmatpush1.msra.mxu0 %v156
  %2984 = vmatprep.subr.mxu0 0.0
  %2985 = vmatpush1.msra.mxu0 %v157
  %2986 = vmatprep.subr.mxu0 0.0
  %2987 = vmatpush1.msra.mxu0 %v158
  %2988 = vmatprep.subr.mxu0 0.0
  %2989 = vmatpush1.msra.mxu0 %v159
  %2990 = vmatprep.subr.mxu0 0.0
  %2991 = vmatpush1.msra.mxu0 %v160
  %2992 = vmatprep.subr.mxu0 0.0
  %2993 = vmatpush1.msra.mxu0 %v161
  %2994 = vmatprep.subr.mxu0 0.0
  %2995 = vmatpush1.msra.mxu0 %v162
  %2996 = vmatprep.subr.mxu0 0.0
  %2997 = vmatpush1.msra.mxu0 %v163
  %2998 = vmatprep.subr.mxu0 0.0
  %2999 = vmatpush1.msra.mxu0 %v164
  %3000 = vmatprep.subr.mxu0 0.0
  %3001 = vmatpush1.msra.mxu0 %v165
  %3002 = vmatprep.subr.mxu0 0.0
  %3003 = vmatpush1.msra.mxu0 %v166
  %3004 = vmatprep.subr.mxu0 0.0
  %3005 = vmatpush1.msra.mxu0 %v167
  %3006 = vmatprep.subr.mxu0 0.0
  %3007 = vmatpush1.msra.mxu0 %v168
  %3008 = vmatprep.subr.mxu0 0.0
  %3009 = vmatpush1.msra.mxu0 %v169
  %3010 = vmatprep.subr.mxu0 0.0
  %3011 = vmatpush1.msra.mxu0 %v170
  %3012 = vmatprep.subr.mxu0 0.0
  %3013 = vmatpush1.msra.mxu0 %v171
  %3014 = vmatprep.subr.mxu0 0.0
  %3015 = vmatpush1.msra.mxu0 %v172
  %3016 = vmatprep.subr.mxu0 0.0
  %3017 = vmatpush1.msra.mxu0 %v173
  %3018 = vmatprep.subr.mxu0 0.0
  %3019 = vmatpush1.msra.mxu0 %v174
  %3020 = vmatprep.mubr.f32.mxu0 %v2925
  %3021 = vmatmul.mubr.f32.gmra.mrb[0].mxu0 %v2924
  %v3022 = vpop.f32.mrb[0].mxu0
  %v3023 = vadd.f32 0.0, %v3022
  %v3024 = vpop.f32.mrb[0].mxu0
  %3025 = vmatprep.mubr.f32.mxu0 %v2930
  %3026 = vmatmul.mubr.f32.gmra.mrb[0].mxu0 %v2929
  %v3027 = vpop.f32.mrb[0].mxu0
  %v3028 = vadd.f32 0.0, %v3027
  %v3029 = vpop.f32.mrb[0].mxu0
  %3030 = vmatprep.mubr.f32.mxu0 %v2935
  %3031 = vmatmul.mubr.f32.gmra.mrb[0].mxu0 %v2934
  %v3032 = vpop.f32.mrb[0].mxu0
  %v3033 = vadd.f32 0.0, %v3032
  %v3034 = vpop.f32.mrb[0].mxu0
  %3035 = vmatprep.mubr.f32.mxu0 %v2940
  %3036 = vmatmul.mubr.f32.gmra.mrb[0].mxu0 %v2939
  %v3037 = vpop.f32.mrb[0].mxu0
  %v3038 = vadd.f32 0.0, %v3037
  %v3039 = vpop.f32.mrb[0].mxu0
  %3040 = vdwg.mxu0
  %3041 = vmatprep.subr.mxu0 0.0
  %3042 = vmatpush1.msra.mxu0 %v175
  %3043 = vmatprep.subr.mxu0 0.0
  %3044 = vmatpush1.msra.mxu0 %v176
  %3045 = vmatprep.subr.mxu0 0.0
  %3046 = vmatpush1.msra.mxu0 %v177
  %3047 = vmatprep.subr.mxu0 0.0
  %3048 = vmatpush1.msra.mxu0 %v178
  %3049 = vmatprep.subr.mxu0 0.0
  %3050 = vmatpush1.msra.mxu0 %v179
  %3051 = vmatprep.subr.mxu0 0.0
  %3052 = vmatpush1.msra.mxu0 %v180
  %3053 = vmatprep.subr.mxu0 0.0
  %3054 = vmatpush1.msra.mxu0 %v181
  %3055 = vmatprep.subr.mxu0 0.0
  %3056 = vmatpush1.msra.mxu0 %v182
  %3057 = vmatprep.subr.mxu0 0.0
  %3058 = vmatpush1.msra.mxu0 %v183
  %3059 = vmatprep.subr.mxu0 0.0
  %3060 = vmatpush1.msra.mxu0 %v184
  %3061 = vmatprep.subr.mxu0 0.0
  %3062 = vmatpush1.msra.mxu0 %v185
  %3063 = vmatprep.subr.mxu0 0.0
  %3064 = vmatpush1.msra.mxu0 %v186
  %3065 = vmatprep.subr.mxu0 0.0
  %3066 = vmatpush1.msra.mxu0 %v187
  %3067 = vmatprep.subr.mxu0 0.0
  %3068 = vmatpush1.msra.mxu0 %v188
  %3069 = vmatprep.subr.mxu0 0.0
  %3070 = vmatpush1.msra.mxu0 %v189
  %3071 = vmatprep.subr.mxu0 0.0
  %3072 = vmatpush1.msra.mxu0 %v190
  %3073 = vmatprep.subr.mxu0 0.0
  %3074 = vmatpush1.msra.mxu0 %v191
  %3075 = vmatprep.subr.mxu0 0.0
  %3076 = vmatpush1.msra.mxu0 %v192
  %3077 = vmatprep.subr.mxu0 0.0
  %3078 = vmatpush1.msra.mxu0 %v193
  %3079 = vmatprep.subr.mxu0 0.0
  %3080 = vmatpush1.msra.mxu0 %v194
  %3081 = vmatprep.subr.mxu0 0.0
  %3082 = vmatpush1.msra.mxu0 %v195
  %3083 = vmatprep.subr.mxu0 0.0
  %3084 = vmatpush1.msra.mxu0 %v196
  %3085 = vmatprep.subr.mxu0 0.0
  %3086 = vmatpush1.msra.mxu0 %v197
  %3087 = vmatprep.subr.mxu0 0.0
  %3088 = vmatpush1.msra.mxu0 %v198
  %3089 = vmatprep.subr.mxu0 0.0
  %3090 = vmatpush1.msra.mxu0 %v199
  %3091 = vmatprep.subr.mxu0 0.0
  %3092 = vmatpush1.msra.mxu0 %v200
  %3093 = vmatprep.subr.mxu0 0.0
  %3094 = vmatpush1.msra.mxu0 %v201
  %3095 = vmatprep.subr.mxu0 0.0
  %3096 = vmatpush1.msra.mxu0 %v202
  %3097 = vmatprep.subr.mxu0 0.0
  %3098 = vmatpush1.msra.mxu0 %v203
  %3099 = vmatprep.subr.mxu0 0.0
  %3100 = vmatpush1.msra.mxu0 %v204
  %3101 = vmatprep.subr.mxu0 0.0
  %3102 = vmatpush1.msra.mxu0 %v205
  %3103 = vmatprep.subr.mxu0 0.0
  %3104 = vmatpush1.msra.mxu0 %v206
  %3105 = vmatprep.mubr.f32.mxu0 %v2927
  %3106 = vmatmul.mubr.f32.gmra.mrb[0].mxu0 %v2926
  %v3107 = vpop.f32.mrb[0].mxu0
  %v3108 = vadd.f32 %v3023, %v3107
  %v3109 = vpop.f32.mrb[0].mxu0
  %3110 = vmatprep.mubr.f32.mxu0 %v2932
  %3111 = vmatmul.mubr.f32.gmra.mrb[0].mxu0 %v2931
  %v3112 = vpop.f32.mrb[0].mxu0
  %v3113 = vadd.f32 %v3028, %v3112
  %v3114 = vpop.f32.mrb[0].mxu0
  %3115 = vmatprep.mubr.f32.mxu0 %v2937
  %3116 = vmatmul.mubr.f32.gmra.mrb[0].mxu0 %v2936
  %v3117 = vpop.f32.mrb[0].mxu0
  %v3118 = vadd.f32 %v3033, %v3117
  %v3119 = vpop.f32.mrb[0].mxu0
  %3120 = vmatprep.mubr.f32.mxu0 %v2942
  %3121 = vmatmul.mubr.f32.gmra.mrb[0].mxu0 %v2941
  %v3122 = vpop.f32.mrb[0].mxu0
  %v3123 = vadd.f32 %v3038, %v3122
  %v3124 = vpop.f32.mrb[0].mxu0
  %3125 = vdwg.mxu0
  %3126 = vmatprep.subr.mxu0 0.0
  %3127 = vmatpush1.msra.mxu0 %v207
  %3128 = vmatprep.subr.mxu0 0.0
  %3129 = vmatpush1.msra.mxu0 %v208
  %3130 = vmatprep.subr.mxu0 0.0
  %3131 = vmatpush1.msra.mxu0 %v209
  %3132 = vmatprep.subr.mxu0 0.0
  %3133 = vmatpush1.msra.mxu0 %v210
  %3134 = vmatprep.subr.mxu0 0.0
  %3135 = vmatpush1.msra.mxu0 0.0
  %3136 = vmatprep.subr.mxu0 0.0
  %3137 = vmatpush1.msra.mxu0 0.0
  %3138 = vmatprep.subr.mxu0 0.0
  %3139 = vmatpush1.msra.mxu0 0.0
  %3140 = vmatprep.subr.mxu0 0.0
  %3141 = vmatpush1.msra.mxu0 0.0
  %3142 = vmatprep.subr.mxu0 0.0
  %3143 = vmatpush1.msra.mxu0 0.0
  %3144 = vmatprep.subr.mxu0 0.0
  %3145 = vmatpush1.msra.mxu0 0.0
  %3146 = vmatprep.subr.mxu0 0.0
  %3147 = vmatpush1.msra.mxu0 0.0
  %3148 = vmatprep.subr.mxu0 0.0
  %3149 = vmatpush1.msra.mxu0 0.0
  %3150 = vmatprep.subr.mxu0 0.0
  %3151 = vmatpush1.msra.mxu0 0.0
  %3152 = vmatprep.subr.mxu0 0.0
  %3153 = vmatpush1.msra.mxu0 0.0
  %3154 = vmatprep.subr.mxu0 0.0
  %3155 = vmatpush1.msra.mxu0 0.0
  %3156 = vmatprep.subr.mxu0 0.0
  %3157 = vmatpush1.msra.mxu0 0.0
  %3158 = vmatprep.subr.mxu0 0.0
  %3159 = vmatpush1.msra.mxu0 0.0
  %3160 = vmatprep.subr.mxu0 0.0
  %3161 = vmatpush1.msra.mxu0 0.0
  %3162 = vmatprep.subr.mxu0 0.0
  %3163 = vmatpush1.msra.mxu0 0.0
  %3164 = vmatprep.subr.mxu0 0.0
  %3165 = vmatpush1.msra.mxu0 0.0
  %3166 = vmatprep.subr.mxu0 0.0
  %3167 = vmatpush1.msra.mxu0 0.0
  %3168 = vmatprep.subr.mxu0 0.0
  %3169 = vmatpush1.msra.mxu0 0.0
  %3170 = vmatprep.subr.mxu0 0.0
  %3171 = vmatpush1.msra.mxu0 0.0
  %3172 = vmatprep.subr.mxu0 0.0
  %3173 = vmatpush1.msra.mxu0 0.0
  %3174 = vmatprep.subr.mxu0 0.0
  %3175 = vmatpush1.msra.mxu0 0.0
  %3176 = vmatprep.subr.mxu0 0.0
  %3177 = vmatpush1.msra.mxu0 0.0
  %3178 = vmatprep.subr.mxu0 0.0
  %3179 = vmatpush1.msra.mxu0 0.0
  %3180 = vmatprep.subr.mxu0 0.0
  %3181 = vmatpush1.msra.mxu0 0.0
  %3182 = vmatprep.subr.mxu0 0.0
  %3183 = vmatpush1.msra.mxu0 0.0
  %3184 = vmatprep.subr.mxu0 0.0
  %3185 = vmatpush1.msra.mxu0 0.0
  %3186 = vmatprep.subr.mxu0 0.0
  %3187 = vmatpush1.msra.mxu0 0.0
  %3188 = vmatprep.subr.mxu0 0.0
  %3189 = vmatpush1.msra.mxu0 0.0
  %3190 = vmatprep.mubr.f32.mxu0 0.0
  %3191 = vmatmul.mubr.f32.gmra.mrb[0].mxu0 %v2945
  %v3192 = vpop.f32.mrb[0].mxu0
  %v3193 = vadd.f32 %v3108, %v3192
  %v3194 = vpop.f32.mrb[0].mxu0
  %3195 = vmatprep.mubr.f32.mxu0 0.0
  %3196 = vmatmul.mubr.f32.gmra.mrb[0].mxu0 %v2948
  %v3197 = vpop.f32.mrb[0].mxu0
  %v3198 = vadd.f32 %v3113, %v3197
  %v3199 = vpop.f32.mrb[0].mxu0
  %3200 = vmatprep.mubr.f32.mxu0 0.0
  %3201 = vmatmul.mubr.f32.gmra.mrb[0].mxu0 %v2951
  %v3202 = vpop.f32.mrb[0].mxu0
  %v3203 = vadd.f32 %v3118, %v3202
  %v3204 = vpop.f32.mrb[0].mxu0
  %3205 = vmatprep.mubr.f32.mxu0 0.0
  %3206 = vmatmul.mubr.f32.gmra.mrb[0].mxu0 %v2954
  %v3207 = vpop.f32.mrb[0].mxu0
  %v3208 = vadd.f32 %v3123, %v3207
  %v3209 = vpop.f32.mrb[0].mxu0
  %3210 = vdwg.mxu0
  %v3212 = vsel %vm705, %v2234, 0
  %v3215 = vsel %vm705, %v2239, 0
  %v3218 = vsel %vm705, %v2244, 0
  %3220 = vmatprep.subr.mxu0 0.0
  %3221 = vmatpush1.msra.mxu0 %v3193
  %3222 = vmatprep.subr.mxu0 0.0
  %3223 = vmatpush1.msra.mxu0 %v3198
  %3224 = vmatprep.subr.mxu0 0.0
  %3225 = vmatpush1.msra.mxu0 %v3203
  %3226 = vmatprep.subr.mxu0 0.0
  %3227 = vmatpush1.msra.mxu0 %v3208
  %3228 = vmatprep.subr.mxu0 0.0
  %3229 = vmatpush1.msra.mxu0 0.0
  %3230 = vmatprep.subr.mxu0 0.0
  %3231 = vmatpush1.msra.mxu0 0.0
  %3232 = vmatprep.subr.mxu0 0.0
  %3233 = vmatpush1.msra.mxu0 0.0
  %3234 = vmatprep.subr.mxu0 0.0
  %3235 = vmatpush1.msra.mxu0 0.0
  %3236 = vmatprep.subr.mxu0 0.0
  %3237 = vmatpush1.msra.mxu0 0.0
  %3238 = vmatprep.subr.mxu0 0.0
  %3239 = vmatpush1.msra.mxu0 0.0
  %3240 = vmatprep.subr.mxu0 0.0
  %3241 = vmatpush1.msra.mxu0 0.0
  %3242 = vmatprep.subr.mxu0 0.0
  %3243 = vmatpush1.msra.mxu0 0.0
  %3244 = vmatprep.subr.mxu0 0.0
  %3245 = vmatpush1.msra.mxu0 0.0
  %3246 = vmatprep.subr.mxu0 0.0
  %3247 = vmatpush1.msra.mxu0 0.0
  %3248 = vmatprep.subr.mxu0 0.0
  %3249 = vmatpush1.msra.mxu0 0.0
  %3250 = vmatprep.subr.mxu0 0.0
  %3251 = vmatpush1.msra.mxu0 0.0
  %3252 = vmatprep.subr.mxu0 0.0
  %3253 = vmatpush1.msra.mxu0 0.0
  %3254 = vmatprep.subr.mxu0 0.0
  %3255 = vmatpush1.msra.mxu0 0.0
  %3256 = vmatprep.subr.mxu0 0.0
  %3257 = vmatpush1.msra.mxu0 0.0
  %3258 = vmatprep.subr.mxu0 0.0
  %3259 = vmatpush1.msra.mxu0 0.0
  %3260 = vmatprep.subr.mxu0 0.0
  %3261 = vmatpush1.msra.mxu0 0.0
  %3262 = vmatprep.subr.mxu0 0.0
  %3263 = vmatpush1.msra.mxu0 0.0
  %3264 = vmatprep.subr.mxu0 0.0
  %3265 = vmatpush1.msra.mxu0 0.0
  %3266 = vmatprep.subr.mxu0 0.0
  %3267 = vmatpush1.msra.mxu0 0.0
  %3268 = vmatprep.subr.mxu0 0.0
  %3269 = vmatpush1.msra.mxu0 0.0
  %3270 = vmatprep.subr.mxu0 0.0
  %3271 = vmatpush1.msra.mxu0 0.0
  %3272 = vmatprep.subr.mxu0 0.0
  %3273 = vmatpush1.msra.mxu0 0.0
  %3274 = vmatprep.subr.mxu0 0.0
  %3275 = vmatpush1.msra.mxu0 0.0
  %3276 = vmatprep.subr.mxu0 0.0
  %3277 = vmatpush1.msra.mxu0 0.0
  %3278 = vmatprep.subr.mxu0 0.0
  %3279 = vmatpush1.msra.mxu0 0.0
  %3280 = vmatprep.subr.mxu0 0.0
  %3281 = vmatpush1.msra.mxu0 0.0
  %3282 = vmatprep.subr.mxu0 0.0
  %3283 = vmatpush1.msra.mxu0 0.0
  %3284 = vmatprep.mubr.f32.mxu0 0.0
  %3285 = vmatmul.mubr.f32.gmra.mrb[0].mxu0 %v3212
  %v3286 = vpop.f32.mrb[0].mxu0
  %v3287 = vadd.f32 0.0, %v3286
  %v3288 = vpop.f32.mrb[0].mxu0
  %3289 = vmatprep.mubr.f32.mxu0 0.0
  %3290 = vmatmul.mubr.f32.gmra.mrb[0].mxu0 %v3215
  %v3291 = vpop.f32.mrb[0].mxu0
  %v3292 = vadd.f32 0.0, %v3291
  %v3293 = vpop.f32.mrb[0].mxu0
  %3294 = vmatprep.mubr.f32.mxu0 0.0
  %3295 = vmatmul.mubr.f32.gmra.mrb[0].mxu0 %v3218
  %v3296 = vpop.f32.mrb[0].mxu0
  %v3297 = vadd.f32 0.0, %v3296
  %v3298 = vpop.f32.mrb[0].mxu0
  %3299 = vdwg.mxu0
  %v3300 = vmul.f32 %v3287, 0.24253562
  %v3301 = vmul.f32 %v3292, 0.24253562
  %v3302 = vmul.f32 %v3297, 0.24253562
  %v3303 = vsel %vm1607, %v3300, -inf
  %3304 = vmax.xlane.f32.xlu0 %v3303
  %v3305 = vpop.xlane.xlu0 %3304
  %v3306 = vsel %vm1607, %v3301, -inf
  %3307 = vmax.xlane.f32.xlu0 %v3306
  %v3308 = vpop.xlane.xlu0 %3307
  %v3309 = vsel %vm1614, %v3302, -inf
  %3310 = vmax.xlane.f32.xlu0 %v3309
  %v3311 = vpop.xlane.xlu0 %3310
  %v3312 = vsub.f32 %v3300, %v3305
  %v3313 = vsub.f32 %v3301, %v3308
  %v3314 = vsub.f32 %v3302, %v3311
  %v3315 = vmul.f32 %v3312, 1.442695
  %v3316 = vpow.pop %v3315
  %v3317 = vmul.f32 %v3313, 1.442695
  %v3318 = vpow.pop %v3317
  %v3319 = vmul.f32 %v3314, 1.442695
  %v3320 = vpow.pop %v3319
  %v3322 = vsel %vm1607, %v3316, 0
  %v3325 = vsel %vm1607, %v3318, 0
  %v3328 = vsel %vm1607, %v3320, 0
  %3330 = vmatprep.subr.mxu0 0.0
  %3331 = vmatpush1.msra.mxu0 %v211
  %3332 = vmatprep.subr.mxu0 0.0
  %3333 = vmatpush1.msra.mxu0 %v212
  %3334 = vmatprep.subr.mxu0 0.0
  %3335 = vmatpush1.msra.mxu0 %v213
  %3336 = vmatprep.subr.mxu0 0.0
  %3337 = vmatpush1.msra.mxu0 %v214
  %3338 = vmatprep.subr.mxu0 0.0
  %3339 = vmatpush1.msra.mxu0 %v215
  %3340 = vmatprep.subr.mxu0 0.0
  %3341 = vmatpush1.msra.mxu0 %v216
  %3342 = vmatprep.subr.mxu0 0.0
  %3343 = vmatpush1.msra.mxu0 %v217
  %3344 = vmatprep.subr.mxu0 0.0
  %3345 = vmatpush1.msra.mxu0 %v218
  %3346 = vmatprep.subr.mxu0 0.0
  %3347 = vmatpush1.msra.mxu0 %v1638
  %3348 = vmatprep.subr.mxu0 0.0
  %3349 = vmatpush1.msra.mxu0 0.0
  %3350 = vmatprep.subr.mxu0 0.0
  %3351 = vmatpush1.msra.mxu0 0.0
  %3352 = vmatprep.subr.mxu0 0.0
  %3353 = vmatpush1.msra.mxu0 0.0
  %3354 = vmatprep.subr.mxu0 0.0
  %3355 = vmatpush1.msra.mxu0 0.0
  %3356 = vmatprep.subr.mxu0 0.0
  %3357 = vmatpush1.msra.mxu0 0.0
  %3358 = vmatprep.subr.mxu0 0.0
  %3359 = vmatpush1.msra.mxu0 0.0
  %3360 = vmatprep.subr.mxu0 0.0
  %3361 = vmatpush1.msra.mxu0 0.0
  %3362 = vmatprep.subr.mxu0 0.0
  %3363 = vmatpush1.msra.mxu0 0.0
  %3364 = vmatprep.subr.mxu0 0.0
  %3365 = vmatpush1.msra.mxu0 0.0
  %3366 = vmatprep.subr.mxu0 0.0
  %3367 = vmatpush1.msra.mxu0 0.0
  %3368 = vmatprep.subr.mxu0 0.0
  %3369 = vmatpush1.msra.mxu0 0.0
  %3370 = vmatprep.subr.mxu0 0.0
  %3371 = vmatpush1.msra.mxu0 0.0
  %3372 = vmatprep.subr.mxu0 0.0
  %3373 = vmatpush1.msra.mxu0 0.0
  %3374 = vmatprep.subr.mxu0 0.0
  %3375 = vmatpush1.msra.mxu0 0.0
  %3376 = vmatprep.subr.mxu0 0.0
  %3377 = vmatpush1.msra.mxu0 0.0
  %3378 = vmatprep.subr.mxu0 0.0
  %3379 = vmatpush1.msra.mxu0 0.0
  %3380 = vmatprep.subr.mxu0 0.0
  %3381 = vmatpush1.msra.mxu0 0.0
  %3382 = vmatprep.subr.mxu0 0.0
  %3383 = vmatpush1.msra.mxu0 0.0
  %3384 = vmatprep.subr.mxu0 0.0
  %3385 = vmatpush1.msra.mxu0 0.0
  %3386 = vmatprep.subr.mxu0 0.0
  %3387 = vmatpush1.msra.mxu0 0.0
  %3388 = vmatprep.subr.mxu0 0.0
  %3389 = vmatpush1.msra.mxu0 0.0
  %3390 = vmatprep.subr.mxu0 0.0
  %3391 = vmatpush1.msra.mxu0 0.0
  %3392 = vmatprep.subr.mxu0 0.0
  %3393 = vmatpush1.msra.mxu0 0.0
  %3394 = vmatprep.mubr.f32.mxu0 0.0
  %3395 = vmatmul.mubr.f32.gmra.mrb[0].mxu0 %v3322
  %v3396 = vpop.f32.mrb[0].mxu0
  %v3397 = vadd.f32 0.0, %v3396
  %v3398 = vpop.f32.mrb[0].mxu0
  %3399 = vmatprep.mubr.f32.mxu0 0.0
  %3400 = vmatmul.mubr.f32.gmra.mrb[0].mxu0 %v3325
  %v3401 = vpop.f32.mrb[0].mxu0
  %v3402 = vadd.f32 0.0, %v3401
  %v3403 = vpop.f32.mrb[0].mxu0
  %3404 = vmatprep.mubr.f32.mxu0 0.0
  %3405 = vmatmul.mubr.f32.gmra.mrb[0].mxu0 %v3328
  %v3406 = vpop.f32.mrb[0].mxu0
  %v3407 = vadd.f32 0.0, %v3406
  %v3408 = vpop.f32.mrb[0].mxu0
  %3409 = vdwg.mxu0
  %v3410 = vrcp.pop %v3397
  %v3411 = vrcp.pop %v3402
  %v3412 = vrcp.pop %v3407
  %v3414 = vsel %vm1723, %v3410, 0
  %v3417 = vsel %vm1723, %v3411, 0
  %v3420 = vsel %vm1723, %v3412, 0
  %3422 = vmatprep.subr.mxu0 0.0
  %3423 = vmatpush1.msra.mxu0 %v1734
  %3424 = vmatprep.subr.mxu0 0.0
  %3425 = vmatpush1.msra.mxu0 0.0
  %3426 = vmatprep.subr.mxu0 0.0
  %3427 = vmatpush1.msra.mxu0 0.0
  %3428 = vmatprep.subr.mxu0 0.0
  %3429 = vmatpush1.msra.mxu0 0.0
  %3430 = vmatprep.subr.mxu0 0.0
  %3431 = vmatpush1.msra.mxu0 0.0
  %3432 = vmatprep.subr.mxu0 0.0
  %3433 = vmatpush1.msra.mxu0 0.0
  %3434 = vmatprep.subr.mxu0 0.0
  %3435 = vmatpush1.msra.mxu0 0.0
  %3436 = vmatprep.subr.mxu0 0.0
  %3437 = vmatpush1.msra.mxu0 0.0
  %3438 = vmatprep.subr.mxu0 0.0
  %3439 = vmatpush1.msra.mxu0 0.0
  %3440 = vmatprep.subr.mxu0 0.0
  %3441 = vmatpush1.msra.mxu0 0.0
  %3442 = vmatprep.subr.mxu0 0.0
  %3443 = vmatpush1.msra.mxu0 0.0
  %3444 = vmatprep.subr.mxu0 0.0
  %3445 = vmatpush1.msra.mxu0 0.0
  %3446 = vmatprep.subr.mxu0 0.0
  %3447 = vmatpush1.msra.mxu0 0.0
  %3448 = vmatprep.subr.mxu0 0.0
  %3449 = vmatpush1.msra.mxu0 0.0
  %3450 = vmatprep.subr.mxu0 0.0
  %3451 = vmatpush1.msra.mxu0 0.0
  %3452 = vmatprep.subr.mxu0 0.0
  %3453 = vmatpush1.msra.mxu0 0.0
  %3454 = vmatprep.subr.mxu0 0.0
  %3455 = vmatpush1.msra.mxu0 0.0
  %3456 = vmatprep.subr.mxu0 0.0
  %3457 = vmatpush1.msra.mxu0 0.0
  %3458 = vmatprep.subr.mxu0 0.0
  %3459 = vmatpush1.msra.mxu0 0.0
  %3460 = vmatprep.subr.mxu0 0.0
  %3461 = vmatpush1.msra.mxu0 0.0
  %3462 = vmatprep.subr.mxu0 0.0
  %3463 = vmatpush1.msra.mxu0 0.0
  %3464 = vmatprep.subr.mxu0 0.0
  %3465 = vmatpush1.msra.mxu0 0.0
  %3466 = vmatprep.subr.mxu0 0.0
  %3467 = vmatpush1.msra.mxu0 0.0
  %3468 = vmatprep.subr.mxu0 0.0
  %3469 = vmatpush1.msra.mxu0 0.0
  %3470 = vmatprep.subr.mxu0 0.0
  %3471 = vmatpush1.msra.mxu0 0.0
  %3472 = vmatprep.subr.mxu0 0.0
  %3473 = vmatpush1.msra.mxu0 0.0
  %3474 = vmatprep.subr.mxu0 0.0
  %3475 = vmatpush1.msra.mxu0 0.0
  %3476 = vmatprep.subr.mxu0 0.0
  %3477 = vmatpush1.msra.mxu0 0.0
  %3478 = vmatprep.subr.mxu0 0.0
  %3479 = vmatpush1.msra.mxu0 0.0
  %3480 = vmatprep.subr.mxu0 0.0
  %3481 = vmatpush1.msra.mxu0 0.0
  %3482 = vmatprep.subr.mxu0 0.0
  %3483 = vmatpush1.msra.mxu0 0.0
  %3484 = vmatprep.subr.mxu0 0.0
  %3485 = vmatpush1.msra.mxu0 0.0
  %3486 = vmatprep.mubr.f32.mxu0 0.0
  %3487 = vmatmul.mubr.f32.gmra.mrb[0].mxu0 %v3414
  %v3488 = vpop.f32.mrb[0].mxu0
  %v3489 = vadd.f32 0.0, %v3488
  %v3490 = vpop.f32.mrb[0].mxu0
  %3491 = vmatprep.mubr.f32.mxu0 0.0
  %3492 = vmatmul.mubr.f32.gmra.mrb[0].mxu0 %v3417
  %v3493 = vpop.f32.mrb[0].mxu0
  %v3494 = vadd.f32 0.0, %v3493
  %v3495 = vpop.f32.mrb[0].mxu0
  %3496 = vmatprep.mubr.f32.mxu0 0.0
  %3497 = vmatmul.mubr.f32.gmra.mrb[0].mxu0 %v3420
  %v3498 = vpop.f32.mrb[0].mxu0
  %v3499 = vadd.f32 0.0, %v3498
  %v3500 = vpop.f32.mrb[0].mxu0
  %3501 = vdwg.mxu0
  %v3502 = vmul.f32 %v3316, %v3489
  %v3503 = vmul.f32 %v3318, %v3494
  %v3504 = vmul.f32 %v3320, %v3499
  %v3506 = vsel %vm980, %v2404, 0
  %3508 = vmatprep.subr.mxu0 0.0
  %3509 = vmatpush1.msra.mxu0 %v2394
  %3510 = vmatprep.subr.mxu0 0.0
  %3511 = vmatpush1.msra.mxu0 %v2399
  %3512 = vmatprep.subr.mxu0 0.0
  %3513 = vmatpush1.msra.mxu0 %v3506
  %3514 = vmatprep.subr.mxu0 0.0
  %3515 = vmatpush1.msra.mxu0 0.0
  %3516 = vmatprep.subr.mxu0 0.0
  %3517 = vmatpush1.msra.mxu0 0.0
  %3518 = vmatprep.subr.mxu0 0.0
  %3519 = vmatpush1.msra.mxu0 0.0
  %3520 = vmatprep.subr.mxu0 0.0
  %3521 = vmatpush1.msra.mxu0 0.0
  %3522 = vmatprep.subr.mxu0 0.0
  %3523 = vmatpush1.msra.mxu0 0.0
  %3524 = vmatprep.subr.mxu0 0.0
  %3525 = vmatpush1.msra.mxu0 0.0
  %3526 = vmatprep.subr.mxu0 0.0
  %3527 = vmatpush1.msra.mxu0 0.0
  %3528 = vmatprep.subr.mxu0 0.0
  %3529 = vmatpush1.msra.mxu0 0.0
  %3530 = vmatprep.subr.mxu0 0.0
  %3531 = vmatpush1.msra.mxu0 0.0
  %3532 = vmatprep.subr.mxu0 0.0
  %3533 = vmatpush1.msra.mxu0 0.0
  %3534 = vmatprep.subr.mxu0 0.0
  %3535 = vmatpush1.msra.mxu0 0.0
  %3536 = vmatprep.subr.mxu0 0.0
  %3537 = vmatpush1.msra.mxu0 0.0
  %3538 = vmatprep.subr.mxu0 0.0
  %3539 = vmatpush1.msra.mxu0 0.0
  %3540 = vmatprep.subr.mxu0 0.0
  %3541 = vmatpush1.msra.mxu0 0.0
  %3542 = vmatprep.subr.mxu0 0.0
  %3543 = vmatpush1.msra.mxu0 0.0
  %3544 = vmatprep.subr.mxu0 0.0
  %3545 = vmatpush1.msra.mxu0 0.0
  %3546 = vmatprep.subr.mxu0 0.0
  %3547 = vmatpush1.msra.mxu0 0.0
  %3548 = vmatprep.subr.mxu0 0.0
  %3549 = vmatpush1.msra.mxu0 0.0
  %3550 = vmatprep.subr.mxu0 0.0
  %3551 = vmatpush1.msra.mxu0 0.0
  %3552 = vmatprep.subr.mxu0 0.0
  %3553 = vmatpush1.msra.mxu0 0.0
  %3554 = vmatprep.subr.mxu0 0.0
  %3555 = vmatpush1.msra.mxu0 0.0
  %3556 = vmatprep.subr.mxu0 0.0
  %3557 = vmatpush1.msra.mxu0 0.0
  %3558 = vmatprep.subr.mxu0 0.0
  %3559 = vmatpush1.msra.mxu0 0.0
  %3560 = vmatprep.subr.mxu0 0.0
  %3561 = vmatpush1.msra.mxu0 0.0
  %3562 = vmatprep.subr.mxu0 0.0
  %3563 = vmatpush1.msra.mxu0 0.0
  %3564 = vmatprep.subr.mxu0 0.0
  %3565 = vmatpush1.msra.mxu0 0.0
  %3566 = vmatprep.subr.mxu0 0.0
  %3567 = vmatpush1.msra.mxu0 0.0
  %3568 = vmatprep.subr.mxu0 0.0
  %3569 = vmatpush1.msra.mxu0 0.0
  %3570 = vmatprep.subr.mxu0 0.0
  %3571 = vmatpush1.msra.mxu0 0.0
  %3572 = vmatprep.mubr.f32.mxu0 0.0
  %3573 = vmatmul.mubr.f32.gmra.mrb[0].mxu0 %v1820
  %v3574 = vpop.f32.mrb[0].mxu0
  %v3575 = vadd.f32 0.0, %v3574
  %v3576 = vpop.f32.mrb[0].mxu0
  %3577 = vmatprep.mubr.f32.mxu0 0.0
  %3578 = vmatmul.mubr.f32.gmra.mrb[0].mxu0 %v1823
  %v3579 = vpop.f32.mrb[0].mxu0
  %v3580 = vadd.f32 0.0, %v3579
  %v3581 = vpop.f32.mrb[0].mxu0
  %3582 = vmatprep.mubr.f32.mxu0 0.0
  %3583 = vmatmul.mubr.f32.gmra.mrb[0].mxu0 %v1826
  %v3584 = vpop.f32.mrb[0].mxu0
  %v3585 = vadd.f32 0.0, %v3584
  %v3586 = vpop.f32.mrb[0].mxu0
  %3587 = vmatprep.mubr.f32.mxu0 0.0
  %3588 = vmatmul.mubr.f32.gmra.mrb[0].mxu0 %v1829
  %v3589 = vpop.f32.mrb[0].mxu0
  %v3590 = vadd.f32 0.0, %v3589
  %v3591 = vpop.f32.mrb[0].mxu0
  %3592 = vmatprep.mubr.f32.mxu0 0.0
  %3593 = vmatmul.mubr.f32.gmra.mrb[0].mxu0 %v1832
  %v3594 = vpop.f32.mrb[0].mxu0
  %v3595 = vadd.f32 0.0, %v3594
  %v3596 = vpop.f32.mrb[0].mxu0
  %3597 = vmatprep.mubr.f32.mxu0 0.0
  %3598 = vmatmul.mubr.f32.gmra.mrb[0].mxu0 %v1835
  %v3599 = vpop.f32.mrb[0].mxu0
  %v3600 = vadd.f32 0.0, %v3599
  %v3601 = vpop.f32.mrb[0].mxu0
  %3602 = vmatprep.mubr.f32.mxu0 0.0
  %3603 = vmatmul.mubr.f32.gmra.mrb[0].mxu0 %v1838
  %v3604 = vpop.f32.mrb[0].mxu0
  %v3605 = vadd.f32 0.0, %v3604
  %v3606 = vpop.f32.mrb[0].mxu0
  %3607 = vmatprep.mubr.f32.mxu0 0.0
  %3608 = vmatmul.mubr.f32.gmra.mrb[0].mxu0 %v1841
  %v3609 = vpop.f32.mrb[0].mxu0
  %v3610 = vadd.f32 0.0, %v3609
  %v3611 = vpop.f32.mrb[0].mxu0
  %3612 = vmatprep.mubr.f32.mxu0 0.0
  %3613 = vmatmul.mubr.f32.gmra.mrb[0].mxu0 %v1844
  %v3614 = vpop.f32.mrb[0].mxu0
  %v3615 = vadd.f32 0.0, %v3614
  %v3616 = vpop.f32.mrb[0].mxu0
  %3617 = vdwg.mxu0
  %v3618 = vmul.f32 %v3575, %v230
  %v3619 = vmul.f32 %v3580, %v231
  %v3620 = vmul.f32 %v3585, %v232
  %v3621 = vmul.f32 %v3590, %v233
  %v3622 = vmul.f32 %v3595, %v234
  %v3623 = vmul.f32 %v3600, %v235
  %v3624 = vmul.f32 %v3605, %v236
  %v3625 = vmul.f32 %v3610, %v237
  %v3626 = vmul.f32 %v3615, %v238
  %v3628 = vsel %vm1607, %v3502, 0
  %v3631 = vsel %vm1607, %v3503, 0
  %v3634 = vsel %vm1607, %v3504, 0
  %v3637 = vsel %vm1636, %v3626, 0
  %3639 = vmatprep.subr.mxu0 0.0
  %3640 = vmatpush1.msra.mxu0 %v3618
  %3641 = vmatprep.subr.mxu0 0.0
  %3642 = vmatpush1.msra.mxu0 %v3619
  %3643 = vmatprep.subr.mxu0 0.0
  %3644 = vmatpush1.msra.mxu0 %v3620
  %3645 = vmatprep.subr.mxu0 0.0
  %3646 = vmatpush1.msra.mxu0 %v3621
  %3647 = vmatprep.subr.mxu0 0.0
  %3648 = vmatpush1.msra.mxu0 %v3622
  %3649 = vmatprep.subr.mxu0 0.0
  %3650 = vmatpush1.msra.mxu0 %v3623
  %3651 = vmatprep.subr.mxu0 0.0
  %3652 = vmatpush1.msra.mxu0 %v3624
  %3653 = vmatprep.subr.mxu0 0.0
  %3654 = vmatpush1.msra.mxu0 %v3625
  %3655 = vmatprep.subr.mxu0 0.0
  %3656 = vmatpush1.msra.mxu0 %v3637
  %3657 = vmatprep.subr.mxu0 0.0
  %3658 = vmatpush1.msra.mxu0 0.0
  %3659 = vmatprep.subr.mxu0 0.0
  %3660 = vmatpush1.msra.mxu0 0.0
  %3661 = vmatprep.subr.mxu0 0.0
  %3662 = vmatpush1.msra.mxu0 0.0
  %3663 = vmatprep.subr.mxu0 0.0
  %3664 = vmatpush1.msra.mxu0 0.0
  %3665 = vmatprep.subr.mxu0 0.0
  %3666 = vmatpush1.msra.mxu0 0.0
  %3667 = vmatprep.subr.mxu0 0.0
  %3668 = vmatpush1.msra.mxu0 0.0
  %3669 = vmatprep.subr.mxu0 0.0
  %3670 = vmatpush1.msra.mxu0 0.0
  %3671 = vmatprep.subr.mxu0 0.0
  %3672 = vmatpush1.msra.mxu0 0.0
  %3673 = vmatprep.subr.mxu0 0.0
  %3674 = vmatpush1.msra.mxu0 0.0
  %3675 = vmatprep.subr.mxu0 0.0
  %3676 = vmatpush1.msra.mxu0 0.0
  %3677 = vmatprep.subr.mxu0 0.0
  %3678 = vmatpush1.msra.mxu0 0.0
  %3679 = vmatprep.subr.mxu0 0.0
  %3680 = vmatpush1.msra.mxu0 0.0
  %3681 = vmatprep.subr.mxu0 0.0
  %3682 = vmatpush1.msra.mxu0 0.0
  %3683 = vmatprep.subr.mxu0 0.0
  %3684 = vmatpush1.msra.mxu0 0.0
  %3685 = vmatprep.subr.mxu0 0.0
  %3686 = vmatpush1.msra.mxu0 0.0
  %3687 = vmatprep.subr.mxu0 0.0
  %3688 = vmatpush1.msra.mxu0 0.0
  %3689 = vmatprep.subr.mxu0 0.0
  %3690 = vmatpush1.msra.mxu0 0.0
  %3691 = vmatprep.subr.mxu0 0.0
  %3692 = vmatpush1.msra.mxu0 0.0
  %3693 = vmatprep.subr.mxu0 0.0
  %3694 = vmatpush1.msra.mxu0 0.0
  %3695 = vmatprep.subr.mxu0 0.0
  %3696 = vmatpush1.msra.mxu0 0.0
  %3697 = vmatprep.subr.mxu0 0.0
  %3698 = vmatpush1.msra.mxu0 0.0
  %3699 = vmatprep.subr.mxu0 0.0
  %3700 = vmatpush1.msra.mxu0 0.0
  %3701 = vmatprep.subr.mxu0 0.0
  %3702 = vmatpush1.msra.mxu0 0.0
  %3703 = vmatprep.mubr.f32.mxu0 0.0
  %3704 = vmatmul.mubr.f32.gmra.mrb[0].mxu0 %v3628
  %v3705 = vpop.f32.mrb[0].mxu0
  %v3706 = vadd.f32 0.0, %v3705
  %v3707 = vpop.f32.mrb[0].mxu0
  %3708 = vmatprep.mubr.f32.mxu0 0.0
  %3709 = vmatmul.mubr.f32.gmra.mrb[0].mxu0 %v3631
  %v3710 = vpop.f32.mrb[0].mxu0
  %v3711 = vadd.f32 0.0, %v3710
  %v3712 = vpop.f32.mrb[0].mxu0
  %3713 = vmatprep.mubr.f32.mxu0 0.0
  %3714 = vmatmul.mubr.f32.gmra.mrb[0].mxu0 %v3634
  %v3715 = vpop.f32.mrb[0].mxu0
  %v3716 = vadd.f32 0.0, %v3715
  %v3717 = vpop.f32.mrb[0].mxu0
  %3718 = vdwg.mxu0
  %s3719 = scalar_lea.vmem %s24, 40
  %v3720 = vld [vmem:[%s3719] sm:$0xff]
  %v3721 = vld [vmem:[%s3719 + $0x8] sm:$0xff]
  %v3722 = vld [vmem:[%s3719 + $0x10] sm:$0xff]
  %v3723 = vld [vmem:[%s3719 + $0x18] sm:$0xff]
  %v3724 = vld [vmem:[%s3719 + $0x20] sm:$0x3]
  %v3726 = vsel %vm976, %v3720, 0
  %v3729 = vsel %vm976, %v3721, 0
  %v3732 = vsel %vm976, %v3722, 0
  %v3735 = vsel %vm976, %v3723, 0
  %v3738 = vsel %vm976, %v3724, 0
  %v3741 = vsel %vm980, %v3716, 0
  %3743 = vmatprep.subr.mxu0 0.0
  %3744 = vmatpush1.msra.mxu0 %v3706
  %3745 = vmatprep.subr.mxu0 0.0
  %3746 = vmatpush1.msra.mxu0 %v3711
  %3747 = vmatprep.subr.mxu0 0.0
  %3748 = vmatpush1.msra.mxu0 %v3741
  %3749 = vmatprep.subr.mxu0 0.0
  %3750 = vmatpush1.msra.mxu0 0.0
  %3751 = vmatprep.subr.mxu0 0.0
  %3752 = vmatpush1.msra.mxu0 0.0
  %3753 = vmatprep.subr.mxu0 0.0
  %3754 = vmatpush1.msra.mxu0 0.0
  %3755 = vmatprep.subr.mxu0 0.0
  %3756 = vmatpush1.msra.mxu0 0.0
  %3757 = vmatprep.subr.mxu0 0.0
  %3758 = vmatpush1.msra.mxu0 0.0
  %3759 = vmatprep.subr.mxu0 0.0
  %3760 = vmatpush1.msra.mxu0 0.0
  %3761 = vmatprep.subr.mxu0 0.0
  %3762 = vmatpush1.msra.mxu0 0.0
  %3763 = vmatprep.subr.mxu0 0.0
  %3764 = vmatpush1.msra.mxu0 0.0
  %3765 = vmatprep.subr.mxu0 0.0
  %3766 = vmatpush1.msra.mxu0 0.0
  %3767 = vmatprep.subr.mxu0 0.0
  %3768 = vmatpush1.msra.mxu0 0.0
  %3769 = vmatprep.subr.mxu0 0.0
  %3770 = vmatpush1.msra.mxu0 0.0
  %3771 = vmatprep.subr.mxu0 0.0
  %3772 = vmatpush1.msra.mxu0 0.0
  %3773 = vmatprep.subr.mxu0 0.0
  %3774 = vmatpush1.msra.mxu0 0.0
  %3775 = vmatprep.subr.mxu0 0.0
  %3776 = vmatpush1.msra.mxu0 0.0
  %3777 = vmatprep.subr.mxu0 0.0
  %3778 = vmatpush1.msra.mxu0 0.0
  %3779 = vmatprep.subr.mxu0 0.0
  %3780 = vmatpush1.msra.mxu0 0.0
  %3781 = vmatprep.subr.mxu0 0.0
  %3782 = vmatpush1.msra.mxu0 0.0
  %3783 = vmatprep.subr.mxu0 0.0
  %3784 = vmatpush1.msra.mxu0 0.0
  %3785 = vmatprep.subr.mxu0 0.0
  %3786 = vmatpush1.msra.mxu0 0.0
  %3787 = vmatprep.subr.mxu0 0.0
  %3788 = vmatpush1.msra.mxu0 0.0
  %3789 = vmatprep.subr.mxu0 0.0
  %3790 = vmatpush1.msra.mxu0 0.0
  %3791 = vmatprep.subr.mxu0 0.0
  %3792 = vmatpush1.msra.mxu0 0.0
  %3793 = vmatprep.subr.mxu0 0.0
  %3794 = vmatpush1.msra.mxu0 0.0
  %3795 = vmatprep.subr.mxu0 0.0
  %3796 = vmatpush1.msra.mxu0 0.0
  %3797 = vmatprep.subr.mxu0 0.0
  %3798 = vmatpush1.msra.mxu0 0.0
  %3799 = vmatprep.subr.mxu0 0.0
  %3800 = vmatpush1.msra.mxu0 0.0
  %3801 = vmatprep.subr.mxu0 0.0
  %3802 = vmatpush1.msra.mxu0 0.0
  %3803 = vmatprep.subr.mxu0 0.0
  %3804 = vmatpush1.msra.mxu0 0.0
  %3805 = vmatprep.subr.mxu0 0.0
  %3806 = vmatpush1.msra.mxu0 0.0
  %3807 = vmatprep.mubr.f32.mxu0 0.0
  %3808 = vmatmul.mubr.f32.gmra.mrb[0].mxu0 %v3726
  %v3809 = vpop.f32.mrb[0].mxu0
  %v3810 = vadd.f32 0.0, %v3809
  %v3811 = vpop.f32.mrb[0].mxu0
  %3812 = vmatprep.mubr.f32.mxu0 0.0
  %3813 = vmatmul.mubr.f32.gmra.mrb[0].mxu0 %v3729
  %v3814 = vpop.f32.mrb[0].mxu0
  %v3815 = vadd.f32 0.0, %v3814
  %v3816 = vpop.f32.mrb[0].mxu0
  %3817 = vmatprep.mubr.f32.mxu0 0.0
  %3818 = vmatmul.mubr.f32.gmra.mrb[0].mxu0 %v3732
  %v3819 = vpop.f32.mrb[0].mxu0
  %v3820 = vadd.f32 0.0, %v3819
  %v3821 = vpop.f32.mrb[0].mxu0
  %3822 = vmatprep.mubr.f32.mxu0 0.0
  %3823 = vmatmul.mubr.f32.gmra.mrb[0].mxu0 %v3735
  %v3824 = vpop.f32.mrb[0].mxu0
  %v3825 = vadd.f32 0.0, %v3824
  %v3826 = vpop.f32.mrb[0].mxu0
  %3827 = vmatprep.mubr.f32.mxu0 0.0
  %3828 = vmatmul.mubr.f32.gmra.mrb[0].mxu0 %v3738
  %v3829 = vpop.f32.mrb[0].mxu0
  %v3830 = vadd.f32 0.0, %v3829
  %v3831 = vpop.f32.mrb[0].mxu0
  %3832 = vdwg.mxu0
  %v3834 = vsel %vm976, %v2060, 0
  %v3837 = vsel %vm976, %v2061, 0
  %v3840 = vsel %vm976, %v2062, 0
  %v3843 = vsel %vm976, %v2063, 0
  %v3846 = vsel %vm976, %v2064, 0
  %v3849 = vsel %vm980, %v2057, 0
  %3851 = vmatprep.subr.mxu0 0.0
  %3852 = vmatpush1.msra.mxu0 %v2047
  %3853 = vmatprep.subr.mxu0 0.0
  %3854 = vmatpush1.msra.mxu0 %v2052
  %3855 = vmatprep.subr.mxu0 0.0
  %3856 = vmatpush1.msra.mxu0 %v3849
  %3857 = vmatprep.subr.mxu0 0.0
  %3858 = vmatpush1.msra.mxu0 0.0
  %3859 = vmatprep.subr.mxu0 0.0
  %3860 = vmatpush1.msra.mxu0 0.0
  %3861 = vmatprep.subr.mxu0 0.0
  %3862 = vmatpush1.msra.mxu0 0.0
  %3863 = vmatprep.subr.mxu0 0.0
  %3864 = vmatpush1.msra.mxu0 0.0
  %3865 = vmatprep.subr.mxu0 0.0
  %3866 = vmatpush1.msra.mxu0 0.0
  %3867 = vmatprep.subr.mxu0 0.0
  %3868 = vmatpush1.msra.mxu0 0.0
  %3869 = vmatprep.subr.mxu0 0.0
  %3870 = vmatpush1.msra.mxu0 0.0
  %3871 = vmatprep.subr.mxu0 0.0
  %3872 = vmatpush1.msra.mxu0 0.0
  %3873 = vmatprep.subr.mxu0 0.0
  %3874 = vmatpush1.msra.mxu0 0.0
  %3875 = vmatprep.subr.mxu0 0.0
  %3876 = vmatpush1.msra.mxu0 0.0
  %3877 = vmatprep.subr.mxu0 0.0
  %3878 = vmatpush1.msra.mxu0 0.0
  %3879 = vmatprep.subr.mxu0 0.0
  %3880 = vmatpush1.msra.mxu0 0.0
  %3881 = vmatprep.subr.mxu0 0.0
  %3882 = vmatpush1.msra.mxu0 0.0
  %3883 = vmatprep.subr.mxu0 0.0
  %3884 = vmatpush1.msra.mxu0 0.0
  %3885 = vmatprep.subr.mxu0 0.0
  %3886 = vmatpush1.msra.mxu0 0.0
  %3887 = vmatprep.subr.mxu0 0.0
  %3888 = vmatpush1.msra.mxu0 0.0
  %3889 = vmatprep.subr.mxu0 0.0
  %3890 = vmatpush1.msra.mxu0 0.0
  %3891 = vmatprep.subr.mxu0 0.0
  %3892 = vmatpush1.msra.mxu0 0.0
  %3893 = vmatprep.subr.mxu0 0.0
  %3894 = vmatpush1.msra.mxu0 0.0
  %3895 = vmatprep.subr.mxu0 0.0
  %3896 = vmatpush1.msra.mxu0 0.0
  %3897 = vmatprep.subr.mxu0 0.0
  %3898 = vmatpush1.msra.mxu0 0.0
  %3899 = vmatprep.subr.mxu0 0.0
  %3900 = vmatpush1.msra.mxu0 0.0
  %3901 = vmatprep.subr.mxu0 0.0
  %3902 = vmatpush1.msra.mxu0 0.0
  %3903 = vmatprep.subr.mxu0 0.0
  %3904 = vmatpush1.msra.mxu0 0.0
  %3905 = vmatprep.subr.mxu0 0.0
  %3906 = vmatpush1.msra.mxu0 0.0
  %3907 = vmatprep.subr.mxu0 0.0
  %3908 = vmatpush1.msra.mxu0 0.0
  %3909 = vmatprep.subr.mxu0 0.0
  %3910 = vmatpush1.msra.mxu0 0.0
  %3911 = vmatprep.subr.mxu0 0.0
  %3912 = vmatpush1.msra.mxu0 0.0
  %3913 = vmatprep.subr.mxu0 0.0
  %3914 = vmatpush1.msra.mxu0 0.0
  %3915 = vmatprep.mubr.f32.mxu0 0.0
  %3916 = vmatmul.mubr.f32.gmra.mrb[0].mxu0 %v3834
  %v3917 = vpop.f32.mrb[0].mxu0
  %v3918 = vadd.f32 %v3810, %v3917
  %v3919 = vpop.f32.mrb[0].mxu0
  %3920 = vmatprep.mubr.f32.mxu0 0.0
  %3921 = vmatmul.mubr.f32.gmra.mrb[0].mxu0 %v3837
  %v3922 = vpop.f32.mrb[0].mxu0
  %v3923 = vadd.f32 %v3815, %v3922
  %v3924 = vpop.f32.mrb[0].mxu0
  %3925 = vmatprep.mubr.f32.mxu0 0.0
  %3926 = vmatmul.mubr.f32.gmra.mrb[0].mxu0 %v3840
  %v3927 = vpop.f32.mrb[0].mxu0
  %v3928 = vadd.f32 %v3820, %v3927
  %v3929 = vpop.f32.mrb[0].mxu0
  %3930 = vmatprep.mubr.f32.mxu0 0.0
  %3931 = vmatmul.mubr.f32.gmra.mrb[0].mxu0 %v3843
  %v3932 = vpop.f32.mrb[0].mxu0
  %v3933 = vadd.f32 %v3825, %v3932
  %v3934 = vpop.f32.mrb[0].mxu0
  %3935 = vmatprep.mubr.f32.mxu0 0.0
  %3936 = vmatmul.mubr.f32.gmra.mrb[0].mxu0 %v3846
  %v3937 = vpop.f32.mrb[0].mxu0
  %v3938 = vadd.f32 %v3830, %v3937
  %v3939 = vpop.f32.mrb[0].mxu0
  %3940 = vdwg.mxu0
  %v3941 = vld [vmem:[%s6] sm:$0xff]
  %v3942 = vld [vmem:[%s6 + $0x8] sm:$0xff]
  %v3943 = vld [vmem:[%s6 + $0x10] sm:$0xff]
  %v3944 = vld [vmem:[%s6 + $0x18] sm:$0xff]
  %v3946 = vsel %vm705, %v3918, 0
  %v3949 = vsel %vm705, %v3923, 0
  %v3952 = vsel %vm705, %v3928, 0
  %v3955 = vsel %vm705, %v3933, 0
  %v3958 = vsel %vm705, %v3938, 0
  %3960 = vmatprep.subr.mxu0 0.0
  %3961 = vmatpush1.msra.mxu0 %v3941
  %3962 = vmatprep.subr.mxu0 0.0
  %3963 = vmatpush1.msra.mxu0 %v3942
  %3964 = vmatprep.subr.mxu0 0.0
  %3965 = vmatpush1.msra.mxu0 %v3943
  %3966 = vmatprep.subr.mxu0 0.0
  %3967 = vmatpush1.msra.mxu0 %v3944
  %3968 = vmatprep.subr.mxu0 0.0
  %3969 = vmatpush1.msra.mxu0 0.0
  %3970 = vmatprep.subr.mxu0 0.0
  %3971 = vmatpush1.msra.mxu0 0.0
  %3972 = vmatprep.subr.mxu0 0.0
  %3973 = vmatpush1.msra.mxu0 0.0
  %3974 = vmatprep.subr.mxu0 0.0
  %3975 = vmatpush1.msra.mxu0 0.0
  %3976 = vmatprep.subr.mxu0 0.0
  %3977 = vmatpush1.msra.mxu0 0.0
  %3978 = vmatprep.subr.mxu0 0.0
  %3979 = vmatpush1.msra.mxu0 0.0
  %3980 = vmatprep.subr.mxu0 0.0
  %3981 = vmatpush1.msra.mxu0 0.0
  %3982 = vmatprep.subr.mxu0 0.0
  %3983 = vmatpush1.msra.mxu0 0.0
  %3984 = vmatprep.subr.mxu0 0.0
  %3985 = vmatpush1.msra.mxu0 0.0
  %3986 = vmatprep.subr.mxu0 0.0
  %3987 = vmatpush1.msra.mxu0 0.0
  %3988 = vmatprep.subr.mxu0 0.0
  %3989 = vmatpush1.msra.mxu0 0.0
  %3990 = vmatprep.subr.mxu0 0.0
  %3991 = vmatpush1.msra.mxu0 0.0
  %3992 = vmatprep.subr.mxu0 0.0
  %3993 = vmatpush1.msra.mxu0 0.0
  %3994 = vmatprep.subr.mxu0 0.0
  %3995 = vmatpush1.msra.mxu0 0.0
  %3996 = vmatprep.subr.mxu0 0.0
  %3997 = vmatpush1.msra.mxu0 0.0
  %3998 = vmatprep.subr.mxu0 0.0
  %3999 = vmatpush1.msra.mxu0 0.0
  %4000 = vmatprep.subr.mxu0 0.0
  %4001 = vmatpush1.msra.mxu0 0.0
  %4002 = vmatprep.subr.mxu0 0.0
  %4003 = vmatpush1.msra.mxu0 0.0
  %4004 = vmatprep.subr.mxu0 0.0
  %4005 = vmatpush1.msra.mxu0 0.0
  %4006 = vmatprep.subr.mxu0 0.0
  %4007 = vmatpush1.msra.mxu0 0.0
  %4008 = vmatprep.subr.mxu0 0.0
  %4009 = vmatpush1.msra.mxu0 0.0
  %4010 = vmatprep.subr.mxu0 0.0
  %4011 = vmatpush1.msra.mxu0 0.0
  %4012 = vmatprep.subr.mxu0 0.0
  %4013 = vmatpush1.msra.mxu0 0.0
  %4014 = vmatprep.subr.mxu0 0.0
  %4015 = vmatpush1.msra.mxu0 0.0
  %4016 = vmatprep.subr.mxu0 0.0
  %4017 = vmatpush1.msra.mxu0 0.0
  %4018 = vmatprep.subr.mxu0 0.0
  %4019 = vmatpush1.msra.mxu0 0.0
  %4020 = vmatprep.subr.mxu0 0.0
  %4021 = vmatpush1.msra.mxu0 0.0
  %4022 = vmatprep.subr.mxu0 0.0
  %4023 = vmatpush1.msra.mxu0 0.0
  %4024 = vmatprep.mubr.f32.mxu0 0.0
  %4025 = vmatmul.mubr.f32.gmra.mrb[0].mxu0 %v3946
  %v4026 = vpop.f32.mrb[0].mxu0
  %v4027 = vadd.f32 %v83, %v4026
  %v4028 = vpop.f32.mrb[0].mxu0
  %4029 = vmatprep.mubr.f32.mxu0 0.0
  %4030 = vmatmul.mubr.f32.gmra.mrb[0].mxu0 %v3949
  %v4031 = vpop.f32.mrb[0].mxu0
  %v4032 = vadd.f32 %v84, %v4031
  %v4033 = vpop.f32.mrb[0].mxu0
  %4034 = vmatprep.mubr.f32.mxu0 0.0
  %4035 = vmatmul.mubr.f32.gmra.mrb[0].mxu0 %v3952
  %v4036 = vpop.f32.mrb[0].mxu0
  %v4037 = vadd.f32 %v85, %v4036
  %v4038 = vpop.f32.mrb[0].mxu0
  %4039 = vmatprep.mubr.f32.mxu0 0.0
  %4040 = vmatmul.mubr.f32.gmra.mrb[0].mxu0 %v3955
  %v4041 = vpop.f32.mrb[0].mxu0
  %v4042 = vadd.f32 %v86, %v4041
  %v4043 = vpop.f32.mrb[0].mxu0
  %4044 = vmatprep.mubr.f32.mxu0 0.0
  %4045 = vmatmul.mubr.f32.gmra.mrb[0].mxu0 %v3958
  %v4046 = vpop.f32.mrb[0].mxu0
  %v4047 = vadd.f32 %v87, %v4046
  %v4048 = vpop.f32.mrb[0].mxu0
  %4049 = vdwg.mxu0
  %v4050 = vld [vmem:[%s7] sm:$0x1]
  %v4051 = vld [vmem:[%s8] sm:$0x1]
  %v4052 = vsel %vm241, %v4027, 0.0
  %4053 = vadd.xlane.f32.xlu0 %v4052
  %v4054 = vpop.xlane.xlu0 %4053
  %v4055 = vsel %vm241, %v4032, 0.0
  %4056 = vadd.xlane.f32.xlu0 %v4055
  %v4057 = vpop.xlane.xlu0 %4056
  %v4058 = vsel %vm241, %v4037, 0.0
  %4059 = vadd.xlane.f32.xlu0 %v4058
  %v4060 = vpop.xlane.xlu0 %4059
  %v4061 = vsel %vm241, %v4042, 0.0
  %4062 = vadd.xlane.f32.xlu0 %v4061
  %v4063 = vpop.xlane.xlu0 %4062
  %v4064 = vsel %vm254, %v4047, 0.0
  %4065 = vadd.xlane.f32.xlu0 %v4064
  %v4066 = vpop.xlane.xlu0 %4065
  %v4067 = vmul.f32 %v4054, %v258
  %v4068 = vmul.f32 %v4057, %v258
  %v4069 = vmul.f32 %v4060, %v258
  %v4070 = vmul.f32 %v4063, %v258
  %v4071 = vmul.f32 %v4066, %v258
  %v4072 = vmul.f32 %v4027, %v4027
  %v4073 = vmul.f32 %v4032, %v4032
  %v4074 = vmul.f32 %v4037, %v4037
  %v4075 = vmul.f32 %v4042, %v4042
  %v4076 = vmul.f32 %v4047, %v4047
  %v4077 = vsel %vm241, %v4072, 0.0
  %4078 = vadd.xlane.f32.xlu0 %v4077
  %v4079 = vpop.xlane.xlu0 %4078
  %v4080 = vsel %vm241, %v4073, 0.0
  %4081 = vadd.xlane.f32.xlu0 %v4080
  %v4082 = vpop.xlane.xlu0 %4081
  %v4083 = vsel %vm241, %v4074, 0.0
  %4084 = vadd.xlane.f32.xlu0 %v4083
  %v4085 = vpop.xlane.xlu0 %4084
  %v4086 = vsel %vm241, %v4075, 0.0
  %4087 = vadd.xlane.f32.xlu0 %v4086
  %v4088 = vpop.xlane.xlu0 %4087
  %v4089 = vsel %vm254, %v4076, 0.0
  %4090 = vadd.xlane.f32.xlu0 %v4089
  %v4091 = vpop.xlane.xlu0 %4090
  %v4092 = vmul.f32 %v4079, %v258
  %v4093 = vmul.f32 %v4082, %v258
  %v4094 = vmul.f32 %v4085, %v258
  %v4095 = vmul.f32 %v4088, %v258
  %v4096 = vmul.f32 %v4091, %v258
  %v4097 = vmul.f32 %v4067, %v4067
  %v4098 = vmul.f32 %v4068, %v4068
  %v4099 = vmul.f32 %v4069, %v4069
  %v4100 = vmul.f32 %v4070, %v4070
  %v4101 = vmul.f32 %v4071, %v4071
  %v4102 = vsub.f32 %v4092, %v4097
  %v4103 = vsub.f32 %v4093, %v4098
  %v4104 = vsub.f32 %v4094, %v4099
  %v4105 = vsub.f32 %v4095, %v4100
  %v4106 = vsub.f32 %v4096, %v4101
  %v4107 = vsub.f32 %v4027, %v4067
  %v4108 = vsub.f32 %v4032, %v4068
  %v4109 = vsub.f32 %v4037, %v4069
  %v4110 = vsub.f32 %v4042, %v4070
  %v4111 = vsub.f32 %v4047, %v4071
  %v4112 = vadd.f32 %v4102, 1e-05
  %v4113 = vadd.f32 %v4103, 1e-05
  %v4114 = vadd.f32 %v4104, 1e-05
  %v4115 = vadd.f32 %v4105, 1e-05
  %v4116 = vadd.f32 %v4106, 1e-05
  %v4117 = vrsqrt.pop %v4112
  %v4118 = vrsqrt.pop %v4113
  %v4119 = vrsqrt.pop %v4114
  %v4120 = vrsqrt.pop %v4115
  %v4121 = vrsqrt.pop %v4116
  %v4122 = vmul.f32 %v4107, %v4117
  %v4123 = vmul.f32 %v4108, %v4118
  %v4124 = vmul.f32 %v4109, %v4119
  %v4125 = vmul.f32 %v4110, %v4120
  %v4126 = vmul.f32 %v4111, %v4121
  %v4128 = vlaneseq
  %v4129 = vshrl.u32 %v4128, 7
  %v4130 = vsub.s32 0, %v4129
  %v4131 = vrot.slane %v4050, %v4130
  %v4133 = vmul.f32 %v4122, %v4131
  %v4134 = vmul.f32 %v4123, %v4131
  %v4135 = vmul.f32 %v4124, %v4131
  %v4136 = vmul.f32 %v4125, %v4131
  %v4137 = vmul.f32 %v4126, %v4131
  %v4139 = vlaneseq
  %v4140 = vshrl.u32 %v4139, 7
  %v4141 = vsub.s32 0, %v4140
  %v4142 = vrot.slane %v4051, %v4141
  %v4144 = vadd.f32 %v4133, %v4142
  %v4145 = vadd.f32 %v4134, %v4142
  %v4146 = vadd.f32 %v4135, %v4142
  %v4147 = vadd.f32 %v4136, %v4142
  %v4148 = vadd.f32 %v4137, %v4142
  %v4149 = vld [vmem:[%s9] sm:$0xff]
  %v4150 = vld [vmem:[%s9 + $0x8] sm:$0xff]
  %v4151 = vld [vmem:[%s9 + $0x10] sm:$0xff]
  %v4152 = vld [vmem:[%s9 + $0x18] sm:$0xff]
  %v4153 = vld [vmem:[%s9 + $0x20] sm:$0xff]
  %v4154 = vld [vmem:[%s9 + $0x28] sm:$0xff]
  %v4155 = vld [vmem:[%s10] sm:$0x1]
  %v4157 = vlaneseq
  %v4158 = vshrl.u32 %v4157, 7
  %v4159 = vsub.s32 0, %v4158
  %v4160 = vrot.slane %v4155, %v4159
  %v4163 = vsel %vm241, %v4144, 0
  %v4166 = vsel %vm241, %v4145, 0
  %v4169 = vsel %vm241, %v4146, 0
  %v4172 = vsel %vm241, %v4147, 0
  %v4175 = vsel %vm241, %v4148, 0
  %4177 = vmatprep.subr.mxu0 0.0
  %4178 = vmatpush1.msra.mxu0 %v4149
  %4179 = vmatprep.subr.mxu0 0.0
  %4180 = vmatpush1.msra.mxu0 %v4150
  %4181 = vmatprep.subr.mxu0 0.0
  %4182 = vmatpush1.msra.mxu0 %v4151
  %4183 = vmatprep.subr.mxu0 0.0
  %4184 = vmatpush1.msra.mxu0 %v4152
  %4185 = vmatprep.subr.mxu0 0.0
  %4186 = vmatpush1.msra.mxu0 %v4153
  %4187 = vmatprep.subr.mxu0 0.0
  %4188 = vmatpush1.msra.mxu0 %v4154
  %4189 = vmatprep.subr.mxu0 0.0
  %4190 = vmatpush1.msra.mxu0 0.0
  %4191 = vmatprep.subr.mxu0 0.0
  %4192 = vmatpush1.msra.mxu0 0.0
  %4193 = vmatprep.subr.mxu0 0.0
  %4194 = vmatpush1.msra.mxu0 0.0
  %4195 = vmatprep.subr.mxu0 0.0
  %4196 = vmatpush1.msra.mxu0 0.0
  %4197 = vmatprep.subr.mxu0 0.0
  %4198 = vmatpush1.msra.mxu0 0.0
  %4199 = vmatprep.subr.mxu0 0.0
  %4200 = vmatpush1.msra.mxu0 0.0
  %4201 = vmatprep.subr.mxu0 0.0
  %4202 = vmatpush1.msra.mxu0 0.0
  %4203 = vmatprep.subr.mxu0 0.0
  %4204 = vmatpush1.msra.mxu0 0.0
  %4205 = vmatprep.subr.mxu0 0.0
  %4206 = vmatpush1.msra.mxu0 0.0
  %4207 = vmatprep.subr.mxu0 0.0
  %4208 = vmatpush1.msra.mxu0 0.0
  %4209 = vmatprep.subr.mxu0 0.0
  %4210 = vmatpush1.msra.mxu0 0.0
  %4211 = vmatprep.subr.mxu0 0.0
  %4212 = vmatpush1.msra.mxu0 0.0
  %4213 = vmatprep.subr.mxu0 0.0
  %4214 = vmatpush1.msra.mxu0 0.0
  %4215 = vmatprep.subr.mxu0 0.0
  %4216 = vmatpush1.msra.mxu0 0.0
  %4217 = vmatprep.subr.mxu0 0.0
  %4218 = vmatpush1.msra.mxu0 0.0
  %4219 = vmatprep.subr.mxu0 0.0
  %4220 = vmatpush1.msra.mxu0 0.0
  %4221 = vmatprep.subr.mxu0 0.0
  %4222 = vmatpush1.msra.mxu0 0.0
  %4223 = vmatprep.subr.mxu0 0.0
  %4224 = vmatpush1.msra.mxu0 0.0
  %4225 = vmatprep.subr.mxu0 0.0
  %4226 = vmatpush1.msra.mxu0 0.0
  %4227 = vmatprep.subr.mxu0 0.0
  %4228 = vmatpush1.msra.mxu0 0.0
  %4229 = vmatprep.subr.mxu0 0.0
  %4230 = vmatpush1.msra.mxu0 0.0
  %4231 = vmatprep.subr.mxu0 0.0
  %4232 = vmatpush1.msra.mxu0 0.0
  %4233 = vmatprep.subr.mxu0 0.0
  %4234 = vmatpush1.msra.mxu0 0.0
  %4235 = vmatprep.subr.mxu0 0.0
  %4236 = vmatpush1.msra.mxu0 0.0
  %4237 = vmatprep.subr.mxu0 0.0
  %4238 = vmatpush1.msra.mxu0 0.0
  %4239 = vmatprep.subr.mxu0 0.0
  %4240 = vmatpush1.msra.mxu0 0.0
  %4241 = vmatprep.mubr.f32.mxu0 0.0
  %4242 = vmatmul.mubr.f32.gmra.mrb[0].mxu0 %v4163
  %v4243 = vpop.f32.mrb[0].mxu0
  %v4244 = vadd.f32 %v4160, %v4243
  %v4245 = vpop.f32.mrb[0].mxu0
  %4246 = vmatprep.mubr.f32.mxu0 0.0
  %4247 = vmatmul.mubr.f32.gmra.mrb[0].mxu0 %v4166
  %v4248 = vpop.f32.mrb[0].mxu0
  %v4249 = vadd.f32 %v4160, %v4248
  %v4250 = vpop.f32.mrb[0].mxu0
  %4251 = vmatprep.mubr.f32.mxu0 0.0
  %4252 = vmatmul.mubr.f32.gmra.mrb[0].mxu0 %v4169
  %v4253 = vpop.f32.mrb[0].mxu0
  %v4254 = vadd.f32 %v4160, %v4253
  %v4255 = vpop.f32.mrb[0].mxu0
  %4256 = vmatprep.mubr.f32.mxu0 0.0
  %4257 = vmatmul.mubr.f32.gmra.mrb[0].mxu0 %v4172
  %v4258 = vpop.f32.mrb[0].mxu0
  %v4259 = vadd.f32 %v4160, %v4258
  %v4260 = vpop.f32.mrb[0].mxu0
  %4261 = vmatprep.mubr.f32.mxu0 0.0
  %4262 = vmatmul.mubr.f32.gmra.mrb[0].mxu0 %v4175
  %v4263 = vpop.f32.mrb[0].mxu0
  %v4264 = vadd.f32 %v4160, %v4263
  %v4265 = vpop.f32.mrb[0].mxu0
  %4266 = vdwg.mxu0
  %v4267 = vmul.f32 %v4244, 0.5
  %v4268 = vmul.f32 %v4249, 0.5
  %v4269 = vmul.f32 %v4254, 0.5
  %v4270 = vmul.f32 %v4259, 0.5
  %v4271 = vmul.f32 %v4264, 0.5
  %v4272 = vmul.f32 %v4244, 0.70710677
  %v4273 = vmul.f32 %v4249, 0.70710677
  %v4274 = vmul.f32 %v4254, 0.70710677
  %v4275 = vmul.f32 %v4259, 0.70710677
  %v4276 = vmul.f32 %v4264, 0.70710677
  %v4277 = verf.f32.pop %v4272
  %v4278 = verf.f32.pop %v4273
  %v4279 = verf.f32.pop %v4274
  %v4280 = verf.f32.pop %v4275
  %v4281 = verf.f32.pop %v4276
  %v4282 = vadd.f32 %v4277, 1.0
  %v4283 = vadd.f32 %v4278, 1.0
  %v4284 = vadd.f32 %v4279, 1.0
  %v4285 = vadd.f32 %v4280, 1.0
  %v4286 = vadd.f32 %v4281, 1.0
  %v4287 = vmul.f32 %v4267, %v4282
  %v4288 = vmul.f32 %v4268, %v4283
  %v4289 = vmul.f32 %v4269, %v4284
  %v4290 = vmul.f32 %v4270, %v4285
  %v4291 = vmul.f32 %v4271, %v4286
  %v4292 = vld [vmem:[%s11] sm:$0xff]
  %v4293 = vld [vmem:[%s11 + $0x8] sm:$0xff]
  %v4294 = vld [vmem:[%s11 + $0x10] sm:$0xff]
  %v4295 = vld [vmem:[%s11 + $0x18] sm:$0xff]
  %v4296 = vld [vmem:[%s11 + $0x20] sm:$0xff]
  %v4297 = vld [vmem:[%s11 + $0x28] sm:$0xff]
  %v4298 = vld [vmem:[%s11 + $0x30] sm:$0xff]
  %v4299 = vld [vmem:[%s11 + $0x38] sm:$0xff]
  %v4300 = vld [vmem:[%s12] sm:$0x1]
  %v4302 = vlaneseq
  %v4303 = vshrl.u32 %v4302, 7
  %v4304 = vsub.s32 0, %v4303
  %v4305 = vrot.slane %v4300, %v4304
  %vm4307 = vcmask 523264
  %v4309 = vsel %vm4307, %v4287, 0
  %v4312 = vsel %vm4307, %v4288, 0
  %v4315 = vsel %vm4307, %v4289, 0
  %v4318 = vsel %vm4307, %v4290, 0
  %v4321 = vsel %vm4307, %v4291, 0
  %4323 = vmatprep.subr.mxu0 0.0
  %4324 = vmatpush1.msra.mxu0 %v4292
  %4325 = vmatprep.subr.mxu0 0.0
  %4326 = vmatpush1.msra.mxu0 %v4293
  %4327 = vmatprep.subr.mxu0 0.0
  %4328 = vmatpush1.msra.mxu0 %v4294
  %4329 = vmatprep.subr.mxu0 0.0
  %4330 = vmatpush1.msra.mxu0 %v4295
  %4331 = vmatprep.subr.mxu0 0.0
  %4332 = vmatpush1.msra.mxu0 %v4296
  %4333 = vmatprep.subr.mxu0 0.0
  %4334 = vmatpush1.msra.mxu0 %v4297
  %4335 = vmatprep.subr.mxu0 0.0
  %4336 = vmatpush1.msra.mxu0 %v4298
  %4337 = vmatprep.subr.mxu0 0.0
  %4338 = vmatpush1.msra.mxu0 %v4299
  %4339 = vmatprep.subr.mxu0 0.0
  %4340 = vmatpush1.msra.mxu0 0.0
  %4341 = vmatprep.subr.mxu0 0.0
  %4342 = vmatpush1.msra.mxu0 0.0
  %4343 = vmatprep.subr.mxu0 0.0
  %4344 = vmatpush1.msra.mxu0 0.0
  %4345 = vmatprep.subr.mxu0 0.0
  %4346 = vmatpush1.msra.mxu0 0.0
  %4347 = vmatprep.subr.mxu0 0.0
  %4348 = vmatpush1.msra.mxu0 0.0
  %4349 = vmatprep.subr.mxu0 0.0
  %4350 = vmatpush1.msra.mxu0 0.0
  %4351 = vmatprep.subr.mxu0 0.0
  %4352 = vmatpush1.msra.mxu0 0.0
  %4353 = vmatprep.subr.mxu0 0.0
  %4354 = vmatpush1.msra.mxu0 0.0
  %4355 = vmatprep.subr.mxu0 0.0
  %4356 = vmatpush1.msra.mxu0 0.0
  %4357 = vmatprep.subr.mxu0 0.0
  %4358 = vmatpush1.msra.mxu0 0.0
  %4359 = vmatprep.subr.mxu0 0.0
  %4360 = vmatpush1.msra.mxu0 0.0
  %4361 = vmatprep.subr.mxu0 0.0
  %4362 = vmatpush1.msra.mxu0 0.0
  %4363 = vmatprep.subr.mxu0 0.0
  %4364 = vmatpush1.msra.mxu0 0.0
  %4365 = vmatprep.subr.mxu0 0.0
  %4366 = vmatpush1.msra.mxu0 0.0
  %4367 = vmatprep.subr.mxu0 0.0
  %4368 = vmatpush1.msra.mxu0 0.0
  %4369 = vmatprep.subr.mxu0 0.0
  %4370 = vmatpush1.msra.mxu0 0.0
  %4371 = vmatprep.subr.mxu0 0.0
  %4372 = vmatpush1.msra.mxu0 0.0
  %4373 = vmatprep.subr.mxu0 0.0
  %4374 = vmatpush1.msra.mxu0 0.0
  %4375 = vmatprep.subr.mxu0 0.0
  %4376 = vmatpush1.msra.mxu0 0.0
  %4377 = vmatprep.subr.mxu0 0.0
  %4378 = vmatpush1.msra.mxu0 0.0
  %4379 = vmatprep.subr.mxu0 0.0
  %4380 = vmatpush1.msra.mxu0 0.0
  %4381 = vmatprep.subr.mxu0 0.0
  %4382 = vmatpush1.msra.mxu0 0.0
  %4383 = vmatprep.subr.mxu0 0.0
  %4384 = vmatpush1.msra.mxu0 0.0
  %4385 = vmatprep.subr.mxu0 0.0
  %4386 = vmatpush1.msra.mxu0 0.0
  %4387 = vmatprep.mubr.f32.mxu0 0.0
  %4388 = vmatmul.mubr.f32.gmra.mrb[0].mxu0 %v4309
  %v4389 = vpop.f32.mrb[0].mxu0
  %v4390 = vadd.f32 %v4305, %v4389
  %v4391 = vpop.f32.mrb[0].mxu0
  %4392 = vmatprep.mubr.f32.mxu0 0.0
  %4393 = vmatmul.mubr.f32.gmra.mrb[0].mxu0 %v4312
  %v4394 = vpop.f32.mrb[0].mxu0
  %v4395 = vadd.f32 %v4305, %v4394
  %v4396 = vpop.f32.mrb[0].mxu0
  %4397 = vmatprep.mubr.f32.mxu0 0.0
  %4398 = vmatmul.mubr.f32.gmra.mrb[0].mxu0 %v4315
  %v4399 = vpop.f32.mrb[0].mxu0
  %v4400 = vadd.f32 %v4305, %v4399
  %v4401 = vpop.f32.mrb[0].mxu0
  %4402 = vmatprep.mubr.f32.mxu0 0.0
  %4403 = vmatmul.mubr.f32.gmra.mrb[0].mxu0 %v4318
  %v4404 = vpop.f32.mrb[0].mxu0
  %v4405 = vadd.f32 %v4305, %v4404
  %v4406 = vpop.f32.mrb[0].mxu0
  %4407 = vmatprep.mubr.f32.mxu0 0.0
  %4408 = vmatmul.mubr.f32.gmra.mrb[0].mxu0 %v4321
  %v4409 = vpop.f32.mrb[0].mxu0
  %v4410 = vadd.f32 %v4305, %v4409
  %v4411 = vpop.f32.mrb[0].mxu0
  %4412 = vdwg.mxu0
  %v4413 = vadd.f32 %v4390, %v4027
  %v4414 = vadd.f32 %v4395, %v4032
  %v4415 = vadd.f32 %v4400, %v4037
  %v4416 = vadd.f32 %v4405, %v4042
  %v4417 = vadd.f32 %v4410, %v4047
  %s4418 = scalar_lea.vmem %s1, 1
  %v4419 = vld [vmem:[%s4418] sm:$0x1]
  %s4420 = scalar_lea.vmem %s2, 1
  %v4421 = vld [vmem:[%s4420] sm:$0x1]
  %v4422 = vsel %vm241, %v4413, 0.0
  %4423 = vadd.xlane.f32.xlu0 %v4422
  %v4424 = vpop.xlane.xlu0 %4423
  %v4425 = vsel %vm241, %v4414, 0.0
  %4426 = vadd.xlane.f32.xlu0 %v4425
  %v4427 = vpop.xlane.xlu0 %4426
  %v4428 = vsel %vm241, %v4415, 0.0
  %4429 = vadd.xlane.f32.xlu0 %v4428
  %v4430 = vpop.xlane.xlu0 %4429
  %v4431 = vsel %vm241, %v4416, 0.0
  %4432 = vadd.xlane.f32.xlu0 %v4431
  %v4433 = vpop.xlane.xlu0 %4432
  %v4434 = vsel %vm254, %v4417, 0.0
  %4435 = vadd.xlane.f32.xlu0 %v4434
  %v4436 = vpop.xlane.xlu0 %4435
  %v4437 = vmul.f32 %v4424, %v258
  %v4438 = vmul.f32 %v4427, %v258
  %v4439 = vmul.f32 %v4430, %v258
  %v4440 = vmul.f32 %v4433, %v258
  %v4441 = vmul.f32 %v4436, %v258
  %v4442 = vmul.f32 %v4413, %v4413
  %v4443 = vmul.f32 %v4414, %v4414
  %v4444 = vmul.f32 %v4415, %v4415
  %v4445 = vmul.f32 %v4416, %v4416
  %v4446 = vmul.f32 %v4417, %v4417
  %v4447 = vsel %vm241, %v4442, 0.0
  %4448 = vadd.xlane.f32.xlu0 %v4447
  %v4449 = vpop.xlane.xlu0 %4448
  %v4450 = vsel %vm241, %v4443, 0.0
  %4451 = vadd.xlane.f32.xlu0 %v4450
  %v4452 = vpop.xlane.xlu0 %4451
  %v4453 = vsel %vm241, %v4444, 0.0
  %4454 = vadd.xlane.f32.xlu0 %v4453
  %v4455 = vpop.xlane.xlu0 %4454
  %v4456 = vsel %vm241, %v4445, 0.0
  %4457 = vadd.xlane.f32.xlu0 %v4456
  %v4458 = vpop.xlane.xlu0 %4457
  %v4459 = vsel %vm254, %v4446, 0.0
  %4460 = vadd.xlane.f32.xlu0 %v4459
  %v4461 = vpop.xlane.xlu0 %4460
  %v4462 = vmul.f32 %v4449, %v258
  %v4463 = vmul.f32 %v4452, %v258
  %v4464 = vmul.f32 %v4455, %v258
  %v4465 = vmul.f32 %v4458, %v258
  %v4466 = vmul.f32 %v4461, %v258
  %v4467 = vmul.f32 %v4437, %v4437
  %v4468 = vmul.f32 %v4438, %v4438
  %v4469 = vmul.f32 %v4439, %v4439
  %v4470 = vmul.f32 %v4440, %v4440
  %v4471 = vmul.f32 %v4441, %v4441
  %v4472 = vsub.f32 %v4462, %v4467
  %v4473 = vsub.f32 %v4463, %v4468
  %v4474 = vsub.f32 %v4464, %v4469
  %v4475 = vsub.f32 %v4465, %v4470
  %v4476 = vsub.f32 %v4466, %v4471
  %v4477 = vsub.f32 %v4413, %v4437
  %v4478 = vsub.f32 %v4414, %v4438
  %v4479 = vsub.f32 %v4415, %v4439
  %v4480 = vsub.f32 %v4416, %v4440
  %v4481 = vsub.f32 %v4417, %v4441
  %v4482 = vadd.f32 %v4472, 1e-05
  %v4483 = vadd.f32 %v4473, 1e-05
  %v4484 = vadd.f32 %v4474, 1e-05
  %v4485 = vadd.f32 %v4475, 1e-05
  %v4486 = vadd.f32 %v4476, 1e-05
  %v4487 = vrsqrt.pop %v4482
  %v4488 = vrsqrt.pop %v4483
  %v4489 = vrsqrt.pop %v4484
  %v4490 = vrsqrt.pop %v4485
  %v4491 = vrsqrt.pop %v4486
  %v4492 = vmul.f32 %v4477, %v4487
  %v4493 = vmul.f32 %v4478, %v4488
  %v4494 = vmul.f32 %v4479, %v4489
  %v4495 = vmul.f32 %v4480, %v4490
  %v4496 = vmul.f32 %v4481, %v4491
  %v4498 = vlaneseq
  %v4499 = vshrl.u32 %v4498, 7
  %v4500 = vsub.s32 0, %v4499
  %v4501 = vrot.slane %v4419, %v4500
  %v4503 = vmul.f32 %v4492, %v4501
  %v4504 = vmul.f32 %v4493, %v4501
  %v4505 = vmul.f32 %v4494, %v4501
  %v4506 = vmul.f32 %v4495, %v4501
  %v4507 = vmul.f32 %v4496, %v4501
  %v4509 = vlaneseq
  %v4510 = vshrl.u32 %v4509, 7
  %v4511 = vsub.s32 0, %v4510
  %v4512 = vrot.slane %v4421, %v4511
  %v4514 = vadd.f32 %v4503, %v4512
  %v4515 = vadd.f32 %v4504, %v4512
  %v4516 = vadd.f32 %v4505, %v4512
  %v4517 = vadd.f32 %v4506, %v4512
  %v4518 = vadd.f32 %v4507, %v4512
  %v4520 = vsel %vm354, %v4518, 0
  %4522 = vmatprep.subr.mxu0 0.0
  %4523 = vmatpush1.msra.mxu0 %v4514
  %4524 = vmatprep.subr.mxu0 0.0
  %4525 = vmatpush1.msra.mxu0 %v4515
  %4526 = vmatprep.subr.mxu0 0.0
  %4527 = vmatpush1.msra.mxu0 %v4516
  %4528 = vmatprep.subr.mxu0 0.0
  %4529 = vmatpush1.msra.mxu0 %v4517
  %4530 = vmatprep.subr.mxu0 0.0
  %4531 = vmatpush1.msra.mxu0 %v4520
  %4532 = vmatprep.subr.mxu0 0.0
  %4533 = vmatpush1.msra.mxu0 0.0
  %4534 = vmatprep.subr.mxu0 0.0
  %4535 = vmatpush1.msra.mxu0 0.0
  %4536 = vmatprep.subr.mxu0 0.0
  %4537 = vmatpush1.msra.mxu0 0.0
  %4538 = vmatprep.subr.mxu0 0.0
  %4539 = vmatpush1.msra.mxu0 0.0
  %4540 = vmatprep.subr.mxu0 0.0
  %4541 = vmatpush1.msra.mxu0 0.0
  %4542 = vmatprep.subr.mxu0 0.0
  %4543 = vmatpush1.msra.mxu0 0.0
  %4544 = vmatprep.subr.mxu0 0.0
  %4545 = vmatpush1.msra.mxu0 0.0
  %4546 = vmatprep.subr.mxu0 0.0
  %4547 = vmatpush1.msra.mxu0 0.0
  %4548 = vmatprep.subr.mxu0 0.0
  %4549 = vmatpush1.msra.mxu0 0.0
  %4550 = vmatprep.subr.mxu0 0.0
  %4551 = vmatpush1.msra.mxu0 0.0
  %4552 = vmatprep.subr.mxu0 0.0
  %4553 = vmatpush1.msra.mxu0 0.0
  %4554 = vmatprep.subr.mxu0 0.0
  %4555 = vmatpush1.msra.mxu0 0.0
  %4556 = vmatprep.subr.mxu0 0.0
  %4557 = vmatpush1.msra.mxu0 0.0
  %4558 = vmatprep.subr.mxu0 0.0
  %4559 = vmatpush1.msra.mxu0 0.0
  %4560 = vmatprep.subr.mxu0 0.0
  %4561 = vmatpush1.msra.mxu0 0.0
  %4562 = vmatprep.subr.mxu0 0.0
  %4563 = vmatpush1.msra.mxu0 0.0
  %4564 = vmatprep.subr.mxu0 0.0
  %4565 = vmatpush1.msra.mxu0 0.0
  %4566 = vmatprep.subr.mxu0 0.0
  %4567 = vmatpush1.msra.mxu0 0.0
  %4568 = vmatprep.subr.mxu0 0.0
  %4569 = vmatpush1.msra.mxu0 0.0
  %4570 = vmatprep.subr.mxu0 0.0
  %4571 = vmatpush1.msra.mxu0 0.0
  %4572 = vmatprep.subr.mxu0 0.0
  %4573 = vmatpush1.msra.mxu0 0.0
  %4574 = vmatprep.subr.mxu0 0.0
  %4575 = vmatpush1.msra.mxu0 0.0
  %4576 = vmatprep.subr.mxu0 0.0
  %4577 = vmatpush1.msra.mxu0 0.0
  %4578 = vmatprep.subr.mxu0 0.0
  %4579 = vmatpush1.msra.mxu0 0.0
  %4580 = vmatprep.subr.mxu0 0.0
  %4581 = vmatpush1.msra.mxu0 0.0
  %4582 = vmatprep.subr.mxu0 0.0
  %4583 = vmatpush1.msra.mxu0 0.0
  %4584 = vmatprep.subr.mxu0 0.0
  %4585 = vmatpush1.msra.mxu0 0.0
  %4586 = vmatprep.mubr.f32.mxu0 0.0
  %4587 = vmatmul.mubr.f32.gmra.mrb[0].mxu0 %v346
  %v4588 = vpop.f32.mrb[0].mxu0
  %v4589 = vadd.f32 0.0, %v4588
  %v4590 = vpop.f32.mrb[0].mxu0
  %4591 = vmatprep.mubr.f32.mxu0 0.0
  %4592 = vmatmul.mubr.f32.gmra.mrb[0].mxu0 %v349
  %v4593 = vpop.f32.mrb[0].mxu0
  %v4594 = vadd.f32 0.0, %v4593
  %v4595 = vpop.f32.mrb[0].mxu0
  %4596 = vmatprep.mubr.f32.mxu0 0.0
  %4597 = vmatmul.mubr.f32.gmra.mrb[0].mxu0 %v352
  %v4598 = vpop.f32.mrb[0].mxu0
  %v4599 = vadd.f32 0.0, %v4598
  %v4600 = vpop.f32.mrb[0].mxu0
  %4601 = vdwg.mxu0
  %s4602 = scalar_lea.vmem %s3, 48
  %v4603 = vld [vmem:[%s4602] sm:$0xff]
  %v4604 = vld [vmem:[%s4602 + $0x8] sm:$0xff]
  %v4605 = vld [vmem:[%s4602 + $0x10] sm:$0xff]
  %v4606 = vld [vmem:[%s4602 + $0x18] sm:$0xff]
  %v4607 = vld [vmem:[%s4602 + $0x20] sm:$0xff]
  %v4608 = vld [vmem:[%s4602 + $0x28] sm:$0xff]
  %v4610 = vsel %vm241, %v4589, 0
  %v4613 = vsel %vm241, %v4594, 0
  %v4616 = vsel %vm241, %v4599, 0
  %4618 = vmatprep.subr.mxu0 0.0
  %4619 = vmatpush1.msra.mxu0 %v4603
  %4620 = vmatprep.subr.mxu0 0.0
  %4621 = vmatpush1.msra.mxu0 %v4604
  %4622 = vmatprep.subr.mxu0 0.0
  %4623 = vmatpush1.msra.mxu0 %v4605
  %4624 = vmatprep.subr.mxu0 0.0
  %4625 = vmatpush1.msra.mxu0 %v4606
  %4626 = vmatprep.subr.mxu0 0.0
  %4627 = vmatpush1.msra.mxu0 %v4607
  %4628 = vmatprep.subr.mxu0 0.0
  %4629 = vmatpush1.msra.mxu0 %v4608
  %4630 = vmatprep.subr.mxu0 0.0
  %4631 = vmatpush1.msra.mxu0 0.0
  %4632 = vmatprep.subr.mxu0 0.0
  %4633 = vmatpush1.msra.mxu0 0.0
  %4634 = vmatprep.subr.mxu0 0.0
  %4635 = vmatpush1.msra.mxu0 0.0
  %4636 = vmatprep.subr.mxu0 0.0
  %4637 = vmatpush1.msra.mxu0 0.0
  %4638 = vmatprep.subr.mxu0 0.0
  %4639 = vmatpush1.msra.mxu0 0.0
  %4640 = vmatprep.subr.mxu0 0.0
  %4641 = vmatpush1.msra.mxu0 0.0
  %4642 = vmatprep.subr.mxu0 0.0
  %4643 = vmatpush1.msra.mxu0 0.0
  %4644 = vmatprep.subr.mxu0 0.0
  %4645 = vmatpush1.msra.mxu0 0.0
  %4646 = vmatprep.subr.mxu0 0.0
  %4647 = vmatpush1.msra.mxu0 0.0
  %4648 = vmatprep.subr.mxu0 0.0
  %4649 = vmatpush1.msra.mxu0 0.0
  %4650 = vmatprep.subr.mxu0 0.0
  %4651 = vmatpush1.msra.mxu0 0.0
  %4652 = vmatprep.subr.mxu0 0.0
  %4653 = vmatpush1.msra.mxu0 0.0
  %4654 = vmatprep.subr.mxu0 0.0
  %4655 = vmatpush1.msra.mxu0 0.0
  %4656 = vmatprep.subr.mxu0 0.0
  %4657 = vmatpush1.msra.mxu0 0.0
  %4658 = vmatprep.subr.mxu0 0.0
  %4659 = vmatpush1.msra.mxu0 0.0
  %4660 = vmatprep.subr.mxu0 0.0
  %4661 = vmatpush1.msra.mxu0 0.0
  %4662 = vmatprep.subr.mxu0 0.0
  %4663 = vmatpush1.msra.mxu0 0.0
  %4664 = vmatprep.subr.mxu0 0.0
  %4665 = vmatpush1.msra.mxu0 0.0
  %4666 = vmatprep.subr.mxu0 0.0
  %4667 = vmatpush1.msra.mxu0 0.0
  %4668 = vmatprep.subr.mxu0 0.0
  %4669 = vmatpush1.msra.mxu0 0.0
  %4670 = vmatprep.subr.mxu0 0.0
  %4671 = vmatpush1.msra.mxu0 0.0
  %4672 = vmatprep.subr.mxu0 0.0
  %4673 = vmatpush1.msra.mxu0 0.0
  %4674 = vmatprep.subr.mxu0 0.0
  %4675 = vmatpush1.msra.mxu0 0.0
  %4676 = vmatprep.subr.mxu0 0.0
  %4677 = vmatpush1.msra.mxu0 0.0
  %4678 = vmatprep.subr.mxu0 0.0
  %4679 = vmatpush1.msra.mxu0 0.0
  %4680 = vmatprep.subr.mxu0 0.0
  %4681 = vmatpush1.msra.mxu0 0.0
  %4682 = vmatprep.mubr.f32.mxu0 0.0
  %4683 = vmatmul.mubr.f32.gmra.mrb[0].mxu0 %v4610
  %v4684 = vpop.f32.mrb[0].mxu0
  %v4685 = vadd.f32 0.0, %v4684
  %v4686 = vpop.f32.mrb[0].mxu0
  %4687 = vmatprep.mubr.f32.mxu0 0.0
  %4688 = vmatmul.mubr.f32.gmra.mrb[0].mxu0 %v4613
  %v4689 = vpop.f32.mrb[0].mxu0
  %v4690 = vadd.f32 0.0, %v4689
  %v4691 = vpop.f32.mrb[0].mxu0
  %4692 = vmatprep.mubr.f32.mxu0 0.0
  %4693 = vmatmul.mubr.f32.gmra.mrb[0].mxu0 %v4616
  %v4694 = vpop.f32.mrb[0].mxu0
  %v4695 = vadd.f32 0.0, %v4694
  %v4696 = vpop.f32.mrb[0].mxu0
  %4697 = vdwg.mxu0
  %s4698 = scalar_lea.vmem %s4, 48
  %v4699 = vld [vmem:[%s4698] sm:$0xff]
  %v4700 = vld [vmem:[%s4698 + $0x8] sm:$0xff]
  %v4701 = vld [vmem:[%s4698 + $0x10] sm:$0xff]
  %v4702 = vld [vmem:[%s4698 + $0x18] sm:$0xff]
  %v4703 = vld [vmem:[%s4698 + $0x20] sm:$0xff]
  %v4704 = vld [vmem:[%s4698 + $0x28] sm:$0xff]
  %4705 = vmatprep.subr.mxu0 0.0
  %4706 = vmatpush1.msra.mxu0 %v4699
  %4707 = vmatprep.subr.mxu0 0.0
  %4708 = vmatpush1.msra.mxu0 %v4700
  %4709 = vmatprep.subr.mxu0 0.0
  %4710 = vmatpush1.msra.mxu0 %v4701
  %4711 = vmatprep.subr.mxu0 0.0
  %4712 = vmatpush1.msra.mxu0 %v4702
  %4713 = vmatprep.subr.mxu0 0.0
  %4714 = vmatpush1.msra.mxu0 %v4703
  %4715 = vmatprep.subr.mxu0 0.0
  %4716 = vmatpush1.msra.mxu0 %v4704
  %4717 = vmatprep.subr.mxu0 0.0
  %4718 = vmatpush1.msra.mxu0 0.0
  %4719 = vmatprep.subr.mxu0 0.0
  %4720 = vmatpush1.msra.mxu0 0.0
  %4721 = vmatprep.subr.mxu0 0.0
  %4722 = vmatpush1.msra.mxu0 0.0
  %4723 = vmatprep.subr.mxu0 0.0
  %4724 = vmatpush1.msra.mxu0 0.0
  %4725 = vmatprep.subr.mxu0 0.0
  %4726 = vmatpush1.msra.mxu0 0.0
  %4727 = vmatprep.subr.mxu0 0.0
  %4728 = vmatpush1.msra.mxu0 0.0
  %4729 = vmatprep.subr.mxu0 0.0
  %4730 = vmatpush1.msra.mxu0 0.0
  %4731 = vmatprep.subr.mxu0 0.0
  %4732 = vmatpush1.msra.mxu0 0.0
  %4733 = vmatprep.subr.mxu0 0.0
  %4734 = vmatpush1.msra.mxu0 0.0
  %4735 = vmatprep.subr.mxu0 0.0
  %4736 = vmatpush1.msra.mxu0 0.0
  %4737 = vmatprep.subr.mxu0 0.0
  %4738 = vmatpush1.msra.mxu0 0.0
  %4739 = vmatprep.subr.mxu0 0.0
  %4740 = vmatpush1.msra.mxu0 0.0
  %4741 = vmatprep.subr.mxu0 0.0
  %4742 = vmatpush1.msra.mxu0 0.0
  %4743 = vmatprep.subr.mxu0 0.0
  %4744 = vmatpush1.msra.mxu0 0.0
  %4745 = vmatprep.subr.mxu0 0.0
  %4746 = vmatpush1.msra.mxu0 0.0
  %4747 = vmatprep.subr.mxu0 0.0
  %4748 = vmatpush1.msra.mxu0 0.0
  %4749 = vmatprep.subr.mxu0 0.0
  %4750 = vmatpush1.msra.mxu0 0.0
  %4751 = vmatprep.subr.mxu0 0.0
  %4752 = vmatpush1.msra.mxu0 0.0
  %4753 = vmatprep.subr.mxu0 0.0
  %4754 = vmatpush1.msra.mxu0 0.0
  %4755 = vmatprep.subr.mxu0 0.0
  %4756 = vmatpush1.msra.mxu0 0.0
  %4757 = vmatprep.subr.mxu0 0.0
  %4758 = vmatpush1.msra.mxu0 0.0
  %4759 = vmatprep.subr.mxu0 0.0
  %4760 = vmatpush1.msra.mxu0 0.0
  %4761 = vmatprep.subr.mxu0 0.0
  %4762 = vmatpush1.msra.mxu0 0.0
  %4763 = vmatprep.subr.mxu0 0.0
  %4764 = vmatpush1.msra.mxu0 0.0
  %4765 = vmatprep.subr.mxu0 0.0
  %4766 = vmatpush1.msra.mxu0 0.0
  %4767 = vmatprep.subr.mxu0 0.0
  %4768 = vmatpush1.msra.mxu0 0.0
  %4769 = vmatprep.mubr.f32.mxu0 0.0
  %4770 = vmatmul.mubr.f32.gmra.mrb[0].mxu0 %v4610
  %v4771 = vpop.f32.mrb[0].mxu0
  %v4772 = vadd.f32 0.0, %v4771
  %v4773 = vpop.f32.mrb[0].mxu0
  %4774 = vmatprep.mubr.f32.mxu0 0.0
  %4775 = vmatmul.mubr.f32.gmra.mrb[0].mxu0 %v4613
  %v4776 = vpop.f32.mrb[0].mxu0
  %v4777 = vadd.f32 0.0, %v4776
  %v4778 = vpop.f32.mrb[0].mxu0
  %4779 = vmatprep.mubr.f32.mxu0 0.0
  %4780 = vmatmul.mubr.f32.gmra.mrb[0].mxu0 %v4616
  %v4781 = vpop.f32.mrb[0].mxu0
  %v4782 = vadd.f32 0.0, %v4781
  %v4783 = vpop.f32.mrb[0].mxu0
  %4784 = vdwg.mxu0
  %s4785 = scalar_lea.vmem %s5, 48
  %v4786 = vld [vmem:[%s4785] sm:$0xff]
  %v4787 = vld [vmem:[%s4785 + $0x8] sm:$0xff]
  %v4788 = vld [vmem:[%s4785 + $0x10] sm:$0xff]
  %v4789 = vld [vmem:[%s4785 + $0x18] sm:$0xff]
  %v4790 = vld [vmem:[%s4785 + $0x20] sm:$0xff]
  %v4791 = vld [vmem:[%s4785 + $0x28] sm:$0xff]
  %4792 = vmatprep.subr.mxu0 0.0
  %4793 = vmatpush1.msra.mxu0 %v4786
  %4794 = vmatprep.subr.mxu0 0.0
  %4795 = vmatpush1.msra.mxu0 %v4787
  %4796 = vmatprep.subr.mxu0 0.0
  %4797 = vmatpush1.msra.mxu0 %v4788
  %4798 = vmatprep.subr.mxu0 0.0
  %4799 = vmatpush1.msra.mxu0 %v4789
  %4800 = vmatprep.subr.mxu0 0.0
  %4801 = vmatpush1.msra.mxu0 %v4790
  %4802 = vmatprep.subr.mxu0 0.0
  %4803 = vmatpush1.msra.mxu0 %v4791
  %4804 = vmatprep.subr.mxu0 0.0
  %4805 = vmatpush1.msra.mxu0 0.0
  %4806 = vmatprep.subr.mxu0 0.0
  %4807 = vmatpush1.msra.mxu0 0.0
  %4808 = vmatprep.subr.mxu0 0.0
  %4809 = vmatpush1.msra.mxu0 0.0
  %4810 = vmatprep.subr.mxu0 0.0
  %4811 = vmatpush1.msra.mxu0 0.0
  %4812 = vmatprep.subr.mxu0 0.0
  %4813 = vmatpush1.msra.mxu0 0.0
  %4814 = vmatprep.subr.mxu0 0.0
  %4815 = vmatpush1.msra.mxu0 0.0
  %4816 = vmatprep.subr.mxu0 0.0
  %4817 = vmatpush1.msra.mxu0 0.0
  %4818 = vmatprep.subr.mxu0 0.0
  %4819 = vmatpush1.msra.mxu0 0.0
  %4820 = vmatprep.subr.mxu0 0.0
  %4821 = vmatpush1.msra.mxu0 0.0
  %4822 = vmatprep.subr.mxu0 0.0
  %4823 = vmatpush1.msra.mxu0 0.0
  %4824 = vmatprep.subr.mxu0 0.0
  %4825 = vmatpush1.msra.mxu0 0.0
  %4826 = vmatprep.subr.mxu0 0.0
  %4827 = vmatpush1.msra.mxu0 0.0
  %4828 = vmatprep.subr.mxu0 0.0
  %4829 = vmatpush1.msra.mxu0 0.0
  %4830 = vmatprep.subr.mxu0 0.0
  %4831 = vmatpush1.msra.mxu0 0.0
  %4832 = vmatprep.subr.mxu0 0.0
  %4833 = vmatpush1.msra.mxu0 0.0
  %4834 = vmatprep.subr.mxu0 0.0
  %4835 = vmatpush1.msra.mxu0 0.0
  %4836 = vmatprep.subr.mxu0 0.0
  %4837 = vmatpush1.msra.mxu0 0.0
  %4838 = vmatprep.subr.mxu0 0.0
  %4839 = vmatpush1.msra.mxu0 0.0
  %4840 = vmatprep.subr.mxu0 0.0
  %4841 = vmatpush1.msra.mxu0 0.0
  %4842 = vmatprep.subr.mxu0 0.0
  %4843 = vmatpush1.msra.mxu0 0.0
  %4844 = vmatprep.subr.mxu0 0.0
  %4845 = vmatpush1.msra.mxu0 0.0
  %4846 = vmatprep.subr.mxu0 0.0
  %4847 = vmatpush1.msra.mxu0 0.0
  %4848 = vmatprep.subr.mxu0 0.0
  %4849 = vmatpush1.msra.mxu0 0.0
  %4850 = vmatprep.subr.mxu0 0.0
  %4851 = vmatpush1.msra.mxu0 0.0
  %4852 = vmatprep.subr.mxu0 0.0
  %4853 = vmatpush1.msra.mxu0 0.0
  %4854 = vmatprep.subr.mxu0 0.0
  %4855 = vmatpush1.msra.mxu0 0.0
  %4856 = vmatprep.mubr.f32.mxu0 0.0
  %4857 = vmatmul.mubr.f32.gmra.mrb[0].mxu0 %v4610
  %v4858 = vpop.f32.mrb[0].mxu0
  %v4859 = vadd.f32 0.0, %v4858
  %v4860 = vpop.f32.mrb[0].mxu0
  %4861 = vmatprep.mubr.f32.mxu0 0.0
  %4862 = vmatmul.mubr.f32.gmra.mrb[0].mxu0 %v4613
  %v4863 = vpop.f32.mrb[0].mxu0
  %v4864 = vadd.f32 0.0, %v4863
  %v4865 = vpop.f32.mrb[0].mxu0
  %4866 = vmatprep.mubr.f32.mxu0 0.0
  %4867 = vmatmul.mubr.f32.gmra.mrb[0].mxu0 %v4616
  %v4868 = vpop.f32.mrb[0].mxu0
  %v4869 = vadd.f32 0.0, %v4868
  %v4870 = vpop.f32.mrb[0].mxu0
  %4871 = vdwg.mxu0
  %v4873 = vsel %vm705, %v4772, 0
  %v4876 = vsel %vm705, %v4777, 0
  %v4879 = vsel %vm705, %v4782, 0
  %4881 = vmatprep.subr.mxu0 %v89
  %4882 = vmatpush1.msra.mxu0 %v88
  %4883 = vmatprep.subr.mxu0 %v94
  %4884 = vmatpush1.msra.mxu0 %v93
  %4885 = vmatprep.subr.mxu0 %v99
  %4886 = vmatpush1.msra.mxu0 %v98
  %4887 = vmatprep.subr.mxu0 %v104
  %4888 = vmatpush1.msra.mxu0 %v103
  %4889 = vmatprep.subr.mxu0 0.0
  %4890 = vmatpush1.msra.mxu0 0.0
  %4891 = vmatprep.subr.mxu0 0.0
  %4892 = vmatpush1.msra.mxu0 0.0
  %4893 = vmatprep.subr.mxu0 0.0
  %4894 = vmatpush1.msra.mxu0 0.0
  %4895 = vmatprep.subr.mxu0 0.0
  %4896 = vmatpush1.msra.mxu0 0.0
  %4897 = vmatprep.subr.mxu0 0.0
  %4898 = vmatpush1.msra.mxu0 0.0
  %4899 = vmatprep.subr.mxu0 0.0
  %4900 = vmatpush1.msra.mxu0 0.0
  %4901 = vmatprep.subr.mxu0 0.0
  %4902 = vmatpush1.msra.mxu0 0.0
  %4903 = vmatprep.subr.mxu0 0.0
  %4904 = vmatpush1.msra.mxu0 0.0
  %4905 = vmatprep.subr.mxu0 0.0
  %4906 = vmatpush1.msra.mxu0 0.0
  %4907 = vmatprep.subr.mxu0 0.0
  %4908 = vmatpush1.msra.mxu0 0.0
  %4909 = vmatprep.subr.mxu0 0.0
  %4910 = vmatpush1.msra.mxu0 0.0
  %4911 = vmatprep.subr.mxu0 0.0
  %4912 = vmatpush1.msra.mxu0 0.0
  %4913 = vmatprep.subr.mxu0 0.0
  %4914 = vmatpush1.msra.mxu0 0.0
  %4915 = vmatprep.subr.mxu0 0.0
  %4916 = vmatpush1.msra.mxu0 0.0
  %4917 = vmatprep.subr.mxu0 0.0
  %4918 = vmatpush1.msra.mxu0 0.0
  %4919 = vmatprep.subr.mxu0 0.0
  %4920 = vmatpush1.msra.mxu0 0.0
  %4921 = vmatprep.subr.mxu0 0.0
  %4922 = vmatpush1.msra.mxu0 0.0
  %4923 = vmatprep.subr.mxu0 0.0
  %4924 = vmatpush1.msra.mxu0 0.0
  %4925 = vmatprep.subr.mxu0 0.0
  %4926 = vmatpush1.msra.mxu0 0.0
  %4927 = vmatprep.subr.mxu0 0.0
  %4928 = vmatpush1.msra.mxu0 0.0
  %4929 = vmatprep.subr.mxu0 0.0
  %4930 = vmatpush1.msra.mxu0 0.0
  %4931 = vmatprep.subr.mxu0 0.0
  %4932 = vmatpush1.msra.mxu0 0.0
  %4933 = vmatprep.subr.mxu0 0.0
  %4934 = vmatpush1.msra.mxu0 0.0
  %4935 = vmatprep.subr.mxu0 0.0
  %4936 = vmatpush1.msra.mxu0 0.0
  %4937 = vmatprep.subr.mxu0 0.0
  %4938 = vmatpush1.msra.mxu0 0.0
  %4939 = vmatprep.subr.mxu0 0.0
  %4940 = vmatpush1.msra.mxu0 0.0
  %4941 = vmatprep.subr.mxu0 0.0
  %4942 = vmatpush1.msra.mxu0 0.0
  %4943 = vmatprep.subr.mxu0 0.0
  %4944 = vmatpush1.msra.mxu0 0.0
  %4945 = vmatprep.mubr.f32.mxu0 0.0
  %4946 = vmatmul.mubr.f32.gmra.mrb[0].mxu0 %v4873
  %v4947 = vpop.f32.mrb[0].mxu0
  %v4948 = vadd.f32 0.0, %v4947
  %v4949 = vpop.f32.mrb[0].mxu0
  %v4950 = vadd.f32 0.0, %v4949
  %4951 = vmatprep.mubr.f32.mxu0 0.0
  %4952 = vmatmul.mubr.f32.gmra.mrb[0].mxu0 %v4876
  %v4953 = vpop.f32.mrb[0].mxu0
  %v4954 = vadd.f32 0.0, %v4953
  %v4955 = vpop.f32.mrb[0].mxu0
  %v4956 = vadd.f32 0.0, %v4955
  %4957 = vmatprep.mubr.f32.mxu0 0.0
  %4958 = vmatmul.mubr.f32.gmra.mrb[0].mxu0 %v4879
  %v4959 = vpop.f32.mrb[0].mxu0
  %v4960 = vadd.f32 0.0, %v4959
  %v4961 = vpop.f32.mrb[0].mxu0
  %v4962 = vadd.f32 0.0, %v4961
  %4963 = vdwg.mxu0
  %4964 = vmatprep.subr.mxu0 %v91
  %4965 = vmatpush1.msra.mxu0 %v90
  %4966 = vmatprep.subr.mxu0 %v96
  %4967 = vmatpush1.msra.mxu0 %v95
  %4968 = vmatprep.subr.mxu0 %v101
  %4969 = vmatpush1.msra.mxu0 %v100
  %4970 = vmatprep.subr.mxu0 %v106
  %4971 = vmatpush1.msra.mxu0 %v105
  %4972 = vmatprep.subr.mxu0 0.0
  %4973 = vmatpush1.msra.mxu0 0.0
  %4974 = vmatprep.subr.mxu0 0.0
  %4975 = vmatpush1.msra.mxu0 0.0
  %4976 = vmatprep.subr.mxu0 0.0
  %4977 = vmatpush1.msra.mxu0 0.0
  %4978 = vmatprep.subr.mxu0 0.0
  %4979 = vmatpush1.msra.mxu0 0.0
  %4980 = vmatprep.subr.mxu0 0.0
  %4981 = vmatpush1.msra.mxu0 0.0
  %4982 = vmatprep.subr.mxu0 0.0
  %4983 = vmatpush1.msra.mxu0 0.0
  %4984 = vmatprep.subr.mxu0 0.0
  %4985 = vmatpush1.msra.mxu0 0.0
  %4986 = vmatprep.subr.mxu0 0.0
  %4987 = vmatpush1.msra.mxu0 0.0
  %4988 = vmatprep.subr.mxu0 0.0
  %4989 = vmatpush1.msra.mxu0 0.0
  %4990 = vmatprep.subr.mxu0 0.0
  %4991 = vmatpush1.msra.mxu0 0.0
  %4992 = vmatprep.subr.mxu0 0.0
  %4993 = vmatpush1.msra.mxu0 0.0
  %4994 = vmatprep.subr.mxu0 0.0
  %4995 = vmatpush1.msra.mxu0 0.0
  %4996 = vmatprep.subr.mxu0 0.0
  %4997 = vmatpush1.msra.mxu0 0.0
  %4998 = vmatprep.subr.mxu0 0.0
  %4999 = vmatpush1.msra.mxu0 0.0
  %5000 = vmatprep.subr.mxu0 0.0
  %5001 = vmatpush1.msra.mxu0 0.0
  %5002 = vmatprep.subr.mxu0 0.0
  %5003 = vmatpush1.msra.mxu0 0.0
  %5004 = vmatprep.subr.mxu0 0.0
  %5005 = vmatpush1.msra.mxu0 0.0
  %5006 = vmatprep.subr.mxu0 0.0
  %5007 = vmatpush1.msra.mxu0 0.0
  %5008 = vmatprep.subr.mxu0 0.0
  %5009 = vmatpush1.msra.mxu0 0.0
  %5010 = vmatprep.subr.mxu0 0.0
  %5011 = vmatpush1.msra.mxu0 0.0
  %5012 = vmatprep.subr.mxu0 0.0
  %5013 = vmatpush1.msra.mxu0 0.0
  %5014 = vmatprep.subr.mxu0 0.0
  %5015 = vmatpush1.msra.mxu0 0.0
  %5016 = vmatprep.subr.mxu0 0.0
  %5017 = vmatpush1.msra.mxu0 0.0
  %5018 = vmatprep.subr.mxu0 0.0
  %5019 = vmatpush1.msra.mxu0 0.0
  %5020 = vmatprep.subr.mxu0 0.0
  %5021 = vmatpush1.msra.mxu0 0.0
  %5022 = vmatprep.subr.mxu0 0.0
  %5023 = vmatpush1.msra.mxu0 0.0
  %5024 = vmatprep.subr.mxu0 0.0
  %5025 = vmatpush1.msra.mxu0 0.0
  %5026 = vmatprep.subr.mxu0 0.0
  %5027 = vmatpush1.msra.mxu0 0.0
  %5028 = vmatprep.mubr.f32.mxu0 0.0
  %5029 = vmatmul.mubr.f32.gmra.mrb[0].mxu0 %v4873
  %v5030 = vpop.f32.mrb[0].mxu0
  %v5031 = vadd.f32 0.0, %v5030
  %v5032 = vpop.f32.mrb[0].mxu0
  %v5033 = vadd.f32 0.0, %v5032
  %5034 = vmatprep.mubr.f32.mxu0 0.0
  %5035 = vmatmul.mubr.f32.gmra.mrb[0].mxu0 %v4876
  %v5036 = vpop.f32.mrb[0].mxu0
  %v5037 = vadd.f32 0.0, %v5036
  %v5038 = vpop.f32.mrb[0].mxu0
  %v5039 = vadd.f32 0.0, %v5038
  %5040 = vmatprep.mubr.f32.mxu0 0.0
  %5041 = vmatmul.mubr.f32.gmra.mrb[0].mxu0 %v4879
  %v5042 = vpop.f32.mrb[0].mxu0
  %v5043 = vadd.f32 0.0, %v5042
  %v5044 = vpop.f32.mrb[0].mxu0
  %v5045 = vadd.f32 0.0, %v5044
  %5046 = vdwg.mxu0
  %5047 = vmatprep.subr.mxu0 0.0
  %5048 = vmatpush1.msra.mxu0 %v92
  %5049 = vmatprep.subr.mxu0 0.0
  %5050 = vmatpush1.msra.mxu0 %v97
  %5051 = vmatprep.subr.mxu0 0.0
  %5052 = vmatpush1.msra.mxu0 %v102
  %5053 = vmatprep.subr.mxu0 0.0
  %5054 = vmatpush1.msra.mxu0 %v107
  %5055 = vmatprep.subr.mxu0 0.0
  %5056 = vmatpush1.msra.mxu0 0.0
  %5057 = vmatprep.subr.mxu0 0.0
  %5058 = vmatpush1.msra.mxu0 0.0
  %5059 = vmatprep.subr.mxu0 0.0
  %5060 = vmatpush1.msra.mxu0 0.0
  %5061 = vmatprep.subr.mxu0 0.0
  %5062 = vmatpush1.msra.mxu0 0.0
  %5063 = vmatprep.subr.mxu0 0.0
  %5064 = vmatpush1.msra.mxu0 0.0
  %5065 = vmatprep.subr.mxu0 0.0
  %5066 = vmatpush1.msra.mxu0 0.0
  %5067 = vmatprep.subr.mxu0 0.0
  %5068 = vmatpush1.msra.mxu0 0.0
  %5069 = vmatprep.subr.mxu0 0.0
  %5070 = vmatpush1.msra.mxu0 0.0
  %5071 = vmatprep.subr.mxu0 0.0
  %5072 = vmatpush1.msra.mxu0 0.0
  %5073 = vmatprep.subr.mxu0 0.0
  %5074 = vmatpush1.msra.mxu0 0.0
  %5075 = vmatprep.subr.mxu0 0.0
  %5076 = vmatpush1.msra.mxu0 0.0
  %5077 = vmatprep.subr.mxu0 0.0
  %5078 = vmatpush1.msra.mxu0 0.0
  %5079 = vmatprep.subr.mxu0 0.0
  %5080 = vmatpush1.msra.mxu0 0.0
  %5081 = vmatprep.subr.mxu0 0.0
  %5082 = vmatpush1.msra.mxu0 0.0
  %5083 = vmatprep.subr.mxu0 0.0
  %5084 = vmatpush1.msra.mxu0 0.0
  %5085 = vmatprep.subr.mxu0 0.0
  %5086 = vmatpush1.msra.mxu0 0.0
  %5087 = vmatprep.subr.mxu0 0.0
  %5088 = vmatpush1.msra.mxu0 0.0
  %5089 = vmatprep.subr.mxu0 0.0
  %5090 = vmatpush1.msra.mxu0 0.0
  %5091 = vmatprep.subr.mxu0 0.0
  %5092 = vmatpush1.msra.mxu0 0.0
  %5093 = vmatprep.subr.mxu0 0.0
  %5094 = vmatpush1.msra.mxu0 0.0
  %5095 = vmatprep.subr.mxu0 0.0
  %5096 = vmatpush1.msra.mxu0 0.0
  %5097 = vmatprep.subr.mxu0 0.0
  %5098 = vmatpush1.msra.mxu0 0.0
  %5099 = vmatprep.subr.mxu0 0.0
  %5100 = vmatpush1.msra.mxu0 0.0
  %5101 = vmatprep.subr.mxu0 0.0
  %5102 = vmatpush1.msra.mxu0 0.0
  %5103 = vmatprep.subr.mxu0 0.0
  %5104 = vmatpush1.msra.mxu0 0.0
  %5105 = vmatprep.subr.mxu0 0.0
  %5106 = vmatpush1.msra.mxu0 0.0
  %5107 = vmatprep.subr.mxu0 0.0
  %5108 = vmatpush1.msra.mxu0 0.0
  %5109 = vmatprep.subr.mxu0 0.0
  %5110 = vmatpush1.msra.mxu0 0.0
  %5111 = vmatprep.mubr.f32.mxu0 0.0
  %5112 = vmatmul.mubr.f32.gmra.mrb[0].mxu0 %v4873
  %v5113 = vpop.f32.mrb[0].mxu0
  %v5114 = vadd.f32 0.0, %v5113
  %v5115 = vpop.f32.mrb[0].mxu0
  %5116 = vmatprep.mubr.f32.mxu0 0.0
  %5117 = vmatmul.mubr.f32.gmra.mrb[0].mxu0 %v4876
  %v5118 = vpop.f32.mrb[0].mxu0
  %v5119 = vadd.f32 0.0, %v5118
  %v5120 = vpop.f32.mrb[0].mxu0
  %5121 = vmatprep.mubr.f32.mxu0 0.0
  %5122 = vmatmul.mubr.f32.gmra.mrb[0].mxu0 %v4879
  %v5123 = vpop.f32.mrb[0].mxu0
  %v5124 = vadd.f32 0.0, %v5123
  %v5125 = vpop.f32.mrb[0].mxu0
  %5126 = vdwg.mxu0
  %v5127 = vmul.f32 %v4948, %v108
  %v5128 = vmul.f32 %v4950, %v109
  %v5129 = vmul.f32 %v5031, %v110
  %v5130 = vmul.f32 %v5033, %v111
  %v5131 = vmul.f32 %v5114, %v112
  %v5132 = vmul.f32 %v4954, %v113
  %v5133 = vmul.f32 %v4956, %v114
  %v5134 = vmul.f32 %v5037, %v115
  %v5135 = vmul.f32 %v5039, %v116
  %v5136 = vmul.f32 %v5119, %v117
  %v5137 = vmul.f32 %v4960, %v118
  %v5138 = vmul.f32 %v4962, %v119
  %v5139 = vmul.f32 %v5043, %v120
  %v5140 = vmul.f32 %v5045, %v121
  %v5141 = vmul.f32 %v5124, %v122
  %v5143 = vsel %vm980, %v5137, 0
  %v5146 = vsel %vm980, %v5138, 0
  %v5149 = vsel %vm980, %v5139, 0
  %v5152 = vsel %vm980, %v5140, 0
  %v5155 = vsel %vm980, %v5141, 0
  %5157 = vmatprep.subr.mxu0 %v5128
  %5158 = vmatpush1.msra.mxu0 %v5127
  %5159 = vmatprep.subr.mxu0 %v5133
  %5160 = vmatpush1.msra.mxu0 %v5132
  %5161 = vmatprep.subr.mxu0 %v5146
  %5162 = vmatpush1.msra.mxu0 %v5143
  %5163 = vmatprep.subr.mxu0 0.0
  %5164 = vmatpush1.msra.mxu0 0.0
  %5165 = vmatprep.subr.mxu0 0.0
  %5166 = vmatpush1.msra.mxu0 0.0
  %5167 = vmatprep.subr.mxu0 0.0
  %5168 = vmatpush1.msra.mxu0 0.0
  %5169 = vmatprep.subr.mxu0 0.0
  %5170 = vmatpush1.msra.mxu0 0.0
  %5171 = vmatprep.subr.mxu0 0.0
  %5172 = vmatpush1.msra.mxu0 0.0
  %5173 = vmatprep.subr.mxu0 0.0
  %5174 = vmatpush1.msra.mxu0 0.0
  %5175 = vmatprep.subr.mxu0 0.0
  %5176 = vmatpush1.msra.mxu0 0.0
  %5177 = vmatprep.subr.mxu0 0.0
  %5178 = vmatpush1.msra.mxu0 0.0
  %5179 = vmatprep.subr.mxu0 0.0
  %5180 = vmatpush1.msra.mxu0 0.0
  %5181 = vmatprep.subr.mxu0 0.0
  %5182 = vmatpush1.msra.mxu0 0.0
  %5183 = vmatprep.subr.mxu0 0.0
  %5184 = vmatpush1.msra.mxu0 0.0
  %5185 = vmatprep.subr.mxu0 0.0
  %5186 = vmatpush1.msra.mxu0 0.0
  %5187 = vmatprep.subr.mxu0 0.0
  %5188 = vmatpush1.msra.mxu0 0.0
  %5189 = vmatprep.subr.mxu0 0.0
  %5190 = vmatpush1.msra.mxu0 0.0
  %5191 = vmatprep.subr.mxu0 0.0
  %5192 = vmatpush1.msra.mxu0 0.0
  %5193 = vmatprep.subr.mxu0 0.0
  %5194 = vmatpush1.msra.mxu0 0.0
  %5195 = vmatprep.subr.mxu0 0.0
  %5196 = vmatpush1.msra.mxu0 0.0
  %5197 = vmatprep.subr.mxu0 0.0
  %5198 = vmatpush1.msra.mxu0 0.0
  %5199 = vmatprep.subr.mxu0 0.0
  %5200 = vmatpush1.msra.mxu0 0.0
  %5201 = vmatprep.subr.mxu0 0.0
  %5202 = vmatpush1.msra.mxu0 0.0
  %5203 = vmatprep.subr.mxu0 0.0
  %5204 = vmatpush1.msra.mxu0 0.0
  %5205 = vmatprep.subr.mxu0 0.0
  %5206 = vmatpush1.msra.mxu0 0.0
  %5207 = vmatprep.subr.mxu0 0.0
  %5208 = vmatpush1.msra.mxu0 0.0
  %5209 = vmatprep.subr.mxu0 0.0
  %5210 = vmatpush1.msra.mxu0 0.0
  %5211 = vmatprep.subr.mxu0 0.0
  %5212 = vmatpush1.msra.mxu0 0.0
  %5213 = vmatprep.subr.mxu0 0.0
  %5214 = vmatpush1.msra.mxu0 0.0
  %5215 = vmatprep.subr.mxu0 0.0
  %5216 = vmatpush1.msra.mxu0 0.0
  %5217 = vmatprep.subr.mxu0 0.0
  %5218 = vmatpush1.msra.mxu0 0.0
  %5219 = vmatprep.subr.mxu0 0.0
  %5220 = vmatpush1.msra.mxu0 0.0
  %5221 = vmatprep.mubr.f32.mxu0 0.0
  %5222 = vmatmul.mubr.f32.gmra.mrb[0].mxu0 %v978
  %v5223 = vpop.f32.mrb[0].mxu0
  %v5224 = vadd.f32 0.0, %v5223
  %v5225 = vpop.f32.mrb[0].mxu0
  %v5226 = vadd.f32 0.0, %v5225
  %5227 = vdwg.mxu0
  %5228 = vmatprep.subr.mxu0 %v5130
  %5229 = vmatpush1.msra.mxu0 %v5129
  %5230 = vmatprep.subr.mxu0 %v5135
  %5231 = vmatpush1.msra.mxu0 %v5134
  %5232 = vmatprep.subr.mxu0 %v5152
  %5233 = vmatpush1.msra.mxu0 %v5149
  %5234 = vmatprep.subr.mxu0 0.0
  %5235 = vmatpush1.msra.mxu0 0.0
  %5236 = vmatprep.subr.mxu0 0.0
  %5237 = vmatpush1.msra.mxu0 0.0
  %5238 = vmatprep.subr.mxu0 0.0
  %5239 = vmatpush1.msra.mxu0 0.0
  %5240 = vmatprep.subr.mxu0 0.0
  %5241 = vmatpush1.msra.mxu0 0.0
  %5242 = vmatprep.subr.mxu0 0.0
  %5243 = vmatpush1.msra.mxu0 0.0
  %5244 = vmatprep.subr.mxu0 0.0
  %5245 = vmatpush1.msra.mxu0 0.0
  %5246 = vmatprep.subr.mxu0 0.0
  %5247 = vmatpush1.msra.mxu0 0.0
  %5248 = vmatprep.subr.mxu0 0.0
  %5249 = vmatpush1.msra.mxu0 0.0
  %5250 = vmatprep.subr.mxu0 0.0
  %5251 = vmatpush1.msra.mxu0 0.0
  %5252 = vmatprep.subr.mxu0 0.0
  %5253 = vmatpush1.msra.mxu0 0.0
  %5254 = vmatprep.subr.mxu0 0.0
  %5255 = vmatpush1.msra.mxu0 0.0
  %5256 = vmatprep.subr.mxu0 0.0
  %5257 = vmatpush1.msra.mxu0 0.0
  %5258 = vmatprep.subr.mxu0 0.0
  %5259 = vmatpush1.msra.mxu0 0.0
  %5260 = vmatprep.subr.mxu0 0.0
  %5261 = vmatpush1.msra.mxu0 0.0
  %5262 = vmatprep.subr.mxu0 0.0
  %5263 = vmatpush1.msra.mxu0 0.0
  %5264 = vmatprep.subr.mxu0 0.0
  %5265 = vmatpush1.msra.mxu0 0.0
  %5266 = vmatprep.subr.mxu0 0.0
  %5267 = vmatpush1.msra.mxu0 0.0
  %5268 = vmatprep.subr.mxu0 0.0
  %5269 = vmatpush1.msra.mxu0 0.0
  %5270 = vmatprep.subr.mxu0 0.0
  %5271 = vmatpush1.msra.mxu0 0.0
  %5272 = vmatprep.subr.mxu0 0.0
  %5273 = vmatpush1.msra.mxu0 0.0
  %5274 = vmatprep.subr.mxu0 0.0
  %5275 = vmatpush1.msra.mxu0 0.0
  %5276 = vmatprep.subr.mxu0 0.0
  %5277 = vmatpush1.msra.mxu0 0.0
  %5278 = vmatprep.subr.mxu0 0.0
  %5279 = vmatpush1.msra.mxu0 0.0
  %5280 = vmatprep.subr.mxu0 0.0
  %5281 = vmatpush1.msra.mxu0 0.0
  %5282 = vmatprep.subr.mxu0 0.0
  %5283 = vmatpush1.msra.mxu0 0.0
  %5284 = vmatprep.subr.mxu0 0.0
  %5285 = vmatpush1.msra.mxu0 0.0
  %5286 = vmatprep.subr.mxu0 0.0
  %5287 = vmatpush1.msra.mxu0 0.0
  %5288 = vmatprep.subr.mxu0 0.0
  %5289 = vmatpush1.msra.mxu0 0.0
  %5290 = vmatprep.subr.mxu0 0.0
  %5291 = vmatpush1.msra.mxu0 0.0
  %5292 = vmatprep.mubr.f32.mxu0 0.0
  %5293 = vmatmul.mubr.f32.gmra.mrb[0].mxu0 %v978
  %v5294 = vpop.f32.mrb[0].mxu0
  %v5295 = vadd.f32 0.0, %v5294
  %v5296 = vpop.f32.mrb[0].mxu0
  %v5297 = vadd.f32 0.0, %v5296
  %5298 = vdwg.mxu0
  %5299 = vmatprep.subr.mxu0 0.0
  %5300 = vmatpush1.msra.mxu0 %v5131
  %5301 = vmatprep.subr.mxu0 0.0
  %5302 = vmatpush1.msra.mxu0 %v5136
  %5303 = vmatprep.subr.mxu0 0.0
  %5304 = vmatpush1.msra.mxu0 %v5155
  %5305 = vmatprep.subr.mxu0 0.0
  %5306 = vmatpush1.msra.mxu0 0.0
  %5307 = vmatprep.subr.mxu0 0.0
  %5308 = vmatpush1.msra.mxu0 0.0
  %5309 = vmatprep.subr.mxu0 0.0
  %5310 = vmatpush1.msra.mxu0 0.0
  %5311 = vmatprep.subr.mxu0 0.0
  %5312 = vmatpush1.msra.mxu0 0.0
  %5313 = vmatprep.subr.mxu0 0.0
  %5314 = vmatpush1.msra.mxu0 0.0
  %5315 = vmatprep.subr.mxu0 0.0
  %5316 = vmatpush1.msra.mxu0 0.0
  %5317 = vmatprep.subr.mxu0 0.0
  %5318 = vmatpush1.msra.mxu0 0.0
  %5319 = vmatprep.subr.mxu0 0.0
  %5320 = vmatpush1.msra.mxu0 0.0
  %5321 = vmatprep.subr.mxu0 0.0
  %5322 = vmatpush1.msra.mxu0 0.0
  %5323 = vmatprep.subr.mxu0 0.0
  %5324 = vmatpush1.msra.mxu0 0.0
  %5325 = vmatprep.subr.mxu0 0.0
  %5326 = vmatpush1.msra.mxu0 0.0
  %5327 = vmatprep.subr.mxu0 0.0
  %5328 = vmatpush1.msra.mxu0 0.0
  %5329 = vmatprep.subr.mxu0 0.0
  %5330 = vmatpush1.msra.mxu0 0.0
  %5331 = vmatprep.subr.mxu0 0.0
  %5332 = vmatpush1.msra.mxu0 0.0
  %5333 = vmatprep.subr.mxu0 0.0
  %5334 = vmatpush1.msra.mxu0 0.0
  %5335 = vmatprep.subr.mxu0 0.0
  %5336 = vmatpush1.msra.mxu0 0.0
  %5337 = vmatprep.subr.mxu0 0.0
  %5338 = vmatpush1.msra.mxu0 0.0
  %5339 = vmatprep.subr.mxu0 0.0
  %5340 = vmatpush1.msra.mxu0 0.0
  %5341 = vmatprep.subr.mxu0 0.0
  %5342 = vmatpush1.msra.mxu0 0.0
  %5343 = vmatprep.subr.mxu0 0.0
  %5344 = vmatpush1.msra.mxu0 0.0
  %5345 = vmatprep.subr.mxu0 0.0
  %5346 = vmatpush1.msra.mxu0 0.0
  %5347 = vmatprep.subr.mxu0 0.0
  %5348 = vmatpush1.msra.mxu0 0.0
  %5349 = vmatprep.subr.mxu0 0.0
  %5350 = vmatpush1.msra.mxu0 0.0
  %5351 = vmatprep.subr.mxu0 0.0
  %5352 = vmatpush1.msra.mxu0 0.0
  %5353 = vmatprep.subr.mxu0 0.0
  %5354 = vmatpush1.msra.mxu0 0.0
  %5355 = vmatprep.subr.mxu0 0.0
  %5356 = vmatpush1.msra.mxu0 0.0
  %5357 = vmatprep.subr.mxu0 0.0
  %5358 = vmatpush1.msra.mxu0 0.0
  %5359 = vmatprep.subr.mxu0 0.0
  %5360 = vmatpush1.msra.mxu0 0.0
  %5361 = vmatprep.subr.mxu0 0.0
  %5362 = vmatpush1.msra.mxu0 0.0
  %5363 = vmatprep.mubr.f32.mxu0 0.0
  %5364 = vmatmul.mubr.f32.gmra.mrb[0].mxu0 %v978
  %v5365 = vpop.f32.mrb[0].mxu0
  %v5366 = vadd.f32 0.0, %v5365
  %v5367 = vpop.f32.mrb[0].mxu0
  %5368 = vdwg.mxu0
  %v5369 = vlaneseq
  %v5370 = vshrl.u32 %v5369, 7
  %v5371 = vsub.s32 0, %v5370
  %v5372 = vrot.slane %v5224, %v5371
  %v5373 = vlaneseq
  %v5374 = vshrl.u32 %v5373, 7
  %v5375 = vsub.s32 0, %v5374
  %v5376 = vrot.slane %v5226, %v5375
  %v5377 = vlaneseq
  %v5378 = vshrl.u32 %v5377, 7
  %v5379 = vsub.s32 0, %v5378
  %v5380 = vrot.slane %v5295, %v5379
  %v5381 = vlaneseq
  %v5382 = vshrl.u32 %v5381, 7
  %v5383 = vsub.s32 0, %v5382
  %v5384 = vrot.slane %v5297, %v5383
  %v5385 = vlaneseq
  %v5386 = vshrl.u32 %v5385, 7
  %v5387 = vsub.s32 0, %v5386
  %v5388 = vrot.slane %v5366, %v5387
  %v5389 = vmul.f32 %v5372, %v123
  %v5390 = vmul.f32 %v5376, %v124
  %v5391 = vmul.f32 %v5380, %v125
  %v5392 = vmul.f32 %v5384, %v126
  %v5393 = vmul.f32 %v5388, %v127
  %v5394 = vmul.f32 %v5372, %v128
  %v5395 = vmul.f32 %v5376, %v129
  %v5396 = vmul.f32 %v5380, %v130
  %v5397 = vmul.f32 %v5384, %v131
  %v5398 = vmul.f32 %v5388, %v132
  %v5399 = vmul.f32 %v5372, %v133
  %v5400 = vmul.f32 %v5376, %v134
  %v5401 = vmul.f32 %v5380, %v135
  %v5402 = vmul.f32 %v5384, %v136
  %v5403 = vmul.f32 %v5388, %v137
  %v5404 = vmul.f32 %v5372, %v138
  %v5405 = vmul.f32 %v5376, %v139
  %v5406 = vmul.f32 %v5380, %v140
  %v5407 = vmul.f32 %v5384, %v141
  %v5408 = vmul.f32 %v5388, %v142
  %v5410 = vsel %vm705, %v5393, 0
  %v5413 = vsel %vm705, %v5398, 0
  %v5416 = vsel %vm705, %v5403, 0
  %v5419 = vsel %vm705, %v5408, 0
  %5421 = vmatprep.subr.mxu0 0.0
  %5422 = vmatpush1.msra.mxu0 %v143
  %5423 = vmatprep.subr.mxu0 0.0
  %5424 = vmatpush1.msra.mxu0 %v144
  %5425 = vmatprep.subr.mxu0 0.0
  %5426 = vmatpush1.msra.mxu0 %v145
  %5427 = vmatprep.subr.mxu0 0.0
  %5428 = vmatpush1.msra.mxu0 %v146
  %5429 = vmatprep.subr.mxu0 0.0
  %5430 = vmatpush1.msra.mxu0 %v147
  %5431 = vmatprep.subr.mxu0 0.0
  %5432 = vmatpush1.msra.mxu0 %v148
  %5433 = vmatprep.subr.mxu0 0.0
  %5434 = vmatpush1.msra.mxu0 %v149
  %5435 = vmatprep.subr.mxu0 0.0
  %5436 = vmatpush1.msra.mxu0 %v150
  %5437 = vmatprep.subr.mxu0 0.0
  %5438 = vmatpush1.msra.mxu0 %v151
  %5439 = vmatprep.subr.mxu0 0.0
  %5440 = vmatpush1.msra.mxu0 %v152
  %5441 = vmatprep.subr.mxu0 0.0
  %5442 = vmatpush1.msra.mxu0 %v153
  %5443 = vmatprep.subr.mxu0 0.0
  %5444 = vmatpush1.msra.mxu0 %v154
  %5445 = vmatprep.subr.mxu0 0.0
  %5446 = vmatpush1.msra.mxu0 %v155
  %5447 = vmatprep.subr.mxu0 0.0
  %5448 = vmatpush1.msra.mxu0 %v156
  %5449 = vmatprep.subr.mxu0 0.0
  %5450 = vmatpush1.msra.mxu0 %v157
  %5451 = vmatprep.subr.mxu0 0.0
  %5452 = vmatpush1.msra.mxu0 %v158
  %5453 = vmatprep.subr.mxu0 0.0
  %5454 = vmatpush1.msra.mxu0 %v159
  %5455 = vmatprep.subr.mxu0 0.0
  %5456 = vmatpush1.msra.mxu0 %v160
  %5457 = vmatprep.subr.mxu0 0.0
  %5458 = vmatpush1.msra.mxu0 %v161
  %5459 = vmatprep.subr.mxu0 0.0
  %5460 = vmatpush1.msra.mxu0 %v162
  %5461 = vmatprep.subr.mxu0 0.0
  %5462 = vmatpush1.msra.mxu0 %v163
  %5463 = vmatprep.subr.mxu0 0.0
  %5464 = vmatpush1.msra.mxu0 %v164
  %5465 = vmatprep.subr.mxu0 0.0
  %5466 = vmatpush1.msra.mxu0 %v165
  %5467 = vmatprep.subr.mxu0 0.0
  %5468 = vmatpush1.msra.mxu0 %v166
  %5469 = vmatprep.subr.mxu0 0.0
  %5470 = vmatpush1.msra.mxu0 %v167
  %5471 = vmatprep.subr.mxu0 0.0
  %5472 = vmatpush1.msra.mxu0 %v168
  %5473 = vmatprep.subr.mxu0 0.0
  %5474 = vmatpush1.msra.mxu0 %v169
  %5475 = vmatprep.subr.mxu0 0.0
  %5476 = vmatpush1.msra.mxu0 %v170
  %5477 = vmatprep.subr.mxu0 0.0
  %5478 = vmatpush1.msra.mxu0 %v171
  %5479 = vmatprep.subr.mxu0 0.0
  %5480 = vmatpush1.msra.mxu0 %v172
  %5481 = vmatprep.subr.mxu0 0.0
  %5482 = vmatpush1.msra.mxu0 %v173
  %5483 = vmatprep.subr.mxu0 0.0
  %5484 = vmatpush1.msra.mxu0 %v174
  %5485 = vmatprep.mubr.f32.mxu0 %v5390
  %5486 = vmatmul.mubr.f32.gmra.mrb[0].mxu0 %v5389
  %v5487 = vpop.f32.mrb[0].mxu0
  %v5488 = vadd.f32 0.0, %v5487
  %v5489 = vpop.f32.mrb[0].mxu0
  %5490 = vmatprep.mubr.f32.mxu0 %v5395
  %5491 = vmatmul.mubr.f32.gmra.mrb[0].mxu0 %v5394
  %v5492 = vpop.f32.mrb[0].mxu0
  %v5493 = vadd.f32 0.0, %v5492
  %v5494 = vpop.f32.mrb[0].mxu0
  %5495 = vmatprep.mubr.f32.mxu0 %v5400
  %5496 = vmatmul.mubr.f32.gmra.mrb[0].mxu0 %v5399
  %v5497 = vpop.f32.mrb[0].mxu0
  %v5498 = vadd.f32 0.0, %v5497
  %v5499 = vpop.f32.mrb[0].mxu0
  %5500 = vmatprep.mubr.f32.mxu0 %v5405
  %5501 = vmatmul.mubr.f32.gmra.mrb[0].mxu0 %v5404
  %v5502 = vpop.f32.mrb[0].mxu0
  %v5503 = vadd.f32 0.0, %v5502
  %v5504 = vpop.f32.mrb[0].mxu0
  %5505 = vdwg.mxu0
  %5506 = vmatprep.subr.mxu0 0.0
  %5507 = vmatpush1.msra.mxu0 %v175
  %5508 = vmatprep.subr.mxu0 0.0
  %5509 = vmatpush1.msra.mxu0 %v176
  %5510 = vmatprep.subr.mxu0 0.0
  %5511 = vmatpush1.msra.mxu0 %v177
  %5512 = vmatprep.subr.mxu0 0.0
  %5513 = vmatpush1.msra.mxu0 %v178
  %5514 = vmatprep.subr.mxu0 0.0
  %5515 = vmatpush1.msra.mxu0 %v179
  %5516 = vmatprep.subr.mxu0 0.0
  %5517 = vmatpush1.msra.mxu0 %v180
  %5518 = vmatprep.subr.mxu0 0.0
  %5519 = vmatpush1.msra.mxu0 %v181
  %5520 = vmatprep.subr.mxu0 0.0
  %5521 = vmatpush1.msra.mxu0 %v182
  %5522 = vmatprep.subr.mxu0 0.0
  %5523 = vmatpush1.msra.mxu0 %v183
  %5524 = vmatprep.subr.mxu0 0.0
  %5525 = vmatpush1.msra.mxu0 %v184
  %5526 = vmatprep.subr.mxu0 0.0
  %5527 = vmatpush1.msra.mxu0 %v185
  %5528 = vmatprep.subr.mxu0 0.0
  %5529 = vmatpush1.msra.mxu0 %v186
  %5530 = vmatprep.subr.mxu0 0.0
  %5531 = vmatpush1.msra.mxu0 %v187
  %5532 = vmatprep.subr.mxu0 0.0
  %5533 = vmatpush1.msra.mxu0 %v188
  %5534 = vmatprep.subr.mxu0 0.0
  %5535 = vmatpush1.msra.mxu0 %v189
  %5536 = vmatprep.subr.mxu0 0.0
  %5537 = vmatpush1.msra.mxu0 %v190
  %5538 = vmatprep.subr.mxu0 0.0
  %5539 = vmatpush1.msra.mxu0 %v191
  %5540 = vmatprep.subr.mxu0 0.0
  %5541 = vmatpush1.msra.mxu0 %v192
  %5542 = vmatprep.subr.mxu0 0.0
  %5543 = vmatpush1.msra.mxu0 %v193
  %5544 = vmatprep.subr.mxu0 0.0
  %5545 = vmatpush1.msra.mxu0 %v194
  %5546 = vmatprep.subr.mxu0 0.0
  %5547 = vmatpush1.msra.mxu0 %v195
  %5548 = vmatprep.subr.mxu0 0.0
  %5549 = vmatpush1.msra.mxu0 %v196
  %5550 = vmatprep.subr.mxu0 0.0
  %5551 = vmatpush1.msra.mxu0 %v197
  %5552 = vmatprep.subr.mxu0 0.0
  %5553 = vmatpush1.msra.mxu0 %v198
  %5554 = vmatprep.subr.mxu0 0.0
  %5555 = vmatpush1.msra.mxu0 %v199
  %5556 = vmatprep.subr.mxu0 0.0
  %5557 = vmatpush1.msra.mxu0 %v200
  %5558 = vmatprep.subr.mxu0 0.0
  %5559 = vmatpush1.msra.mxu0 %v201
  %5560 = vmatprep.subr.mxu0 0.0
  %5561 = vmatpush1.msra.mxu0 %v202
  %5562 = vmatprep.subr.mxu0 0.0
  %5563 = vmatpush1.msra.mxu0 %v203
  %5564 = vmatprep.subr.mxu0 0.0
  %5565 = vmatpush1.msra.mxu0 %v204
  %5566 = vmatprep.subr.mxu0 0.0
  %5567 = vmatpush1.msra.mxu0 %v205
  %5568 = vmatprep.subr.mxu0 0.0
  %5569 = vmatpush1.msra.mxu0 %v206
  %5570 = vmatprep.mubr.f32.mxu0 %v5392
  %5571 = vmatmul.mubr.f32.gmra.mrb[0].mxu0 %v5391
  %v5572 = vpop.f32.mrb[0].mxu0
  %v5573 = vadd.f32 %v5488, %v5572
  %v5574 = vpop.f32.mrb[0].mxu0
  %5575 = vmatprep.mubr.f32.mxu0 %v5397
  %5576 = vmatmul.mubr.f32.gmra.mrb[0].mxu0 %v5396
  %v5577 = vpop.f32.mrb[0].mxu0
  %v5578 = vadd.f32 %v5493, %v5577
  %v5579 = vpop.f32.mrb[0].mxu0
  %5580 = vmatprep.mubr.f32.mxu0 %v5402
  %5581 = vmatmul.mubr.f32.gmra.mrb[0].mxu0 %v5401
  %v5582 = vpop.f32.mrb[0].mxu0
  %v5583 = vadd.f32 %v5498, %v5582
  %v5584 = vpop.f32.mrb[0].mxu0
  %5585 = vmatprep.mubr.f32.mxu0 %v5407
  %5586 = vmatmul.mubr.f32.gmra.mrb[0].mxu0 %v5406
  %v5587 = vpop.f32.mrb[0].mxu0
  %v5588 = vadd.f32 %v5503, %v5587
  %v5589 = vpop.f32.mrb[0].mxu0
  %5590 = vdwg.mxu0
  %5591 = vmatprep.subr.mxu0 0.0
  %5592 = vmatpush1.msra.mxu0 %v207
  %5593 = vmatprep.subr.mxu0 0.0
  %5594 = vmatpush1.msra.mxu0 %v208
  %5595 = vmatprep.subr.mxu0 0.0
  %5596 = vmatpush1.msra.mxu0 %v209
  %5597 = vmatprep.subr.mxu0 0.0
  %5598 = vmatpush1.msra.mxu0 %v210
  %5599 = vmatprep.subr.mxu0 0.0
  %5600 = vmatpush1.msra.mxu0 0.0
  %5601 = vmatprep.subr.mxu0 0.0
  %5602 = vmatpush1.msra.mxu0 0.0
  %5603 = vmatprep.subr.mxu0 0.0
  %5604 = vmatpush1.msra.mxu0 0.0
  %5605 = vmatprep.subr.mxu0 0.0
  %5606 = vmatpush1.msra.mxu0 0.0
  %5607 = vmatprep.subr.mxu0 0.0
  %5608 = vmatpush1.msra.mxu0 0.0
  %5609 = vmatprep.subr.mxu0 0.0
  %5610 = vmatpush1.msra.mxu0 0.0
  %5611 = vmatprep.subr.mxu0 0.0
  %5612 = vmatpush1.msra.mxu0 0.0
  %5613 = vmatprep.subr.mxu0 0.0
  %5614 = vmatpush1.msra.mxu0 0.0
  %5615 = vmatprep.subr.mxu0 0.0
  %5616 = vmatpush1.msra.mxu0 0.0
  %5617 = vmatprep.subr.mxu0 0.0
  %5618 = vmatpush1.msra.mxu0 0.0
  %5619 = vmatprep.subr.mxu0 0.0
  %5620 = vmatpush1.msra.mxu0 0.0
  %5621 = vmatprep.subr.mxu0 0.0
  %5622 = vmatpush1.msra.mxu0 0.0
  %5623 = vmatprep.subr.mxu0 0.0
  %5624 = vmatpush1.msra.mxu0 0.0
  %5625 = vmatprep.subr.mxu0 0.0
  %5626 = vmatpush1.msra.mxu0 0.0
  %5627 = vmatprep.subr.mxu0 0.0
  %5628 = vmatpush1.msra.mxu0 0.0
  %5629 = vmatprep.subr.mxu0 0.0
  %5630 = vmatpush1.msra.mxu0 0.0
  %5631 = vmatprep.subr.mxu0 0.0
  %5632 = vmatpush1.msra.mxu0 0.0
  %5633 = vmatprep.subr.mxu0 0.0
  %5634 = vmatpush1.msra.mxu0 0.0
  %5635 = vmatprep.subr.mxu0 0.0
  %5636 = vmatpush1.msra.mxu0 0.0
  %5637 = vmatprep.subr.mxu0 0.0
  %5638 = vmatpush1.msra.mxu0 0.0
  %5639 = vmatprep.subr.mxu0 0.0
  %5640 = vmatpush1.msra.mxu0 0.0
  %5641 = vmatprep.subr.mxu0 0.0
  %5642 = vmatpush1.msra.mxu0 0.0
  %5643 = vmatprep.subr.mxu0 0.0
  %5644 = vmatpush1.msra.mxu0 0.0
  %5645 = vmatprep.subr.mxu0 0.0
  %5646 = vmatpush1.msra.mxu0 0.0
  %5647 = vmatprep.subr.mxu0 0.0
  %5648 = vmatpush1.msra.mxu0 0.0
  %5649 = vmatprep.subr.mxu0 0.0
  %5650 = vmatpush1.msra.mxu0 0.0
  %5651 = vmatprep.subr.mxu0 0.0
  %5652 = vmatpush1.msra.mxu0 0.0
  %5653 = vmatprep.subr.mxu0 0.0
  %5654 = vmatpush1.msra.mxu0 0.0
  %5655 = vmatprep.mubr.f32.mxu0 0.0
  %5656 = vmatmul.mubr.f32.gmra.mrb[0].mxu0 %v5410
  %v5657 = vpop.f32.mrb[0].mxu0
  %v5658 = vadd.f32 %v5573, %v5657
  %v5659 = vpop.f32.mrb[0].mxu0
  %5660 = vmatprep.mubr.f32.mxu0 0.0
  %5661 = vmatmul.mubr.f32.gmra.mrb[0].mxu0 %v5413
  %v5662 = vpop.f32.mrb[0].mxu0
  %v5663 = vadd.f32 %v5578, %v5662
  %v5664 = vpop.f32.mrb[0].mxu0
  %5665 = vmatprep.mubr.f32.mxu0 0.0
  %5666 = vmatmul.mubr.f32.gmra.mrb[0].mxu0 %v5416
  %v5667 = vpop.f32.mrb[0].mxu0
  %v5668 = vadd.f32 %v5583, %v5667
  %v5669 = vpop.f32.mrb[0].mxu0
  %5670 = vmatprep.mubr.f32.mxu0 0.0
  %5671 = vmatmul.mubr.f32.gmra.mrb[0].mxu0 %v5419
  %v5672 = vpop.f32.mrb[0].mxu0
  %v5673 = vadd.f32 %v5588, %v5672
  %v5674 = vpop.f32.mrb[0].mxu0
  %5675 = vdwg.mxu0
  %v5677 = vsel %vm705, %v4685, 0
  %v5680 = vsel %vm705, %v4690, 0
  %v5683 = vsel %vm705, %v4695, 0
  %5685 = vmatprep.subr.mxu0 0.0
  %5686 = vmatpush1.msra.mxu0 %v5658
  %5687 = vmatprep.subr.mxu0 0.0
  %5688 = vmatpush1.msra.mxu0 %v5663
  %5689 = vmatprep.subr.mxu0 0.0
  %5690 = vmatpush1.msra.mxu0 %v5668
  %5691 = vmatprep.subr.mxu0 0.0
  %5692 = vmatpush1.msra.mxu0 %v5673
  %5693 = vmatprep.subr.mxu0 0.0
  %5694 = vmatpush1.msra.mxu0 0.0
  %5695 = vmatprep.subr.mxu0 0.0
  %5696 = vmatpush1.msra.mxu0 0.0
  %5697 = vmatprep.subr.mxu0 0.0
  %5698 = vmatpush1.msra.mxu0 0.0
  %5699 = vmatprep.subr.mxu0 0.0
  %5700 = vmatpush1.msra.mxu0 0.0
  %5701 = vmatprep.subr.mxu0 0.0
  %5702 = vmatpush1.msra.mxu0 0.0
  %5703 = vmatprep.subr.mxu0 0.0
  %5704 = vmatpush1.msra.mxu0 0.0
  %5705 = vmatprep.subr.mxu0 0.0
  %5706 = vmatpush1.msra.mxu0 0.0
  %5707 = vmatprep.subr.mxu0 0.0
  %5708 = vmatpush1.msra.mxu0 0.0
  %5709 = vmatprep.subr.mxu0 0.0
  %5710 = vmatpush1.msra.mxu0 0.0
  %5711 = vmatprep.subr.mxu0 0.0
  %5712 = vmatpush1.msra.mxu0 0.0
  %5713 = vmatprep.subr.mxu0 0.0
  %5714 = vmatpush1.msra.mxu0 0.0
  %5715 = vmatprep.subr.mxu0 0.0
  %5716 = vmatpush1.msra.mxu0 0.0
  %5717 = vmatprep.subr.mxu0 0.0
  %5718 = vmatpush1.msra.mxu0 0.0
  %5719 = vmatprep.subr.mxu0 0.0
  %5720 = vmatpush1.msra.mxu0 0.0
  %5721 = vmatprep.subr.mxu0 0.0
  %5722 = vmatpush1.msra.mxu0 0.0
  %5723 = vmatprep.subr.mxu0 0.0
  %5724 = vmatpush1.msra.mxu0 0.0
  %5725 = vmatprep.subr.mxu0 0.0
  %5726 = vmatpush1.msra.mxu0 0.0
  %5727 = vmatprep.subr.mxu0 0.0
  %5728 = vmatpush1.msra.mxu0 0.0
  %5729 = vmatprep.subr.mxu0 0.0
  %5730 = vmatpush1.msra.mxu0 0.0
  %5731 = vmatprep.subr.mxu0 0.0
  %5732 = vmatpush1.msra.mxu0 0.0
  %5733 = vmatprep.subr.mxu0 0.0
  %5734 = vmatpush1.msra.mxu0 0.0
  %5735 = vmatprep.subr.mxu0 0.0
  %5736 = vmatpush1.msra.mxu0 0.0
  %5737 = vmatprep.subr.mxu0 0.0
  %5738 = vmatpush1.msra.mxu0 0.0
  %5739 = vmatprep.subr.mxu0 0.0
  %5740 = vmatpush1.msra.mxu0 0.0
  %5741 = vmatprep.subr.mxu0 0.0
  %5742 = vmatpush1.msra.mxu0 0.0
  %5743 = vmatprep.subr.mxu0 0.0
  %5744 = vmatpush1.msra.mxu0 0.0
  %5745 = vmatprep.subr.mxu0 0.0
  %5746 = vmatpush1.msra.mxu0 0.0
  %5747 = vmatprep.subr.mxu0 0.0
  %5748 = vmatpush1.msra.mxu0 0.0
  %5749 = vmatprep.mubr.f32.mxu0 0.0
  %5750 = vmatmul.mubr.f32.gmra.mrb[0].mxu0 %v5677
  %v5751 = vpop.f32.mrb[0].mxu0
  %v5752 = vadd.f32 0.0, %v5751
  %v5753 = vpop.f32.mrb[0].mxu0
  %5754 = vmatprep.mubr.f32.mxu0 0.0
  %5755 = vmatmul.mubr.f32.gmra.mrb[0].mxu0 %v5680
  %v5756 = vpop.f32.mrb[0].mxu0
  %v5757 = vadd.f32 0.0, %v5756
  %v5758 = vpop.f32.mrb[0].mxu0
  %5759 = vmatprep.mubr.f32.mxu0 0.0
  %5760 = vmatmul.mubr.f32.gmra.mrb[0].mxu0 %v5683
  %v5761 = vpop.f32.mrb[0].mxu0
  %v5762 = vadd.f32 0.0, %v5761
  %v5763 = vpop.f32.mrb[0].mxu0
  %5764 = vdwg.mxu0
  %v5765 = vmul.f32 %v5752, 0.24253562
  %v5766 = vmul.f32 %v5757, 0.24253562
  %v5767 = vmul.f32 %v5762, 0.24253562
  %v5768 = vsel %vm1607, %v5765, -inf
  %5769 = vmax.xlane.f32.xlu0 %v5768
  %v5770 = vpop.xlane.xlu0 %5769
  %v5771 = vsel %vm1607, %v5766, -inf
  %5772 = vmax.xlane.f32.xlu0 %v5771
  %v5773 = vpop.xlane.xlu0 %5772
  %v5774 = vsel %vm1614, %v5767, -inf
  %5775 = vmax.xlane.f32.xlu0 %v5774
  %v5776 = vpop.xlane.xlu0 %5775
  %v5777 = vsub.f32 %v5765, %v5770
  %v5778 = vsub.f32 %v5766, %v5773
  %v5779 = vsub.f32 %v5767, %v5776
  %v5780 = vmul.f32 %v5777, 1.442695
  %v5781 = vpow.pop %v5780
  %v5782 = vmul.f32 %v5778, 1.442695
  %v5783 = vpow.pop %v5782
  %v5784 = vmul.f32 %v5779, 1.442695
  %v5785 = vpow.pop %v5784
  %v5787 = vsel %vm1607, %v5781, 0
  %v5790 = vsel %vm1607, %v5783, 0
  %v5793 = vsel %vm1607, %v5785, 0
  %5795 = vmatprep.subr.mxu0 0.0
  %5796 = vmatpush1.msra.mxu0 %v211
  %5797 = vmatprep.subr.mxu0 0.0
  %5798 = vmatpush1.msra.mxu0 %v212
  %5799 = vmatprep.subr.mxu0 0.0
  %5800 = vmatpush1.msra.mxu0 %v213
  %5801 = vmatprep.subr.mxu0 0.0
  %5802 = vmatpush1.msra.mxu0 %v214
  %5803 = vmatprep.subr.mxu0 0.0
  %5804 = vmatpush1.msra.mxu0 %v215
  %5805 = vmatprep.subr.mxu0 0.0
  %5806 = vmatpush1.msra.mxu0 %v216
  %5807 = vmatprep.subr.mxu0 0.0
  %5808 = vmatpush1.msra.mxu0 %v217
  %5809 = vmatprep.subr.mxu0 0.0
  %5810 = vmatpush1.msra.mxu0 %v218
  %5811 = vmatprep.subr.mxu0 0.0
  %5812 = vmatpush1.msra.mxu0 %v1638
  %5813 = vmatprep.subr.mxu0 0.0
  %5814 = vmatpush1.msra.mxu0 0.0
  %5815 = vmatprep.subr.mxu0 0.0
  %5816 = vmatpush1.msra.mxu0 0.0
  %5817 = vmatprep.subr.mxu0 0.0
  %5818 = vmatpush1.msra.mxu0 0.0
  %5819 = vmatprep.subr.mxu0 0.0
  %5820 = vmatpush1.msra.mxu0 0.0
  %5821 = vmatprep.subr.mxu0 0.0
  %5822 = vmatpush1.msra.mxu0 0.0
  %5823 = vmatprep.subr.mxu0 0.0
  %5824 = vmatpush1.msra.mxu0 0.0
  %5825 = vmatprep.subr.mxu0 0.0
  %5826 = vmatpush1.msra.mxu0 0.0
  %5827 = vmatprep.subr.mxu0 0.0
  %5828 = vmatpush1.msra.mxu0 0.0
  %5829 = vmatprep.subr.mxu0 0.0
  %5830 = vmatpush1.msra.mxu0 0.0
  %5831 = vmatprep.subr.mxu0 0.0
  %5832 = vmatpush1.msra.mxu0 0.0
  %5833 = vmatprep.subr.mxu0 0.0
  %5834 = vmatpush1.msra.mxu0 0.0
  %5835 = vmatprep.subr.mxu0 0.0
  %5836 = vmatpush1.msra.mxu0 0.0
  %5837 = vmatprep.subr.mxu0 0.0
  %5838 = vmatpush1.msra.mxu0 0.0
  %5839 = vmatprep.subr.mxu0 0.0
  %5840 = vmatpush1.msra.mxu0 0.0
  %5841 = vmatprep.subr.mxu0 0.0
  %5842 = vmatpush1.msra.mxu0 0.0
  %5843 = vmatprep.subr.mxu0 0.0
  %5844 = vmatpush1.msra.mxu0 0.0
  %5845 = vmatprep.subr.mxu0 0.0
  %5846 = vmatpush1.msra.mxu0 0.0
  %5847 = vmatprep.subr.mxu0 0.0
  %5848 = vmatpush1.msra.mxu0 0.0
  %5849 = vmatprep.subr.mxu0 0.0
  %5850 = vmatpush1.msra.mxu0 0.0
  %5851 = vmatprep.subr.mxu0 0.0
  %5852 = vmatpush1.msra.mxu0 0.0
  %5853 = vmatprep.subr.mxu0 0.0
  %5854 = vmatpush1.msra.mxu0 0.0
  %5855 = vmatprep.subr.mxu0 0.0
  %5856 = vmatpush1.msra.mxu0 0.0
  %5857 = vmatprep.subr.mxu0 0.0
  %5858 = vmatpush1.msra.mxu0 0.0
  %5859 = vmatprep.mubr.f32.mxu0 0.0
  %5860 = vmatmul.mubr.f32.gmra.mrb[0].mxu0 %v5787
  %v5861 = vpop.f32.mrb[0].mxu0
  %v5862 = vadd.f32 0.0, %v5861
  %v5863 = vpop.f32.mrb[0].mxu0
  %5864 = vmatprep.mubr.f32.mxu0 0.0
  %5865 = vmatmul.mubr.f32.gmra.mrb[0].mxu0 %v5790
  %v5866 = vpop.f32.mrb[0].mxu0
  %v5867 = vadd.f32 0.0, %v5866
  %v5868 = vpop.f32.mrb[0].mxu0
  %5869 = vmatprep.mubr.f32.mxu0 0.0
  %5870 = vmatmul.mubr.f32.gmra.mrb[0].mxu0 %v5793
  %v5871 = vpop.f32.mrb[0].mxu0
  %v5872 = vadd.f32 0.0, %v5871
  %v5873 = vpop.f32.mrb[0].mxu0
  %5874 = vdwg.mxu0
  %v5875 = vrcp.pop %v5862
  %v5876 = vrcp.pop %v5867
  %v5877 = vrcp.pop %v5872
  %v5879 = vsel %vm1723, %v5875, 0
  %v5882 = vsel %vm1723, %v5876, 0
  %v5885 = vsel %vm1723, %v5877, 0
  %5887 = vmatprep.subr.mxu0 0.0
  %5888 = vmatpush1.msra.mxu0 %v1734
  %5889 = vmatprep.subr.mxu0 0.0
  %5890 = vmatpush1.msra.mxu0 0.0
  %5891 = vmatprep.subr.mxu0 0.0
  %5892 = vmatpush1.msra.mxu0 0.0
  %5893 = vmatprep.subr.mxu0 0.0
  %5894 = vmatpush1.msra.mxu0 0.0
  %5895 = vmatprep.subr.mxu0 0.0
  %5896 = vmatpush1.msra.mxu0 0.0
  %5897 = vmatprep.subr.mxu0 0.0
  %5898 = vmatpush1.msra.mxu0 0.0
  %5899 = vmatprep.subr.mxu0 0.0
  %5900 = vmatpush1.msra.mxu0 0.0
  %5901 = vmatprep.subr.mxu0 0.0
  %5902 = vmatpush1.msra.mxu0 0.0
  %5903 = vmatprep.subr.mxu0 0.0
  %5904 = vmatpush1.msra.mxu0 0.0
  %5905 = vmatprep.subr.mxu0 0.0
  %5906 = vmatpush1.msra.mxu0 0.0
  %5907 = vmatprep.subr.mxu0 0.0
  %5908 = vmatpush1.msra.mxu0 0.0
  %5909 = vmatprep.subr.mxu0 0.0
  %5910 = vmatpush1.msra.mxu0 0.0
  %5911 = vmatprep.subr.mxu0 0.0
  %5912 = vmatpush1.msra.mxu0 0.0
  %5913 = vmatprep.subr.mxu0 0.0
  %5914 = vmatpush1.msra.mxu0 0.0
  %5915 = vmatprep.subr.mxu0 0.0
  %5916 = vmatpush1.msra.mxu0 0.0
  %5917 = vmatprep.subr.mxu0 0.0
  %5918 = vmatpush1.msra.mxu0 0.0
  %5919 = vmatprep.subr.mxu0 0.0
  %5920 = vmatpush1.msra.mxu0 0.0
  %5921 = vmatprep.subr.mxu0 0.0
  %5922 = vmatpush1.msra.mxu0 0.0
  %5923 = vmatprep.subr.mxu0 0.0
  %5924 = vmatpush1.msra.mxu0 0.0
  %5925 = vmatprep.subr.mxu0 0.0
  %5926 = vmatpush1.msra.mxu0 0.0
  %5927 = vmatprep.subr.mxu0 0.0
  %5928 = vmatpush1.msra.mxu0 0.0
  %5929 = vmatprep.subr.mxu0 0.0
  %5930 = vmatpush1.msra.mxu0 0.0
  %5931 = vmatprep.subr.mxu0 0.0
  %5932 = vmatpush1.msra.mxu0 0.0
  %5933 = vmatprep.subr.mxu0 0.0
  %5934 = vmatpush1.msra.mxu0 0.0
  %5935 = vmatprep.subr.mxu0 0.0
  %5936 = vmatpush1.msra.mxu0 0.0
  %5937 = vmatprep.subr.mxu0 0.0
  %5938 = vmatpush1.msra.mxu0 0.0
  %5939 = vmatprep.subr.mxu0 0.0
  %5940 = vmatpush1.msra.mxu0 0.0
  %5941 = vmatprep.subr.mxu0 0.0
  %5942 = vmatpush1.msra.mxu0 0.0
  %5943 = vmatprep.subr.mxu0 0.0
  %5944 = vmatpush1.msra.mxu0 0.0
  %5945 = vmatprep.subr.mxu0 0.0
  %5946 = vmatpush1.msra.mxu0 0.0
  %5947 = vmatprep.subr.mxu0 0.0
  %5948 = vmatpush1.msra.mxu0 0.0
  %5949 = vmatprep.subr.mxu0 0.0
  %5950 = vmatpush1.msra.mxu0 0.0
  %5951 = vmatprep.mubr.f32.mxu0 0.0
  %5952 = vmatmul.mubr.f32.gmra.mrb[0].mxu0 %v5879
  %v5953 = vpop.f32.mrb[0].mxu0
  %v5954 = vadd.f32 0.0, %v5953
  %v5955 = vpop.f32.mrb[0].mxu0
  %5956 = vmatprep.mubr.f32.mxu0 0.0
  %5957 = vmatmul.mubr.f32.gmra.mrb[0].mxu0 %v5882
  %v5958 = vpop.f32.mrb[0].mxu0
  %v5959 = vadd.f32 0.0, %v5958
  %v5960 = vpop.f32.mrb[0].mxu0
  %5961 = vmatprep.mubr.f32.mxu0 0.0
  %5962 = vmatmul.mubr.f32.gmra.mrb[0].mxu0 %v5885
  %v5963 = vpop.f32.mrb[0].mxu0
  %v5964 = vadd.f32 0.0, %v5963
  %v5965 = vpop.f32.mrb[0].mxu0
  %5966 = vdwg.mxu0
  %v5967 = vmul.f32 %v5781, %v5954
  %v5968 = vmul.f32 %v5783, %v5959
  %v5969 = vmul.f32 %v5785, %v5964
  %v5971 = vsel %vm980, %v4869, 0
  %5973 = vmatprep.subr.mxu0 0.0
  %5974 = vmatpush1.msra.mxu0 %v4859
  %5975 = vmatprep.subr.mxu0 0.0
  %5976 = vmatpush1.msra.mxu0 %v4864
  %5977 = vmatprep.subr.mxu0 0.0
  %5978 = vmatpush1.msra.mxu0 %v5971
  %5979 = vmatprep.subr.mxu0 0.0
  %5980 = vmatpush1.msra.mxu0 0.0
  %5981 = vmatprep.subr.mxu0 0.0
  %5982 = vmatpush1.msra.mxu0 0.0
  %5983 = vmatprep.subr.mxu0 0.0
  %5984 = vmatpush1.msra.mxu0 0.0
  %5985 = vmatprep.subr.mxu0 0.0
  %5986 = vmatpush1.msra.mxu0 0.0
  %5987 = vmatprep.subr.mxu0 0.0
  %5988 = vmatpush1.msra.mxu0 0.0
  %5989 = vmatprep.subr.mxu0 0.0
  %5990 = vmatpush1.msra.mxu0 0.0
  %5991 = vmatprep.subr.mxu0 0.0
  %5992 = vmatpush1.msra.mxu0 0.0
  %5993 = vmatprep.subr.mxu0 0.0
  %5994 = vmatpush1.msra.mxu0 0.0
  %5995 = vmatprep.subr.mxu0 0.0
  %5996 = vmatpush1.msra.mxu0 0.0
  %5997 = vmatprep.subr.mxu0 0.0
  %5998 = vmatpush1.msra.mxu0 0.0
  %5999 = vmatprep.subr.mxu0 0.0
  %6000 = vmatpush1.msra.mxu0 0.0
  %6001 = vmatprep.subr.mxu0 0.0
  %6002 = vmatpush1.msra.mxu0 0.0
  %6003 = vmatprep.subr.mxu0 0.0
  %6004 = vmatpush1.msra.mxu0 0.0
  %6005 = vmatprep.subr.mxu0 0.0
  %6006 = vmatpush1.msra.mxu0 0.0
  %6007 = vmatprep.subr.mxu0 0.0
  %6008 = vmatpush1.msra.mxu0 0.0
  %6009 = vmatprep.subr.mxu0 0.0
  %6010 = vmatpush1.msra.mxu0 0.0
  %6011 = vmatprep.subr.mxu0 0.0
  %6012 = vmatpush1.msra.mxu0 0.0
  %6013 = vmatprep.subr.mxu0 0.0
  %6014 = vmatpush1.msra.mxu0 0.0
  %6015 = vmatprep.subr.mxu0 0.0
  %6016 = vmatpush1.msra.mxu0 0.0
  %6017 = vmatprep.subr.mxu0 0.0
  %6018 = vmatpush1.msra.mxu0 0.0
  %6019 = vmatprep.subr.mxu0 0.0
  %6020 = vmatpush1.msra.mxu0 0.0
  %6021 = vmatprep.subr.mxu0 0.0
  %6022 = vmatpush1.msra.mxu0 0.0
  %6023 = vmatprep.subr.mxu0 0.0
  %6024 = vmatpush1.msra.mxu0 0.0
  %6025 = vmatprep.subr.mxu0 0.0
  %6026 = vmatpush1.msra.mxu0 0.0
  %6027 = vmatprep.subr.mxu0 0.0
  %6028 = vmatpush1.msra.mxu0 0.0
  %6029 = vmatprep.subr.mxu0 0.0
  %6030 = vmatpush1.msra.mxu0 0.0
  %6031 = vmatprep.subr.mxu0 0.0
  %6032 = vmatpush1.msra.mxu0 0.0
  %6033 = vmatprep.subr.mxu0 0.0
  %6034 = vmatpush1.msra.mxu0 0.0
  %6035 = vmatprep.subr.mxu0 0.0
  %6036 = vmatpush1.msra.mxu0 0.0
  %6037 = vmatprep.mubr.f32.mxu0 0.0
  %6038 = vmatmul.mubr.f32.gmra.mrb[0].mxu0 %v1820
  %v6039 = vpop.f32.mrb[0].mxu0
  %v6040 = vadd.f32 0.0, %v6039
  %v6041 = vpop.f32.mrb[0].mxu0
  %6042 = vmatprep.mubr.f32.mxu0 0.0
  %6043 = vmatmul.mubr.f32.gmra.mrb[0].mxu0 %v1823
  %v6044 = vpop.f32.mrb[0].mxu0
  %v6045 = vadd.f32 0.0, %v6044
  %v6046 = vpop.f32.mrb[0].mxu0
  %6047 = vmatprep.mubr.f32.mxu0 0.0
  %6048 = vmatmul.mubr.f32.gmra.mrb[0].mxu0 %v1826
  %v6049 = vpop.f32.mrb[0].mxu0
  %v6050 = vadd.f32 0.0, %v6049
  %v6051 = vpop.f32.mrb[0].mxu0
  %6052 = vmatprep.mubr.f32.mxu0 0.0
  %6053 = vmatmul.mubr.f32.gmra.mrb[0].mxu0 %v1829
  %v6054 = vpop.f32.mrb[0].mxu0
  %v6055 = vadd.f32 0.0, %v6054
  %v6056 = vpop.f32.mrb[0].mxu0
  %6057 = vmatprep.mubr.f32.mxu0 0.0
  %6058 = vmatmul.mubr.f32.gmra.mrb[0].mxu0 %v1832
  %v6059 = vpop.f32.mrb[0].mxu0
  %v6060 = vadd.f32 0.0, %v6059
  %v6061 = vpop.f32.mrb[0].mxu0
  %6062 = vmatprep.mubr.f32.mxu0 0.0
  %6063 = vmatmul.mubr.f32.gmra.mrb[0].mxu0 %v1835
  %v6064 = vpop.f32.mrb[0].mxu0
  %v6065 = vadd.f32 0.0, %v6064
  %v6066 = vpop.f32.mrb[0].mxu0
  %6067 = vmatprep.mubr.f32.mxu0 0.0
  %6068 = vmatmul.mubr.f32.gmra.mrb[0].mxu0 %v1838
  %v6069 = vpop.f32.mrb[0].mxu0
  %v6070 = vadd.f32 0.0, %v6069
  %v6071 = vpop.f32.mrb[0].mxu0
  %6072 = vmatprep.mubr.f32.mxu0 0.0
  %6073 = vmatmul.mubr.f32.gmra.mrb[0].mxu0 %v1841
  %v6074 = vpop.f32.mrb[0].mxu0
  %v6075 = vadd.f32 0.0, %v6074
  %v6076 = vpop.f32.mrb[0].mxu0
  %6077 = vmatprep.mubr.f32.mxu0 0.0
  %6078 = vmatmul.mubr.f32.gmra.mrb[0].mxu0 %v1844
  %v6079 = vpop.f32.mrb[0].mxu0
  %v6080 = vadd.f32 0.0, %v6079
  %v6081 = vpop.f32.mrb[0].mxu0
  %6082 = vdwg.mxu0
  %v6083 = vmul.f32 %v6040, %v230
  %v6084 = vmul.f32 %v6045, %v231
  %v6085 = vmul.f32 %v6050, %v232
  %v6086 = vmul.f32 %v6055, %v233
  %v6087 = vmul.f32 %v6060, %v234
  %v6088 = vmul.f32 %v6065, %v235
  %v6089 = vmul.f32 %v6070, %v236
  %v6090 = vmul.f32 %v6075, %v237
  %v6091 = vmul.f32 %v6080, %v238
  %v6093 = vsel %vm1607, %v5967, 0
  %v6096 = vsel %vm1607, %v5968, 0
  %v6099 = vsel %vm1607, %v5969, 0
  %v6102 = vsel %vm1636, %v6091, 0
  %6104 = vmatprep.subr.mxu0 0.0
  %6105 = vmatpush1.msra.mxu0 %v6083
  %6106 = vmatprep.subr.mxu0 0.0
  %6107 = vmatpush1.msra.mxu0 %v6084
  %6108 = vmatprep.subr.mxu0 0.0
  %6109 = vmatpush1.msra.mxu0 %v6085
  %6110 = vmatprep.subr.mxu0 0.0
  %6111 = vmatpush1.msra.mxu0 %v6086
  %6112 = vmatprep.subr.mxu0 0.0
  %6113 = vmatpush1.msra.mxu0 %v6087
  %6114 = vmatprep.subr.mxu0 0.0
  %6115 = vmatpush1.msra.mxu0 %v6088
  %6116 = vmatprep.subr.mxu0 0.0
  %6117 = vmatpush1.msra.mxu0 %v6089
  %6118 = vmatprep.subr.mxu0 0.0
  %6119 = vmatpush1.msra.mxu0 %v6090
  %6120 = vmatprep.subr.mxu0 0.0
  %6121 = vmatpush1.msra.mxu0 %v6102
  %6122 = vmatprep.subr.mxu0 0.0
  %6123 = vmatpush1.msra.mxu0 0.0
  %6124 = vmatprep.subr.mxu0 0.0
  %6125 = vmatpush1.msra.mxu0 0.0
  %6126 = vmatprep.subr.mxu0 0.0
  %6127 = vmatpush1.msra.mxu0 0.0
  %6128 = vmatprep.subr.mxu0 0.0
  %6129 = vmatpush1.msra.mxu0 0.0
  %6130 = vmatprep.subr.mxu0 0.0
  %6131 = vmatpush1.msra.mxu0 0.0
  %6132 = vmatprep.subr.mxu0 0.0
  %6133 = vmatpush1.msra.mxu0 0.0
  %6134 = vmatprep.subr.mxu0 0.0
  %6135 = vmatpush1.msra.mxu0 0.0
  %6136 = vmatprep.subr.mxu0 0.0
  %6137 = vmatpush1.msra.mxu0 0.0
  %6138 = vmatprep.subr.mxu0 0.0
  %6139 = vmatpush1.msra.mxu0 0.0
  %6140 = vmatprep.subr.mxu0 0.0
  %6141 = vmatpush1.msra.mxu0 0.0
  %6142 = vmatprep.subr.mxu0 0.0
  %6143 = vmatpush1.msra.mxu0 0.0
  %6144 = vmatprep.subr.mxu0 0.0
  %6145 = vmatpush1.msra.mxu0 0.0
  %6146 = vmatprep.subr.mxu0 0.0
  %6147 = vmatpush1.msra.mxu0 0.0
  %6148 = vmatprep.subr.mxu0 0.0
  %6149 = vmatpush1.msra.mxu0 0.0
  %6150 = vmatprep.subr.mxu0 0.0
  %6151 = vmatpush1.msra.mxu0 0.0
  %6152 = vmatprep.subr.mxu0 0.0
  %6153 = vmatpush1.msra.mxu0 0.0
  %6154 = vmatprep.subr.mxu0 0.0
  %6155 = vmatpush1.msra.mxu0 0.0
  %6156 = vmatprep.subr.mxu0 0.0
  %6157 = vmatpush1.msra.mxu0 0.0
  %6158 = vmatprep.subr.mxu0 0.0
  %6159 = vmatpush1.msra.mxu0 0.0
  %6160 = vmatprep.subr.mxu0 0.0
  %6161 = vmatpush1.msra.mxu0 0.0
  %6162 = vmatprep.subr.mxu0 0.0
  %6163 = vmatpush1.msra.mxu0 0.0
  %6164 = vmatprep.subr.mxu0 0.0
  %6165 = vmatpush1.msra.mxu0 0.0
  %6166 = vmatprep.subr.mxu0 0.0
  %6167 = vmatpush1.msra.mxu0 0.0
  %6168 = vmatprep.mubr.f32.mxu0 0.0
  %6169 = vmatmul.mubr.f32.gmra.mrb[0].mxu0 %v6093
  %v6170 = vpop.f32.mrb[0].mxu0
  %v6171 = vadd.f32 0.0, %v6170
  %v6172 = vpop.f32.mrb[0].mxu0
  %6173 = vmatprep.mubr.f32.mxu0 0.0
  %6174 = vmatmul.mubr.f32.gmra.mrb[0].mxu0 %v6096
  %v6175 = vpop.f32.mrb[0].mxu0
  %v6176 = vadd.f32 0.0, %v6175
  %v6177 = vpop.f32.mrb[0].mxu0
  %6178 = vmatprep.mubr.f32.mxu0 0.0
  %6179 = vmatmul.mubr.f32.gmra.mrb[0].mxu0 %v6099
  %v6180 = vpop.f32.mrb[0].mxu0
  %v6181 = vadd.f32 0.0, %v6180
  %v6182 = vpop.f32.mrb[0].mxu0
  %6183 = vdwg.mxu0
  %6184 = vmatprep.subr.mxu0 0.0
  %6185 = vmatpush1.msra.mxu0 %v4514
  %6186 = vmatprep.subr.mxu0 0.0
  %6187 = vmatpush1.msra.mxu0 %v4515
  %6188 = vmatprep.subr.mxu0 0.0
  %6189 = vmatpush1.msra.mxu0 %v4516
  %6190 = vmatprep.subr.mxu0 0.0
  %6191 = vmatpush1.msra.mxu0 %v4517
  %6192 = vmatprep.subr.mxu0 0.0
  %6193 = vmatpush1.msra.mxu0 %v4520
  %6194 = vmatprep.subr.mxu0 0.0
  %6195 = vmatpush1.msra.mxu0 0.0
  %6196 = vmatprep.subr.mxu0 0.0
  %6197 = vmatpush1.msra.mxu0 0.0
  %6198 = vmatprep.subr.mxu0 0.0
  %6199 = vmatpush1.msra.mxu0 0.0
  %6200 = vmatprep.subr.mxu0 0.0
  %6201 = vmatpush1.msra.mxu0 0.0
  %6202 = vmatprep.subr.mxu0 0.0
  %6203 = vmatpush1.msra.mxu0 0.0
  %6204 = vmatprep.subr.mxu0 0.0
  %6205 = vmatpush1.msra.mxu0 0.0
  %6206 = vmatprep.subr.mxu0 0.0
  %6207 = vmatpush1.msra.mxu0 0.0
  %6208 = vmatprep.subr.mxu0 0.0
  %6209 = vmatpush1.msra.mxu0 0.0
  %6210 = vmatprep.subr.mxu0 0.0
  %6211 = vmatpush1.msra.mxu0 0.0
  %6212 = vmatprep.subr.mxu0 0.0
  %6213 = vmatpush1.msra.mxu0 0.0
  %6214 = vmatprep.subr.mxu0 0.0
  %6215 = vmatpush1.msra.mxu0 0.0
  %6216 = vmatprep.subr.mxu0 0.0
  %6217 = vmatpush1.msra.mxu0 0.0
  %6218 = vmatprep.subr.mxu0 0.0
  %6219 = vmatpush1.msra.mxu0 0.0
  %6220 = vmatprep.subr.mxu0 0.0
  %6221 = vmatpush1.msra.mxu0 0.0
  %6222 = vmatprep.subr.mxu0 0.0
  %6223 = vmatpush1.msra.mxu0 0.0
  %6224 = vmatprep.subr.mxu0 0.0
  %6225 = vmatpush1.msra.mxu0 0.0
  %6226 = vmatprep.subr.mxu0 0.0
  %6227 = vmatpush1.msra.mxu0 0.0
  %6228 = vmatprep.subr.mxu0 0.0
  %6229 = vmatpush1.msra.mxu0 0.0
  %6230 = vmatprep.subr.mxu0 0.0
  %6231 = vmatpush1.msra.mxu0 0.0
  %6232 = vmatprep.subr.mxu0 0.0
  %6233 = vmatpush1.msra.mxu0 0.0
  %6234 = vmatprep.subr.mxu0 0.0
  %6235 = vmatpush1.msra.mxu0 0.0
  %6236 = vmatprep.subr.mxu0 0.0
  %6237 = vmatpush1.msra.mxu0 0.0
  %6238 = vmatprep.subr.mxu0 0.0
  %6239 = vmatpush1.msra.mxu0 0.0
  %6240 = vmatprep.subr.mxu0 0.0
  %6241 = vmatpush1.msra.mxu0 0.0
  %6242 = vmatprep.subr.mxu0 0.0
  %6243 = vmatpush1.msra.mxu0 0.0
  %6244 = vmatprep.subr.mxu0 0.0
  %6245 = vmatpush1.msra.mxu0 0.0
  %6246 = vmatprep.subr.mxu0 0.0
  %6247 = vmatpush1.msra.mxu0 0.0
  %6248 = vmatprep.mubr.f32.mxu0 0.0
  %6249 = vmatmul.mubr.f32.gmra.mrb[0].mxu0 %v2070
  %v6250 = vpop.f32.mrb[0].mxu0
  %v6251 = vadd.f32 0.0, %v6250
  %v6252 = vpop.f32.mrb[0].mxu0
  %6253 = vmatprep.mubr.f32.mxu0 0.0
  %6254 = vmatmul.mubr.f32.gmra.mrb[0].mxu0 %v2073
  %v6255 = vpop.f32.mrb[0].mxu0
  %v6256 = vadd.f32 0.0, %v6255
  %v6257 = vpop.f32.mrb[0].mxu0
  %6258 = vmatprep.mubr.f32.mxu0 0.0
  %6259 = vmatmul.mubr.f32.gmra.mrb[0].mxu0 %v2076
  %v6260 = vpop.f32.mrb[0].mxu0
  %v6261 = vadd.f32 0.0, %v6260
  %v6262 = vpop.f32.mrb[0].mxu0
  %6263 = vdwg.mxu0
  %v6265 = vsel %vm241, %v6251, 0
  %v6268 = vsel %vm241, %v6256, 0
  %v6271 = vsel %vm241, %v6261, 0
  %6273 = vmatprep.subr.mxu0 0.0
  %6274 = vmatpush1.msra.mxu0 %v4603
  %6275 = vmatprep.subr.mxu0 0.0
  %6276 = vmatpush1.msra.mxu0 %v4604
  %6277 = vmatprep.subr.mxu0 0.0
  %6278 = vmatpush1.msra.mxu0 %v4605
  %6279 = vmatprep.subr.mxu0 0.0
  %6280 = vmatpush1.msra.mxu0 %v4606
  %6281 = vmatprep.subr.mxu0 0.0
  %6282 = vmatpush1.msra.mxu0 %v4607
  %6283 = vmatprep.subr.mxu0 0.0
  %6284 = vmatpush1.msra.mxu0 %v4608
  %6285 = vmatprep.subr.mxu0 0.0
  %6286 = vmatpush1.msra.mxu0 0.0
  %6287 = vmatprep.subr.mxu0 0.0
  %6288 = vmatpush1.msra.mxu0 0.0
  %6289 = vmatprep.subr.mxu0 0.0
  %6290 = vmatpush1.msra.mxu0 0.0
  %6291 = vmatprep.subr.mxu0 0.0
  %6292 = vmatpush1.msra.mxu0 0.0
  %6293 = vmatprep.subr.mxu0 0.0
  %6294 = vmatpush1.msra.mxu0 0.0
  %6295 = vmatprep.subr.mxu0 0.0
  %6296 = vmatpush1.msra.mxu0 0.0
  %6297 = vmatprep.subr.mxu0 0.0
  %6298 = vmatpush1.msra.mxu0 0.0
  %6299 = vmatprep.subr.mxu0 0.0
  %6300 = vmatpush1.msra.mxu0 0.0
  %6301 = vmatprep.subr.mxu0 0.0
  %6302 = vmatpush1.msra.mxu0 0.0
  %6303 = vmatprep.subr.mxu0 0.0
  %6304 = vmatpush1.msra.mxu0 0.0
  %6305 = vmatprep.subr.mxu0 0.0
  %6306 = vmatpush1.msra.mxu0 0.0
  %6307 = vmatprep.subr.mxu0 0.0
  %6308 = vmatpush1.msra.mxu0 0.0
  %6309 = vmatprep.subr.mxu0 0.0
  %6310 = vmatpush1.msra.mxu0 0.0
  %6311 = vmatprep.subr.mxu0 0.0
  %6312 = vmatpush1.msra.mxu0 0.0
  %6313 = vmatprep.subr.mxu0 0.0
  %6314 = vmatpush1.msra.mxu0 0.0
  %6315 = vmatprep.subr.mxu0 0.0
  %6316 = vmatpush1.msra.mxu0 0.0
  %6317 = vmatprep.subr.mxu0 0.0
  %6318 = vmatpush1.msra.mxu0 0.0
  %6319 = vmatprep.subr.mxu0 0.0
  %6320 = vmatpush1.msra.mxu0 0.0
  %6321 = vmatprep.subr.mxu0 0.0
  %6322 = vmatpush1.msra.mxu0 0.0
  %6323 = vmatprep.subr.mxu0 0.0
  %6324 = vmatpush1.msra.mxu0 0.0
  %6325 = vmatprep.subr.mxu0 0.0
  %6326 = vmatpush1.msra.mxu0 0.0
  %6327 = vmatprep.subr.mxu0 0.0
  %6328 = vmatpush1.msra.mxu0 0.0
  %6329 = vmatprep.subr.mxu0 0.0
  %6330 = vmatpush1.msra.mxu0 0.0
  %6331 = vmatprep.subr.mxu0 0.0
  %6332 = vmatpush1.msra.mxu0 0.0
  %6333 = vmatprep.subr.mxu0 0.0
  %6334 = vmatpush1.msra.mxu0 0.0
  %6335 = vmatprep.subr.mxu0 0.0
  %6336 = vmatpush1.msra.mxu0 0.0
  %6337 = vmatprep.mubr.f32.mxu0 0.0
  %6338 = vmatmul.mubr.f32.gmra.mrb[0].mxu0 %v6265
  %v6339 = vpop.f32.mrb[0].mxu0
  %v6340 = vadd.f32 0.0, %v6339
  %v6341 = vpop.f32.mrb[0].mxu0
  %6342 = vmatprep.mubr.f32.mxu0 0.0
  %6343 = vmatmul.mubr.f32.gmra.mrb[0].mxu0 %v6268
  %v6344 = vpop.f32.mrb[0].mxu0
  %v6345 = vadd.f32 0.0, %v6344
  %v6346 = vpop.f32.mrb[0].mxu0
  %6347 = vmatprep.mubr.f32.mxu0 0.0
  %6348 = vmatmul.mubr.f32.gmra.mrb[0].mxu0 %v6271
  %v6349 = vpop.f32.mrb[0].mxu0
  %v6350 = vadd.f32 0.0, %v6349
  %v6351 = vpop.f32.mrb[0].mxu0
  %6352 = vdwg.mxu0
  %6353 = vmatprep.subr.mxu0 0.0
  %6354 = vmatpush1.msra.mxu0 %v4699
  %6355 = vmatprep.subr.mxu0 0.0
  %6356 = vmatpush1.msra.mxu0 %v4700
  %6357 = vmatprep.subr.mxu0 0.0
  %6358 = vmatpush1.msra.mxu0 %v4701
  %6359 = vmatprep.subr.mxu0 0.0
  %6360 = vmatpush1.msra.mxu0 %v4702
  %6361 = vmatprep.subr.mxu0 0.0
  %6362 = vmatpush1.msra.mxu0 %v4703
  %6363 = vmatprep.subr.mxu0 0.0
  %6364 = vmatpush1.msra.mxu0 %v4704
  %6365 = vmatprep.subr.mxu0 0.0
  %6366 = vmatpush1.msra.mxu0 0.0
  %6367 = vmatprep.subr.mxu0 0.0
  %6368 = vmatpush1.msra.mxu0 0.0
  %6369 = vmatprep.subr.mxu0 0.0
  %6370 = vmatpush1.msra.mxu0 0.0
  %6371 = vmatprep.subr.mxu0 0.0
  %6372 = vmatpush1.msra.mxu0 0.0
  %6373 = vmatprep.subr.mxu0 0.0
  %6374 = vmatpush1.msra.mxu0 0.0
  %6375 = vmatprep.subr.mxu0 0.0
  %6376 = vmatpush1.msra.mxu0 0.0
  %6377 = vmatprep.subr.mxu0 0.0
  %6378 = vmatpush1.msra.mxu0 0.0
  %6379 = vmatprep.subr.mxu0 0.0
  %6380 = vmatpush1.msra.mxu0 0.0
  %6381 = vmatprep.subr.mxu0 0.0
  %6382 = vmatpush1.msra.mxu0 0.0
  %6383 = vmatprep.subr.mxu0 0.0
  %6384 = vmatpush1.msra.mxu0 0.0
  %6385 = vmatprep.subr.mxu0 0.0
  %6386 = vmatpush1.msra.mxu0 0.0
  %6387 = vmatprep.subr.mxu0 0.0
  %6388 = vmatpush1.msra.mxu0 0.0
  %6389 = vmatprep.subr.mxu0 0.0
  %6390 = vmatpush1.msra.mxu0 0.0
  %6391 = vmatprep.subr.mxu0 0.0
  %6392 = vmatpush1.msra.mxu0 0.0
  %6393 = vmatprep.subr.mxu0 0.0
  %6394 = vmatpush1.msra.mxu0 0.0
  %6395 = vmatprep.subr.mxu0 0.0
  %6396 = vmatpush1.msra.mxu0 0.0
  %6397 = vmatprep.subr.mxu0 0.0
  %6398 = vmatpush1.msra.mxu0 0.0
  %6399 = vmatprep.subr.mxu0 0.0
  %6400 = vmatpush1.msra.mxu0 0.0
  %6401 = vmatprep.subr.mxu0 0.0
  %6402 = vmatpush1.msra.mxu0 0.0
  %6403 = vmatprep.subr.mxu0 0.0
  %6404 = vmatpush1.msra.mxu0 0.0
  %6405 = vmatprep.subr.mxu0 0.0
  %6406 = vmatpush1.msra.mxu0 0.0
  %6407 = vmatprep.subr.mxu0 0.0
  %6408 = vmatpush1.msra.mxu0 0.0
  %6409 = vmatprep.subr.mxu0 0.0
  %6410 = vmatpush1.msra.mxu0 0.0
  %6411 = vmatprep.subr.mxu0 0.0
  %6412 = vmatpush1.msra.mxu0 0.0
  %6413 = vmatprep.subr.mxu0 0.0
  %6414 = vmatpush1.msra.mxu0 0.0
  %6415 = vmatprep.subr.mxu0 0.0
  %6416 = vmatpush1.msra.mxu0 0.0
  %6417 = vmatprep.mubr.f32.mxu0 0.0
  %6418 = vmatmul.mubr.f32.gmra.mrb[0].mxu0 %v6265
  %v6419 = vpop.f32.mrb[0].mxu0
  %v6420 = vadd.f32 0.0, %v6419
  %v6421 = vpop.f32.mrb[0].mxu0
  %6422 = vmatprep.mubr.f32.mxu0 0.0
  %6423 = vmatmul.mubr.f32.gmra.mrb[0].mxu0 %v6268
  %v6424 = vpop.f32.mrb[0].mxu0
  %v6425 = vadd.f32 0.0, %v6424
  %v6426 = vpop.f32.mrb[0].mxu0
  %6427 = vmatprep.mubr.f32.mxu0 0.0
  %6428 = vmatmul.mubr.f32.gmra.mrb[0].mxu0 %v6271
  %v6429 = vpop.f32.mrb[0].mxu0
  %v6430 = vadd.f32 0.0, %v6429
  %v6431 = vpop.f32.mrb[0].mxu0
  %6432 = vdwg.mxu0
  %6433 = vmatprep.subr.mxu0 0.0
  %6434 = vmatpush1.msra.mxu0 %v4786
  %6435 = vmatprep.subr.mxu0 0.0
  %6436 = vmatpush1.msra.mxu0 %v4787
  %6437 = vmatprep.subr.mxu0 0.0
  %6438 = vmatpush1.msra.mxu0 %v4788
  %6439 = vmatprep.subr.mxu0 0.0
  %6440 = vmatpush1.msra.mxu0 %v4789
  %6441 = vmatprep.subr.mxu0 0.0
  %6442 = vmatpush1.msra.mxu0 %v4790
  %6443 = vmatprep.subr.mxu0 0.0
  %6444 = vmatpush1.msra.mxu0 %v4791
  %6445 = vmatprep.subr.mxu0 0.0
  %6446 = vmatpush1.msra.mxu0 0.0
  %6447 = vmatprep.subr.mxu0 0.0
  %6448 = vmatpush1.msra.mxu0 0.0
  %6449 = vmatprep.subr.mxu0 0.0
  %6450 = vmatpush1.msra.mxu0 0.0
  %6451 = vmatprep.subr.mxu0 0.0
  %6452 = vmatpush1.msra.mxu0 0.0
  %6453 = vmatprep.subr.mxu0 0.0
  %6454 = vmatpush1.msra.mxu0 0.0
  %6455 = vmatprep.subr.mxu0 0.0
  %6456 = vmatpush1.msra.mxu0 0.0
  %6457 = vmatprep.subr.mxu0 0.0
  %6458 = vmatpush1.msra.mxu0 0.0
  %6459 = vmatprep.subr.mxu0 0.0
  %6460 = vmatpush1.msra.mxu0 0.0
  %6461 = vmatprep.subr.mxu0 0.0
  %6462 = vmatpush1.msra.mxu0 0.0
  %6463 = vmatprep.subr.mxu0 0.0
  %6464 = vmatpush1.msra.mxu0 0.0
  %6465 = vmatprep.subr.mxu0 0.0
  %6466 = vmatpush1.msra.mxu0 0.0
  %6467 = vmatprep.subr.mxu0 0.0
  %6468 = vmatpush1.msra.mxu0 0.0
  %6469 = vmatprep.subr.mxu0 0.0
  %6470 = vmatpush1.msra.mxu0 0.0
  %6471 = vmatprep.subr.mxu0 0.0
  %6472 = vmatpush1.msra.mxu0 0.0
  %6473 = vmatprep.subr.mxu0 0.0
  %6474 = vmatpush1.msra.mxu0 0.0
  %6475 = vmatprep.subr.mxu0 0.0
  %6476 = vmatpush1.msra.mxu0 0.0
  %6477 = vmatprep.subr.mxu0 0.0
  %6478 = vmatpush1.msra.mxu0 0.0
  %6479 = vmatprep.subr.mxu0 0.0
  %6480 = vmatpush1.msra.mxu0 0.0
  %6481 = vmatprep.subr.mxu0 0.0
  %6482 = vmatpush1.msra.mxu0 0.0
  %6483 = vmatprep.subr.mxu0 0.0
  %6484 = vmatpush1.msra.mxu0 0.0
  %6485 = vmatprep.subr.mxu0 0.0
  %6486 = vmatpush1.msra.mxu0 0.0
  %6487 = vmatprep.subr.mxu0 0.0
  %6488 = vmatpush1.msra.mxu0 0.0
  %6489 = vmatprep.subr.mxu0 0.0
  %6490 = vmatpush1.msra.mxu0 0.0
  %6491 = vmatprep.subr.mxu0 0.0
  %6492 = vmatpush1.msra.mxu0 0.0
  %6493 = vmatprep.subr.mxu0 0.0
  %6494 = vmatpush1.msra.mxu0 0.0
  %6495 = vmatprep.subr.mxu0 0.0
  %6496 = vmatpush1.msra.mxu0 0.0
  %6497 = vmatprep.mubr.f32.mxu0 0.0
  %6498 = vmatmul.mubr.f32.gmra.mrb[0].mxu0 %v6265
  %v6499 = vpop.f32.mrb[0].mxu0
  %v6500 = vadd.f32 0.0, %v6499
  %v6501 = vpop.f32.mrb[0].mxu0
  %6502 = vmatprep.mubr.f32.mxu0 0.0
  %6503 = vmatmul.mubr.f32.gmra.mrb[0].mxu0 %v6268
  %v6504 = vpop.f32.mrb[0].mxu0
  %v6505 = vadd.f32 0.0, %v6504
  %v6506 = vpop.f32.mrb[0].mxu0
  %6507 = vmatprep.mubr.f32.mxu0 0.0
  %6508 = vmatmul.mubr.f32.gmra.mrb[0].mxu0 %v6271
  %v6509 = vpop.f32.mrb[0].mxu0
  %v6510 = vadd.f32 0.0, %v6509
  %v6511 = vpop.f32.mrb[0].mxu0
  %6512 = vdwg.mxu0
  %v6514 = vsel %vm705, %v6420, 0
  %v6517 = vsel %vm705, %v6425, 0
  %v6520 = vsel %vm705, %v6430, 0
  %6522 = vmatprep.subr.mxu0 %v89
  %6523 = vmatpush1.msra.mxu0 %v88
  %6524 = vmatprep.subr.mxu0 %v94
  %6525 = vmatpush1.msra.mxu0 %v93
  %6526 = vmatprep.subr.mxu0 %v99
  %6527 = vmatpush1.msra.mxu0 %v98
  %6528 = vmatprep.subr.mxu0 %v104
  %6529 = vmatpush1.msra.mxu0 %v103
  %6530 = vmatprep.subr.mxu0 0.0
  %6531 = vmatpush1.msra.mxu0 0.0
  %6532 = vmatprep.subr.mxu0 0.0
  %6533 = vmatpush1.msra.mxu0 0.0
  %6534 = vmatprep.subr.mxu0 0.0
  %6535 = vmatpush1.msra.mxu0 0.0
  %6536 = vmatprep.subr.mxu0 0.0
  %6537 = vmatpush1.msra.mxu0 0.0
  %6538 = vmatprep.subr.mxu0 0.0
  %6539 = vmatpush1.msra.mxu0 0.0
  %6540 = vmatprep.subr.mxu0 0.0
  %6541 = vmatpush1.msra.mxu0 0.0
  %6542 = vmatprep.subr.mxu0 0.0
  %6543 = vmatpush1.msra.mxu0 0.0
  %6544 = vmatprep.subr.mxu0 0.0
  %6545 = vmatpush1.msra.mxu0 0.0
  %6546 = vmatprep.subr.mxu0 0.0
  %6547 = vmatpush1.msra.mxu0 0.0
  %6548 = vmatprep.subr.mxu0 0.0
  %6549 = vmatpush1.msra.mxu0 0.0
  %6550 = vmatprep.subr.mxu0 0.0
  %6551 = vmatpush1.msra.mxu0 0.0
  %6552 = vmatprep.subr.mxu0 0.0
  %6553 = vmatpush1.msra.mxu0 0.0
  %6554 = vmatprep.subr.mxu0 0.0
  %6555 = vmatpush1.msra.mxu0 0.0
  %6556 = vmatprep.subr.mxu0 0.0
  %6557 = vmatpush1.msra.mxu0 0.0
  %6558 = vmatprep.subr.mxu0 0.0
  %6559 = vmatpush1.msra.mxu0 0.0
  %6560 = vmatprep.subr.mxu0 0.0
  %6561 = vmatpush1.msra.mxu0 0.0
  %6562 = vmatprep.subr.mxu0 0.0
  %6563 = vmatpush1.msra.mxu0 0.0
  %6564 = vmatprep.subr.mxu0 0.0
  %6565 = vmatpush1.msra.mxu0 0.0
  %6566 = vmatprep.subr.mxu0 0.0
  %6567 = vmatpush1.msra.mxu0 0.0
  %6568 = vmatprep.subr.mxu0 0.0
  %6569 = vmatpush1.msra.mxu0 0.0
  %6570 = vmatprep.subr.mxu0 0.0
  %6571 = vmatpush1.msra.mxu0 0.0
  %6572 = vmatprep.subr.mxu0 0.0
  %6573 = vmatpush1.msra.mxu0 0.0
  %6574 = vmatprep.subr.mxu0 0.0
  %6575 = vmatpush1.msra.mxu0 0.0
  %6576 = vmatprep.subr.mxu0 0.0
  %6577 = vmatpush1.msra.mxu0 0.0
  %6578 = vmatprep.subr.mxu0 0.0
  %6579 = vmatpush1.msra.mxu0 0.0
  %6580 = vmatprep.subr.mxu0 0.0
  %6581 = vmatpush1.msra.mxu0 0.0
  %6582 = vmatprep.subr.mxu0 0.0
  %6583 = vmatpush1.msra.mxu0 0.0
  %6584 = vmatprep.subr.mxu0 0.0
  %6585 = vmatpush1.msra.mxu0 0.0
  %6586 = vmatprep.mubr.f32.mxu0 0.0
  %6587 = vmatmul.mubr.f32.gmra.mrb[0].mxu0 %v6514
  %v6588 = vpop.f32.mrb[0].mxu0
  %v6589 = vadd.f32 0.0, %v6588
  %v6590 = vpop.f32.mrb[0].mxu0
  %v6591 = vadd.f32 0.0, %v6590
  %6592 = vmatprep.mubr.f32.mxu0 0.0
  %6593 = vmatmul.mubr.f32.gmra.mrb[0].mxu0 %v6517
  %v6594 = vpop.f32.mrb[0].mxu0
  %v6595 = vadd.f32 0.0, %v6594
  %v6596 = vpop.f32.mrb[0].mxu0
  %v6597 = vadd.f32 0.0, %v6596
  %6598 = vmatprep.mubr.f32.mxu0 0.0
  %6599 = vmatmul.mubr.f32.gmra.mrb[0].mxu0 %v6520
  %v6600 = vpop.f32.mrb[0].mxu0
  %v6601 = vadd.f32 0.0, %v6600
  %v6602 = vpop.f32.mrb[0].mxu0
  %v6603 = vadd.f32 0.0, %v6602
  %6604 = vdwg.mxu0
  %6605 = vmatprep.subr.mxu0 %v91
  %6606 = vmatpush1.msra.mxu0 %v90
  %6607 = vmatprep.subr.mxu0 %v96
  %6608 = vmatpush1.msra.mxu0 %v95
  %6609 = vmatprep.subr.mxu0 %v101
  %6610 = vmatpush1.msra.mxu0 %v100
  %6611 = vmatprep.subr.mxu0 %v106
  %6612 = vmatpush1.msra.mxu0 %v105
  %6613 = vmatprep.subr.mxu0 0.0
  %6614 = vmatpush1.msra.mxu0 0.0
  %6615 = vmatprep.subr.mxu0 0.0
  %6616 = vmatpush1.msra.mxu0 0.0
  %6617 = vmatprep.subr.mxu0 0.0
  %6618 = vmatpush1.msra.mxu0 0.0
  %6619 = vmatprep.subr.mxu0 0.0
  %6620 = vmatpush1.msra.mxu0 0.0
  %6621 = vmatprep.subr.mxu0 0.0
  %6622 = vmatpush1.msra.mxu0 0.0
  %6623 = vmatprep.subr.mxu0 0.0
  %6624 = vmatpush1.msra.mxu0 0.0
  %6625 = vmatprep.subr.mxu0 0.0
  %6626 = vmatpush1.msra.mxu0 0.0
  %6627 = vmatprep.subr.mxu0 0.0
  %6628 = vmatpush1.msra.mxu0 0.0
  %6629 = vmatprep.subr.mxu0 0.0
  %6630 = vmatpush1.msra.mxu0 0.0
  %6631 = vmatprep.subr.mxu0 0.0
  %6632 = vmatpush1.msra.mxu0 0.0
  %6633 = vmatprep.subr.mxu0 0.0
  %6634 = vmatpush1.msra.mxu0 0.0
  %6635 = vmatprep.subr.mxu0 0.0
  %6636 = vmatpush1.msra.mxu0 0.0
  %6637 = vmatprep.subr.mxu0 0.0
  %6638 = vmatpush1.msra.mxu0 0.0
  %6639 = vmatprep.subr.mxu0 0.0
  %6640 = vmatpush1.msra.mxu0 0.0
  %6641 = vmatprep.subr.mxu0 0.0
  %6642 = vmatpush1.msra.mxu0 0.0
  %6643 = vmatprep.subr.mxu0 0.0
  %6644 = vmatpush1.msra.mxu0 0.0
  %6645 = vmatprep.subr.mxu0 0.0
  %6646 = vmatpush1.msra.mxu0 0.0
  %6647 = vmatprep.subr.mxu0 0.0
  %6648 = vmatpush1.msra.mxu0 0.0
  %6649 = vmatprep.subr.mxu0 0.0
  %6650 = vmatpush1.msra.mxu0 0.0
  %6651 = vmatprep.subr.mxu0 0.0
  %6652 = vmatpush1.msra.mxu0 0.0
  %6653 = vmatprep.subr.mxu0 0.0
  %6654 = vmatpush1.msra.mxu0 0.0
  %6655 = vmatprep.subr.mxu0 0.0
  %6656 = vmatpush1.msra.mxu0 0.0
  %6657 = vmatprep.subr.mxu0 0.0
  %6658 = vmatpush1.msra.mxu0 0.0
  %6659 = vmatprep.subr.mxu0 0.0
  %6660 = vmatpush1.msra.mxu0 0.0
  %6661 = vmatprep.subr.mxu0 0.0
  %6662 = vmatpush1.msra.mxu0 0.0
  %6663 = vmatprep.subr.mxu0 0.0
  %6664 = vmatpush1.msra.mxu0 0.0
  %6665 = vmatprep.subr.mxu0 0.0
  %6666 = vmatpush1.msra.mxu0 0.0
  %6667 = vmatprep.subr.mxu0 0.0
  %6668 = vmatpush1.msra.mxu0 0.0
  %6669 = vmatprep.mubr.f32.mxu0 0.0
  %6670 = vmatmul.mubr.f32.gmra.mrb[0].mxu0 %v6514
  %v6671 = vpop.f32.mrb[0].mxu0
  %v6672 = vadd.f32 0.0, %v6671
  %v6673 = vpop.f32.mrb[0].mxu0
  %v6674 = vadd.f32 0.0, %v6673
  %6675 = vmatprep.mubr.f32.mxu0 0.0
  %6676 = vmatmul.mubr.f32.gmra.mrb[0].mxu0 %v6517
  %v6677 = vpop.f32.mrb[0].mxu0
  %v6678 = vadd.f32 0.0, %v6677
  %v6679 = vpop.f32.mrb[0].mxu0
  %v6680 = vadd.f32 0.0, %v6679
  %6681 = vmatprep.mubr.f32.mxu0 0.0
  %6682 = vmatmul.mubr.f32.gmra.mrb[0].mxu0 %v6520
  %v6683 = vpop.f32.mrb[0].mxu0
  %v6684 = vadd.f32 0.0, %v6683
  %v6685 = vpop.f32.mrb[0].mxu0
  %v6686 = vadd.f32 0.0, %v6685
  %6687 = vdwg.mxu0
  %6688 = vmatprep.subr.mxu0 0.0
  %6689 = vmatpush1.msra.mxu0 %v92
  %6690 = vmatprep.subr.mxu0 0.0
  %6691 = vmatpush1.msra.mxu0 %v97
  %6692 = vmatprep.subr.mxu0 0.0
  %6693 = vmatpush1.msra.mxu0 %v102
  %6694 = vmatprep.subr.mxu0 0.0
  %6695 = vmatpush1.msra.mxu0 %v107
  %6696 = vmatprep.subr.mxu0 0.0
  %6697 = vmatpush1.msra.mxu0 0.0
  %6698 = vmatprep.subr.mxu0 0.0
  %6699 = vmatpush1.msra.mxu0 0.0
  %6700 = vmatprep.subr.mxu0 0.0
  %6701 = vmatpush1.msra.mxu0 0.0
  %6702 = vmatprep.subr.mxu0 0.0
  %6703 = vmatpush1.msra.mxu0 0.0
  %6704 = vmatprep.subr.mxu0 0.0
  %6705 = vmatpush1.msra.mxu0 0.0
  %6706 = vmatprep.subr.mxu0 0.0
  %6707 = vmatpush1.msra.mxu0 0.0
  %6708 = vmatprep.subr.mxu0 0.0
  %6709 = vmatpush1.msra.mxu0 0.0
  %6710 = vmatprep.subr.mxu0 0.0
  %6711 = vmatpush1.msra.mxu0 0.0
  %6712 = vmatprep.subr.mxu0 0.0
  %6713 = vmatpush1.msra.mxu0 0.0
  %6714 = vmatprep.subr.mxu0 0.0
  %6715 = vmatpush1.msra.mxu0 0.0
  %6716 = vmatprep.subr.mxu0 0.0
  %6717 = vmatpush1.msra.mxu0 0.0
  %6718 = vmatprep.subr.mxu0 0.0
  %6719 = vmatpush1.msra.mxu0 0.0
  %6720 = vmatprep.subr.mxu0 0.0
  %6721 = vmatpush1.msra.mxu0 0.0
  %6722 = vmatprep.subr.mxu0 0.0
  %6723 = vmatpush1.msra.mxu0 0.0
  %6724 = vmatprep.subr.mxu0 0.0
  %6725 = vmatpush1.msra.mxu0 0.0
  %6726 = vmatprep.subr.mxu0 0.0
  %6727 = vmatpush1.msra.mxu0 0.0
  %6728 = vmatprep.subr.mxu0 0.0
  %6729 = vmatpush1.msra.mxu0 0.0
  %6730 = vmatprep.subr.mxu0 0.0
  %6731 = vmatpush1.msra.mxu0 0.0
  %6732 = vmatprep.subr.mxu0 0.0
  %6733 = vmatpush1.msra.mxu0 0.0
  %6734 = vmatprep.subr.mxu0 0.0
  %6735 = vmatpush1.msra.mxu0 0.0
  %6736 = vmatprep.subr.mxu0 0.0
  %6737 = vmatpush1.msra.mxu0 0.0
  %6738 = vmatprep.subr.mxu0 0.0
  %6739 = vmatpush1.msra.mxu0 0.0
  %6740 = vmatprep.subr.mxu0 0.0
  %6741 = vmatpush1.msra.mxu0 0.0
  %6742 = vmatprep.subr.mxu0 0.0
  %6743 = vmatpush1.msra.mxu0 0.0
  %6744 = vmatprep.subr.mxu0 0.0
  %6745 = vmatpush1.msra.mxu0 0.0
  %6746 = vmatprep.subr.mxu0 0.0
  %6747 = vmatpush1.msra.mxu0 0.0
  %6748 = vmatprep.subr.mxu0 0.0
  %6749 = vmatpush1.msra.mxu0 0.0
  %6750 = vmatprep.subr.mxu0 0.0
  %6751 = vmatpush1.msra.mxu0 0.0
  %6752 = vmatprep.mubr.f32.mxu0 0.0
  %6753 = vmatmul.mubr.f32.gmra.mrb[0].mxu0 %v6514
  %v6754 = vpop.f32.mrb[0].mxu0
  %v6755 = vadd.f32 0.0, %v6754
  %v6756 = vpop.f32.mrb[0].mxu0
  %6757 = vmatprep.mubr.f32.mxu0 0.0
  %6758 = vmatmul.mubr.f32.gmra.mrb[0].mxu0 %v6517
  %v6759 = vpop.f32.mrb[0].mxu0
  %v6760 = vadd.f32 0.0, %v6759
  %v6761 = vpop.f32.mrb[0].mxu0
  %6762 = vmatprep.mubr.f32.mxu0 0.0
  %6763 = vmatmul.mubr.f32.gmra.mrb[0].mxu0 %v6520
  %v6764 = vpop.f32.mrb[0].mxu0
  %v6765 = vadd.f32 0.0, %v6764
  %v6766 = vpop.f32.mrb[0].mxu0
  %6767 = vdwg.mxu0
  %v6768 = vmul.f32 %v6589, %v108
  %v6769 = vmul.f32 %v6591, %v109
  %v6770 = vmul.f32 %v6672, %v110
  %v6771 = vmul.f32 %v6674, %v111
  %v6772 = vmul.f32 %v6755, %v112
  %v6773 = vmul.f32 %v6595, %v113
  %v6774 = vmul.f32 %v6597, %v114
  %v6775 = vmul.f32 %v6678, %v115
  %v6776 = vmul.f32 %v6680, %v116
  %v6777 = vmul.f32 %v6760, %v117
  %v6778 = vmul.f32 %v6601, %v118
  %v6779 = vmul.f32 %v6603, %v119
  %v6780 = vmul.f32 %v6684, %v120
  %v6781 = vmul.f32 %v6686, %v121
  %v6782 = vmul.f32 %v6765, %v122
  %v6784 = vsel %vm980, %v6778, 0
  %v6787 = vsel %vm980, %v6779, 0
  %v6790 = vsel %vm980, %v6780, 0
  %v6793 = vsel %vm980, %v6781, 0
  %v6796 = vsel %vm980, %v6782, 0
  %6798 = vmatprep.subr.mxu0 %v6769
  %6799 = vmatpush1.msra.mxu0 %v6768
  %6800 = vmatprep.subr.mxu0 %v6774
  %6801 = vmatpush1.msra.mxu0 %v6773
  %6802 = vmatprep.subr.mxu0 %v6787
  %6803 = vmatpush1.msra.mxu0 %v6784
  %6804 = vmatprep.subr.mxu0 0.0
  %6805 = vmatpush1.msra.mxu0 0.0
  %6806 = vmatprep.subr.mxu0 0.0
  %6807 = vmatpush1.msra.mxu0 0.0
  %6808 = vmatprep.subr.mxu0 0.0
  %6809 = vmatpush1.msra.mxu0 0.0
  %6810 = vmatprep.subr.mxu0 0.0
  %6811 = vmatpush1.msra.mxu0 0.0
  %6812 = vmatprep.subr.mxu0 0.0
  %6813 = vmatpush1.msra.mxu0 0.0
  %6814 = vmatprep.subr.mxu0 0.0
  %6815 = vmatpush1.msra.mxu0 0.0
  %6816 = vmatprep.subr.mxu0 0.0
  %6817 = vmatpush1.msra.mxu0 0.0
  %6818 = vmatprep.subr.mxu0 0.0
  %6819 = vmatpush1.msra.mxu0 0.0
  %6820 = vmatprep.subr.mxu0 0.0
  %6821 = vmatpush1.msra.mxu0 0.0
  %6822 = vmatprep.subr.mxu0 0.0
  %6823 = vmatpush1.msra.mxu0 0.0
  %6824 = vmatprep.subr.mxu0 0.0
  %6825 = vmatpush1.msra.mxu0 0.0
  %6826 = vmatprep.subr.mxu0 0.0
  %6827 = vmatpush1.msra.mxu0 0.0
  %6828 = vmatprep.subr.mxu0 0.0
  %6829 = vmatpush1.msra.mxu0 0.0
  %6830 = vmatprep.subr.mxu0 0.0
  %6831 = vmatpush1.msra.mxu0 0.0
  %6832 = vmatprep.subr.mxu0 0.0
  %6833 = vmatpush1.msra.mxu0 0.0
  %6834 = vmatprep.subr.mxu0 0.0
  %6835 = vmatpush1.msra.mxu0 0.0
  %6836 = vmatprep.subr.mxu0 0.0
  %6837 = vmatpush1.msra.mxu0 0.0
  %6838 = vmatprep.subr.mxu0 0.0
  %6839 = vmatpush1.msra.mxu0 0.0
  %6840 = vmatprep.subr.mxu0 0.0
  %6841 = vmatpush1.msra.mxu0 0.0
  %6842 = vmatprep.subr.mxu0 0.0
  %6843 = vmatpush1.msra.mxu0 0.0
  %6844 = vmatprep.subr.mxu0 0.0
  %6845 = vmatpush1.msra.mxu0 0.0
  %6846 = vmatprep.subr.mxu0 0.0
  %6847 = vmatpush1.msra.mxu0 0.0
  %6848 = vmatprep.subr.mxu0 0.0
  %6849 = vmatpush1.msra.mxu0 0.0
  %6850 = vmatprep.subr.mxu0 0.0
  %6851 = vmatpush1.msra.mxu0 0.0
  %6852 = vmatprep.subr.mxu0 0.0
  %6853 = vmatpush1.msra.mxu0 0.0
  %6854 = vmatprep.subr.mxu0 0.0
  %6855 = vmatpush1.msra.mxu0 0.0
  %6856 = vmatprep.subr.mxu0 0.0
  %6857 = vmatpush1.msra.mxu0 0.0
  %6858 = vmatprep.subr.mxu0 0.0
  %6859 = vmatpush1.msra.mxu0 0.0
  %6860 = vmatprep.subr.mxu0 0.0
  %6861 = vmatpush1.msra.mxu0 0.0
  %6862 = vmatprep.mubr.f32.mxu0 0.0
  %6863 = vmatmul.mubr.f32.gmra.mrb[0].mxu0 %v978
  %v6864 = vpop.f32.mrb[0].mxu0
  %v6865 = vadd.f32 0.0, %v6864
  %v6866 = vpop.f32.mrb[0].mxu0
  %v6867 = vadd.f32 0.0, %v6866
  %6868 = vdwg.mxu0
  %6869 = vmatprep.subr.mxu0 %v6771
  %6870 = vmatpush1.msra.mxu0 %v6770
  %6871 = vmatprep.subr.mxu0 %v6776
  %6872 = vmatpush1.msra.mxu0 %v6775
  %6873 = vmatprep.subr.mxu0 %v6793
  %6874 = vmatpush1.msra.mxu0 %v6790
  %6875 = vmatprep.subr.mxu0 0.0
  %6876 = vmatpush1.msra.mxu0 0.0
  %6877 = vmatprep.subr.mxu0 0.0
  %6878 = vmatpush1.msra.mxu0 0.0
  %6879 = vmatprep.subr.mxu0 0.0
  %6880 = vmatpush1.msra.mxu0 0.0
  %6881 = vmatprep.subr.mxu0 0.0
  %6882 = vmatpush1.msra.mxu0 0.0
  %6883 = vmatprep.subr.mxu0 0.0
  %6884 = vmatpush1.msra.mxu0 0.0
  %6885 = vmatprep.subr.mxu0 0.0
  %6886 = vmatpush1.msra.mxu0 0.0
  %6887 = vmatprep.subr.mxu0 0.0
  %6888 = vmatpush1.msra.mxu0 0.0
  %6889 = vmatprep.subr.mxu0 0.0
  %6890 = vmatpush1.msra.mxu0 0.0
  %6891 = vmatprep.subr.mxu0 0.0
  %6892 = vmatpush1.msra.mxu0 0.0
  %6893 = vmatprep.subr.mxu0 0.0
  %6894 = vmatpush1.msra.mxu0 0.0
  %6895 = vmatprep.subr.mxu0 0.0
  %6896 = vmatpush1.msra.mxu0 0.0
  %6897 = vmatprep.subr.mxu0 0.0
  %6898 = vmatpush1.msra.mxu0 0.0
  %6899 = vmatprep.subr.mxu0 0.0
  %6900 = vmatpush1.msra.mxu0 0.0
  %6901 = vmatprep.subr.mxu0 0.0
  %6902 = vmatpush1.msra.mxu0 0.0
  %6903 = vmatprep.subr.mxu0 0.0
  %6904 = vmatpush1.msra.mxu0 0.0
  %6905 = vmatprep.subr.mxu0 0.0
  %6906 = vmatpush1.msra.mxu0 0.0
  %6907 = vmatprep.subr.mxu0 0.0
  %6908 = vmatpush1.msra.mxu0 0.0
  %6909 = vmatprep.subr.mxu0 0.0
  %6910 = vmatpush1.msra.mxu0 0.0
  %6911 = vmatprep.subr.mxu0 0.0
  %6912 = vmatpush1.msra.mxu0 0.0
  %6913 = vmatprep.subr.mxu0 0.0
  %6914 = vmatpush1.msra.mxu0 0.0
  %6915 = vmatprep.subr.mxu0 0.0
  %6916 = vmatpush1.msra.mxu0 0.0
  %6917 = vmatprep.subr.mxu0 0.0
  %6918 = vmatpush1.msra.mxu0 0.0
  %6919 = vmatprep.subr.mxu0 0.0
  %6920 = vmatpush1.msra.mxu0 0.0
  %6921 = vmatprep.subr.mxu0 0.0
  %6922 = vmatpush1.msra.mxu0 0.0
  %6923 = vmatprep.subr.mxu0 0.0
  %6924 = vmatpush1.msra.mxu0 0.0
  %6925 = vmatprep.subr.mxu0 0.0
  %6926 = vmatpush1.msra.mxu0 0.0
  %6927 = vmatprep.subr.mxu0 0.0
  %6928 = vmatpush1.msra.mxu0 0.0
  %6929 = vmatprep.subr.mxu0 0.0
  %6930 = vmatpush1.msra.mxu0 0.0
  %6931 = vmatprep.subr.mxu0 0.0
  %6932 = vmatpush1.msra.mxu0 0.0
  %6933 = vmatprep.mubr.f32.mxu0 0.0
  %6934 = vmatmul.mubr.f32.gmra.mrb[0].mxu0 %v978
  %v6935 = vpop.f32.mrb[0].mxu0
  %v6936 = vadd.f32 0.0, %v6935
  %v6937 = vpop.f32.mrb[0].mxu0
  %v6938 = vadd.f32 0.0, %v6937
  %6939 = vdwg.mxu0
  %6940 = vmatprep.subr.mxu0 0.0
  %6941 = vmatpush1.msra.mxu0 %v6772
  %6942 = vmatprep.subr.mxu0 0.0
  %6943 = vmatpush1.msra.mxu0 %v6777
  %6944 = vmatprep.subr.mxu0 0.0
  %6945 = vmatpush1.msra.mxu0 %v6796
  %6946 = vmatprep.subr.mxu0 0.0
  %6947 = vmatpush1.msra.mxu0 0.0
  %6948 = vmatprep.subr.mxu0 0.0
  %6949 = vmatpush1.msra.mxu0 0.0
  %6950 = vmatprep.subr.mxu0 0.0
  %6951 = vmatpush1.msra.mxu0 0.0
  %6952 = vmatprep.subr.mxu0 0.0
  %6953 = vmatpush1.msra.mxu0 0.0
  %6954 = vmatprep.subr.mxu0 0.0
  %6955 = vmatpush1.msra.mxu0 0.0
  %6956 = vmatprep.subr.mxu0 0.0
  %6957 = vmatpush1.msra.mxu0 0.0
  %6958 = vmatprep.subr.mxu0 0.0
  %6959 = vmatpush1.msra.mxu0 0.0
  %6960 = vmatprep.subr.mxu0 0.0
  %6961 = vmatpush1.msra.mxu0 0.0
  %6962 = vmatprep.subr.mxu0 0.0
  %6963 = vmatpush1.msra.mxu0 0.0
  %6964 = vmatprep.subr.mxu0 0.0
  %6965 = vmatpush1.msra.mxu0 0.0
  %6966 = vmatprep.subr.mxu0 0.0
  %6967 = vmatpush1.msra.mxu0 0.0
  %6968 = vmatprep.subr.mxu0 0.0
  %6969 = vmatpush1.msra.mxu0 0.0
  %6970 = vmatprep.subr.mxu0 0.0
  %6971 = vmatpush1.msra.mxu0 0.0
  %6972 = vmatprep.subr.mxu0 0.0
  %6973 = vmatpush1.msra.mxu0 0.0
  %6974 = vmatprep.subr.mxu0 0.0
  %6975 = vmatpush1.msra.mxu0 0.0
  %6976 = vmatprep.subr.mxu0 0.0
  %6977 = vmatpush1.msra.mxu0 0.0
  %6978 = vmatprep.subr.mxu0 0.0
  %6979 = vmatpush1.msra.mxu0 0.0
  %6980 = vmatprep.subr.mxu0 0.0
  %6981 = vmatpush1.msra.mxu0 0.0
  %6982 = vmatprep.subr.mxu0 0.0
  %6983 = vmatpush1.msra.mxu0 0.0
  %6984 = vmatprep.subr.mxu0 0.0
  %6985 = vmatpush1.msra.mxu0 0.0
  %6986 = vmatprep.subr.mxu0 0.0
  %6987 = vmatpush1.msra.mxu0 0.0
  %6988 = vmatprep.subr.mxu0 0.0
  %6989 = vmatpush1.msra.mxu0 0.0
  %6990 = vmatprep.subr.mxu0 0.0
  %6991 = vmatpush1.msra.mxu0 0.0
  %6992 = vmatprep.subr.mxu0 0.0
  %6993 = vmatpush1.msra.mxu0 0.0
  %6994 = vmatprep.subr.mxu0 0.0
  %6995 = vmatpush1.msra.mxu0 0.0
  %6996 = vmatprep.subr.mxu0 0.0
  %6997 = vmatpush1.msra.mxu0 0.0
  %6998 = vmatprep.subr.mxu0 0.0
  %6999 = vmatpush1.msra.mxu0 0.0
  %7000 = vmatprep.subr.mxu0 0.0
  %7001 = vmatpush1.msra.mxu0 0.0
  %7002 = vmatprep.subr.mxu0 0.0
  %7003 = vmatpush1.msra.mxu0 0.0
  %7004 = vmatprep.mubr.f32.mxu0 0.0
  %7005 = vmatmul.mubr.f32.gmra.mrb[0].mxu0 %v978
  %v7006 = vpop.f32.mrb[0].mxu0
  %v7007 = vadd.f32 0.0, %v7006
  %v7008 = vpop.f32.mrb[0].mxu0
  %7009 = vdwg.mxu0
  %v7010 = vlaneseq
  %v7011 = vshrl.u32 %v7010, 7
  %v7012 = vsub.s32 0, %v7011
  %v7013 = vrot.slane %v6865, %v7012
  %v7014 = vlaneseq
  %v7015 = vshrl.u32 %v7014, 7
  %v7016 = vsub.s32 0, %v7015
  %v7017 = vrot.slane %v6867, %v7016
  %v7018 = vlaneseq
  %v7019 = vshrl.u32 %v7018, 7
  %v7020 = vsub.s32 0, %v7019
  %v7021 = vrot.slane %v6936, %v7020
  %v7022 = vlaneseq
  %v7023 = vshrl.u32 %v7022, 7
  %v7024 = vsub.s32 0, %v7023
  %v7025 = vrot.slane %v6938, %v7024
  %v7026 = vlaneseq
  %v7027 = vshrl.u32 %v7026, 7
  %v7028 = vsub.s32 0, %v7027
  %v7029 = vrot.slane %v7007, %v7028
  %v7030 = vmul.f32 %v7013, %v123
  %v7031 = vmul.f32 %v7017, %v124
  %v7032 = vmul.f32 %v7021, %v125
  %v7033 = vmul.f32 %v7025, %v126
  %v7034 = vmul.f32 %v7029, %v127
  %v7035 = vmul.f32 %v7013, %v128
  %v7036 = vmul.f32 %v7017, %v129
  %v7037 = vmul.f32 %v7021, %v130
  %v7038 = vmul.f32 %v7025, %v131
  %v7039 = vmul.f32 %v7029, %v132
  %v7040 = vmul.f32 %v7013, %v133
  %v7041 = vmul.f32 %v7017, %v134
  %v7042 = vmul.f32 %v7021, %v135
  %v7043 = vmul.f32 %v7025, %v136
  %v7044 = vmul.f32 %v7029, %v137
  %v7045 = vmul.f32 %v7013, %v138
  %v7046 = vmul.f32 %v7017, %v139
  %v7047 = vmul.f32 %v7021, %v140
  %v7048 = vmul.f32 %v7025, %v141
  %v7049 = vmul.f32 %v7029, %v142
  %v7051 = vsel %vm705, %v7034, 0
  %v7054 = vsel %vm705, %v7039, 0
  %v7057 = vsel %vm705, %v7044, 0
  %v7060 = vsel %vm705, %v7049, 0
  %7062 = vmatprep.subr.mxu0 0.0
  %7063 = vmatpush1.msra.mxu0 %v143
  %7064 = vmatprep.subr.mxu0 0.0
  %7065 = vmatpush1.msra.mxu0 %v144
  %7066 = vmatprep.subr.mxu0 0.0
  %7067 = vmatpush1.msra.mxu0 %v145
  %7068 = vmatprep.subr.mxu0 0.0
  %7069 = vmatpush1.msra.mxu0 %v146
  %7070 = vmatprep.subr.mxu0 0.0
  %7071 = vmatpush1.msra.mxu0 %v147
  %7072 = vmatprep.subr.mxu0 0.0
  %7073 = vmatpush1.msra.mxu0 %v148
  %7074 = vmatprep.subr.mxu0 0.0
  %7075 = vmatpush1.msra.mxu0 %v149
  %7076 = vmatprep.subr.mxu0 0.0
  %7077 = vmatpush1.msra.mxu0 %v150
  %7078 = vmatprep.subr.mxu0 0.0
  %7079 = vmatpush1.msra.mxu0 %v151
  %7080 = vmatprep.subr.mxu0 0.0
  %7081 = vmatpush1.msra.mxu0 %v152
  %7082 = vmatprep.subr.mxu0 0.0
  %7083 = vmatpush1.msra.mxu0 %v153
  %7084 = vmatprep.subr.mxu0 0.0
  %7085 = vmatpush1.msra.mxu0 %v154
  %7086 = vmatprep.subr.mxu0 0.0
  %7087 = vmatpush1.msra.mxu0 %v155
  %7088 = vmatprep.subr.mxu0 0.0
  %7089 = vmatpush1.msra.mxu0 %v156
  %7090 = vmatprep.subr.mxu0 0.0
  %7091 = vmatpush1.msra.mxu0 %v157
  %7092 = vmatprep.subr.mxu0 0.0
  %7093 = vmatpush1.msra.mxu0 %v158
  %7094 = vmatprep.subr.mxu0 0.0
  %7095 = vmatpush1.msra.mxu0 %v159
  %7096 = vmatprep.subr.mxu0 0.0
  %7097 = vmatpush1.msra.mxu0 %v160
  %7098 = vmatprep.subr.mxu0 0.0
  %7099 = vmatpush1.msra.mxu0 %v161
  %7100 = vmatprep.subr.mxu0 0.0
  %7101 = vmatpush1.msra.mxu0 %v162
  %7102 = vmatprep.subr.mxu0 0.0
  %7103 = vmatpush1.msra.mxu0 %v163
  %7104 = vmatprep.subr.mxu0 0.0
  %7105 = vmatpush1.msra.mxu0 %v164
  %7106 = vmatprep.subr.mxu0 0.0
  %7107 = vmatpush1.msra.mxu0 %v165
  %7108 = vmatprep.subr.mxu0 0.0
  %7109 = vmatpush1.msra.mxu0 %v166
  %7110 = vmatprep.subr.mxu0 0.0
  %7111 = vmatpush1.msra.mxu0 %v167
  %7112 = vmatprep.subr.mxu0 0.0
  %7113 = vmatpush1.msra.mxu0 %v168
  %7114 = vmatprep.subr.mxu0 0.0
  %7115 = vmatpush1.msra.mxu0 %v169
  %7116 = vmatprep.subr.mxu0 0.0
  %7117 = vmatpush1.msra.mxu0 %v170
  %7118 = vmatprep.subr.mxu0 0.0
  %7119 = vmatpush1.msra.mxu0 %v171
  %7120 = vmatprep.subr.mxu0 0.0
  %7121 = vmatpush1.msra.mxu0 %v172
  %7122 = vmatprep.subr.mxu0 0.0
  %7123 = vmatpush1.msra.mxu0 %v173
  %7124 = vmatprep.subr.mxu0 0.0
  %7125 = vmatpush1.msra.mxu0 %v174
  %7126 = vmatprep.mubr.f32.mxu0 %v7031
  %7127 = vmatmul.mubr.f32.gmra.mrb[0].mxu0 %v7030
  %v7128 = vpop.f32.mrb[0].mxu0
  %v7129 = vadd.f32 0.0, %v7128
  %v7130 = vpop.f32.mrb[0].mxu0
  %7131 = vmatprep.mubr.f32.mxu0 %v7036
  %7132 = vmatmul.mubr.f32.gmra.mrb[0].mxu0 %v7035
  %v7133 = vpop.f32.mrb[0].mxu0
  %v7134 = vadd.f32 0.0, %v7133
  %v7135 = vpop.f32.mrb[0].mxu0
  %7136 = vmatprep.mubr.f32.mxu0 %v7041
  %7137 = vmatmul.mubr.f32.gmra.mrb[0].mxu0 %v7040
  %v7138 = vpop.f32.mrb[0].mxu0
  %v7139 = vadd.f32 0.0, %v7138
  %v7140 = vpop.f32.mrb[0].mxu0
  %7141 = vmatprep.mubr.f32.mxu0 %v7046
  %7142 = vmatmul.mubr.f32.gmra.mrb[0].mxu0 %v7045
  %v7143 = vpop.f32.mrb[0].mxu0
  %v7144 = vadd.f32 0.0, %v7143
  %v7145 = vpop.f32.mrb[0].mxu0
  %7146 = vdwg.mxu0
  %7147 = vmatprep.subr.mxu0 0.0
  %7148 = vmatpush1.msra.mxu0 %v175
  %7149 = vmatprep.subr.mxu0 0.0
  %7150 = vmatpush1.msra.mxu0 %v176
  %7151 = vmatprep.subr.mxu0 0.0
  %7152 = vmatpush1.msra.mxu0 %v177
  %7153 = vmatprep.subr.mxu0 0.0
  %7154 = vmatpush1.msra.mxu0 %v178
  %7155 = vmatprep.subr.mxu0 0.0
  %7156 = vmatpush1.msra.mxu0 %v179
  %7157 = vmatprep.subr.mxu0 0.0
  %7158 = vmatpush1.msra.mxu0 %v180
  %7159 = vmatprep.subr.mxu0 0.0
  %7160 = vmatpush1.msra.mxu0 %v181
  %7161 = vmatprep.subr.mxu0 0.0
  %7162 = vmatpush1.msra.mxu0 %v182
  %7163 = vmatprep.subr.mxu0 0.0
  %7164 = vmatpush1.msra.mxu0 %v183
  %7165 = vmatprep.subr.mxu0 0.0
  %7166 = vmatpush1.msra.mxu0 %v184
  %7167 = vmatprep.subr.mxu0 0.0
  %7168 = vmatpush1.msra.mxu0 %v185
  %7169 = vmatprep.subr.mxu0 0.0
  %7170 = vmatpush1.msra.mxu0 %v186
  %7171 = vmatprep.subr.mxu0 0.0
  %7172 = vmatpush1.msra.mxu0 %v187
  %7173 = vmatprep.subr.mxu0 0.0
  %7174 = vmatpush1.msra.mxu0 %v188
  %7175 = vmatprep.subr.mxu0 0.0
  %7176 = vmatpush1.msra.mxu0 %v189
  %7177 = vmatprep.subr.mxu0 0.0
  %7178 = vmatpush1.msra.mxu0 %v190
  %7179 = vmatprep.subr.mxu0 0.0
  %7180 = vmatpush1.msra.mxu0 %v191
  %7181 = vmatprep.subr.mxu0 0.0
  %7182 = vmatpush1.msra.mxu0 %v192
  %7183 = vmatprep.subr.mxu0 0.0
  %7184 = vmatpush1.msra.mxu0 %v193
  %7185 = vmatprep.subr.mxu0 0.0
  %7186 = vmatpush1.msra.mxu0 %v194
  %7187 = vmatprep.subr.mxu0 0.0
  %7188 = vmatpush1.msra.mxu0 %v195
  %7189 = vmatprep.subr.mxu0 0.0
  %7190 = vmatpush1.msra.mxu0 %v196
  %7191 = vmatprep.subr.mxu0 0.0
  %7192 = vmatpush1.msra.mxu0 %v197
  %7193 = vmatprep.subr.mxu0 0.0
  %7194 = vmatpush1.msra.mxu0 %v198
  %7195 = vmatprep.subr.mxu0 0.0
  %7196 = vmatpush1.msra.mxu0 %v199
  %7197 = vmatprep.subr.mxu0 0.0
  %7198 = vmatpush1.msra.mxu0 %v200
  %7199 = vmatprep.subr.mxu0 0.0
  %7200 = vmatpush1.msra.mxu0 %v201
  %7201 = vmatprep.subr.mxu0 0.0
  %7202 = vmatpush1.msra.mxu0 %v202
  %7203 = vmatprep.subr.mxu0 0.0
  %7204 = vmatpush1.msra.mxu0 %v203
  %7205 = vmatprep.subr.mxu0 0.0
  %7206 = vmatpush1.msra.mxu0 %v204
  %7207 = vmatprep.subr.mxu0 0.0
  %7208 = vmatpush1.msra.mxu0 %v205
  %7209 = vmatprep.subr.mxu0 0.0
  %7210 = vmatpush1.msra.mxu0 %v206
  %7211 = vmatprep.mubr.f32.mxu0 %v7033
  %7212 = vmatmul.mubr.f32.gmra.mrb[0].mxu0 %v7032
  %v7213 = vpop.f32.mrb[0].mxu0
  %v7214 = vadd.f32 %v7129, %v7213
  %v7215 = vpop.f32.mrb[0].mxu0
  %7216 = vmatprep.mubr.f32.mxu0 %v7038
  %7217 = vmatmul.mubr.f32.gmra.mrb[0].mxu0 %v7037
  %v7218 = vpop.f32.mrb[0].mxu0
  %v7219 = vadd.f32 %v7134, %v7218
  %v7220 = vpop.f32.mrb[0].mxu0
  %7221 = vmatprep.mubr.f32.mxu0 %v7043
  %7222 = vmatmul.mubr.f32.gmra.mrb[0].mxu0 %v7042
  %v7223 = vpop.f32.mrb[0].mxu0
  %v7224 = vadd.f32 %v7139, %v7223
  %v7225 = vpop.f32.mrb[0].mxu0
  %7226 = vmatprep.mubr.f32.mxu0 %v7048
  %7227 = vmatmul.mubr.f32.gmra.mrb[0].mxu0 %v7047
  %v7228 = vpop.f32.mrb[0].mxu0
  %v7229 = vadd.f32 %v7144, %v7228
  %v7230 = vpop.f32.mrb[0].mxu0
  %7231 = vdwg.mxu0
  %7232 = vmatprep.subr.mxu0 0.0
  %7233 = vmatpush1.msra.mxu0 %v207
  %7234 = vmatprep.subr.mxu0 0.0
  %7235 = vmatpush1.msra.mxu0 %v208
  %7236 = vmatprep.subr.mxu0 0.0
  %7237 = vmatpush1.msra.mxu0 %v209
  %7238 = vmatprep.subr.mxu0 0.0
  %7239 = vmatpush1.msra.mxu0 %v210
  %7240 = vmatprep.subr.mxu0 0.0
  %7241 = vmatpush1.msra.mxu0 0.0
  %7242 = vmatprep.subr.mxu0 0.0
  %7243 = vmatpush1.msra.mxu0 0.0
  %7244 = vmatprep.subr.mxu0 0.0
  %7245 = vmatpush1.msra.mxu0 0.0
  %7246 = vmatprep.subr.mxu0 0.0
  %7247 = vmatpush1.msra.mxu0 0.0
  %7248 = vmatprep.subr.mxu0 0.0
  %7249 = vmatpush1.msra.mxu0 0.0
  %7250 = vmatprep.subr.mxu0 0.0
  %7251 = vmatpush1.msra.mxu0 0.0
  %7252 = vmatprep.subr.mxu0 0.0
  %7253 = vmatpush1.msra.mxu0 0.0
  %7254 = vmatprep.subr.mxu0 0.0
  %7255 = vmatpush1.msra.mxu0 0.0
  %7256 = vmatprep.subr.mxu0 0.0
  %7257 = vmatpush1.msra.mxu0 0.0
  %7258 = vmatprep.subr.mxu0 0.0
  %7259 = vmatpush1.msra.mxu0 0.0
  %7260 = vmatprep.subr.mxu0 0.0
  %7261 = vmatpush1.msra.mxu0 0.0
  %7262 = vmatprep.subr.mxu0 0.0
  %7263 = vmatpush1.msra.mxu0 0.0
  %7264 = vmatprep.subr.mxu0 0.0
  %7265 = vmatpush1.msra.mxu0 0.0
  %7266 = vmatprep.subr.mxu0 0.0
  %7267 = vmatpush1.msra.mxu0 0.0
  %7268 = vmatprep.subr.mxu0 0.0
  %7269 = vmatpush1.msra.mxu0 0.0
  %7270 = vmatprep.subr.mxu0 0.0
  %7271 = vmatpush1.msra.mxu0 0.0
  %7272 = vmatprep.subr.mxu0 0.0
  %7273 = vmatpush1.msra.mxu0 0.0
  %7274 = vmatprep.subr.mxu0 0.0
  %7275 = vmatpush1.msra.mxu0 0.0
  %7276 = vmatprep.subr.mxu0 0.0
  %7277 = vmatpush1.msra.mxu0 0.0
  %7278 = vmatprep.subr.mxu0 0.0
  %7279 = vmatpush1.msra.mxu0 0.0
  %7280 = vmatprep.subr.mxu0 0.0
  %7281 = vmatpush1.msra.mxu0 0.0
  %7282 = vmatprep.subr.mxu0 0.0
  %7283 = vmatpush1.msra.mxu0 0.0
  %7284 = vmatprep.subr.mxu0 0.0
  %7285 = vmatpush1.msra.mxu0 0.0
  %7286 = vmatprep.subr.mxu0 0.0
  %7287 = vmatpush1.msra.mxu0 0.0
  %7288 = vmatprep.subr.mxu0 0.0
  %7289 = vmatpush1.msra.mxu0 0.0
  %7290 = vmatprep.subr.mxu0 0.0
  %7291 = vmatpush1.msra.mxu0 0.0
  %7292 = vmatprep.subr.mxu0 0.0
  %7293 = vmatpush1.msra.mxu0 0.0
  %7294 = vmatprep.subr.mxu0 0.0
  %7295 = vmatpush1.msra.mxu0 0.0
  %7296 = vmatprep.mubr.f32.mxu0 0.0
  %7297 = vmatmul.mubr.f32.gmra.mrb[0].mxu0 %v7051
  %v7298 = vpop.f32.mrb[0].mxu0
  %v7299 = vadd.f32 %v7214, %v7298
  %v7300 = vpop.f32.mrb[0].mxu0
  %7301 = vmatprep.mubr.f32.mxu0 0.0
  %7302 = vmatmul.mubr.f32.gmra.mrb[0].mxu0 %v7054
  %v7303 = vpop.f32.mrb[0].mxu0
  %v7304 = vadd.f32 %v7219, %v7303
  %v7305 = vpop.f32.mrb[0].mxu0
  %7306 = vmatprep.mubr.f32.mxu0 0.0
  %7307 = vmatmul.mubr.f32.gmra.mrb[0].mxu0 %v7057
  %v7308 = vpop.f32.mrb[0].mxu0
  %v7309 = vadd.f32 %v7224, %v7308
  %v7310 = vpop.f32.mrb[0].mxu0
  %7311 = vmatprep.mubr.f32.mxu0 0.0
  %7312 = vmatmul.mubr.f32.gmra.mrb[0].mxu0 %v7060
  %v7313 = vpop.f32.mrb[0].mxu0
  %v7314 = vadd.f32 %v7229, %v7313
  %v7315 = vpop.f32.mrb[0].mxu0
  %7316 = vdwg.mxu0
  %v7318 = vsel %vm705, %v6340, 0
  %v7321 = vsel %vm705, %v6345, 0
  %v7324 = vsel %vm705, %v6350, 0
  %7326 = vmatprep.subr.mxu0 0.0
  %7327 = vmatpush1.msra.mxu0 %v7299
  %7328 = vmatprep.subr.mxu0 0.0
  %7329 = vmatpush1.msra.mxu0 %v7304
  %7330 = vmatprep.subr.mxu0 0.0
  %7331 = vmatpush1.msra.mxu0 %v7309
  %7332 = vmatprep.subr.mxu0 0.0
  %7333 = vmatpush1.msra.mxu0 %v7314
  %7334 = vmatprep.subr.mxu0 0.0
  %7335 = vmatpush1.msra.mxu0 0.0
  %7336 = vmatprep.subr.mxu0 0.0
  %7337 = vmatpush1.msra.mxu0 0.0
  %7338 = vmatprep.subr.mxu0 0.0
  %7339 = vmatpush1.msra.mxu0 0.0
  %7340 = vmatprep.subr.mxu0 0.0
  %7341 = vmatpush1.msra.mxu0 0.0
  %7342 = vmatprep.subr.mxu0 0.0
  %7343 = vmatpush1.msra.mxu0 0.0
  %7344 = vmatprep.subr.mxu0 0.0
  %7345 = vmatpush1.msra.mxu0 0.0
  %7346 = vmatprep.subr.mxu0 0.0
  %7347 = vmatpush1.msra.mxu0 0.0
  %7348 = vmatprep.subr.mxu0 0.0
  %7349 = vmatpush1.msra.mxu0 0.0
  %7350 = vmatprep.subr.mxu0 0.0
  %7351 = vmatpush1.msra.mxu0 0.0
  %7352 = vmatprep.subr.mxu0 0.0
  %7353 = vmatpush1.msra.mxu0 0.0
  %7354 = vmatprep.subr.mxu0 0.0
  %7355 = vmatpush1.msra.mxu0 0.0
  %7356 = vmatprep.subr.mxu0 0.0
  %7357 = vmatpush1.msra.mxu0 0.0
  %7358 = vmatprep.subr.mxu0 0.0
  %7359 = vmatpush1.msra.mxu0 0.0
  %7360 = vmatprep.subr.mxu0 0.0
  %7361 = vmatpush1.msra.mxu0 0.0
  %7362 = vmatprep.subr.mxu0 0.0
  %7363 = vmatpush1.msra.mxu0 0.0
  %7364 = vmatprep.subr.mxu0 0.0
  %7365 = vmatpush1.msra.mxu0 0.0
  %7366 = vmatprep.subr.mxu0 0.0
  %7367 = vmatpush1.msra.mxu0 0.0
  %7368 = vmatprep.subr.mxu0 0.0
  %7369 = vmatpush1.msra.mxu0 0.0
  %7370 = vmatprep.subr.mxu0 0.0
  %7371 = vmatpush1.msra.mxu0 0.0
  %7372 = vmatprep.subr.mxu0 0.0
  %7373 = vmatpush1.msra.mxu0 0.0
  %7374 = vmatprep.subr.mxu0 0.0
  %7375 = vmatpush1.msra.mxu0 0.0
  %7376 = vmatprep.subr.mxu0 0.0
  %7377 = vmatpush1.msra.mxu0 0.0
  %7378 = vmatprep.subr.mxu0 0.0
  %7379 = vmatpush1.msra.mxu0 0.0
  %7380 = vmatprep.subr.mxu0 0.0
  %7381 = vmatpush1.msra.mxu0 0.0
  %7382 = vmatprep.subr.mxu0 0.0
  %7383 = vmatpush1.msra.mxu0 0.0
  %7384 = vmatprep.subr.mxu0 0.0
  %7385 = vmatpush1.msra.mxu0 0.0
  %7386 = vmatprep.subr.mxu0 0.0
  %7387 = vmatpush1.msra.mxu0 0.0
  %7388 = vmatprep.subr.mxu0 0.0
  %7389 = vmatpush1.msra.mxu0 0.0
  %7390 = vmatprep.mubr.f32.mxu0 0.0
  %7391 = vmatmul.mubr.f32.gmra.mrb[0].mxu0 %v7318
  %v7392 = vpop.f32.mrb[0].mxu0
  %v7393 = vadd.f32 0.0, %v7392
  %v7394 = vpop.f32.mrb[0].mxu0
  %7395 = vmatprep.mubr.f32.mxu0 0.0
  %7396 = vmatmul.mubr.f32.gmra.mrb[0].mxu0 %v7321
  %v7397 = vpop.f32.mrb[0].mxu0
  %v7398 = vadd.f32 0.0, %v7397
  %v7399 = vpop.f32.mrb[0].mxu0
  %7400 = vmatprep.mubr.f32.mxu0 0.0
  %7401 = vmatmul.mubr.f32.gmra.mrb[0].mxu0 %v7324
  %v7402 = vpop.f32.mrb[0].mxu0
  %v7403 = vadd.f32 0.0, %v7402
  %v7404 = vpop.f32.mrb[0].mxu0
  %7405 = vdwg.mxu0
  %v7406 = vmul.f32 %v7393, 0.24253562
  %v7407 = vmul.f32 %v7398, 0.24253562
  %v7408 = vmul.f32 %v7403, 0.24253562
  %v7409 = vsel %vm1607, %v7406, -inf
  %7410 = vmax.xlane.f32.xlu0 %v7409
  %v7411 = vpop.xlane.xlu0 %7410
  %v7412 = vsel %vm1607, %v7407, -inf
  %7413 = vmax.xlane.f32.xlu0 %v7412
  %v7414 = vpop.xlane.xlu0 %7413
  %v7415 = vsel %vm1614, %v7408, -inf
  %7416 = vmax.xlane.f32.xlu0 %v7415
  %v7417 = vpop.xlane.xlu0 %7416
  %v7418 = vsub.f32 %v7406, %v7411
  %v7419 = vsub.f32 %v7407, %v7414
  %v7420 = vsub.f32 %v7408, %v7417
  %v7421 = vmul.f32 %v7418, 1.442695
  %v7422 = vpow.pop %v7421
  %v7423 = vmul.f32 %v7419, 1.442695
  %v7424 = vpow.pop %v7423
  %v7425 = vmul.f32 %v7420, 1.442695
  %v7426 = vpow.pop %v7425
  %v7428 = vsel %vm1607, %v7422, 0
  %v7431 = vsel %vm1607, %v7424, 0
  %v7434 = vsel %vm1607, %v7426, 0
  %7436 = vmatprep.subr.mxu0 0.0
  %7437 = vmatpush1.msra.mxu0 %v211
  %7438 = vmatprep.subr.mxu0 0.0
  %7439 = vmatpush1.msra.mxu0 %v212
  %7440 = vmatprep.subr.mxu0 0.0
  %7441 = vmatpush1.msra.mxu0 %v213
  %7442 = vmatprep.subr.mxu0 0.0
  %7443 = vmatpush1.msra.mxu0 %v214
  %7444 = vmatprep.subr.mxu0 0.0
  %7445 = vmatpush1.msra.mxu0 %v215
  %7446 = vmatprep.subr.mxu0 0.0
  %7447 = vmatpush1.msra.mxu0 %v216
  %7448 = vmatprep.subr.mxu0 0.0
  %7449 = vmatpush1.msra.mxu0 %v217
  %7450 = vmatprep.subr.mxu0 0.0
  %7451 = vmatpush1.msra.mxu0 %v218
  %7452 = vmatprep.subr.mxu0 0.0
  %7453 = vmatpush1.msra.mxu0 %v1638
  %7454 = vmatprep.subr.mxu0 0.0
  %7455 = vmatpush1.msra.mxu0 0.0
  %7456 = vmatprep.subr.mxu0 0.0
  %7457 = vmatpush1.msra.mxu0 0.0
  %7458 = vmatprep.subr.mxu0 0.0
  %7459 = vmatpush1.msra.mxu0 0.0
  %7460 = vmatprep.subr.mxu0 0.0
  %7461 = vmatpush1.msra.mxu0 0.0
  %7462 = vmatprep.subr.mxu0 0.0
  %7463 = vmatpush1.msra.mxu0 0.0
  %7464 = vmatprep.subr.mxu0 0.0
  %7465 = vmatpush1.msra.mxu0 0.0
  %7466 = vmatprep.subr.mxu0 0.0
  %7467 = vmatpush1.msra.mxu0 0.0
  %7468 = vmatprep.subr.mxu0 0.0
  %7469 = vmatpush1.msra.mxu0 0.0
  %7470 = vmatprep.subr.mxu0 0.0
  %7471 = vmatpush1.msra.mxu0 0.0
  %7472 = vmatprep.subr.mxu0 0.0
  %7473 = vmatpush1.msra.mxu0 0.0
  %7474 = vmatprep.subr.mxu0 0.0
  %7475 = vmatpush1.msra.mxu0 0.0
  %7476 = vmatprep.subr.mxu0 0.0
  %7477 = vmatpush1.msra.mxu0 0.0
  %7478 = vmatprep.subr.mxu0 0.0
  %7479 = vmatpush1.msra.mxu0 0.0
  %7480 = vmatprep.subr.mxu0 0.0
  %7481 = vmatpush1.msra.mxu0 0.0
  %7482 = vmatprep.subr.mxu0 0.0
  %7483 = vmatpush1.msra.mxu0 0.0
  %7484 = vmatprep.subr.mxu0 0.0
  %7485 = vmatpush1.msra.mxu0 0.0
  %7486 = vmatprep.subr.mxu0 0.0
  %7487 = vmatpush1.msra.mxu0 0.0
  %7488 = vmatprep.subr.mxu0 0.0
  %7489 = vmatpush1.msra.mxu0 0.0
  %7490 = vmatprep.subr.mxu0 0.0
  %7491 = vmatpush1.msra.mxu0 0.0
  %7492 = vmatprep.subr.mxu0 0.0
  %7493 = vmatpush1.msra.mxu0 0.0
  %7494 = vmatprep.subr.mxu0 0.0
  %7495 = vmatpush1.msra.mxu0 0.0
  %7496 = vmatprep.subr.mxu0 0.0
  %7497 = vmatpush1.msra.mxu0 0.0
  %7498 = vmatprep.subr.mxu0 0.0
  %7499 = vmatpush1.msra.mxu0 0.0
  %7500 = vmatprep.mubr.f32.mxu0 0.0
  %7501 = vmatmul.mubr.f32.gmra.mrb[0].mxu0 %v7428
  %v7502 = vpop.f32.mrb[0].mxu0
  %v7503 = vadd.f32 0.0, %v7502
  %v7504 = vpop.f32.mrb[0].mxu0
  %7505 = vmatprep.mubr.f32.mxu0 0.0
  %7506 = vmatmul.mubr.f32.gmra.mrb[0].mxu0 %v7431
  %v7507 = vpop.f32.mrb[0].mxu0
  %v7508 = vadd.f32 0.0, %v7507
  %v7509 = vpop.f32.mrb[0].mxu0
  %7510 = vmatprep.mubr.f32.mxu0 0.0
  %7511 = vmatmul.mubr.f32.gmra.mrb[0].mxu0 %v7434
  %v7512 = vpop.f32.mrb[0].mxu0
  %v7513 = vadd.f32 0.0, %v7512
  %v7514 = vpop.f32.mrb[0].mxu0
  %7515 = vdwg.mxu0
  %v7516 = vrcp.pop %v7503
  %v7517 = vrcp.pop %v7508
  %v7518 = vrcp.pop %v7513
  %v7520 = vsel %vm1723, %v7516, 0
  %v7523 = vsel %vm1723, %v7517, 0
  %v7526 = vsel %vm1723, %v7518, 0
  %7528 = vmatprep.subr.mxu0 0.0
  %7529 = vmatpush1.msra.mxu0 %v1734
  %7530 = vmatprep.subr.mxu0 0.0
  %7531 = vmatpush1.msra.mxu0 0.0
  %7532 = vmatprep.subr.mxu0 0.0
  %7533 = vmatpush1.msra.mxu0 0.0
  %7534 = vmatprep.subr.mxu0 0.0
  %7535 = vmatpush1.msra.mxu0 0.0
  %7536 = vmatprep.subr.mxu0 0.0
  %7537 = vmatpush1.msra.mxu0 0.0
  %7538 = vmatprep.subr.mxu0 0.0
  %7539 = vmatpush1.msra.mxu0 0.0
  %7540 = vmatprep.subr.mxu0 0.0
  %7541 = vmatpush1.msra.mxu0 0.0
  %7542 = vmatprep.subr.mxu0 0.0
  %7543 = vmatpush1.msra.mxu0 0.0
  %7544 = vmatprep.subr.mxu0 0.0
  %7545 = vmatpush1.msra.mxu0 0.0
  %7546 = vmatprep.subr.mxu0 0.0
  %7547 = vmatpush1.msra.mxu0 0.0
  %7548 = vmatprep.subr.mxu0 0.0
  %7549 = vmatpush1.msra.mxu0 0.0
  %7550 = vmatprep.subr.mxu0 0.0
  %7551 = vmatpush1.msra.mxu0 0.0
  %7552 = vmatprep.subr.mxu0 0.0
  %7553 = vmatpush1.msra.mxu0 0.0
  %7554 = vmatprep.subr.mxu0 0.0
  %7555 = vmatpush1.msra.mxu0 0.0
  %7556 = vmatprep.subr.mxu0 0.0
  %7557 = vmatpush1.msra.mxu0 0.0
  %7558 = vmatprep.subr.mxu0 0.0
  %7559 = vmatpush1.msra.mxu0 0.0
  %7560 = vmatprep.subr.mxu0 0.0
  %7561 = vmatpush1.msra.mxu0 0.0
  %7562 = vmatprep.subr.mxu0 0.0
  %7563 = vmatpush1.msra.mxu0 0.0
  %7564 = vmatprep.subr.mxu0 0.0
  %7565 = vmatpush1.msra.mxu0 0.0
  %7566 = vmatprep.subr.mxu0 0.0
  %7567 = vmatpush1.msra.mxu0 0.0
  %7568 = vmatprep.subr.mxu0 0.0
  %7569 = vmatpush1.msra.mxu0 0.0
  %7570 = vmatprep.subr.mxu0 0.0
  %7571 = vmatpush1.msra.mxu0 0.0
  %7572 = vmatprep.subr.mxu0 0.0
  %7573 = vmatpush1.msra.mxu0 0.0
  %7574 = vmatprep.subr.mxu0 0.0
  %7575 = vmatpush1.msra.mxu0 0.0
  %7576 = vmatprep.subr.mxu0 0.0
  %7577 = vmatpush1.msra.mxu0 0.0
  %7578 = vmatprep.subr.mxu0 0.0
  %7579 = vmatpush1.msra.mxu0 0.0
  %7580 = vmatprep.subr.mxu0 0.0
  %7581 = vmatpush1.msra.mxu0 0.0
  %7582 = vmatprep.subr.mxu0 0.0
  %7583 = vmatpush1.msra.mxu0 0.0
  %7584 = vmatprep.subr.mxu0 0.0
  %7585 = vmatpush1.msra.mxu0 0.0
  %7586 = vmatprep.subr.mxu0 0.0
  %7587 = vmatpush1.msra.mxu0 0.0
  %7588 = vmatprep.subr.mxu0 0.0
  %7589 = vmatpush1.msra.mxu0 0.0
  %7590 = vmatprep.subr.mxu0 0.0
  %7591 = vmatpush1.msra.mxu0 0.0
  %7592 = vmatprep.mubr.f32.mxu0 0.0
  %7593 = vmatmul.mubr.f32.gmra.mrb[0].mxu0 %v7520
  %v7594 = vpop.f32.mrb[0].mxu0
  %v7595 = vadd.f32 0.0, %v7594
  %v7596 = vpop.f32.mrb[0].mxu0
  %7597 = vmatprep.mubr.f32.mxu0 0.0
  %7598 = vmatmul.mubr.f32.gmra.mrb[0].mxu0 %v7523
  %v7599 = vpop.f32.mrb[0].mxu0
  %v7600 = vadd.f32 0.0, %v7599
  %v7601 = vpop.f32.mrb[0].mxu0
  %7602 = vmatprep.mubr.f32.mxu0 0.0
  %7603 = vmatmul.mubr.f32.gmra.mrb[0].mxu0 %v7526
  %v7604 = vpop.f32.mrb[0].mxu0
  %v7605 = vadd.f32 0.0, %v7604
  %v7606 = vpop.f32.mrb[0].mxu0
  %7607 = vdwg.mxu0
  %v7608 = vmul.f32 %v7422, %v7595
  %v7609 = vmul.f32 %v7424, %v7600
  %v7610 = vmul.f32 %v7426, %v7605
  %v7612 = vsel %vm980, %v6510, 0
  %7614 = vmatprep.subr.mxu0 0.0
  %7615 = vmatpush1.msra.mxu0 %v6500
  %7616 = vmatprep.subr.mxu0 0.0
  %7617 = vmatpush1.msra.mxu0 %v6505
  %7618 = vmatprep.subr.mxu0 0.0
  %7619 = vmatpush1.msra.mxu0 %v7612
  %7620 = vmatprep.subr.mxu0 0.0
  %7621 = vmatpush1.msra.mxu0 0.0
  %7622 = vmatprep.subr.mxu0 0.0
  %7623 = vmatpush1.msra.mxu0 0.0
  %7624 = vmatprep.subr.mxu0 0.0
  %7625 = vmatpush1.msra.mxu0 0.0
  %7626 = vmatprep.subr.mxu0 0.0
  %7627 = vmatpush1.msra.mxu0 0.0
  %7628 = vmatprep.subr.mxu0 0.0
  %7629 = vmatpush1.msra.mxu0 0.0
  %7630 = vmatprep.subr.mxu0 0.0
  %7631 = vmatpush1.msra.mxu0 0.0
  %7632 = vmatprep.subr.mxu0 0.0
  %7633 = vmatpush1.msra.mxu0 0.0
  %7634 = vmatprep.subr.mxu0 0.0
  %7635 = vmatpush1.msra.mxu0 0.0
  %7636 = vmatprep.subr.mxu0 0.0
  %7637 = vmatpush1.msra.mxu0 0.0
  %7638 = vmatprep.subr.mxu0 0.0
  %7639 = vmatpush1.msra.mxu0 0.0
  %7640 = vmatprep.subr.mxu0 0.0
  %7641 = vmatpush1.msra.mxu0 0.0
  %7642 = vmatprep.subr.mxu0 0.0
  %7643 = vmatpush1.msra.mxu0 0.0
  %7644 = vmatprep.subr.mxu0 0.0
  %7645 = vmatpush1.msra.mxu0 0.0
  %7646 = vmatprep.subr.mxu0 0.0
  %7647 = vmatpush1.msra.mxu0 0.0
  %7648 = vmatprep.subr.mxu0 0.0
  %7649 = vmatpush1.msra.mxu0 0.0
  %7650 = vmatprep.subr.mxu0 0.0
  %7651 = vmatpush1.msra.mxu0 0.0
  %7652 = vmatprep.subr.mxu0 0.0
  %7653 = vmatpush1.msra.mxu0 0.0
  %7654 = vmatprep.subr.mxu0 0.0
  %7655 = vmatpush1.msra.mxu0 0.0
  %7656 = vmatprep.subr.mxu0 0.0
  %7657 = vmatpush1.msra.mxu0 0.0
  %7658 = vmatprep.subr.mxu0 0.0
  %7659 = vmatpush1.msra.mxu0 0.0
  %7660 = vmatprep.subr.mxu0 0.0
  %7661 = vmatpush1.msra.mxu0 0.0
  %7662 = vmatprep.subr.mxu0 0.0
  %7663 = vmatpush1.msra.mxu0 0.0
  %7664 = vmatprep.subr.mxu0 0.0
  %7665 = vmatpush1.msra.mxu0 0.0
  %7666 = vmatprep.subr.mxu0 0.0
  %7667 = vmatpush1.msra.mxu0 0.0
  %7668 = vmatprep.subr.mxu0 0.0
  %7669 = vmatpush1.msra.mxu0 0.0
  %7670 = vmatprep.subr.mxu0 0.0
  %7671 = vmatpush1.msra.mxu0 0.0
  %7672 = vmatprep.subr.mxu0 0.0
  %7673 = vmatpush1.msra.mxu0 0.0
  %7674 = vmatprep.subr.mxu0 0.0
  %7675 = vmatpush1.msra.mxu0 0.0
  %7676 = vmatprep.subr.mxu0 0.0
  %7677 = vmatpush1.msra.mxu0 0.0
  %7678 = vmatprep.mubr.f32.mxu0 0.0
  %7679 = vmatmul.mubr.f32.gmra.mrb[0].mxu0 %v1820
  %v7680 = vpop.f32.mrb[0].mxu0
  %v7681 = vadd.f32 0.0, %v7680
  %v7682 = vpop.f32.mrb[0].mxu0
  %7683 = vmatprep.mubr.f32.mxu0 0.0
  %7684 = vmatmul.mubr.f32.gmra.mrb[0].mxu0 %v1823
  %v7685 = vpop.f32.mrb[0].mxu0
  %v7686 = vadd.f32 0.0, %v7685
  %v7687 = vpop.f32.mrb[0].mxu0
  %7688 = vmatprep.mubr.f32.mxu0 0.0
  %7689 = vmatmul.mubr.f32.gmra.mrb[0].mxu0 %v1826
  %v7690 = vpop.f32.mrb[0].mxu0
  %v7691 = vadd.f32 0.0, %v7690
  %v7692 = vpop.f32.mrb[0].mxu0
  %7693 = vmatprep.mubr.f32.mxu0 0.0
  %7694 = vmatmul.mubr.f32.gmra.mrb[0].mxu0 %v1829
  %v7695 = vpop.f32.mrb[0].mxu0
  %v7696 = vadd.f32 0.0, %v7695
  %v7697 = vpop.f32.mrb[0].mxu0
  %7698 = vmatprep.mubr.f32.mxu0 0.0
  %7699 = vmatmul.mubr.f32.gmra.mrb[0].mxu0 %v1832
  %v7700 = vpop.f32.mrb[0].mxu0
  %v7701 = vadd.f32 0.0, %v7700
  %v7702 = vpop.f32.mrb[0].mxu0
  %7703 = vmatprep.mubr.f32.mxu0 0.0
  %7704 = vmatmul.mubr.f32.gmra.mrb[0].mxu0 %v1835
  %v7705 = vpop.f32.mrb[0].mxu0
  %v7706 = vadd.f32 0.0, %v7705
  %v7707 = vpop.f32.mrb[0].mxu0
  %7708 = vmatprep.mubr.f32.mxu0 0.0
  %7709 = vmatmul.mubr.f32.gmra.mrb[0].mxu0 %v1838
  %v7710 = vpop.f32.mrb[0].mxu0
  %v7711 = vadd.f32 0.0, %v7710
  %v7712 = vpop.f32.mrb[0].mxu0
  %7713 = vmatprep.mubr.f32.mxu0 0.0
  %7714 = vmatmul.mubr.f32.gmra.mrb[0].mxu0 %v1841
  %v7715 = vpop.f32.mrb[0].mxu0
  %v7716 = vadd.f32 0.0, %v7715
  %v7717 = vpop.f32.mrb[0].mxu0
  %7718 = vmatprep.mubr.f32.mxu0 0.0
  %7719 = vmatmul.mubr.f32.gmra.mrb[0].mxu0 %v1844
  %v7720 = vpop.f32.mrb[0].mxu0
  %v7721 = vadd.f32 0.0, %v7720
  %v7722 = vpop.f32.mrb[0].mxu0
  %7723 = vdwg.mxu0
  %v7724 = vmul.f32 %v7681, %v230
  %v7725 = vmul.f32 %v7686, %v231
  %v7726 = vmul.f32 %v7691, %v232
  %v7727 = vmul.f32 %v7696, %v233
  %v7728 = vmul.f32 %v7701, %v234
  %v7729 = vmul.f32 %v7706, %v235
  %v7730 = vmul.f32 %v7711, %v236
  %v7731 = vmul.f32 %v7716, %v237
  %v7732 = vmul.f32 %v7721, %v238
  %v7734 = vsel %vm1607, %v7608, 0
  %v7737 = vsel %vm1607, %v7609, 0
  %v7740 = vsel %vm1607, %v7610, 0
  %v7743 = vsel %vm1636, %v7732, 0
  %7745 = vmatprep.subr.mxu0 0.0
  %7746 = vmatpush1.msra.mxu0 %v7724
  %7747 = vmatprep.subr.mxu0 0.0
  %7748 = vmatpush1.msra.mxu0 %v7725
  %7749 = vmatprep.subr.mxu0 0.0
  %7750 = vmatpush1.msra.mxu0 %v7726
  %7751 = vmatprep.subr.mxu0 0.0
  %7752 = vmatpush1.msra.mxu0 %v7727
  %7753 = vmatprep.subr.mxu0 0.0
  %7754 = vmatpush1.msra.mxu0 %v7728
  %7755 = vmatprep.subr.mxu0 0.0
  %7756 = vmatpush1.msra.mxu0 %v7729
  %7757 = vmatprep.subr.mxu0 0.0
  %7758 = vmatpush1.msra.mxu0 %v7730
  %7759 = vmatprep.subr.mxu0 0.0
  %7760 = vmatpush1.msra.mxu0 %v7731
  %7761 = vmatprep.subr.mxu0 0.0
  %7762 = vmatpush1.msra.mxu0 %v7743
  %7763 = vmatprep.subr.mxu0 0.0
  %7764 = vmatpush1.msra.mxu0 0.0
  %7765 = vmatprep.subr.mxu0 0.0
  %7766 = vmatpush1.msra.mxu0 0.0
  %7767 = vmatprep.subr.mxu0 0.0
  %7768 = vmatpush1.msra.mxu0 0.0
  %7769 = vmatprep.subr.mxu0 0.0
  %7770 = vmatpush1.msra.mxu0 0.0
  %7771 = vmatprep.subr.mxu0 0.0
  %7772 = vmatpush1.msra.mxu0 0.0
  %7773 = vmatprep.subr.mxu0 0.0
  %7774 = vmatpush1.msra.mxu0 0.0
  %7775 = vmatprep.subr.mxu0 0.0
  %7776 = vmatpush1.msra.mxu0 0.0
  %7777 = vmatprep.subr.mxu0 0.0
  %7778 = vmatpush1.msra.mxu0 0.0
  %7779 = vmatprep.subr.mxu0 0.0
  %7780 = vmatpush1.msra.mxu0 0.0
  %7781 = vmatprep.subr.mxu0 0.0
  %7782 = vmatpush1.msra.mxu0 0.0
  %7783 = vmatprep.subr.mxu0 0.0
  %7784 = vmatpush1.msra.mxu0 0.0
  %7785 = vmatprep.subr.mxu0 0.0
  %7786 = vmatpush1.msra.mxu0 0.0
  %7787 = vmatprep.subr.mxu0 0.0
  %7788 = vmatpush1.msra.mxu0 0.0
  %7789 = vmatprep.subr.mxu0 0.0
  %7790 = vmatpush1.msra.mxu0 0.0
  %7791 = vmatprep.subr.mxu0 0.0
  %7792 = vmatpush1.msra.mxu0 0.0
  %7793 = vmatprep.subr.mxu0 0.0
  %7794 = vmatpush1.msra.mxu0 0.0
  %7795 = vmatprep.subr.mxu0 0.0
  %7796 = vmatpush1.msra.mxu0 0.0
  %7797 = vmatprep.subr.mxu0 0.0
  %7798 = vmatpush1.msra.mxu0 0.0
  %7799 = vmatprep.subr.mxu0 0.0
  %7800 = vmatpush1.msra.mxu0 0.0
  %7801 = vmatprep.subr.mxu0 0.0
  %7802 = vmatpush1.msra.mxu0 0.0
  %7803 = vmatprep.subr.mxu0 0.0
  %7804 = vmatpush1.msra.mxu0 0.0
  %7805 = vmatprep.subr.mxu0 0.0
  %7806 = vmatpush1.msra.mxu0 0.0
  %7807 = vmatprep.subr.mxu0 0.0
  %7808 = vmatpush1.msra.mxu0 0.0
  %7809 = vmatprep.mubr.f32.mxu0 0.0
  %7810 = vmatmul.mubr.f32.gmra.mrb[0].mxu0 %v7734
  %v7811 = vpop.f32.mrb[0].mxu0
  %v7812 = vadd.f32 0.0, %v7811
  %v7813 = vpop.f32.mrb[0].mxu0
  %7814 = vmatprep.mubr.f32.mxu0 0.0
  %7815 = vmatmul.mubr.f32.gmra.mrb[0].mxu0 %v7737
  %v7816 = vpop.f32.mrb[0].mxu0
  %v7817 = vadd.f32 0.0, %v7816
  %v7818 = vpop.f32.mrb[0].mxu0
  %7819 = vmatprep.mubr.f32.mxu0 0.0
  %7820 = vmatmul.mubr.f32.gmra.mrb[0].mxu0 %v7740
  %v7821 = vpop.f32.mrb[0].mxu0
  %v7822 = vadd.f32 0.0, %v7821
  %v7823 = vpop.f32.mrb[0].mxu0
  %7824 = vdwg.mxu0
  %v7826 = vsel %vm980, %v7822, 0
  %7828 = vmatprep.subr.mxu0 0.0
  %7829 = vmatpush1.msra.mxu0 %v7812
  %7830 = vmatprep.subr.mxu0 0.0
  %7831 = vmatpush1.msra.mxu0 %v7817
  %7832 = vmatprep.subr.mxu0 0.0
  %7833 = vmatpush1.msra.mxu0 %v7826
  %7834 = vmatprep.subr.mxu0 0.0
  %7835 = vmatpush1.msra.mxu0 0.0
  %7836 = vmatprep.subr.mxu0 0.0
  %7837 = vmatpush1.msra.mxu0 0.0
  %7838 = vmatprep.subr.mxu0 0.0
  %7839 = vmatpush1.msra.mxu0 0.0
  %7840 = vmatprep.subr.mxu0 0.0
  %7841 = vmatpush1.msra.mxu0 0.0
  %7842 = vmatprep.subr.mxu0 0.0
  %7843 = vmatpush1.msra.mxu0 0.0
  %7844 = vmatprep.subr.mxu0 0.0
  %7845 = vmatpush1.msra.mxu0 0.0
  %7846 = vmatprep.subr.mxu0 0.0
  %7847 = vmatpush1.msra.mxu0 0.0
  %7848 = vmatprep.subr.mxu0 0.0
  %7849 = vmatpush1.msra.mxu0 0.0
  %7850 = vmatprep.subr.mxu0 0.0
  %7851 = vmatpush1.msra.mxu0 0.0
  %7852 = vmatprep.subr.mxu0 0.0
  %7853 = vmatpush1.msra.mxu0 0.0
  %7854 = vmatprep.subr.mxu0 0.0
  %7855 = vmatpush1.msra.mxu0 0.0
  %7856 = vmatprep.subr.mxu0 0.0
  %7857 = vmatpush1.msra.mxu0 0.0
  %7858 = vmatprep.subr.mxu0 0.0
  %7859 = vmatpush1.msra.mxu0 0.0
  %7860 = vmatprep.subr.mxu0 0.0
  %7861 = vmatpush1.msra.mxu0 0.0
  %7862 = vmatprep.subr.mxu0 0.0
  %7863 = vmatpush1.msra.mxu0 0.0
  %7864 = vmatprep.subr.mxu0 0.0
  %7865 = vmatpush1.msra.mxu0 0.0
  %7866 = vmatprep.subr.mxu0 0.0
  %7867 = vmatpush1.msra.mxu0 0.0
  %7868 = vmatprep.subr.mxu0 0.0
  %7869 = vmatpush1.msra.mxu0 0.0
  %7870 = vmatprep.subr.mxu0 0.0
  %7871 = vmatpush1.msra.mxu0 0.0
  %7872 = vmatprep.subr.mxu0 0.0
  %7873 = vmatpush1.msra.mxu0 0.0
  %7874 = vmatprep.subr.mxu0 0.0
  %7875 = vmatpush1.msra.mxu0 0.0
  %7876 = vmatprep.subr.mxu0 0.0
  %7877 = vmatpush1.msra.mxu0 0.0
  %7878 = vmatprep.subr.mxu0 0.0
  %7879 = vmatpush1.msra.mxu0 0.0
  %7880 = vmatprep.subr.mxu0 0.0
  %7881 = vmatpush1.msra.mxu0 0.0
  %7882 = vmatprep.subr.mxu0 0.0
  %7883 = vmatpush1.msra.mxu0 0.0
  %7884 = vmatprep.subr.mxu0 0.0
  %7885 = vmatpush1.msra.mxu0 0.0
  %7886 = vmatprep.subr.mxu0 0.0
  %7887 = vmatpush1.msra.mxu0 0.0
  %7888 = vmatprep.subr.mxu0 0.0
  %7889 = vmatpush1.msra.mxu0 0.0
  %7890 = vmatprep.subr.mxu0 0.0
  %7891 = vmatpush1.msra.mxu0 0.0
  %7892 = vmatprep.mubr.f32.mxu0 0.0
  %7893 = vmatmul.mubr.f32.gmra.mrb[0].mxu0 %v3726
  %v7894 = vpop.f32.mrb[0].mxu0
  %v7895 = vadd.f32 0.0, %v7894
  %v7896 = vpop.f32.mrb[0].mxu0
  %7897 = vmatprep.mubr.f32.mxu0 0.0
  %7898 = vmatmul.mubr.f32.gmra.mrb[0].mxu0 %v3729
  %v7899 = vpop.f32.mrb[0].mxu0
  %v7900 = vadd.f32 0.0, %v7899
  %v7901 = vpop.f32.mrb[0].mxu0
  %7902 = vmatprep.mubr.f32.mxu0 0.0
  %7903 = vmatmul.mubr.f32.gmra.mrb[0].mxu0 %v3732
  %v7904 = vpop.f32.mrb[0].mxu0
  %v7905 = vadd.f32 0.0, %v7904
  %v7906 = vpop.f32.mrb[0].mxu0
  %7907 = vmatprep.mubr.f32.mxu0 0.0
  %7908 = vmatmul.mubr.f32.gmra.mrb[0].mxu0 %v3735
  %v7909 = vpop.f32.mrb[0].mxu0
  %v7910 = vadd.f32 0.0, %v7909
  %v7911 = vpop.f32.mrb[0].mxu0
  %7912 = vmatprep.mubr.f32.mxu0 0.0
  %7913 = vmatmul.mubr.f32.gmra.mrb[0].mxu0 %v3738
  %v7914 = vpop.f32.mrb[0].mxu0
  %v7915 = vadd.f32 0.0, %v7914
  %v7916 = vpop.f32.mrb[0].mxu0
  %7917 = vdwg.mxu0
  %v7919 = vsel %vm980, %v6181, 0
  %7921 = vmatprep.subr.mxu0 0.0
  %7922 = vmatpush1.msra.mxu0 %v6171
  %7923 = vmatprep.subr.mxu0 0.0
  %7924 = vmatpush1.msra.mxu0 %v6176
  %7925 = vmatprep.subr.mxu0 0.0
  %7926 = vmatpush1.msra.mxu0 %v7919
  %7927 = vmatprep.subr.mxu0 0.0
  %7928 = vmatpush1.msra.mxu0 0.0
  %7929 = vmatprep.subr.mxu0 0.0
  %7930 = vmatpush1.msra.mxu0 0.0
  %7931 = vmatprep.subr.mxu0 0.0
  %7932 = vmatpush1.msra.mxu0 0.0
  %7933 = vmatprep.subr.mxu0 0.0
  %7934 = vmatpush1.msra.mxu0 0.0
  %7935 = vmatprep.subr.mxu0 0.0
  %7936 = vmatpush1.msra.mxu0 0.0
  %7937 = vmatprep.subr.mxu0 0.0
  %7938 = vmatpush1.msra.mxu0 0.0
  %7939 = vmatprep.subr.mxu0 0.0
  %7940 = vmatpush1.msra.mxu0 0.0
  %7941 = vmatprep.subr.mxu0 0.0
  %7942 = vmatpush1.msra.mxu0 0.0
  %7943 = vmatprep.subr.mxu0 0.0
  %7944 = vmatpush1.msra.mxu0 0.0
  %7945 = vmatprep.subr.mxu0 0.0
  %7946 = vmatpush1.msra.mxu0 0.0
  %7947 = vmatprep.subr.mxu0 0.0
  %7948 = vmatpush1.msra.mxu0 0.0
  %7949 = vmatprep.subr.mxu0 0.0
  %7950 = vmatpush1.msra.mxu0 0.0
  %7951 = vmatprep.subr.mxu0 0.0
  %7952 = vmatpush1.msra.mxu0 0.0
  %7953 = vmatprep.subr.mxu0 0.0
  %7954 = vmatpush1.msra.mxu0 0.0
  %7955 = vmatprep.subr.mxu0 0.0
  %7956 = vmatpush1.msra.mxu0 0.0
  %7957 = vmatprep.subr.mxu0 0.0
  %7958 = vmatpush1.msra.mxu0 0.0
  %7959 = vmatprep.subr.mxu0 0.0
  %7960 = vmatpush1.msra.mxu0 0.0
  %7961 = vmatprep.subr.mxu0 0.0
  %7962 = vmatpush1.msra.mxu0 0.0
  %7963 = vmatprep.subr.mxu0 0.0
  %7964 = vmatpush1.msra.mxu0 0.0
  %7965 = vmatprep.subr.mxu0 0.0
  %7966 = vmatpush1.msra.mxu0 0.0
  %7967 = vmatprep.subr.mxu0 0.0
  %7968 = vmatpush1.msra.mxu0 0.0
  %7969 = vmatprep.subr.mxu0 0.0
  %7970 = vmatpush1.msra.mxu0 0.0
  %7971 = vmatprep.subr.mxu0 0.0
  %7972 = vmatpush1.msra.mxu0 0.0
  %7973 = vmatprep.subr.mxu0 0.0
  %7974 = vmatpush1.msra.mxu0 0.0
  %7975 = vmatprep.subr.mxu0 0.0
  %7976 = vmatpush1.msra.mxu0 0.0
  %7977 = vmatprep.subr.mxu0 0.0
  %7978 = vmatpush1.msra.mxu0 0.0
  %7979 = vmatprep.subr.mxu0 0.0
  %7980 = vmatpush1.msra.mxu0 0.0
  %7981 = vmatprep.subr.mxu0 0.0
  %7982 = vmatpush1.msra.mxu0 0.0
  %7983 = vmatprep.subr.mxu0 0.0
  %7984 = vmatpush1.msra.mxu0 0.0
  %7985 = vmatprep.mubr.f32.mxu0 0.0
  %7986 = vmatmul.mubr.f32.gmra.mrb[0].mxu0 %v3834
  %v7987 = vpop.f32.mrb[0].mxu0
  %v7988 = vadd.f32 %v7895, %v7987
  %v7989 = vpop.f32.mrb[0].mxu0
  %7990 = vmatprep.mubr.f32.mxu0 0.0
  %7991 = vmatmul.mubr.f32.gmra.mrb[0].mxu0 %v3837
  %v7992 = vpop.f32.mrb[0].mxu0
  %v7993 = vadd.f32 %v7900, %v7992
  %v7994 = vpop.f32.mrb[0].mxu0
  %7995 = vmatprep.mubr.f32.mxu0 0.0
  %7996 = vmatmul.mubr.f32.gmra.mrb[0].mxu0 %v3840
  %v7997 = vpop.f32.mrb[0].mxu0
  %v7998 = vadd.f32 %v7905, %v7997
  %v7999 = vpop.f32.mrb[0].mxu0
  %8000 = vmatprep.mubr.f32.mxu0 0.0
  %8001 = vmatmul.mubr.f32.gmra.mrb[0].mxu0 %v3843
  %v8002 = vpop.f32.mrb[0].mxu0
  %v8003 = vadd.f32 %v7910, %v8002
  %v8004 = vpop.f32.mrb[0].mxu0
  %8005 = vmatprep.mubr.f32.mxu0 0.0
  %8006 = vmatmul.mubr.f32.gmra.mrb[0].mxu0 %v3846
  %v8007 = vpop.f32.mrb[0].mxu0
  %v8008 = vadd.f32 %v7915, %v8007
  %v8009 = vpop.f32.mrb[0].mxu0
  %8010 = vdwg.mxu0
  %s8011 = scalar_lea.vmem %s6, 32
  %v8012 = vld [vmem:[%s8011] sm:$0xff]
  %v8013 = vld [vmem:[%s8011 + $0x8] sm:$0xff]
  %v8014 = vld [vmem:[%s8011 + $0x10] sm:$0xff]
  %v8015 = vld [vmem:[%s8011 + $0x18] sm:$0xff]
  %v8017 = vsel %vm705, %v7988, 0
  %v8020 = vsel %vm705, %v7993, 0
  %v8023 = vsel %vm705, %v7998, 0
  %v8026 = vsel %vm705, %v8003, 0
  %v8029 = vsel %vm705, %v8008, 0
  %8031 = vmatprep.subr.mxu0 0.0
  %8032 = vmatpush1.msra.mxu0 %v8012
  %8033 = vmatprep.subr.mxu0 0.0
  %8034 = vmatpush1.msra.mxu0 %v8013
  %8035 = vmatprep.subr.mxu0 0.0
  %8036 = vmatpush1.msra.mxu0 %v8014
  %8037 = vmatprep.subr.mxu0 0.0
  %8038 = vmatpush1.msra.mxu0 %v8015
  %8039 = vmatprep.subr.mxu0 0.0
  %8040 = vmatpush1.msra.mxu0 0.0
  %8041 = vmatprep.subr.mxu0 0.0
  %8042 = vmatpush1.msra.mxu0 0.0
  %8043 = vmatprep.subr.mxu0 0.0
  %8044 = vmatpush1.msra.mxu0 0.0
  %8045 = vmatprep.subr.mxu0 0.0
  %8046 = vmatpush1.msra.mxu0 0.0
  %8047 = vmatprep.subr.mxu0 0.0
  %8048 = vmatpush1.msra.mxu0 0.0
  %8049 = vmatprep.subr.mxu0 0.0
  %8050 = vmatpush1.msra.mxu0 0.0
  %8051 = vmatprep.subr.mxu0 0.0
  %8052 = vmatpush1.msra.mxu0 0.0
  %8053 = vmatprep.subr.mxu0 0.0
  %8054 = vmatpush1.msra.mxu0 0.0
  %8055 = vmatprep.subr.mxu0 0.0
  %8056 = vmatpush1.msra.mxu0 0.0
  %8057 = vmatprep.subr.mxu0 0.0
  %8058 = vmatpush1.msra.mxu0 0.0
  %8059 = vmatprep.subr.mxu0 0.0
  %8060 = vmatpush1.msra.mxu0 0.0
  %8061 = vmatprep.subr.mxu0 0.0
  %8062 = vmatpush1.msra.mxu0 0.0
  %8063 = vmatprep.subr.mxu0 0.0
  %8064 = vmatpush1.msra.mxu0 0.0
  %8065 = vmatprep.subr.mxu0 0.0
  %8066 = vmatpush1.msra.mxu0 0.0
  %8067 = vmatprep.subr.mxu0 0.0
  %8068 = vmatpush1.msra.mxu0 0.0
  %8069 = vmatprep.subr.mxu0 0.0
  %8070 = vmatpush1.msra.mxu0 0.0
  %8071 = vmatprep.subr.mxu0 0.0
  %8072 = vmatpush1.msra.mxu0 0.0
  %8073 = vmatprep.subr.mxu0 0.0
  %8074 = vmatpush1.msra.mxu0 0.0
  %8075 = vmatprep.subr.mxu0 0.0
  %8076 = vmatpush1.msra.mxu0 0.0
  %8077 = vmatprep.subr.mxu0 0.0
  %8078 = vmatpush1.msra.mxu0 0.0
  %8079 = vmatprep.subr.mxu0 0.0
  %8080 = vmatpush1.msra.mxu0 0.0
  %8081 = vmatprep.subr.mxu0 0.0
  %8082 = vmatpush1.msra.mxu0 0.0
  %8083 = vmatprep.subr.mxu0 0.0
  %8084 = vmatpush1.msra.mxu0 0.0
  %8085 = vmatprep.subr.mxu0 0.0
  %8086 = vmatpush1.msra.mxu0 0.0
  %8087 = vmatprep.subr.mxu0 0.0
  %8088 = vmatpush1.msra.mxu0 0.0
  %8089 = vmatprep.subr.mxu0 0.0
  %8090 = vmatpush1.msra.mxu0 0.0
  %8091 = vmatprep.subr.mxu0 0.0
  %8092 = vmatpush1.msra.mxu0 0.0
  %8093 = vmatprep.subr.mxu0 0.0
  %8094 = vmatpush1.msra.mxu0 0.0
  %8095 = vmatprep.mubr.f32.mxu0 0.0
  %8096 = vmatmul.mubr.f32.gmra.mrb[0].mxu0 %v8017
  %v8097 = vpop.f32.mrb[0].mxu0
  %v8098 = vadd.f32 %v4413, %v8097
  %v8099 = vpop.f32.mrb[0].mxu0
  %8100 = vmatprep.mubr.f32.mxu0 0.0
  %8101 = vmatmul.mubr.f32.gmra.mrb[0].mxu0 %v8020
  %v8102 = vpop.f32.mrb[0].mxu0
  %v8103 = vadd.f32 %v4414, %v8102
  %v8104 = vpop.f32.mrb[0].mxu0
  %8105 = vmatprep.mubr.f32.mxu0 0.0
  %8106 = vmatmul.mubr.f32.gmra.mrb[0].mxu0 %v8023
  %v8107 = vpop.f32.mrb[0].mxu0
  %v8108 = vadd.f32 %v4415, %v8107
  %v8109 = vpop.f32.mrb[0].mxu0
  %8110 = vmatprep.mubr.f32.mxu0 0.0
  %8111 = vmatmul.mubr.f32.gmra.mrb[0].mxu0 %v8026
  %v8112 = vpop.f32.mrb[0].mxu0
  %v8113 = vadd.f32 %v4416, %v8112
  %v8114 = vpop.f32.mrb[0].mxu0
  %8115 = vmatprep.mubr.f32.mxu0 0.0
  %8116 = vmatmul.mubr.f32.gmra.mrb[0].mxu0 %v8029
  %v8117 = vpop.f32.mrb[0].mxu0
  %v8118 = vadd.f32 %v4417, %v8117
  %v8119 = vpop.f32.mrb[0].mxu0
  %8120 = vdwg.mxu0
  %s8121 = scalar_lea.vmem %s7, 1
  %v8122 = vld [vmem:[%s8121] sm:$0x1]
  %s8123 = scalar_lea.vmem %s8, 1
  %v8124 = vld [vmem:[%s8123] sm:$0x1]
  %v8125 = vsel %vm241, %v8098, 0.0
  %8126 = vadd.xlane.f32.xlu0 %v8125
  %v8127 = vpop.xlane.xlu0 %8126
  %v8128 = vsel %vm241, %v8103, 0.0
  %8129 = vadd.xlane.f32.xlu0 %v8128
  %v8130 = vpop.xlane.xlu0 %8129
  %v8131 = vsel %vm241, %v8108, 0.0
  %8132 = vadd.xlane.f32.xlu0 %v8131
  %v8133 = vpop.xlane.xlu0 %8132
  %v8134 = vsel %vm241, %v8113, 0.0
  %8135 = vadd.xlane.f32.xlu0 %v8134
  %v8136 = vpop.xlane.xlu0 %8135
  %v8137 = vsel %vm254, %v8118, 0.0
  %8138 = vadd.xlane.f32.xlu0 %v8137
  %v8139 = vpop.xlane.xlu0 %8138
  %v8140 = vmul.f32 %v8127, %v258
  %v8141 = vmul.f32 %v8130, %v258
  %v8142 = vmul.f32 %v8133, %v258
  %v8143 = vmul.f32 %v8136, %v258
  %v8144 = vmul.f32 %v8139, %v258
  %v8145 = vmul.f32 %v8098, %v8098
  %v8146 = vmul.f32 %v8103, %v8103
  %v8147 = vmul.f32 %v8108, %v8108
  %v8148 = vmul.f32 %v8113, %v8113
  %v8149 = vmul.f32 %v8118, %v8118
  %v8150 = vsel %vm241, %v8145, 0.0
  %8151 = vadd.xlane.f32.xlu0 %v8150
  %v8152 = vpop.xlane.xlu0 %8151
  %v8153 = vsel %vm241, %v8146, 0.0
  %8154 = vadd.xlane.f32.xlu0 %v8153
  %v8155 = vpop.xlane.xlu0 %8154
  %v8156 = vsel %vm241, %v8147, 0.0
  %8157 = vadd.xlane.f32.xlu0 %v8156
  %v8158 = vpop.xlane.xlu0 %8157
  %v8159 = vsel %vm241, %v8148, 0.0
  %8160 = vadd.xlane.f32.xlu0 %v8159
  %v8161 = vpop.xlane.xlu0 %8160
  %v8162 = vsel %vm254, %v8149, 0.0
  %8163 = vadd.xlane.f32.xlu0 %v8162
  %v8164 = vpop.xlane.xlu0 %8163
  %v8165 = vmul.f32 %v8152, %v258
  %v8166 = vmul.f32 %v8155, %v258
  %v8167 = vmul.f32 %v8158, %v258
  %v8168 = vmul.f32 %v8161, %v258
  %v8169 = vmul.f32 %v8164, %v258
  %v8170 = vmul.f32 %v8140, %v8140
  %v8171 = vmul.f32 %v8141, %v8141
  %v8172 = vmul.f32 %v8142, %v8142
  %v8173 = vmul.f32 %v8143, %v8143
  %v8174 = vmul.f32 %v8144, %v8144
  %v8175 = vsub.f32 %v8165, %v8170
  %v8176 = vsub.f32 %v8166, %v8171
  %v8177 = vsub.f32 %v8167, %v8172
  %v8178 = vsub.f32 %v8168, %v8173
  %v8179 = vsub.f32 %v8169, %v8174
  %v8180 = vsub.f32 %v8098, %v8140
  %v8181 = vsub.f32 %v8103, %v8141
  %v8182 = vsub.f32 %v8108, %v8142
  %v8183 = vsub.f32 %v8113, %v8143
  %v8184 = vsub.f32 %v8118, %v8144
  %v8185 = vadd.f32 %v8175, 1e-05
  %v8186 = vadd.f32 %v8176, 1e-05
  %v8187 = vadd.f32 %v8177, 1e-05
  %v8188 = vadd.f32 %v8178, 1e-05
  %v8189 = vadd.f32 %v8179, 1e-05
  %v8190 = vrsqrt.pop %v8185
  %v8191 = vrsqrt.pop %v8186
  %v8192 = vrsqrt.pop %v8187
  %v8193 = vrsqrt.pop %v8188
  %v8194 = vrsqrt.pop %v8189
  %v8195 = vmul.f32 %v8180, %v8190
  %v8196 = vmul.f32 %v8181, %v8191
  %v8197 = vmul.f32 %v8182, %v8192
  %v8198 = vmul.f32 %v8183, %v8193
  %v8199 = vmul.f32 %v8184, %v8194
  %v8201 = vlaneseq
  %v8202 = vshrl.u32 %v8201, 7
  %v8203 = vsub.s32 0, %v8202
  %v8204 = vrot.slane %v8122, %v8203
  %v8206 = vmul.f32 %v8195, %v8204
  %v8207 = vmul.f32 %v8196, %v8204
  %v8208 = vmul.f32 %v8197, %v8204
  %v8209 = vmul.f32 %v8198, %v8204
  %v8210 = vmul.f32 %v8199, %v8204
  %v8212 = vlaneseq
  %v8213 = vshrl.u32 %v8212, 7
  %v8214 = vsub.s32 0, %v8213
  %v8215 = vrot.slane %v8124, %v8214
  %v8217 = vadd.f32 %v8206, %v8215
  %v8218 = vadd.f32 %v8207, %v8215
  %v8219 = vadd.f32 %v8208, %v8215
  %v8220 = vadd.f32 %v8209, %v8215
  %v8221 = vadd.f32 %v8210, %v8215
  %s8222 = scalar_lea.vmem %s9, 48
  %v8223 = vld [vmem:[%s8222] sm:$0xff]
  %v8224 = vld [vmem:[%s8222 + $0x8] sm:$0xff]
  %v8225 = vld [vmem:[%s8222 + $0x10] sm:$0xff]
  %v8226 = vld [vmem:[%s8222 + $0x18] sm:$0xff]
  %v8227 = vld [vmem:[%s8222 + $0x20] sm:$0xff]
  %v8228 = vld [vmem:[%s8222 + $0x28] sm:$0xff]
  %s8229 = scalar_lea.vmem %s10, 1
  %v8230 = vld [vmem:[%s8229] sm:$0x1]
  %v8232 = vlaneseq
  %v8233 = vshrl.u32 %v8232, 7
  %v8234 = vsub.s32 0, %v8233
  %v8235 = vrot.slane %v8230, %v8234
  %v8238 = vsel %vm241, %v8217, 0
  %v8241 = vsel %vm241, %v8218, 0
  %v8244 = vsel %vm241, %v8219, 0
  %v8247 = vsel %vm241, %v8220, 0
  %v8250 = vsel %vm241, %v8221, 0
  %8252 = vmatprep.subr.mxu0 0.0
  %8253 = vmatpush1.msra.mxu0 %v8223
  %8254 = vmatprep.subr.mxu0 0.0
  %8255 = vmatpush1.msra.mxu0 %v8224
  %8256 = vmatprep.subr.mxu0 0.0
  %8257 = vmatpush1.msra.mxu0 %v8225
  %8258 = vmatprep.subr.mxu0 0.0
  %8259 = vmatpush1.msra.mxu0 %v8226
  %8260 = vmatprep.subr.mxu0 0.0
  %8261 = vmatpush1.msra.mxu0 %v8227
  %8262 = vmatprep.subr.mxu0 0.0
  %8263 = vmatpush1.msra.mxu0 %v8228
  %8264 = vmatprep.subr.mxu0 0.0
  %8265 = vmatpush1.msra.mxu0 0.0
  %8266 = vmatprep.subr.mxu0 0.0
  %8267 = vmatpush1.msra.mxu0 0.0
  %8268 = vmatprep.subr.mxu0 0.0
  %8269 = vmatpush1.msra.mxu0 0.0
  %8270 = vmatprep.subr.mxu0 0.0
  %8271 = vmatpush1.msra.mxu0 0.0
  %8272 = vmatprep.subr.mxu0 0.0
  %8273 = vmatpush1.msra.mxu0 0.0
  %8274 = vmatprep.subr.mxu0 0.0
  %8275 = vmatpush1.msra.mxu0 0.0
  %8276 = vmatprep.subr.mxu0 0.0
  %8277 = vmatpush1.msra.mxu0 0.0
  %8278 = vmatprep.subr.mxu0 0.0
  %8279 = vmatpush1.msra.mxu0 0.0
  %8280 = vmatprep.subr.mxu0 0.0
  %8281 = vmatpush1.msra.mxu0 0.0
  %8282 = vmatprep.subr.mxu0 0.0
  %8283 = vmatpush1.msra.mxu0 0.0
  %8284 = vmatprep.subr.mxu0 0.0
  %8285 = vmatpush1.msra.mxu0 0.0
  %8286 = vmatprep.subr.mxu0 0.0
  %8287 = vmatpush1.msra.mxu0 0.0
  %8288 = vmatprep.subr.mxu0 0.0
  %8289 = vmatpush1.msra.mxu0 0.0
  %8290 = vmatprep.subr.mxu0 0.0
  %8291 = vmatpush1.msra.mxu0 0.0
  %8292 = vmatprep.subr.mxu0 0.0
  %8293 = vmatpush1.msra.mxu0 0.0
  %8294 = vmatprep.subr.mxu0 0.0
  %8295 = vmatpush1.msra.mxu0 0.0
  %8296 = vmatprep.subr.mxu0 0.0
  %8297 = vmatpush1.msra.mxu0 0.0
  %8298 = vmatprep.subr.mxu0 0.0
  %8299 = vmatpush1.msra.mxu0 0.0
  %8300 = vmatprep.subr.mxu0 0.0
  %8301 = vmatpush1.msra.mxu0 0.0
  %8302 = vmatprep.subr.mxu0 0.0
  %8303 = vmatpush1.msra.mxu0 0.0
  %8304 = vmatprep.subr.mxu0 0.0
  %8305 = vmatpush1.msra.mxu0 0.0
  %8306 = vmatprep.subr.mxu0 0.0
  %8307 = vmatpush1.msra.mxu0 0.0
  %8308 = vmatprep.subr.mxu0 0.0
  %8309 = vmatpush1.msra.mxu0 0.0
  %8310 = vmatprep.subr.mxu0 0.0
  %8311 = vmatpush1.msra.mxu0 0.0
  %8312 = vmatprep.subr.mxu0 0.0
  %8313 = vmatpush1.msra.mxu0 0.0
  %8314 = vmatprep.subr.mxu0 0.0
  %8315 = vmatpush1.msra.mxu0 0.0
  %8316 = vmatprep.mubr.f32.mxu0 0.0
  %8317 = vmatmul.mubr.f32.gmra.mrb[0].mxu0 %v8238
  %v8318 = vpop.f32.mrb[0].mxu0
  %v8319 = vadd.f32 %v8235, %v8318
  %v8320 = vpop.f32.mrb[0].mxu0
  %8321 = vmatprep.mubr.f32.mxu0 0.0
  %8322 = vmatmul.mubr.f32.gmra.mrb[0].mxu0 %v8241
  %v8323 = vpop.f32.mrb[0].mxu0
  %v8324 = vadd.f32 %v8235, %v8323
  %v8325 = vpop.f32.mrb[0].mxu0
  %8326 = vmatprep.mubr.f32.mxu0 0.0
  %8327 = vmatmul.mubr.f32.gmra.mrb[0].mxu0 %v8244
  %v8328 = vpop.f32.mrb[0].mxu0
  %v8329 = vadd.f32 %v8235, %v8328
  %v8330 = vpop.f32.mrb[0].mxu0
  %8331 = vmatprep.mubr.f32.mxu0 0.0
  %8332 = vmatmul.mubr.f32.gmra.mrb[0].mxu0 %v8247
  %v8333 = vpop.f32.mrb[0].mxu0
  %v8334 = vadd.f32 %v8235, %v8333
  %v8335 = vpop.f32.mrb[0].mxu0
  %8336 = vmatprep.mubr.f32.mxu0 0.0
  %8337 = vmatmul.mubr.f32.gmra.mrb[0].mxu0 %v8250
  %v8338 = vpop.f32.mrb[0].mxu0
  %v8339 = vadd.f32 %v8235, %v8338
  %v8340 = vpop.f32.mrb[0].mxu0
  %8341 = vdwg.mxu0
  %v8342 = vmul.f32 %v8319, 0.5
  %v8343 = vmul.f32 %v8324, 0.5
  %v8344 = vmul.f32 %v8329, 0.5
  %v8345 = vmul.f32 %v8334, 0.5
  %v8346 = vmul.f32 %v8339, 0.5
  %v8347 = vmul.f32 %v8319, 0.70710677
  %v8348 = vmul.f32 %v8324, 0.70710677
  %v8349 = vmul.f32 %v8329, 0.70710677
  %v8350 = vmul.f32 %v8334, 0.70710677
  %v8351 = vmul.f32 %v8339, 0.70710677
  %v8352 = verf.f32.pop %v8347
  %v8353 = verf.f32.pop %v8348
  %v8354 = verf.f32.pop %v8349
  %v8355 = verf.f32.pop %v8350
  %v8356 = verf.f32.pop %v8351
  %v8357 = vadd.f32 %v8352, 1.0
  %v8358 = vadd.f32 %v8353, 1.0
  %v8359 = vadd.f32 %v8354, 1.0
  %v8360 = vadd.f32 %v8355, 1.0
  %v8361 = vadd.f32 %v8356, 1.0
  %v8362 = vmul.f32 %v8342, %v8357
  %v8363 = vmul.f32 %v8343, %v8358
  %v8364 = vmul.f32 %v8344, %v8359
  %v8365 = vmul.f32 %v8345, %v8360
  %v8366 = vmul.f32 %v8346, %v8361
  %s8367 = scalar_lea.vmem %s11, 64
  %v8368 = vld [vmem:[%s8367] sm:$0xff]
  %v8369 = vld [vmem:[%s8367 + $0x8] sm:$0xff]
  %v8370 = vld [vmem:[%s8367 + $0x10] sm:$0xff]
  %v8371 = vld [vmem:[%s8367 + $0x18] sm:$0xff]
  %v8372 = vld [vmem:[%s8367 + $0x20] sm:$0xff]
  %v8373 = vld [vmem:[%s8367 + $0x28] sm:$0xff]
  %v8374 = vld [vmem:[%s8367 + $0x30] sm:$0xff]
  %v8375 = vld [vmem:[%s8367 + $0x38] sm:$0xff]
  %s8376 = scalar_lea.vmem %s12, 1
  %v8377 = vld [vmem:[%s8376] sm:$0x1]
  %v8379 = vlaneseq
  %v8380 = vshrl.u32 %v8379, 7
  %v8381 = vsub.s32 0, %v8380
  %v8382 = vrot.slane %v8377, %v8381
  %v8385 = vsel %vm4307, %v8362, 0
  %v8388 = vsel %vm4307, %v8363, 0
  %v8391 = vsel %vm4307, %v8364, 0
  %v8394 = vsel %vm4307, %v8365, 0
  %v8397 = vsel %vm4307, %v8366, 0
  %8399 = vmatprep.subr.mxu0 0.0
  %8400 = vmatpush1.msra.mxu0 %v8368
  %8401 = vmatprep.subr.mxu0 0.0
  %8402 = vmatpush1.msra.mxu0 %v8369
  %8403 = vmatprep.subr.mxu0 0.0
  %8404 = vmatpush1.msra.mxu0 %v8370
  %8405 = vmatprep.subr.mxu0 0.0
  %8406 = vmatpush1.msra.mxu0 %v8371
  %8407 = vmatprep.subr.mxu0 0.0
  %8408 = vmatpush1.msra.mxu0 %v8372
  %8409 = vmatprep.subr.mxu0 0.0
  %8410 = vmatpush1.msra.mxu0 %v8373
  %8411 = vmatprep.subr.mxu0 0.0
  %8412 = vmatpush1.msra.mxu0 %v8374
  %8413 = vmatprep.subr.mxu0 0.0
  %8414 = vmatpush1.msra.mxu0 %v8375
  %8415 = vmatprep.subr.mxu0 0.0
  %8416 = vmatpush1.msra.mxu0 0.0
  %8417 = vmatprep.subr.mxu0 0.0
  %8418 = vmatpush1.msra.mxu0 0.0
  %8419 = vmatprep.subr.mxu0 0.0
  %8420 = vmatpush1.msra.mxu0 0.0
  %8421 = vmatprep.subr.mxu0 0.0
  %8422 = vmatpush1.msra.mxu0 0.0
  %8423 = vmatprep.subr.mxu0 0.0
  %8424 = vmatpush1.msra.mxu0 0.0
  %8425 = vmatprep.subr.mxu0 0.0
  %8426 = vmatpush1.msra.mxu0 0.0
  %8427 = vmatprep.subr.mxu0 0.0
  %8428 = vmatpush1.msra.mxu0 0.0
  %8429 = vmatprep.subr.mxu0 0.0
  %8430 = vmatpush1.msra.mxu0 0.0
  %8431 = vmatprep.subr.mxu0 0.0
  %8432 = vmatpush1.msra.mxu0 0.0
  %8433 = vmatprep.subr.mxu0 0.0
  %8434 = vmatpush1.msra.mxu0 0.0
  %8435 = vmatprep.subr.mxu0 0.0
  %8436 = vmatpush1.msra.mxu0 0.0
  %8437 = vmatprep.subr.mxu0 0.0
  %8438 = vmatpush1.msra.mxu0 0.0
  %8439 = vmatprep.subr.mxu0 0.0
  %8440 = vmatpush1.msra.mxu0 0.0
  %8441 = vmatprep.subr.mxu0 0.0
  %8442 = vmatpush1.msra.mxu0 0.0
  %8443 = vmatprep.subr.mxu0 0.0
  %8444 = vmatpush1.msra.mxu0 0.0
  %8445 = vmatprep.subr.mxu0 0.0
  %8446 = vmatpush1.msra.mxu0 0.0
  %8447 = vmatprep.subr.mxu0 0.0
  %8448 = vmatpush1.msra.mxu0 0.0
  %8449 = vmatprep.subr.mxu0 0.0
  %8450 = vmatpush1.msra.mxu0 0.0
  %8451 = vmatprep.subr.mxu0 0.0
  %8452 = vmatpush1.msra.mxu0 0.0
  %8453 = vmatprep.subr.mxu0 0.0
  %8454 = vmatpush1.msra.mxu0 0.0
  %8455 = vmatprep.subr.mxu0 0.0
  %8456 = vmatpush1.msra.mxu0 0.0
  %8457 = vmatprep.subr.mxu0 0.0
  %8458 = vmatpush1.msra.mxu0 0.0
  %8459 = vmatprep.subr.mxu0 0.0
  %8460 = vmatpush1.msra.mxu0 0.0
  %8461 = vmatprep.subr.mxu0 0.0
  %8462 = vmatpush1.msra.mxu0 0.0
  %8463 = vmatprep.mubr.f32.mxu0 0.0
  %8464 = vmatmul.mubr.f32.gmra.mrb[0].mxu0 %v8385
  %v8465 = vpop.f32.mrb[0].mxu0
  %v8466 = vadd.f32 %v8382, %v8465
  %v8467 = vpop.f32.mrb[0].mxu0
  %8468 = vmatprep.mubr.f32.mxu0 0.0
  %8469 = vmatmul.mubr.f32.gmra.mrb[0].mxu0 %v8388
  %v8470 = vpop.f32.mrb[0].mxu0
  %v8471 = vadd.f32 %v8382, %v8470
  %v8472 = vpop.f32.mrb[0].mxu0
  %8473 = vmatprep.mubr.f32.mxu0 0.0
  %8474 = vmatmul.mubr.f32.gmra.mrb[0].mxu0 %v8391
  %v8475 = vpop.f32.mrb[0].mxu0
  %v8476 = vadd.f32 %v8382, %v8475
  %v8477 = vpop.f32.mrb[0].mxu0
  %8478 = vmatprep.mubr.f32.mxu0 0.0
  %8479 = vmatmul.mubr.f32.gmra.mrb[0].mxu0 %v8394
  %v8480 = vpop.f32.mrb[0].mxu0
  %v8481 = vadd.f32 %v8382, %v8480
  %v8482 = vpop.f32.mrb[0].mxu0
  %8483 = vmatprep.mubr.f32.mxu0 0.0
  %8484 = vmatmul.mubr.f32.gmra.mrb[0].mxu0 %v8397
  %v8485 = vpop.f32.mrb[0].mxu0
  %v8486 = vadd.f32 %v8382, %v8485
  %v8487 = vpop.f32.mrb[0].mxu0
  %8488 = vdwg.mxu0
  %v8489 = vadd.f32 %v8466, %v8098
  %v8490 = vadd.f32 %v8471, %v8103
  %v8491 = vadd.f32 %v8476, %v8108
  %v8492 = vadd.f32 %v8481, %v8113
  %v8493 = vadd.f32 %v8486, %v8118
  %v8494 = vld [vmem:[%s25] sm:$0x3]
  %v8496 = vsel %vm344, %v8494, 0
  %v8499 = vsel %vm354, %v8493, 0
  %8501 = vmatprep.subr.mxu0 0.0
  %8502 = vmatpush1.msra.mxu0 %v8489
  %8503 = vmatprep.subr.mxu0 0.0
  %8504 = vmatpush1.msra.mxu0 %v8490
  %8505 = vmatprep.subr.mxu0 0.0
  %8506 = vmatpush1.msra.mxu0 %v8491
  %8507 = vmatprep.subr.mxu0 0.0
  %8508 = vmatpush1.msra.mxu0 %v8492
  %8509 = vmatprep.subr.mxu0 0.0
  %8510 = vmatpush1.msra.mxu0 %v8499
  %8511 = vmatprep.subr.mxu0 0.0
  %8512 = vmatpush1.msra.mxu0 0.0
  %8513 = vmatprep.subr.mxu0 0.0
  %8514 = vmatpush1.msra.mxu0 0.0
  %8515 = vmatprep.subr.mxu0 0.0
  %8516 = vmatpush1.msra.mxu0 0.0
  %8517 = vmatprep.subr.mxu0 0.0
  %8518 = vmatpush1.msra.mxu0 0.0
  %8519 = vmatprep.subr.mxu0 0.0
  %8520 = vmatpush1.msra.mxu0 0.0
  %8521 = vmatprep.subr.mxu0 0.0
  %8522 = vmatpush1.msra.mxu0 0.0
  %8523 = vmatprep.subr.mxu0 0.0
  %8524 = vmatpush1.msra.mxu0 0.0
  %8525 = vmatprep.subr.mxu0 0.0
  %8526 = vmatpush1.msra.mxu0 0.0
  %8527 = vmatprep.subr.mxu0 0.0
  %8528 = vmatpush1.msra.mxu0 0.0
  %8529 = vmatprep.subr.mxu0 0.0
  %8530 = vmatpush1.msra.mxu0 0.0
  %8531 = vmatprep.subr.mxu0 0.0
  %8532 = vmatpush1.msra.mxu0 0.0
  %8533 = vmatprep.subr.mxu0 0.0
  %8534 = vmatpush1.msra.mxu0 0.0
  %8535 = vmatprep.subr.mxu0 0.0
  %8536 = vmatpush1.msra.mxu0 0.0
  %8537 = vmatprep.subr.mxu0 0.0
  %8538 = vmatpush1.msra.mxu0 0.0
  %8539 = vmatprep.subr.mxu0 0.0
  %8540 = vmatpush1.msra.mxu0 0.0
  %8541 = vmatprep.subr.mxu0 0.0
  %8542 = vmatpush1.msra.mxu0 0.0
  %8543 = vmatprep.subr.mxu0 0.0
  %8544 = vmatpush1.msra.mxu0 0.0
  %8545 = vmatprep.subr.mxu0 0.0
  %8546 = vmatpush1.msra.mxu0 0.0
  %8547 = vmatprep.subr.mxu0 0.0
  %8548 = vmatpush1.msra.mxu0 0.0
  %8549 = vmatprep.subr.mxu0 0.0
  %8550 = vmatpush1.msra.mxu0 0.0
  %8551 = vmatprep.subr.mxu0 0.0
  %8552 = vmatpush1.msra.mxu0 0.0
  %8553 = vmatprep.subr.mxu0 0.0
  %8554 = vmatpush1.msra.mxu0 0.0
  %8555 = vmatprep.subr.mxu0 0.0
  %8556 = vmatpush1.msra.mxu0 0.0
  %8557 = vmatprep.subr.mxu0 0.0
  %8558 = vmatpush1.msra.mxu0 0.0
  %8559 = vmatprep.subr.mxu0 0.0
  %8560 = vmatpush1.msra.mxu0 0.0
  %8561 = vmatprep.subr.mxu0 0.0
  %8562 = vmatpush1.msra.mxu0 0.0
  %8563 = vmatprep.subr.mxu0 0.0
  %8564 = vmatpush1.msra.mxu0 0.0
  %8565 = vmatprep.mubr.f32.mxu0 0.0
  %8566 = vmatmul.mubr.f32.gmra.mrb[0].mxu0 %v8496
  %v8567 = vpop.f32.mrb[0].mxu0
  %v8568 = vadd.f32 0.0, %v8567
  %v8569 = vpop.f32.mrb[0].mxu0
  %8570 = vdwg.mxu0
  %v8571 = vld [vmem:[%s13] sm:$0xff]
  %v8572 = vld [vmem:[%s13 + $0x8] sm:$0xff]
  %v8573 = vld [vmem:[%s13 + $0x10] sm:$0xff]
  %v8574 = vld [vmem:[%s13 + $0x18] sm:$0xff]
  %v8575 = vld [vmem:[%s13 + $0x20] sm:$0xff]
  %v8576 = vld [vmem:[%s13 + $0x28] sm:$0xff]
  %v8577 = vld [vmem:[%s14] sm:$0x1]
  %v8579 = vlaneseq
  %v8580 = vshrl.u32 %v8579, 7
  %v8581 = vsub.s32 0, %v8580
  %v8582 = vrot.slane %v8577, %v8581
  %v8585 = vsel %vm241, %v8568, 0
  %8587 = vmatprep.subr.mxu0 0.0
  %8588 = vmatpush1.msra.mxu0 %v8571
  %8589 = vmatprep.subr.mxu0 0.0
  %8590 = vmatpush1.msra.mxu0 %v8572
  %8591 = vmatprep.subr.mxu0 0.0
  %8592 = vmatpush1.msra.mxu0 %v8573
  %8593 = vmatprep.subr.mxu0 0.0
  %8594 = vmatpush1.msra.mxu0 %v8574
  %8595 = vmatprep.subr.mxu0 0.0
  %8596 = vmatpush1.msra.mxu0 %v8575
  %8597 = vmatprep.subr.mxu0 0.0
  %8598 = vmatpush1.msra.mxu0 %v8576
  %8599 = vmatprep.subr.mxu0 0.0
  %8600 = vmatpush1.msra.mxu0 0.0
  %8601 = vmatprep.subr.mxu0 0.0
  %8602 = vmatpush1.msra.mxu0 0.0
  %8603 = vmatprep.subr.mxu0 0.0
  %8604 = vmatpush1.msra.mxu0 0.0
  %8605 = vmatprep.subr.mxu0 0.0
  %8606 = vmatpush1.msra.mxu0 0.0
  %8607 = vmatprep.subr.mxu0 0.0
  %8608 = vmatpush1.msra.mxu0 0.0
  %8609 = vmatprep.subr.mxu0 0.0
  %8610 = vmatpush1.msra.mxu0 0.0
  %8611 = vmatprep.subr.mxu0 0.0
  %8612 = vmatpush1.msra.mxu0 0.0
  %8613 = vmatprep.subr.mxu0 0.0
  %8614 = vmatpush1.msra.mxu0 0.0
  %8615 = vmatprep.subr.mxu0 0.0
  %8616 = vmatpush1.msra.mxu0 0.0
  %8617 = vmatprep.subr.mxu0 0.0
  %8618 = vmatpush1.msra.mxu0 0.0
  %8619 = vmatprep.subr.mxu0 0.0
  %8620 = vmatpush1.msra.mxu0 0.0
  %8621 = vmatprep.subr.mxu0 0.0
  %8622 = vmatpush1.msra.mxu0 0.0
  %8623 = vmatprep.subr.mxu0 0.0
  %8624 = vmatpush1.msra.mxu0 0.0
  %8625 = vmatprep.subr.mxu0 0.0
  %8626 = vmatpush1.msra.mxu0 0.0
  %8627 = vmatprep.subr.mxu0 0.0
  %8628 = vmatpush1.msra.mxu0 0.0
  %8629 = vmatprep.subr.mxu0 0.0
  %8630 = vmatpush1.msra.mxu0 0.0
  %8631 = vmatprep.subr.mxu0 0.0
  %8632 = vmatpush1.msra.mxu0 0.0
  %8633 = vmatprep.subr.mxu0 0.0
  %8634 = vmatpush1.msra.mxu0 0.0
  %8635 = vmatprep.subr.mxu0 0.0
  %8636 = vmatpush1.msra.mxu0 0.0
  %8637 = vmatprep.subr.mxu0 0.0
  %8638 = vmatpush1.msra.mxu0 0.0
  %8639 = vmatprep.subr.mxu0 0.0
  %8640 = vmatpush1.msra.mxu0 0.0
  %8641 = vmatprep.subr.mxu0 0.0
  %8642 = vmatpush1.msra.mxu0 0.0
  %8643 = vmatprep.subr.mxu0 0.0
  %8644 = vmatpush1.msra.mxu0 0.0
  %8645 = vmatprep.subr.mxu0 0.0
  %8646 = vmatpush1.msra.mxu0 0.0
  %8647 = vmatprep.subr.mxu0 0.0
  %8648 = vmatpush1.msra.mxu0 0.0
  %8649 = vmatprep.subr.mxu0 0.0
  %8650 = vmatpush1.msra.mxu0 0.0
  %8651 = vmatprep.mubr.f32.mxu0 0.0
  %8652 = vmatmul.mubr.f32.gmra.mrb[0].mxu0 %v8585
  %v8653 = vpop.f32.mrb[0].mxu0
  %v8654 = vadd.f32 %v8582, %v8653
  %v8655 = vpop.f32.mrb[0].mxu0
  %8656 = vdwg.mxu0
  %vm8657 = vcmask 74752
  %v8658 = vsel %vm8657, %v8654, -inf
  %8659 = vmax.xlane.f32.xlu0 %v8658
  %v8660 = vpop.xlane.xlu0 %8659
  %v8661 = vsub.f32 %v8654, %v8660
  %v8662 = vmul.f32 %v8661, 1.442695
  %v8663 = vpow.pop %v8662
  %v8664 = vsel %vm8657, %v8663, 0.0
  %8665 = vadd.xlane.f32.xlu0 %v8664
  %v8666 = vpop.xlane.xlu0 %8665
  %v8667 = vrcp.pop %v8666
  %v8668 = vmul.f32 %v8663, %v8667
  %8669 = vst.msk [vmem:[%s26] sm:$0x3] %vm8657, %v8668
  // Predicated region
  $region106: #{vit_forward.1} parent=0 // pred_check
    _
  $region107: #{vit_forward.1} parent=0 // pred_check_branch
    %8671 = sbr.rel (0) target = $region109
  $region108: #{vit_forward.1} parent=0 // pred_region
    _
  $region109: #{vit_forward.1} parent=0 // pred_fallthru
    _
  // Predicated region
  $region110: #{vit_forward.1} parent=0 // pred_check
    _
  $region111: #{vit_forward.1} parent=0 // pred_check_branch
    %8673 = sbr.rel (0) target = $region113
  $region112: #{vit_forward.1} parent=0 // pred_region
    _
  $region113: #{vit_forward.1} parent=0 // pred_fallthru
    _

</llo_original>
